<compile_context>
chip_gen: v7x
topology: tpu7x:2x2x1
jax: 0.10.0
libtpu: 0.0.40
codegen_flags: <defaults>
</compile_context>

<pallas_src>
import functools

import jax
import jax.numpy as jnp
from jax import lax
from jax.experimental import pallas as pl
from jax.experimental.pallas import tpu as pltpu


# ----------------------------- kernel ---------------------------------------


def _layernorm(v, gamma, beta, eps=1e-5):
    # v: (T, E) f32, gamma/beta: (1, E) f32
    mu = jnp.mean(v, axis=-1, keepdims=True)
    var = jnp.mean((v - mu) ** 2, axis=-1, keepdims=True)
    return (v - mu) * lax.rsqrt(var + eps) * gamma + beta


def block_kernel(
    x_ref,                                   # (1, T, E)  f32
    g1_ref, b1_ref,                          # attn_norm weight/bias  (1, E) f32
    wq_ref, wk_ref, wv_ref,                  # (H, E, Hd) bf16
    bq_ref, bk_ref, bv_ref,                  # (H, 1, Hd) f32
    wo_ref, bo_ref,                          # (H, Hd, E) bf16, (1, E) f32
    g2_ref, b2_ref,                          # ffn_norm weight/bias   (1, E) f32
    w1_ref, bf1_ref,                         # (E, 4E) bf16, (1, 4E) f32
    w2_ref, bf2_ref,                         # (4E, E) bf16, (1, E) f32
    o_ref,                                   # (1, T, E)
    *, num_heads,
):
    x = x_ref[0].astype(jnp.float32)         # (T, E) residual stream, f32
    T, E = x.shape
    Hd = E // num_heads
    scale = 1.0 / (Hd ** 0.5)

    # ---- attention sub-block: x = x + attn(attn_norm(x)) ----
    h_bf = _layernorm(x, g1_ref[...], b1_ref[...]).astype(jnp.bfloat16)  # MXU input

    row = lax.broadcasted_iota(jnp.int32, (T, T), 0)
    col = lax.broadcasted_iota(jnp.int32, (T, T), 1)
    causal = row >= col

    # Per-head loop (short static unroll). Head weights arrive pre-split, so
    # activations are never lane-sliced; the output projection is folded into
    # a (T, E) f32 accumulator instead of concatenating heads.
    acc = jnp.zeros((T, E), jnp.float32)
    for hix in range(num_heads):
        q = jnp.dot(h_bf, wq_ref[hix], preferred_element_type=jnp.float32) + bq_ref[hix]
        k = jnp.dot(h_bf, wk_ref[hix], preferred_element_type=jnp.float32) + bk_ref[hix]
        v = jnp.dot(h_bf, wv_ref[hix], preferred_element_type=jnp.float32) + bv_ref[hix]

        # scores = q @ k^T (contract last dims; bf16 MXU inputs, f32 acc)
        s = lax.dot_general(
            q.astype(jnp.bfloat16), k.astype(jnp.bfloat16),
            (((1,), (1,)), ((), ())),
            preferred_element_type=jnp.float32) * scale
        s = jnp.where(causal, s, -1e30)
        m = jnp.max(s, axis=-1, keepdims=True)
        p = jnp.exp(s - m)
        inv = pl.reciprocal(jnp.sum(p, axis=-1, keepdims=True), approx=True)
        p = (p * inv).astype(jnp.bfloat16)

        av = jnp.dot(p, v.astype(jnp.bfloat16),
                     preferred_element_type=jnp.float32)           # (T, Hd)
        # fold output projection for this head: acc += av @ wo[h]
        acc = acc + jnp.dot(av.astype(jnp.bfloat16), wo_ref[hix],
                            preferred_element_type=jnp.float32)     # (T, E)

    x = x + acc + bo_ref[...]

    # ---- ffn sub-block: x = x + ffn(ffn_norm(x)) ----
    h2 = _layernorm(x, g2_ref[...], b2_ref[...]).astype(jnp.bfloat16)
    f = jnp.dot(h2, w1_ref[...], preferred_element_type=jnp.float32) + bf1_ref[...]
    f = jax.nn.gelu(f, approximate=True)     # tanh GELU (EUP), f32 elementwise
    f = jnp.dot(f.astype(jnp.bfloat16), w2_ref[...],
                preferred_element_type=jnp.float32) + bf2_ref[...]
    x = x + f

    o_ref[0] = x.astype(o_ref.dtype)


# ----------------------------- wrapper ---------------------------------------

KERNEL_PARAM_ORDER = ("g1", "b1",
                      "wq", "wk", "wv", "bq", "bk", "bv", "wo_h", "bo",
                      "g2", "b2", "w1", "bf1", "w2", "bf2")


def _prepare_kernel_params(params, num_heads):
    """Split QKV/output-proj weights per head and cast matmul weights to bf16."""
    E = params["wqkv"].shape[0]
    Hd = E // num_heads
    bf16 = jnp.bfloat16
    wqkv, bqkv = params["wqkv"], params["bqkv"]

    def split_w(w):      # (E, E) -> (H, E, Hd)
        return w.reshape(E, num_heads, Hd).transpose(1, 0, 2)

    def split_b(b):      # (1, E) -> (H, 1, Hd)
        return b.reshape(num_heads, 1, Hd)

    return {
        "g1": params["g1"], "b1": params["b1"],
        "wq": split_w(wqkv[:, 0 * E:1 * E]).astype(bf16),
        "wk": split_w(wqkv[:, 1 * E:2 * E]).astype(bf16),
        "wv": split_w(wqkv[:, 2 * E:3 * E]).astype(bf16),
        "bq": split_b(bqkv[:, 0 * E:1 * E]),
        "bk": split_b(bqkv[:, 1 * E:2 * E]),
        "bv": split_b(bqkv[:, 2 * E:3 * E]),
        "wo_h": params["wo"].reshape(num_heads, Hd, E).astype(bf16),
        "bo": params["bo"],
        "g2": params["g2"], "b2": params["b2"],
        "w1": params["w1"].astype(bf16), "bf1": params["bf1"],
        "w2": params["w2"].astype(bf16), "bf2": params["bf2"],
    }


def _vmem_limit_bytes(T, E):
    # bf16 weights + f32 I/O tiles (double-buffered) + live f32 intermediates,
    # with 2x headroom; clamped to [16 MiB, 48 MiB] (safe under v7x's 64 MiB).
    weight_bytes = 2 * (12 * E * E)                       # wq/wk/wv/wo/w1/w2 (bf16)
    io_bytes = 4 * (2 * T * E)                            # x tile + out tile (f32)
    interm_bytes = 4 * (3 * T * E + T * T + 4 * T * E)    # LN, acc, scores, ffn hidden
    est = 2 * (weight_bytes + io_bytes) + interm_bytes
    return int(min(max(2 * est, 16 * 2**20), 48 * 2**20))


def transformer_block(x, params, num_heads):
    B, T, E = x.shape
    kp = _prepare_kernel_params(params, num_heads)

    def full_spec(arr):
        nd = arr.ndim
        return pl.BlockSpec(arr.shape, lambda b, _n=nd: (0,) * _n)

    in_specs = [pl.BlockSpec((1, T, E), lambda b: (b, 0, 0))]
    in_specs += [full_spec(kp[name]) for name in KERNEL_PARAM_ORDER]

    grid_spec = pltpu.PrefetchScalarGridSpec(
        num_scalar_prefetch=0,
        grid=(B,),
        in_specs=in_specs,
        out_specs=pl.BlockSpec((1, T, E), lambda b: (b, 0, 0)),
    )

    kernel = functools.partial(block_kernel, num_heads=num_heads)
    return pl.pallas_call(
        kernel,
        out_shape=jax.ShapeDtypeStruct((B, T, E), x.dtype),
        grid_spec=grid_spec,
        compiler_params=pltpu.CompilerParams(
            dimension_semantics=("parallel",),
            vmem_limit_bytes=_vmem_limit_bytes(T, E)),
    )(x, *[kp[name] for name in KERNEL_PARAM_ORDER])


# ----------------------------- reference (pure JAX, f32) ----------------------


def reference_block(x, params, num_heads):
    B, T, E = x.shape
    Hd = E // num_heads
    scale = 1.0 / (Hd ** 0.5)

    def per_example(xe):
        def ln(v, g, b):
            mu = jnp.mean(v, -1, keepdims=True)
            var = jnp.mean((v - mu) ** 2, -1, keepdims=True)
            return (v - mu) * lax.rsqrt(var + 1e-5) * g + b

        h = ln(xe, params["g1"], params["b1"])
        qkv = h @ params["wqkv"] + params["bqkv"]
        q, k, v = qkv[:, :E], qkv[:, E:2 * E], qkv[:, 2 * E:]
        q = q.reshape(T, num_heads, Hd).transpose(1, 0, 2)
        k = k.reshape(T, num_heads, Hd).transpose(1, 0, 2)
        v = v.reshape(T, num_heads, Hd).transpose(1, 0, 2)
        s = jnp.einsum("hqd,hkd->hqk", q, k) * scale
        mask = jnp.tril(jnp.ones((T, T), bool))
        s = jnp.where(mask[None], s, -1e30)
        p = jax.nn.softmax(s, axis=-1)
        a = jnp.einsum("hqk,hkd->hqd", p, v).transpose(1, 0, 2).reshape(T, E)
        xe = xe + (a @ params["wo"] + params["bo"])

        h2 = ln(xe, params["g2"], params["b2"])
        f = jax.nn.gelu(h2 @ params["w1"] + params["bf1"], approximate=True)
        f = f @ params["w2"] + params["bf2"]
        return xe + f

    return jax.vmap(per_example)(x)


# ----------------------------- main -------------------------------------------


def init_params(key, E, ffn_mult=4):
    Hf = E * ffn_mult
    keys = jax.random.split(key, 6)
    s = 0.02
    return {
        "g1":   jnp.ones((1, E), jnp.float32),
        "b1":   jnp.zeros((1, E), jnp.float32),
        "wqkv": s * jax.random.normal(keys[0], (E, 3 * E), jnp.float32),
        "bqkv": jnp.zeros((1, 3 * E), jnp.float32),
        "wo":   s * jax.random.normal(keys[1], (E, E), jnp.float32),
        "bo":   jnp.zeros((1, E), jnp.float32),
        "g2":   jnp.ones((1, E), jnp.float32),
        "b2":   jnp.zeros((1, E), jnp.float32),
        "w1":   s * jax.random.normal(keys[2], (E, Hf), jnp.float32),
        "bf1":  jnp.zeros((1, Hf), jnp.float32),
        "w2":   s * jax.random.normal(keys[3], (Hf, E), jnp.float32),
        "bf2":  jnp.zeros((1, E), jnp.float32),
    }


if __name__ == "__main__":
    # Small but lane-dense shapes: E and 4E multiples of 128, T multiple of 8.
    B, T, E, H = 2, 128, 128, 4              # batch, seq, embedding, heads

    key = jax.random.PRNGKey(0)
    kx, kp = jax.random.split(key)
    x = jax.random.normal(kx, (B, T, E), jnp.float32)
    params = init_params(kp, E)

    out = transformer_block(x, params, num_heads=H)
    out = jax.block_until_ready(out)

    ref = reference_block(x, params, num_heads=H)   # f32 reference
    assert out.shape == (B, T, E)
    # bf16 MXU inputs + approx reciprocal vs. the f32 reference -> loosen tol.
    assert jnp.allclose(out, ref, rtol=2e-2, atol=2e-2), "mismatch vs. JAX reference"

    print("KERNEL_OK")
</pallas_src>

<mosaic_0001>
module attributes {stable_mosaic.version = 11 : i64} {
  func.func @block_kernel(%arg0: i32, %arg1: memref<1x128x128xf32, #tpu.memory_space<vmem>>, %arg2: memref<1x128xf32, #tpu.memory_space<vmem>>, %arg3: memref<1x128xf32, #tpu.memory_space<vmem>>, %arg4: memref<4x128x32xbf16, #tpu.memory_space<vmem>>, %arg5: memref<4x128x32xbf16, #tpu.memory_space<vmem>>, %arg6: memref<4x128x32xbf16, #tpu.memory_space<vmem>>, %arg7: memref<4x1x32xf32, #tpu.memory_space<vmem>>, %arg8: memref<4x1x32xf32, #tpu.memory_space<vmem>>, %arg9: memref<4x1x32xf32, #tpu.memory_space<vmem>>, %arg10: memref<4x32x128xbf16, #tpu.memory_space<vmem>>, %arg11: memref<1x128xf32, #tpu.memory_space<vmem>>, %arg12: memref<1x128xf32, #tpu.memory_space<vmem>>, %arg13: memref<1x128xf32, #tpu.memory_space<vmem>>, %arg14: memref<128x512xbf16, #tpu.memory_space<vmem>>, %arg15: memref<1x512xf32, #tpu.memory_space<vmem>>, %arg16: memref<512x128xbf16, #tpu.memory_space<vmem>>, %arg17: memref<1x128xf32, #tpu.memory_space<vmem>>, %arg18: memref<1x128x128xf32, #tpu.memory_space<vmem>>) attributes {dimension_semantics = [#tpu.dimension_semantics<parallel>], iteration_bounds = array<i64: 2>, scalar_prefetch = 0 : i64, scratch_operands = 0 : i64, tpu.core_type = #tpu.core_type<tc>, window_params = [{transform_indices = @transform_0, window_bounds = array<i64: 1, 128, 128>}, {pipeline_mode = #tpu.pipeline_mode<synchronous>, transform_indices = @transform_1, window_bounds = array<i64: 1, 128>}, {pipeline_mode = #tpu.pipeline_mode<synchronous>, transform_indices = @transform_2, window_bounds = array<i64: 1, 128>}, {pipeline_mode = #tpu.pipeline_mode<synchronous>, transform_indices = @transform_3, window_bounds = array<i64: 4, 128, 32>}, {pipeline_mode = #tpu.pipeline_mode<synchronous>, transform_indices = @transform_4, window_bounds = array<i64: 4, 128, 32>}, {pipeline_mode = #tpu.pipeline_mode<synchronous>, transform_indices = @transform_5, window_bounds = array<i64: 4, 128, 32>}, {pipeline_mode = #tpu.pipeline_mode<synchronous>, transform_indices = @transform_6, window_bounds = array<i64: 4, 1, 32>}, {pipeline_mode = #tpu.pipeline_mode<synchronous>, transform_indices = @transform_7, window_bounds = array<i64: 4, 1, 32>}, {pipeline_mode = #tpu.pipeline_mode<synchronous>, transform_indices = @transform_8, window_bounds = array<i64: 4, 1, 32>}, {pipeline_mode = #tpu.pipeline_mode<synchronous>, transform_indices = @transform_9, window_bounds = array<i64: 4, 32, 128>}, {pipeline_mode = #tpu.pipeline_mode<synchronous>, transform_indices = @transform_10, window_bounds = array<i64: 1, 128>}, {pipeline_mode = #tpu.pipeline_mode<synchronous>, transform_indices = @transform_11, window_bounds = array<i64: 1, 128>}, {pipeline_mode = #tpu.pipeline_mode<synchronous>, transform_indices = @transform_12, window_bounds = array<i64: 1, 128>}, {pipeline_mode = #tpu.pipeline_mode<synchronous>, transform_indices = @transform_13, window_bounds = array<i64: 128, 512>}, {pipeline_mode = #tpu.pipeline_mode<synchronous>, transform_indices = @transform_14, window_bounds = array<i64: 1, 512>}, {pipeline_mode = #tpu.pipeline_mode<synchronous>, transform_indices = @transform_15, window_bounds = array<i64: 512, 128>}, {pipeline_mode = #tpu.pipeline_mode<synchronous>, transform_indices = @transform_16, window_bounds = array<i64: 1, 128>}, {transform_indices = @transform_17, window_bounds = array<i64: 1, 128, 128>}]} {
    %c0 = arith.constant 0 : index
    %c0_0 = arith.constant 0 : index
    %c0_1 = arith.constant 0 : index
    %0 = vector.load %arg1[%c0, %c0_0, %c0_1] : memref<1x128x128xf32, #tpu.memory_space<vmem>>, vector<1x128x128xf32>
    %1 = vector.shape_cast %0 : vector<1x128x128xf32> to vector<128x128xf32>
    %c0_2 = arith.constant 0 : index
    %c0_3 = arith.constant 0 : index
    %2 = vector.load %arg2[%c0_2, %c0_3] : memref<1x128xf32, #tpu.memory_space<vmem>>, vector<1x128xf32>
    %c0_4 = arith.constant 0 : index
    %c0_5 = arith.constant 0 : index
    %3 = vector.load %arg3[%c0_4, %c0_5] : memref<1x128xf32, #tpu.memory_space<vmem>>, vector<1x128xf32>
    %cst = arith.constant dense<0.000000e+00> : vector<128xf32>
    %4 = vector.multi_reduction <add>, %1, %cst [1] : vector<128x128xf32> to vector<128xf32>
    %5 = vector.shape_cast %4 : vector<128xf32> to vector<128x1xf32>
    %cst_6 = arith.constant 1.280000e+02 : f32
    %6 = vector.broadcast %cst_6 : f32 to vector<128x1xf32>
    %7 = arith.divf %5, %6 : vector<128x1xf32>
    %8 = vector.broadcast %7 : vector<128x1xf32> to vector<128x128xf32>
    %9 = arith.subf %1, %8 : vector<128x128xf32>
    %10 = arith.mulf %9, %9 : vector<128x128xf32>
    %cst_7 = arith.constant dense<0.000000e+00> : vector<128xf32>
    %11 = vector.multi_reduction <add>, %10, %cst_7 [1] : vector<128x128xf32> to vector<128xf32>
    %12 = vector.shape_cast %11 : vector<128xf32> to vector<128x1xf32>
    %cst_8 = arith.constant 1.280000e+02 : f32
    %13 = vector.broadcast %cst_8 : f32 to vector<128x1xf32>
    %14 = arith.divf %12, %13 : vector<128x1xf32>
    %15 = vector.broadcast %7 : vector<128x1xf32> to vector<128x128xf32>
    %16 = arith.subf %1, %15 : vector<128x128xf32>
    %cst_9 = arith.constant 9.99999974E-6 : f32
    %17 = vector.broadcast %cst_9 : f32 to vector<128x1xf32>
    %18 = arith.addf %14, %17 : vector<128x1xf32>
    %19 = math.rsqrt %18 : vector<128x1xf32>
    %20 = vector.broadcast %19 : vector<128x1xf32> to vector<128x128xf32>
    %21 = arith.mulf %16, %20 : vector<128x128xf32>
    %22 = vector.broadcast %2 : vector<1x128xf32> to vector<128x128xf32>
    %23 = arith.mulf %21, %22 : vector<128x128xf32>
    %24 = vector.broadcast %3 : vector<1x128xf32> to vector<128x128xf32>
    %25 = arith.addf %23, %24 : vector<128x128xf32>
    %26 = arith.truncf %25 : vector<128x128xf32> to vector<128x128xbf16>
    %27 = tpu.iota {dimensions = array<i32: 0>} : vector<128x128xi32>
    %28 = tpu.iota {dimensions = array<i32: 1>} : vector<128x128xi32>
    %29 = arith.cmpi sge, %27, %28 : vector<128x128xi32>
    %cst_10 = arith.constant 0.000000e+00 : f32
    %30 = vector.broadcast %cst_10 : f32 to vector<128x128xf32>
    %c0_11 = arith.constant 0 : index
    %c0_12 = arith.constant 0 : index
    %c0_13 = arith.constant 0 : index
    %31 = vector.load %arg4[%c0_11, %c0_12, %c0_13] : memref<4x128x32xbf16, #tpu.memory_space<vmem>>, vector<1x128x32xbf16>
    %32 = vector.shape_cast %31 : vector<1x128x32xbf16> to vector<128x32xbf16>
    %cst_14 = arith.constant dense<0.000000e+00> : vector<128x32xf32>
    %33 = tpu.matmul %26, %32, %cst_14 {dimension_numbers = #tpu.dot_dimension_numbers<[1], [0], [0], [1], [0, 0, 1, 1], [], []>} : vector<128x128xbf16>, vector<128x32xbf16>, vector<128x32xf32> -> vector<128x32xf32>
    %c0_15 = arith.constant 0 : index
    %c0_16 = arith.constant 0 : index
    %c0_17 = arith.constant 0 : index
    %34 = vector.load %arg7[%c0_15, %c0_16, %c0_17] : memref<4x1x32xf32, #tpu.memory_space<vmem>>, vector<1x1x32xf32>
    %35 = vector.shape_cast %34 : vector<1x1x32xf32> to vector<1x32xf32>
    %36 = vector.broadcast %35 : vector<1x32xf32> to vector<128x32xf32>
    %37 = arith.addf %33, %36 : vector<128x32xf32>
    %c0_18 = arith.constant 0 : index
    %c0_19 = arith.constant 0 : index
    %c0_20 = arith.constant 0 : index
    %38 = vector.load %arg5[%c0_18, %c0_19, %c0_20] : memref<4x128x32xbf16, #tpu.memory_space<vmem>>, vector<1x128x32xbf16>
    %39 = vector.shape_cast %38 : vector<1x128x32xbf16> to vector<128x32xbf16>
    %cst_21 = arith.constant dense<0.000000e+00> : vector<128x32xf32>
    %40 = tpu.matmul %26, %39, %cst_21 {dimension_numbers = #tpu.dot_dimension_numbers<[1], [0], [0], [1], [0, 0, 1, 1], [], []>} : vector<128x128xbf16>, vector<128x32xbf16>, vector<128x32xf32> -> vector<128x32xf32>
    %c0_22 = arith.constant 0 : index
    %c0_23 = arith.constant 0 : index
    %c0_24 = arith.constant 0 : index
    %41 = vector.load %arg8[%c0_22, %c0_23, %c0_24] : memref<4x1x32xf32, #tpu.memory_space<vmem>>, vector<1x1x32xf32>
    %42 = vector.shape_cast %41 : vector<1x1x32xf32> to vector<1x32xf32>
    %43 = vector.broadcast %42 : vector<1x32xf32> to vector<128x32xf32>
    %44 = arith.addf %40, %43 : vector<128x32xf32>
    %c0_25 = arith.constant 0 : index
    %c0_26 = arith.constant 0 : index
    %c0_27 = arith.constant 0 : index
    %45 = vector.load %arg6[%c0_25, %c0_26, %c0_27] : memref<4x128x32xbf16, #tpu.memory_space<vmem>>, vector<1x128x32xbf16>
    %46 = vector.shape_cast %45 : vector<1x128x32xbf16> to vector<128x32xbf16>
    %cst_28 = arith.constant dense<0.000000e+00> : vector<128x32xf32>
    %47 = tpu.matmul %26, %46, %cst_28 {dimension_numbers = #tpu.dot_dimension_numbers<[1], [0], [0], [1], [0, 0, 1, 1], [], []>} : vector<128x128xbf16>, vector<128x32xbf16>, vector<128x32xf32> -> vector<128x32xf32>
    %c0_29 = arith.constant 0 : index
    %c0_30 = arith.constant 0 : index
    %c0_31 = arith.constant 0 : index
    %48 = vector.load %arg9[%c0_29, %c0_30, %c0_31] : memref<4x1x32xf32, #tpu.memory_space<vmem>>, vector<1x1x32xf32>
    %49 = vector.shape_cast %48 : vector<1x1x32xf32> to vector<1x32xf32>
    %50 = vector.broadcast %49 : vector<1x32xf32> to vector<128x32xf32>
    %51 = arith.addf %47, %50 : vector<128x32xf32>
    %52 = arith.truncf %37 : vector<128x32xf32> to vector<128x32xbf16>
    %53 = arith.truncf %44 : vector<128x32xf32> to vector<128x32xbf16>
    %cst_32 = arith.constant dense<0.000000e+00> : vector<128x128xf32>
    %54 = tpu.matmul %52, %53, %cst_32 {dimension_numbers = #tpu.dot_dimension_numbers<[1], [1], [0], [0], [0, 0, 1, 0], [], []>} : vector<128x32xbf16>, vector<128x32xbf16>, vector<128x128xf32> -> vector<128x128xf32>
    %cst_33 = arith.constant 0.176776692 : f32
    %55 = vector.broadcast %cst_33 : f32 to vector<128x128xf32>
    %56 = arith.mulf %54, %55 : vector<128x128xf32>
    %cst_34 = arith.constant -1.000000e+30 : f32
    %57 = vector.broadcast %cst_34 : f32 to vector<128x128xf32>
    %58 = arith.select %29, %56, %57 : vector<128x128xi1>, vector<128x128xf32>
    %cst_35 = arith.constant dense<0xFF800000> : vector<128xf32>
    %59 = vector.multi_reduction <maximumf>, %58, %cst_35 [1] : vector<128x128xf32> to vector<128xf32>
    %60 = vector.shape_cast %59 : vector<128xf32> to vector<128x1xf32>
    %61 = vector.broadcast %60 : vector<128x1xf32> to vector<128x128xf32>
    %62 = arith.subf %58, %61 : vector<128x128xf32>
    %63 = math.exp %62 : vector<128x128xf32>
    %cst_36 = arith.constant dense<0.000000e+00> : vector<128xf32>
    %64 = vector.multi_reduction <add>, %63, %cst_36 [1] : vector<128x128xf32> to vector<128xf32>
    %65 = vector.shape_cast %64 : vector<128xf32> to vector<128x1xf32>
    %66 = tpu.reciprocal %65 {approx = true} : vector<128x1xf32> -> vector<128x1xf32>
    %67 = vector.broadcast %66 : vector<128x1xf32> to vector<128x128xf32>
    %68 = arith.mulf %63, %67 : vector<128x128xf32>
    %69 = arith.truncf %68 : vector<128x128xf32> to vector<128x128xbf16>
    %70 = arith.truncf %51 : vector<128x32xf32> to vector<128x32xbf16>
    %cst_37 = arith.constant dense<0.000000e+00> : vector<128x32xf32>
    %71 = tpu.matmul %69, %70, %cst_37 {dimension_numbers = #tpu.dot_dimension_numbers<[1], [0], [0], [1], [0, 0, 1, 1], [], []>} : vector<128x128xbf16>, vector<128x32xbf16>, vector<128x32xf32> -> vector<128x32xf32>
    %72 = arith.truncf %71 : vector<128x32xf32> to vector<128x32xbf16>
    %c0_38 = arith.constant 0 : index
    %c0_39 = arith.constant 0 : index
    %c0_40 = arith.constant 0 : index
    %73 = vector.load %arg10[%c0_38, %c0_39, %c0_40] : memref<4x32x128xbf16, #tpu.memory_space<vmem>>, vector<1x32x128xbf16>
    %74 = vector.shape_cast %73 : vector<1x32x128xbf16> to vector<32x128xbf16>
    %cst_41 = arith.constant dense<0.000000e+00> : vector<128x128xf32>
    %75 = tpu.matmul %72, %74, %cst_41 {dimension_numbers = #tpu.dot_dimension_numbers<[1], [0], [0], [1], [0, 0, 1, 1], [], []>} : vector<128x32xbf16>, vector<32x128xbf16>, vector<128x128xf32> -> vector<128x128xf32>
    %76 = arith.addf %30, %75 : vector<128x128xf32>
    %c1 = arith.constant 1 : index
    %c0_42 = arith.constant 0 : index
    %c0_43 = arith.constant 0 : index
    %77 = vector.load %arg4[%c1, %c0_42, %c0_43] : memref<4x128x32xbf16, #tpu.memory_space<vmem>>, vector<1x128x32xbf16>
    %78 = vector.shape_cast %77 : vector<1x128x32xbf16> to vector<128x32xbf16>
    %cst_44 = arith.constant dense<0.000000e+00> : vector<128x32xf32>
    %79 = tpu.matmul %26, %78, %cst_44 {dimension_numbers = #tpu.dot_dimension_numbers<[1], [0], [0], [1], [0, 0, 1, 1], [], []>} : vector<128x128xbf16>, vector<128x32xbf16>, vector<128x32xf32> -> vector<128x32xf32>
    %c1_45 = arith.constant 1 : index
    %c0_46 = arith.constant 0 : index
    %c0_47 = arith.constant 0 : index
    %80 = vector.load %arg7[%c1_45, %c0_46, %c0_47] : memref<4x1x32xf32, #tpu.memory_space<vmem>>, vector<1x1x32xf32>
    %81 = vector.shape_cast %80 : vector<1x1x32xf32> to vector<1x32xf32>
    %82 = vector.broadcast %81 : vector<1x32xf32> to vector<128x32xf32>
    %83 = arith.addf %79, %82 : vector<128x32xf32>
    %c1_48 = arith.constant 1 : index
    %c0_49 = arith.constant 0 : index
    %c0_50 = arith.constant 0 : index
    %84 = vector.load %arg5[%c1_48, %c0_49, %c0_50] : memref<4x128x32xbf16, #tpu.memory_space<vmem>>, vector<1x128x32xbf16>
    %85 = vector.shape_cast %84 : vector<1x128x32xbf16> to vector<128x32xbf16>
    %cst_51 = arith.constant dense<0.000000e+00> : vector<128x32xf32>
    %86 = tpu.matmul %26, %85, %cst_51 {dimension_numbers = #tpu.dot_dimension_numbers<[1], [0], [0], [1], [0, 0, 1, 1], [], []>} : vector<128x128xbf16>, vector<128x32xbf16>, vector<128x32xf32> -> vector<128x32xf32>
    %c1_52 = arith.constant 1 : index
    %c0_53 = arith.constant 0 : index
    %c0_54 = arith.constant 0 : index
    %87 = vector.load %arg8[%c1_52, %c0_53, %c0_54] : memref<4x1x32xf32, #tpu.memory_space<vmem>>, vector<1x1x32xf32>
    %88 = vector.shape_cast %87 : vector<1x1x32xf32> to vector<1x32xf32>
    %89 = vector.broadcast %88 : vector<1x32xf32> to vector<128x32xf32>
    %90 = arith.addf %86, %89 : vector<128x32xf32>
    %c1_55 = arith.constant 1 : index
    %c0_56 = arith.constant 0 : index
    %c0_57 = arith.constant 0 : index
    %91 = vector.load %arg6[%c1_55, %c0_56, %c0_57] : memref<4x128x32xbf16, #tpu.memory_space<vmem>>, vector<1x128x32xbf16>
    %92 = vector.shape_cast %91 : vector<1x128x32xbf16> to vector<128x32xbf16>
    %cst_58 = arith.constant dense<0.000000e+00> : vector<128x32xf32>
    %93 = tpu.matmul %26, %92, %cst_58 {dimension_numbers = #tpu.dot_dimension_numbers<[1], [0], [0], [1], [0, 0, 1, 1], [], []>} : vector<128x128xbf16>, vector<128x32xbf16>, vector<128x32xf32> -> vector<128x32xf32>
    %c1_59 = arith.constant 1 : index
    %c0_60 = arith.constant 0 : index
    %c0_61 = arith.constant 0 : index
    %94 = vector.load %arg9[%c1_59, %c0_60, %c0_61] : memref<4x1x32xf32, #tpu.memory_space<vmem>>, vector<1x1x32xf32>
    %95 = vector.shape_cast %94 : vector<1x1x32xf32> to vector<1x32xf32>
    %96 = vector.broadcast %95 : vector<1x32xf32> to vector<128x32xf32>
    %97 = arith.addf %93, %96 : vector<128x32xf32>
    %98 = arith.truncf %83 : vector<128x32xf32> to vector<128x32xbf16>
    %99 = arith.truncf %90 : vector<128x32xf32> to vector<128x32xbf16>
    %cst_62 = arith.constant dense<0.000000e+00> : vector<128x128xf32>
    %100 = tpu.matmul %98, %99, %cst_62 {dimension_numbers = #tpu.dot_dimension_numbers<[1], [1], [0], [0], [0, 0, 1, 0], [], []>} : vector<128x32xbf16>, vector<128x32xbf16>, vector<128x128xf32> -> vector<128x128xf32>
    %cst_63 = arith.constant 0.176776692 : f32
    %101 = vector.broadcast %cst_63 : f32 to vector<128x128xf32>
    %102 = arith.mulf %100, %101 : vector<128x128xf32>
    %cst_64 = arith.constant -1.000000e+30 : f32
    %103 = vector.broadcast %cst_64 : f32 to vector<128x128xf32>
    %104 = arith.select %29, %102, %103 : vector<128x128xi1>, vector<128x128xf32>
    %cst_65 = arith.constant dense<0xFF800000> : vector<128xf32>
    %105 = vector.multi_reduction <maximumf>, %104, %cst_65 [1] : vector<128x128xf32> to vector<128xf32>
    %106 = vector.shape_cast %105 : vector<128xf32> to vector<128x1xf32>
    %107 = vector.broadcast %106 : vector<128x1xf32> to vector<128x128xf32>
    %108 = arith.subf %104, %107 : vector<128x128xf32>
    %109 = math.exp %108 : vector<128x128xf32>
    %cst_66 = arith.constant dense<0.000000e+00> : vector<128xf32>
    %110 = vector.multi_reduction <add>, %109, %cst_66 [1] : vector<128x128xf32> to vector<128xf32>
    %111 = vector.shape_cast %110 : vector<128xf32> to vector<128x1xf32>
    %112 = tpu.reciprocal %111 {approx = true} : vector<128x1xf32> -> vector<128x1xf32>
    %113 = vector.broadcast %112 : vector<128x1xf32> to vector<128x128xf32>
    %114 = arith.mulf %109, %113 : vector<128x128xf32>
    %115 = arith.truncf %114 : vector<128x128xf32> to vector<128x128xbf16>
    %116 = arith.truncf %97 : vector<128x32xf32> to vector<128x32xbf16>
    %cst_67 = arith.constant dense<0.000000e+00> : vector<128x32xf32>
    %117 = tpu.matmul %115, %116, %cst_67 {dimension_numbers = #tpu.dot_dimension_numbers<[1], [0], [0], [1], [0, 0, 1, 1], [], []>} : vector<128x128xbf16>, vector<128x32xbf16>, vector<128x32xf32> -> vector<128x32xf32>
    %118 = arith.truncf %117 : vector<128x32xf32> to vector<128x32xbf16>
    %c1_68 = arith.constant 1 : index
    %c0_69 = arith.constant 0 : index
    %c0_70 = arith.constant 0 : index
    %119 = vector.load %arg10[%c1_68, %c0_69, %c0_70] : memref<4x32x128xbf16, #tpu.memory_space<vmem>>, vector<1x32x128xbf16>
    %120 = vector.shape_cast %119 : vector<1x32x128xbf16> to vector<32x128xbf16>
    %cst_71 = arith.constant dense<0.000000e+00> : vector<128x128xf32>
    %121 = tpu.matmul %118, %120, %cst_71 {dimension_numbers = #tpu.dot_dimension_numbers<[1], [0], [0], [1], [0, 0, 1, 1], [], []>} : vector<128x32xbf16>, vector<32x128xbf16>, vector<128x128xf32> -> vector<128x128xf32>
    %122 = arith.addf %76, %121 : vector<128x128xf32>
    %c2 = arith.constant 2 : index
    %c0_72 = arith.constant 0 : index
    %c0_73 = arith.constant 0 : index
    %123 = vector.load %arg4[%c2, %c0_72, %c0_73] : memref<4x128x32xbf16, #tpu.memory_space<vmem>>, vector<1x128x32xbf16>
    %124 = vector.shape_cast %123 : vector<1x128x32xbf16> to vector<128x32xbf16>
    %cst_74 = arith.constant dense<0.000000e+00> : vector<128x32xf32>
    %125 = tpu.matmul %26, %124, %cst_74 {dimension_numbers = #tpu.dot_dimension_numbers<[1], [0], [0], [1], [0, 0, 1, 1], [], []>} : vector<128x128xbf16>, vector<128x32xbf16>, vector<128x32xf32> -> vector<128x32xf32>
    %c2_75 = arith.constant 2 : index
    %c0_76 = arith.constant 0 : index
    %c0_77 = arith.constant 0 : index
    %126 = vector.load %arg7[%c2_75, %c0_76, %c0_77] : memref<4x1x32xf32, #tpu.memory_space<vmem>>, vector<1x1x32xf32>
    %127 = vector.shape_cast %126 : vector<1x1x32xf32> to vector<1x32xf32>
    %128 = vector.broadcast %127 : vector<1x32xf32> to vector<128x32xf32>
    %129 = arith.addf %125, %128 : vector<128x32xf32>
    %c2_78 = arith.constant 2 : index
    %c0_79 = arith.constant 0 : index
    %c0_80 = arith.constant 0 : index
    %130 = vector.load %arg5[%c2_78, %c0_79, %c0_80] : memref<4x128x32xbf16, #tpu.memory_space<vmem>>, vector<1x128x32xbf16>
    %131 = vector.shape_cast %130 : vector<1x128x32xbf16> to vector<128x32xbf16>
    %cst_81 = arith.constant dense<0.000000e+00> : vector<128x32xf32>
    %132 = tpu.matmul %26, %131, %cst_81 {dimension_numbers = #tpu.dot_dimension_numbers<[1], [0], [0], [1], [0, 0, 1, 1], [], []>} : vector<128x128xbf16>, vector<128x32xbf16>, vector<128x32xf32> -> vector<128x32xf32>
    %c2_82 = arith.constant 2 : index
    %c0_83 = arith.constant 0 : index
    %c0_84 = arith.constant 0 : index
    %133 = vector.load %arg8[%c2_82, %c0_83, %c0_84] : memref<4x1x32xf32, #tpu.memory_space<vmem>>, vector<1x1x32xf32>
    %134 = vector.shape_cast %133 : vector<1x1x32xf32> to vector<1x32xf32>
    %135 = vector.broadcast %134 : vector<1x32xf32> to vector<128x32xf32>
    %136 = arith.addf %132, %135 : vector<128x32xf32>
    %c2_85 = arith.constant 2 : index
    %c0_86 = arith.constant 0 : index
    %c0_87 = arith.constant 0 : index
    %137 = vector.load %arg6[%c2_85, %c0_86, %c0_87] : memref<4x128x32xbf16, #tpu.memory_space<vmem>>, vector<1x128x32xbf16>
    %138 = vector.shape_cast %137 : vector<1x128x32xbf16> to vector<128x32xbf16>
    %cst_88 = arith.constant dense<0.000000e+00> : vector<128x32xf32>
    %139 = tpu.matmul %26, %138, %cst_88 {dimension_numbers = #tpu.dot_dimension_numbers<[1], [0], [0], [1], [0, 0, 1, 1], [], []>} : vector<128x128xbf16>, vector<128x32xbf16>, vector<128x32xf32> -> vector<128x32xf32>
    %c2_89 = arith.constant 2 : index
    %c0_90 = arith.constant 0 : index
    %c0_91 = arith.constant 0 : index
    %140 = vector.load %arg9[%c2_89, %c0_90, %c0_91] : memref<4x1x32xf32, #tpu.memory_space<vmem>>, vector<1x1x32xf32>
    %141 = vector.shape_cast %140 : vector<1x1x32xf32> to vector<1x32xf32>
    %142 = vector.broadcast %141 : vector<1x32xf32> to vector<128x32xf32>
    %143 = arith.addf %139, %142 : vector<128x32xf32>
    %144 = arith.truncf %129 : vector<128x32xf32> to vector<128x32xbf16>
    %145 = arith.truncf %136 : vector<128x32xf32> to vector<128x32xbf16>
    %cst_92 = arith.constant dense<0.000000e+00> : vector<128x128xf32>
    %146 = tpu.matmul %144, %145, %cst_92 {dimension_numbers = #tpu.dot_dimension_numbers<[1], [1], [0], [0], [0, 0, 1, 0], [], []>} : vector<128x32xbf16>, vector<128x32xbf16>, vector<128x128xf32> -> vector<128x128xf32>
    %cst_93 = arith.constant 0.176776692 : f32
    %147 = vector.broadcast %cst_93 : f32 to vector<128x128xf32>
    %148 = arith.mulf %146, %147 : vector<128x128xf32>
    %cst_94 = arith.constant -1.000000e+30 : f32
    %149 = vector.broadcast %cst_94 : f32 to vector<128x128xf32>
    %150 = arith.select %29, %148, %149 : vector<128x128xi1>, vector<128x128xf32>
    %cst_95 = arith.constant dense<0xFF800000> : vector<128xf32>
    %151 = vector.multi_reduction <maximumf>, %150, %cst_95 [1] : vector<128x128xf32> to vector<128xf32>
    %152 = vector.shape_cast %151 : vector<128xf32> to vector<128x1xf32>
    %153 = vector.broadcast %152 : vector<128x1xf32> to vector<128x128xf32>
    %154 = arith.subf %150, %153 : vector<128x128xf32>
    %155 = math.exp %154 : vector<128x128xf32>
    %cst_96 = arith.constant dense<0.000000e+00> : vector<128xf32>
    %156 = vector.multi_reduction <add>, %155, %cst_96 [1] : vector<128x128xf32> to vector<128xf32>
    %157 = vector.shape_cast %156 : vector<128xf32> to vector<128x1xf32>
    %158 = tpu.reciprocal %157 {approx = true} : vector<128x1xf32> -> vector<128x1xf32>
    %159 = vector.broadcast %158 : vector<128x1xf32> to vector<128x128xf32>
    %160 = arith.mulf %155, %159 : vector<128x128xf32>
    %161 = arith.truncf %160 : vector<128x128xf32> to vector<128x128xbf16>
    %162 = arith.truncf %143 : vector<128x32xf32> to vector<128x32xbf16>
    %cst_97 = arith.constant dense<0.000000e+00> : vector<128x32xf32>
    %163 = tpu.matmul %161, %162, %cst_97 {dimension_numbers = #tpu.dot_dimension_numbers<[1], [0], [0], [1], [0, 0, 1, 1], [], []>} : vector<128x128xbf16>, vector<128x32xbf16>, vector<128x32xf32> -> vector<128x32xf32>
    %164 = arith.truncf %163 : vector<128x32xf32> to vector<128x32xbf16>
    %c2_98 = arith.constant 2 : index
    %c0_99 = arith.constant 0 : index
    %c0_100 = arith.constant 0 : index
    %165 = vector.load %arg10[%c2_98, %c0_99, %c0_100] : memref<4x32x128xbf16, #tpu.memory_space<vmem>>, vector<1x32x128xbf16>
    %166 = vector.shape_cast %165 : vector<1x32x128xbf16> to vector<32x128xbf16>
    %cst_101 = arith.constant dense<0.000000e+00> : vector<128x128xf32>
    %167 = tpu.matmul %164, %166, %cst_101 {dimension_numbers = #tpu.dot_dimension_numbers<[1], [0], [0], [1], [0, 0, 1, 1], [], []>} : vector<128x32xbf16>, vector<32x128xbf16>, vector<128x128xf32> -> vector<128x128xf32>
    %168 = arith.addf %122, %167 : vector<128x128xf32>
    %c3 = arith.constant 3 : index
    %c0_102 = arith.constant 0 : index
    %c0_103 = arith.constant 0 : index
    %169 = vector.load %arg4[%c3, %c0_102, %c0_103] : memref<4x128x32xbf16, #tpu.memory_space<vmem>>, vector<1x128x32xbf16>
    %170 = vector.shape_cast %169 : vector<1x128x32xbf16> to vector<128x32xbf16>
    %cst_104 = arith.constant dense<0.000000e+00> : vector<128x32xf32>
    %171 = tpu.matmul %26, %170, %cst_104 {dimension_numbers = #tpu.dot_dimension_numbers<[1], [0], [0], [1], [0, 0, 1, 1], [], []>} : vector<128x128xbf16>, vector<128x32xbf16>, vector<128x32xf32> -> vector<128x32xf32>
    %c3_105 = arith.constant 3 : index
    %c0_106 = arith.constant 0 : index
    %c0_107 = arith.constant 0 : index
    %172 = vector.load %arg7[%c3_105, %c0_106, %c0_107] : memref<4x1x32xf32, #tpu.memory_space<vmem>>, vector<1x1x32xf32>
    %173 = vector.shape_cast %172 : vector<1x1x32xf32> to vector<1x32xf32>
    %174 = vector.broadcast %173 : vector<1x32xf32> to vector<128x32xf32>
    %175 = arith.addf %171, %174 : vector<128x32xf32>
    %c3_108 = arith.constant 3 : index
    %c0_109 = arith.constant 0 : index
    %c0_110 = arith.constant 0 : index
    %176 = vector.load %arg5[%c3_108, %c0_109, %c0_110] : memref<4x128x32xbf16, #tpu.memory_space<vmem>>, vector<1x128x32xbf16>
    %177 = vector.shape_cast %176 : vector<1x128x32xbf16> to vector<128x32xbf16>
    %cst_111 = arith.constant dense<0.000000e+00> : vector<128x32xf32>
    %178 = tpu.matmul %26, %177, %cst_111 {dimension_numbers = #tpu.dot_dimension_numbers<[1], [0], [0], [1], [0, 0, 1, 1], [], []>} : vector<128x128xbf16>, vector<128x32xbf16>, vector<128x32xf32> -> vector<128x32xf32>
    %c3_112 = arith.constant 3 : index
    %c0_113 = arith.constant 0 : index
    %c0_114 = arith.constant 0 : index
    %179 = vector.load %arg8[%c3_112, %c0_113, %c0_114] : memref<4x1x32xf32, #tpu.memory_space<vmem>>, vector<1x1x32xf32>
    %180 = vector.shape_cast %179 : vector<1x1x32xf32> to vector<1x32xf32>
    %181 = vector.broadcast %180 : vector<1x32xf32> to vector<128x32xf32>
    %182 = arith.addf %178, %181 : vector<128x32xf32>
    %c3_115 = arith.constant 3 : index
    %c0_116 = arith.constant 0 : index
    %c0_117 = arith.constant 0 : index
    %183 = vector.load %arg6[%c3_115, %c0_116, %c0_117] : memref<4x128x32xbf16, #tpu.memory_space<vmem>>, vector<1x128x32xbf16>
    %184 = vector.shape_cast %183 : vector<1x128x32xbf16> to vector<128x32xbf16>
    %cst_118 = arith.constant dense<0.000000e+00> : vector<128x32xf32>
    %185 = tpu.matmul %26, %184, %cst_118 {dimension_numbers = #tpu.dot_dimension_numbers<[1], [0], [0], [1], [0, 0, 1, 1], [], []>} : vector<128x128xbf16>, vector<128x32xbf16>, vector<128x32xf32> -> vector<128x32xf32>
    %c3_119 = arith.constant 3 : index
    %c0_120 = arith.constant 0 : index
    %c0_121 = arith.constant 0 : index
    %186 = vector.load %arg9[%c3_119, %c0_120, %c0_121] : memref<4x1x32xf32, #tpu.memory_space<vmem>>, vector<1x1x32xf32>
    %187 = vector.shape_cast %186 : vector<1x1x32xf32> to vector<1x32xf32>
    %188 = vector.broadcast %187 : vector<1x32xf32> to vector<128x32xf32>
    %189 = arith.addf %185, %188 : vector<128x32xf32>
    %190 = arith.truncf %175 : vector<128x32xf32> to vector<128x32xbf16>
    %191 = arith.truncf %182 : vector<128x32xf32> to vector<128x32xbf16>
    %cst_122 = arith.constant dense<0.000000e+00> : vector<128x128xf32>
    %192 = tpu.matmul %190, %191, %cst_122 {dimension_numbers = #tpu.dot_dimension_numbers<[1], [1], [0], [0], [0, 0, 1, 0], [], []>} : vector<128x32xbf16>, vector<128x32xbf16>, vector<128x128xf32> -> vector<128x128xf32>
    %cst_123 = arith.constant 0.176776692 : f32
    %193 = vector.broadcast %cst_123 : f32 to vector<128x128xf32>
    %194 = arith.mulf %192, %193 : vector<128x128xf32>
    %cst_124 = arith.constant -1.000000e+30 : f32
    %195 = vector.broadcast %cst_124 : f32 to vector<128x128xf32>
    %196 = arith.select %29, %194, %195 : vector<128x128xi1>, vector<128x128xf32>
    %cst_125 = arith.constant dense<0xFF800000> : vector<128xf32>
    %197 = vector.multi_reduction <maximumf>, %196, %cst_125 [1] : vector<128x128xf32> to vector<128xf32>
    %198 = vector.shape_cast %197 : vector<128xf32> to vector<128x1xf32>
    %199 = vector.broadcast %198 : vector<128x1xf32> to vector<128x128xf32>
    %200 = arith.subf %196, %199 : vector<128x128xf32>
    %201 = math.exp %200 : vector<128x128xf32>
    %cst_126 = arith.constant dense<0.000000e+00> : vector<128xf32>
    %202 = vector.multi_reduction <add>, %201, %cst_126 [1] : vector<128x128xf32> to vector<128xf32>
    %203 = vector.shape_cast %202 : vector<128xf32> to vector<128x1xf32>
    %204 = tpu.reciprocal %203 {approx = true} : vector<128x1xf32> -> vector<128x1xf32>
    %205 = vector.broadcast %204 : vector<128x1xf32> to vector<128x128xf32>
    %206 = arith.mulf %201, %205 : vector<128x128xf32>
    %207 = arith.truncf %206 : vector<128x128xf32> to vector<128x128xbf16>
    %208 = arith.truncf %189 : vector<128x32xf32> to vector<128x32xbf16>
    %cst_127 = arith.constant dense<0.000000e+00> : vector<128x32xf32>
    %209 = tpu.matmul %207, %208, %cst_127 {dimension_numbers = #tpu.dot_dimension_numbers<[1], [0], [0], [1], [0, 0, 1, 1], [], []>} : vector<128x128xbf16>, vector<128x32xbf16>, vector<128x32xf32> -> vector<128x32xf32>
    %210 = arith.truncf %209 : vector<128x32xf32> to vector<128x32xbf16>
    %c3_128 = arith.constant 3 : index
    %c0_129 = arith.constant 0 : index
    %c0_130 = arith.constant 0 : index
    %211 = vector.load %arg10[%c3_128, %c0_129, %c0_130] : memref<4x32x128xbf16, #tpu.memory_space<vmem>>, vector<1x32x128xbf16>
    %212 = vector.shape_cast %211 : vector<1x32x128xbf16> to vector<32x128xbf16>
    %cst_131 = arith.constant dense<0.000000e+00> : vector<128x128xf32>
    %213 = tpu.matmul %210, %212, %cst_131 {dimension_numbers = #tpu.dot_dimension_numbers<[1], [0], [0], [1], [0, 0, 1, 1], [], []>} : vector<128x32xbf16>, vector<32x128xbf16>, vector<128x128xf32> -> vector<128x128xf32>
    %214 = arith.addf %168, %213 : vector<128x128xf32>
    %215 = arith.addf %1, %214 : vector<128x128xf32>
    %c0_132 = arith.constant 0 : index
    %c0_133 = arith.constant 0 : index
    %216 = vector.load %arg11[%c0_132, %c0_133] : memref<1x128xf32, #tpu.memory_space<vmem>>, vector<1x128xf32>
    %217 = vector.broadcast %216 : vector<1x128xf32> to vector<128x128xf32>
    %218 = arith.addf %215, %217 : vector<128x128xf32>
    %c0_134 = arith.constant 0 : index
    %c0_135 = arith.constant 0 : index
    %219 = vector.load %arg12[%c0_134, %c0_135] : memref<1x128xf32, #tpu.memory_space<vmem>>, vector<1x128xf32>
    %c0_136 = arith.constant 0 : index
    %c0_137 = arith.constant 0 : index
    %220 = vector.load %arg13[%c0_136, %c0_137] : memref<1x128xf32, #tpu.memory_space<vmem>>, vector<1x128xf32>
    %cst_138 = arith.constant dense<0.000000e+00> : vector<128xf32>
    %221 = vector.multi_reduction <add>, %218, %cst_138 [1] : vector<128x128xf32> to vector<128xf32>
    %222 = vector.shape_cast %221 : vector<128xf32> to vector<128x1xf32>
    %cst_139 = arith.constant 1.280000e+02 : f32
    %223 = vector.broadcast %cst_139 : f32 to vector<128x1xf32>
    %224 = arith.divf %222, %223 : vector<128x1xf32>
    %225 = vector.broadcast %224 : vector<128x1xf32> to vector<128x128xf32>
    %226 = arith.subf %218, %225 : vector<128x128xf32>
    %227 = arith.mulf %226, %226 : vector<128x128xf32>
    %cst_140 = arith.constant dense<0.000000e+00> : vector<128xf32>
    %228 = vector.multi_reduction <add>, %227, %cst_140 [1] : vector<128x128xf32> to vector<128xf32>
    %229 = vector.shape_cast %228 : vector<128xf32> to vector<128x1xf32>
    %cst_141 = arith.constant 1.280000e+02 : f32
    %230 = vector.broadcast %cst_141 : f32 to vector<128x1xf32>
    %231 = arith.divf %229, %230 : vector<128x1xf32>
    %232 = vector.broadcast %224 : vector<128x1xf32> to vector<128x128xf32>
    %233 = arith.subf %218, %232 : vector<128x128xf32>
    %cst_142 = arith.constant 9.99999974E-6 : f32
    %234 = vector.broadcast %cst_142 : f32 to vector<128x1xf32>
    %235 = arith.addf %231, %234 : vector<128x1xf32>
    %236 = math.rsqrt %235 : vector<128x1xf32>
    %237 = vector.broadcast %236 : vector<128x1xf32> to vector<128x128xf32>
    %238 = arith.mulf %233, %237 : vector<128x128xf32>
    %239 = vector.broadcast %219 : vector<1x128xf32> to vector<128x128xf32>
    %240 = arith.mulf %238, %239 : vector<128x128xf32>
    %241 = vector.broadcast %220 : vector<1x128xf32> to vector<128x128xf32>
    %242 = arith.addf %240, %241 : vector<128x128xf32>
    %243 = arith.truncf %242 : vector<128x128xf32> to vector<128x128xbf16>
    %c0_143 = arith.constant 0 : index
    %c0_144 = arith.constant 0 : index
    %244 = vector.load %arg14[%c0_143, %c0_144] : memref<128x512xbf16, #tpu.memory_space<vmem>>, vector<128x512xbf16>
    %cst_145 = arith.constant dense<0.000000e+00> : vector<128x512xf32>
    %245 = tpu.matmul %243, %244, %cst_145 {dimension_numbers = #tpu.dot_dimension_numbers<[1], [0], [0], [1], [0, 0, 1, 1], [], []>} : vector<128x128xbf16>, vector<128x512xbf16>, vector<128x512xf32> -> vector<128x512xf32>
    %c0_146 = arith.constant 0 : index
    %c0_147 = arith.constant 0 : index
    %246 = vector.load %arg15[%c0_146, %c0_147] : memref<1x512xf32, #tpu.memory_space<vmem>>, vector<1x512xf32>
    %247 = vector.broadcast %246 : vector<1x512xf32> to vector<128x512xf32>
    %248 = arith.addf %245, %247 : vector<128x512xf32>
    %249 = arith.mulf %248, %248 : vector<128x512xf32>
    %250 = arith.mulf %248, %249 : vector<128x512xf32>
    %cst_148 = arith.constant 4.471500e-02 : f32
    %251 = vector.broadcast %cst_148 : f32 to vector<128x512xf32>
    %252 = arith.mulf %251, %250 : vector<128x512xf32>
    %253 = arith.addf %248, %252 : vector<128x512xf32>
    %cst_149 = arith.constant 0.797884583 : f32
    %254 = vector.broadcast %cst_149 : f32 to vector<128x512xf32>
    %255 = arith.mulf %254, %253 : vector<128x512xf32>
    %256 = math.tanh %255 : vector<128x512xf32>
    %cst_150 = arith.constant 1.000000e+00 : f32
    %257 = vector.broadcast %cst_150 : f32 to vector<128x512xf32>
    %258 = arith.addf %257, %256 : vector<128x512xf32>
    %cst_151 = arith.constant 5.000000e-01 : f32
    %259 = vector.broadcast %cst_151 : f32 to vector<128x512xf32>
    %260 = arith.mulf %259, %258 : vector<128x512xf32>
    %261 = arith.mulf %248, %260 : vector<128x512xf32>
    %262 = arith.truncf %261 : vector<128x512xf32> to vector<128x512xbf16>
    %c0_152 = arith.constant 0 : index
    %c0_153 = arith.constant 0 : index
    %263 = vector.load %arg16[%c0_152, %c0_153] : memref<512x128xbf16, #tpu.memory_space<vmem>>, vector<512x128xbf16>
    %cst_154 = arith.constant dense<0.000000e+00> : vector<128x128xf32>
    %264 = tpu.matmul %262, %263, %cst_154 {dimension_numbers = #tpu.dot_dimension_numbers<[1], [0], [0], [1], [0, 0, 1, 1], [], []>} : vector<128x512xbf16>, vector<512x128xbf16>, vector<128x128xf32> -> vector<128x128xf32>
    %c0_155 = arith.constant 0 : index
    %c0_156 = arith.constant 0 : index
    %265 = vector.load %arg17[%c0_155, %c0_156] : memref<1x128xf32, #tpu.memory_space<vmem>>, vector<1x128xf32>
    %266 = vector.broadcast %265 : vector<1x128xf32> to vector<128x128xf32>
    %267 = arith.addf %264, %266 : vector<128x128xf32>
    %268 = arith.addf %218, %267 : vector<128x128xf32>
    %c0_157 = arith.constant 0 : index
    %c0_158 = arith.constant 0 : index
    %c0_159 = arith.constant 0 : index
    %269 = vector.load %arg18[%c0_157, %c0_158, %c0_159] : memref<1x128x128xf32, #tpu.memory_space<vmem>>, vector<1x128x128xf32>
    %270 = vector.shape_cast %269 : vector<1x128x128xf32> to vector<128x128xf32>
    %271 = vector.shape_cast %268 : vector<128x128xf32> to vector<1x128x128xf32>
    tpu.vector_store %arg18[%c0_157, %c0_158, %c0_159], %271 {strides = array<i32>} : memref<1x128x128xf32, #tpu.memory_space<vmem>>, vector<1x128x128xf32>,
    return
  }
  func.func @transform_0(%arg0: i32) -> (i32, i32, i32) {
    %c0_i32 = arith.constant 0 : i32
    %c0_i32_0 = arith.constant 0 : i32
    %c0_i32_1 = arith.constant 0 : i32
    return %arg0, %c0_i32, %c0_i32_0 : i32, i32, i32
  }
  func.func @transform_1(%arg0: i32) -> (i32, i32) {
    %c0_i32 = arith.constant 0 : i32
    %c0_i32_0 = arith.constant 0 : i32
    %c0_i32_1 = arith.constant 0 : i32
    return %c0_i32, %c0_i32_0 : i32, i32
  }
  func.func @transform_2(%arg0: i32) -> (i32, i32) {
    %c0_i32 = arith.constant 0 : i32
    %c0_i32_0 = arith.constant 0 : i32
    %c0_i32_1 = arith.constant 0 : i32
    return %c0_i32, %c0_i32_0 : i32, i32
  }
  func.func @transform_3(%arg0: i32) -> (i32, i32, i32) {
    %c0_i32 = arith.constant 0 : i32
    %c0_i32_0 = arith.constant 0 : i32
    %c0_i32_1 = arith.constant 0 : i32
    %c0_i32_2 = arith.constant 0 : i32
    return %c0_i32, %c0_i32_0, %c0_i32_1 : i32, i32, i32
  }
  func.func @transform_4(%arg0: i32) -> (i32, i32, i32) {
    %c0_i32 = arith.constant 0 : i32
    %c0_i32_0 = arith.constant 0 : i32
    %c0_i32_1 = arith.constant 0 : i32
    %c0_i32_2 = arith.constant 0 : i32
    return %c0_i32, %c0_i32_0, %c0_i32_1 : i32, i32, i32
  }
  func.func @transform_5(%arg0: i32) -> (i32, i32, i32) {
    %c0_i32 = arith.constant 0 : i32
    %c0_i32_0 = arith.constant 0 : i32
    %c0_i32_1 = arith.constant 0 : i32
    %c0_i32_2 = arith.constant 0 : i32
    return %c0_i32, %c0_i32_0, %c0_i32_1 : i32, i32, i32
  }
  func.func @transform_6(%arg0: i32) -> (i32, i32, i32) {
    %c0_i32 = arith.constant 0 : i32
    %c0_i32_0 = arith.constant 0 : i32
    %c0_i32_1 = arith.constant 0 : i32
    %c0_i32_2 = arith.constant 0 : i32
    return %c0_i32, %c0_i32_0, %c0_i32_1 : i32, i32, i32
  }
  func.func @transform_7(%arg0: i32) -> (i32, i32, i32) {
    %c0_i32 = arith.constant 0 : i32
    %c0_i32_0 = arith.constant 0 : i32
    %c0_i32_1 = arith.constant 0 : i32
    %c0_i32_2 = arith.constant 0 : i32
    return %c0_i32, %c0_i32_0, %c0_i32_1 : i32, i32, i32
  }
  func.func @transform_8(%arg0: i32) -> (i32, i32, i32) {
    %c0_i32 = arith.constant 0 : i32
    %c0_i32_0 = arith.constant 0 : i32
    %c0_i32_1 = arith.constant 0 : i32
    %c0_i32_2 = arith.constant 0 : i32
    return %c0_i32, %c0_i32_0, %c0_i32_1 : i32, i32, i32
  }
  func.func @transform_9(%arg0: i32) -> (i32, i32, i32) {
    %c0_i32 = arith.constant 0 : i32
    %c0_i32_0 = arith.constant 0 : i32
    %c0_i32_1 = arith.constant 0 : i32
    %c0_i32_2 = arith.constant 0 : i32
    return %c0_i32, %c0_i32_0, %c0_i32_1 : i32, i32, i32
  }
  func.func @transform_10(%arg0: i32) -> (i32, i32) {
    %c0_i32 = arith.constant 0 : i32
    %c0_i32_0 = arith.constant 0 : i32
    %c0_i32_1 = arith.constant 0 : i32
    return %c0_i32, %c0_i32_0 : i32, i32
  }
  func.func @transform_11(%arg0: i32) -> (i32, i32) {
    %c0_i32 = arith.constant 0 : i32
    %c0_i32_0 = arith.constant 0 : i32
    %c0_i32_1 = arith.constant 0 : i32
    return %c0_i32, %c0_i32_0 : i32, i32
  }
  func.func @transform_12(%arg0: i32) -> (i32, i32) {
    %c0_i32 = arith.constant 0 : i32
    %c0_i32_0 = arith.constant 0 : i32
    %c0_i32_1 = arith.constant 0 : i32
    return %c0_i32, %c0_i32_0 : i32, i32
  }
  func.func @transform_13(%arg0: i32) -> (i32, i32) {
    %c0_i32 = arith.constant 0 : i32
    %c0_i32_0 = arith.constant 0 : i32
    %c0_i32_1 = arith.constant 0 : i32
    return %c0_i32, %c0_i32_0 : i32, i32
  }
  func.func @transform_14(%arg0: i32) -> (i32, i32) {
    %c0_i32 = arith.constant 0 : i32
    %c0_i32_0 = arith.constant 0 : i32
    %c0_i32_1 = arith.constant 0 : i32
    return %c0_i32, %c0_i32_0 : i32, i32
  }
  func.func @transform_15(%arg0: i32) -> (i32, i32) {
    %c0_i32 = arith.constant 0 : i32
    %c0_i32_0 = arith.constant 0 : i32
    %c0_i32_1 = arith.constant 0 : i32
    return %c0_i32, %c0_i32_0 : i32, i32
  }
  func.func @transform_16(%arg0: i32) -> (i32, i32) {
    %c0_i32 = arith.constant 0 : i32
    %c0_i32_0 = arith.constant 0 : i32
    %c0_i32_1 = arith.constant 0 : i32
    return %c0_i32, %c0_i32_0 : i32, i32
  }
  func.func @transform_17(%arg0: i32) -> (i32, i32, i32) {
    %c0_i32 = arith.constant 0 : i32
    %c0_i32_0 = arith.constant 0 : i32
    %c0_i32_1 = arith.constant 0 : i32
    return %arg0, %c0_i32, %c0_i32_0 : i32, i32, i32
  }
}

</mosaic_0001>

<llo_original>
// kernel: tpu_custom_call.1
$region0: #{tpu_custom_call.1}
  #allocation0 [shape = 'u32[]', space=smem, size = 0x4, offset = 0x4, fixed_abs, tag = 'smem constant byte address 0x4 - core index']
  #allocation1 [shape = 'u32[144,128]{1,0:T(1,128)}', space=vmem, size = 0x12000, scoped, tag = 'internal scratch']
  %s0 = inlined_call_operand.vmem [shape: f32[2,128,128], index: 0, kind: input, shape index: {}]
  %s1 = inlined_call_operand.hbm [shape: f32[1,128], index: 1, kind: input, shape index: {}]
  %s2 = inlined_call_operand.hbm [shape: f32[1,128], index: 2, kind: input, shape index: {}]
  %s3 = inlined_call_operand.vmem [shape: bf16[4,128,32], index: 3, kind: input, shape index: {}]
  %s4 = inlined_call_operand.vmem [shape: bf16[4,128,32], index: 4, kind: input, shape index: {}]
  %s5 = inlined_call_operand.vmem [shape: bf16[4,128,32], index: 5, kind: input, shape index: {}]
  %s6 = inlined_call_operand.vmem [shape: f32[4,1,32], index: 6, kind: input, shape index: {}]
  %s7 = inlined_call_operand.vmem [shape: f32[4,1,32], index: 7, kind: input, shape index: {}]
  %s8 = inlined_call_operand.vmem [shape: f32[4,1,32], index: 8, kind: input, shape index: {}]
  %s9 = inlined_call_operand.vmem [shape: bf16[4,32,128], index: 9, kind: input, shape index: {}]
  %s10 = inlined_call_operand.vmem [shape: f32[1,128], index: 10, kind: input, shape index: {}]
  %s11 = inlined_call_operand.vmem [shape: f32[1,128], index: 11, kind: input, shape index: {}]
  %s12 = inlined_call_operand.vmem [shape: f32[1,128], index: 12, kind: input, shape index: {}]
  %s13 = inlined_call_operand.vmem [shape: bf16[128,512], index: 13, kind: input, shape index: {}]
  %s14 = inlined_call_operand.vmem [shape: f32[1,512], index: 14, kind: input, shape index: {}]
  %s15 = inlined_call_operand.vmem [shape: bf16[512,128], index: 15, kind: input, shape index: {}]
  %s16 = inlined_call_operand.vmem [shape: f32[1,128], index: 16, kind: input, shape index: {}]
  %s17 = inlined_call_operand.hbm [shape: f32[2,128,128], index: 17, kind: output, shape index: {}]
  %s18 = sld [smem:[#allocation0]]
  $region109: #{tpu_custom_call.1} parent=0
    _
  %s20 = ssub.s32 1, %s18
  %s21 = scalar_select 0, %s20, %s18
  $region1: #{tpu_custom_call.1} parent=0
    #allocation2 [shape = 'u8[512]{0}', space=vmem, size = 0x400, scoped, tag = 'input window, operand 1, single buffered']
    #allocation3 [shape = 's32[2]{0}', space=sflag, size = 0x8, scoped, tag = 'scoped memory for tpu_custom_call.1']
    #allocation4 [shape = 's32[2]{0}', space=sflag, size = 0x8, scoped, tag = 'scoped memory for tpu_custom_call.1']
    #allocation5 [shape = 'u8[512]{0}', space=vmem, size = 0x400, scoped, tag = 'input window, operand 2, single buffered']
    #allocation6 [shape = 's32[1]{0}', space=sflag, size = 0x4, scoped, tag = 'scoped memory for tpu_custom_call.1']
    #allocation7 [shape = 'u8[131072]{0}', space=vmem, size = 0x20000, scoped, tag = 'output window, operand 0']
    %22 = vsyncpa [#allocation3], 0
    %23 = vsyncpa [#allocation6], 0
    %24 = vsyncpa [#allocation4], 0
    %s25 = scalar_lea.sflag [#allocation4], 1
    %26 = vsyncpa %s25, 0
    loop: start=0, step=1, limit=4
    $region2: #{tpu_custom_call.1} parent=1 // loop_pre_header
      _
    $region3: #{tpu_custom_call.1} parent=1 // loop_header
      %s28 = sphi 0, %s32
      %p29 = scmp.ge.s32.totalorder %s28, 4
      %s38 = sphi 0, %s40
      %s41 = sphi 0, %s38
      %s42 = sphi 0, %s41
      %s58 = sphi 0, %s42
      %s62 = sphi 0, %s62
      %s64 = sphi 0, %s62
      %s65 = sphi 0, %s64
      %s79 = sphi 0, %s65
      %s83 = sphi 0, %s83
      %s85 = sphi 0, %s83
      %s86 = sphi 0, %s85
      %s100 = sphi 0, %s86
      %s104 = sphi 0, %s104
      %s106 = sphi 0, %s104
      %s107 = sphi 0, %s106
      %s121 = sphi 0, %s107
      %s125 = sphi 0, %s125
      %s127 = sphi 0, %s125
      %s128 = sphi 0, %s127
      %s142 = sphi 0, %s128
      %s146 = sphi 0, %s146
      %s148 = sphi 0, %s146
      %s149 = sphi 0, %s148
      %s163 = sphi 0, %s149
      %s167 = sphi 0, %s167
      %s169 = sphi 0, %s167
      %s170 = sphi 0, %s169
      %s184 = sphi 0, %s170
      %s188 = sphi 0, %s188
      %s190 = sphi 0, %s188
      %s191 = sphi 0, %s190
      %s205 = sphi 0, %s191
      %s209 = sphi 0, %s209
      %s211 = sphi 0, %s209
      %s212 = sphi 0, %s211
      %s226 = sphi 0, %s212
      %s230 = sphi 0, %s230
      %s232 = sphi 0, %s230
      %s233 = sphi 0, %s232
      %s247 = sphi 0, %s233
      %s251 = sphi 0, %s251
      %s253 = sphi 0, %s251
      %s254 = sphi 0, %s253
      %s268 = sphi 0, %s254
      %s272 = sphi 0, %s272
      %s274 = sphi 0, %s272
      %s275 = sphi 0, %s274
      %s289 = sphi 0, %s275
      %s293 = sphi 0, %s293
      %s295 = sphi 0, %s293
      %s296 = sphi 0, %s295
      %s310 = sphi 0, %s296
      %s314 = sphi 0, %s314
      %s316 = sphi 0, %s314
      %s317 = sphi 0, %s316
      %s331 = sphi 0, %s317
      %s335 = sphi 0, %s335
      %s337 = sphi 0, %s335
      %s338 = sphi 0, %s337
      %s352 = sphi 0, %s338
      %s356 = sphi 0, %s356
      %s358 = sphi 0, %s356
      %s359 = sphi 0, %s358
      %s373 = sphi 0, %s359
      %s377 = sphi 0, %s377
      %s379 = sphi 0, %s377
      %s380 = sphi 0, %s379
      %s394 = sphi 0, %s380
      %s400 = sphi 0, %s402
      %s403 = sphi 0, %s400
      %s404 = sphi 0, %s403
      %s420 = sphi 0, %s404
    $region4: #{tpu_custom_call.1} parent=1 // loop_header_branch
      %31 = sbr.rel (%p29) target = $region8
    $region5: #{tpu_custom_call.1} parent=1 // loop_body
      %s33 = ssub.s32 %s28, 1
      %s34 = ssub.s32 %s28, 2
      %s35 = sadd.s32 %s28, 1
      %s36 = ssub.s32 %s28, %s35
      %p37 = scmp.eq.s32.totalorder %s36, 0
      %s39 = sadd.s32 %s38, 1
      %s40 = scalar_select %p37, %s38, %s39
      %p43 = pneg %p37
      %p44 = scmp.eq.s32.totalorder %s28, 1
      %p45 = por %p43, %p44
      %p46 = scmp.ne.s32.totalorder %s38, %s41
      %p47 = scmp.eq.s32.totalorder %s28, 0
      %p48 = por %p46, %p47
      %p49 = scmp.ne.s32.totalorder %s38, %s41
      %p50 = scmp.eq.s32.totalorder %s33, 1
      %p51 = por %p49, %p50
      %p52 = scmp.ne.s32.totalorder %s41, %s42
      %p53 = scmp.eq.s32.totalorder %s33, 0
      %p54 = por %p52, %p53
      %p55 = scmp.ne.s32.totalorder %s41, %s42
      %p56 = scmp.eq.s32.totalorder %s34, 1
      %p57 = por %p55, %p56
      %p59 = scmp.ne.s32.totalorder %s42, %s58
      %p60 = scmp.eq.s32.totalorder %s34, 0
      %p61 = por %p59, %p60
      %s63 = sadd.s32 %s62, 1
      %p66 = scmp.eq.s32.totalorder %s28, 1
      %p67 = scmp.ne.s32.totalorder %s62, %s64
      %p68 = scmp.eq.s32.totalorder %s28, 0
      %p69 = por %p67, %p68
      %p70 = scmp.ne.s32.totalorder %s62, %s64
      %p71 = scmp.eq.s32.totalorder %s33, 1
      %p72 = por %p70, %p71
      %p73 = scmp.ne.s32.totalorder %s64, %s65
      %p74 = scmp.eq.s32.totalorder %s33, 0
      %p75 = por %p73, %p74
      %p76 = scmp.ne.s32.totalorder %s64, %s65
      %p77 = scmp.eq.s32.totalorder %s34, 1
      %p78 = por %p76, %p77
      %p80 = scmp.ne.s32.totalorder %s65, %s79
      %p81 = scmp.eq.s32.totalorder %s34, 0
      %p82 = por %p80, %p81
      %s84 = sadd.s32 %s83, 1
      %p87 = scmp.eq.s32.totalorder %s28, 1
      %p88 = scmp.ne.s32.totalorder %s83, %s85
      %p89 = scmp.eq.s32.totalorder %s28, 0
      %p90 = por %p88, %p89
      %p91 = scmp.ne.s32.totalorder %s83, %s85
      %p92 = scmp.eq.s32.totalorder %s33, 1
      %p93 = por %p91, %p92
      %p94 = scmp.ne.s32.totalorder %s85, %s86
      %p95 = scmp.eq.s32.totalorder %s33, 0
      %p96 = por %p94, %p95
      %p97 = scmp.ne.s32.totalorder %s85, %s86
      %p98 = scmp.eq.s32.totalorder %s34, 1
      %p99 = por %p97, %p98
      %p101 = scmp.ne.s32.totalorder %s86, %s100
      %p102 = scmp.eq.s32.totalorder %s34, 0
      %p103 = por %p101, %p102
      %s105 = sadd.s32 %s104, 1
      %p108 = scmp.eq.s32.totalorder %s28, 1
      %p109 = scmp.ne.s32.totalorder %s104, %s106
      %p110 = scmp.eq.s32.totalorder %s28, 0
      %p111 = por %p109, %p110
      %p112 = scmp.ne.s32.totalorder %s104, %s106
      %p113 = scmp.eq.s32.totalorder %s33, 1
      %p114 = por %p112, %p113
      %p115 = scmp.ne.s32.totalorder %s106, %s107
      %p116 = scmp.eq.s32.totalorder %s33, 0
      %p117 = por %p115, %p116
      %p118 = scmp.ne.s32.totalorder %s106, %s107
      %p119 = scmp.eq.s32.totalorder %s34, 1
      %p120 = por %p118, %p119
      %p122 = scmp.ne.s32.totalorder %s107, %s121
      %p123 = scmp.eq.s32.totalorder %s34, 0
      %p124 = por %p122, %p123
      %s126 = sadd.s32 %s125, 1
      %p129 = scmp.eq.s32.totalorder %s28, 1
      %p130 = scmp.ne.s32.totalorder %s125, %s127
      %p131 = scmp.eq.s32.totalorder %s28, 0
      %p132 = por %p130, %p131
      %p133 = scmp.ne.s32.totalorder %s125, %s127
      %p134 = scmp.eq.s32.totalorder %s33, 1
      %p135 = por %p133, %p134
      %p136 = scmp.ne.s32.totalorder %s127, %s128
      %p137 = scmp.eq.s32.totalorder %s33, 0
      %p138 = por %p136, %p137
      %p139 = scmp.ne.s32.totalorder %s127, %s128
      %p140 = scmp.eq.s32.totalorder %s34, 1
      %p141 = por %p139, %p140
      %p143 = scmp.ne.s32.totalorder %s128, %s142
      %p144 = scmp.eq.s32.totalorder %s34, 0
      %p145 = por %p143, %p144
      %s147 = sadd.s32 %s146, 1
      %p150 = scmp.eq.s32.totalorder %s28, 1
      %p151 = scmp.ne.s32.totalorder %s146, %s148
      %p152 = scmp.eq.s32.totalorder %s28, 0
      %p153 = por %p151, %p152
      %p154 = scmp.ne.s32.totalorder %s146, %s148
      %p155 = scmp.eq.s32.totalorder %s33, 1
      %p156 = por %p154, %p155
      %p157 = scmp.ne.s32.totalorder %s148, %s149
      %p158 = scmp.eq.s32.totalorder %s33, 0
      %p159 = por %p157, %p158
      %p160 = scmp.ne.s32.totalorder %s148, %s149
      %p161 = scmp.eq.s32.totalorder %s34, 1
      %p162 = por %p160, %p161
      %p164 = scmp.ne.s32.totalorder %s149, %s163
      %p165 = scmp.eq.s32.totalorder %s34, 0
      %p166 = por %p164, %p165
      %s168 = sadd.s32 %s167, 1
      %p171 = scmp.eq.s32.totalorder %s28, 1
      %p172 = scmp.ne.s32.totalorder %s167, %s169
      %p173 = scmp.eq.s32.totalorder %s28, 0
      %p174 = por %p172, %p173
      %p175 = scmp.ne.s32.totalorder %s167, %s169
      %p176 = scmp.eq.s32.totalorder %s33, 1
      %p177 = por %p175, %p176
      %p178 = scmp.ne.s32.totalorder %s169, %s170
      %p179 = scmp.eq.s32.totalorder %s33, 0
      %p180 = por %p178, %p179
      %p181 = scmp.ne.s32.totalorder %s169, %s170
      %p182 = scmp.eq.s32.totalorder %s34, 1
      %p183 = por %p181, %p182
      %p185 = scmp.ne.s32.totalorder %s170, %s184
      %p186 = scmp.eq.s32.totalorder %s34, 0
      %p187 = por %p185, %p186
      %s189 = sadd.s32 %s188, 1
      %p192 = scmp.eq.s32.totalorder %s28, 1
      %p193 = scmp.ne.s32.totalorder %s188, %s190
      %p194 = scmp.eq.s32.totalorder %s28, 0
      %p195 = por %p193, %p194
      %p196 = scmp.ne.s32.totalorder %s188, %s190
      %p197 = scmp.eq.s32.totalorder %s33, 1
      %p198 = por %p196, %p197
      %p199 = scmp.ne.s32.totalorder %s190, %s191
      %p200 = scmp.eq.s32.totalorder %s33, 0
      %p201 = por %p199, %p200
      %p202 = scmp.ne.s32.totalorder %s190, %s191
      %p203 = scmp.eq.s32.totalorder %s34, 1
      %p204 = por %p202, %p203
      %p206 = scmp.ne.s32.totalorder %s191, %s205
      %p207 = scmp.eq.s32.totalorder %s34, 0
      %p208 = por %p206, %p207
      %s210 = sadd.s32 %s209, 1
      %p213 = scmp.eq.s32.totalorder %s28, 1
      %p214 = scmp.ne.s32.totalorder %s209, %s211
      %p215 = scmp.eq.s32.totalorder %s28, 0
      %p216 = por %p214, %p215
      %p217 = scmp.ne.s32.totalorder %s209, %s211
      %p218 = scmp.eq.s32.totalorder %s33, 1
      %p219 = por %p217, %p218
      %p220 = scmp.ne.s32.totalorder %s211, %s212
      %p221 = scmp.eq.s32.totalorder %s33, 0
      %p222 = por %p220, %p221
      %p223 = scmp.ne.s32.totalorder %s211, %s212
      %p224 = scmp.eq.s32.totalorder %s34, 1
      %p225 = por %p223, %p224
      %p227 = scmp.ne.s32.totalorder %s212, %s226
      %p228 = scmp.eq.s32.totalorder %s34, 0
      %p229 = por %p227, %p228
      %s231 = sadd.s32 %s230, 1
      %p234 = scmp.eq.s32.totalorder %s28, 1
      %p235 = scmp.ne.s32.totalorder %s230, %s232
      %p236 = scmp.eq.s32.totalorder %s28, 0
      %p237 = por %p235, %p236
      %p238 = scmp.ne.s32.totalorder %s230, %s232
      %p239 = scmp.eq.s32.totalorder %s33, 1
      %p240 = por %p238, %p239
      %p241 = scmp.ne.s32.totalorder %s232, %s233
      %p242 = scmp.eq.s32.totalorder %s33, 0
      %p243 = por %p241, %p242
      %p244 = scmp.ne.s32.totalorder %s232, %s233
      %p245 = scmp.eq.s32.totalorder %s34, 1
      %p246 = por %p244, %p245
      %p248 = scmp.ne.s32.totalorder %s233, %s247
      %p249 = scmp.eq.s32.totalorder %s34, 0
      %p250 = por %p248, %p249
      %s252 = sadd.s32 %s251, 1
      %p255 = scmp.eq.s32.totalorder %s28, 1
      %p256 = scmp.ne.s32.totalorder %s251, %s253
      %p257 = scmp.eq.s32.totalorder %s28, 0
      %p258 = por %p256, %p257
      %p259 = scmp.ne.s32.totalorder %s251, %s253
      %p260 = scmp.eq.s32.totalorder %s33, 1
      %p261 = por %p259, %p260
      %p262 = scmp.ne.s32.totalorder %s253, %s254
      %p263 = scmp.eq.s32.totalorder %s33, 0
      %p264 = por %p262, %p263
      %p265 = scmp.ne.s32.totalorder %s253, %s254
      %p266 = scmp.eq.s32.totalorder %s34, 1
      %p267 = por %p265, %p266
      %p269 = scmp.ne.s32.totalorder %s254, %s268
      %p270 = scmp.eq.s32.totalorder %s34, 0
      %p271 = por %p269, %p270
      %s273 = sadd.s32 %s272, 1
      %p276 = scmp.eq.s32.totalorder %s28, 1
      %p277 = scmp.ne.s32.totalorder %s272, %s274
      %p278 = scmp.eq.s32.totalorder %s28, 0
      %p279 = por %p277, %p278
      %p280 = scmp.ne.s32.totalorder %s272, %s274
      %p281 = scmp.eq.s32.totalorder %s33, 1
      %p282 = por %p280, %p281
      %p283 = scmp.ne.s32.totalorder %s274, %s275
      %p284 = scmp.eq.s32.totalorder %s33, 0
      %p285 = por %p283, %p284
      %p286 = scmp.ne.s32.totalorder %s274, %s275
      %p287 = scmp.eq.s32.totalorder %s34, 1
      %p288 = por %p286, %p287
      %p290 = scmp.ne.s32.totalorder %s275, %s289
      %p291 = scmp.eq.s32.totalorder %s34, 0
      %p292 = por %p290, %p291
      %s294 = sadd.s32 %s293, 1
      %p297 = scmp.eq.s32.totalorder %s28, 1
      %p298 = scmp.ne.s32.totalorder %s293, %s295
      %p299 = scmp.eq.s32.totalorder %s28, 0
      %p300 = por %p298, %p299
      %p301 = scmp.ne.s32.totalorder %s293, %s295
      %p302 = scmp.eq.s32.totalorder %s33, 1
      %p303 = por %p301, %p302
      %p304 = scmp.ne.s32.totalorder %s295, %s296
      %p305 = scmp.eq.s32.totalorder %s33, 0
      %p306 = por %p304, %p305
      %p307 = scmp.ne.s32.totalorder %s295, %s296
      %p308 = scmp.eq.s32.totalorder %s34, 1
      %p309 = por %p307, %p308
      %p311 = scmp.ne.s32.totalorder %s296, %s310
      %p312 = scmp.eq.s32.totalorder %s34, 0
      %p313 = por %p311, %p312
      %s315 = sadd.s32 %s314, 1
      %p318 = scmp.eq.s32.totalorder %s28, 1
      %p319 = scmp.ne.s32.totalorder %s314, %s316
      %p320 = scmp.eq.s32.totalorder %s28, 0
      %p321 = por %p319, %p320
      %p322 = scmp.ne.s32.totalorder %s314, %s316
      %p323 = scmp.eq.s32.totalorder %s33, 1
      %p324 = por %p322, %p323
      %p325 = scmp.ne.s32.totalorder %s316, %s317
      %p326 = scmp.eq.s32.totalorder %s33, 0
      %p327 = por %p325, %p326
      %p328 = scmp.ne.s32.totalorder %s316, %s317
      %p329 = scmp.eq.s32.totalorder %s34, 1
      %p330 = por %p328, %p329
      %p332 = scmp.ne.s32.totalorder %s317, %s331
      %p333 = scmp.eq.s32.totalorder %s34, 0
      %p334 = por %p332, %p333
      %s336 = sadd.s32 %s335, 1
      %p339 = scmp.eq.s32.totalorder %s28, 1
      %p340 = scmp.ne.s32.totalorder %s335, %s337
      %p341 = scmp.eq.s32.totalorder %s28, 0
      %p342 = por %p340, %p341
      %p343 = scmp.ne.s32.totalorder %s335, %s337
      %p344 = scmp.eq.s32.totalorder %s33, 1
      %p345 = por %p343, %p344
      %p346 = scmp.ne.s32.totalorder %s337, %s338
      %p347 = scmp.eq.s32.totalorder %s33, 0
      %p348 = por %p346, %p347
      %p349 = scmp.ne.s32.totalorder %s337, %s338
      %p350 = scmp.eq.s32.totalorder %s34, 1
      %p351 = por %p349, %p350
      %p353 = scmp.ne.s32.totalorder %s338, %s352
      %p354 = scmp.eq.s32.totalorder %s34, 0
      %p355 = por %p353, %p354
      %s357 = sadd.s32 %s356, 1
      %p360 = scmp.eq.s32.totalorder %s28, 1
      %p361 = scmp.ne.s32.totalorder %s356, %s358
      %p362 = scmp.eq.s32.totalorder %s28, 0
      %p363 = por %p361, %p362
      %p364 = scmp.ne.s32.totalorder %s356, %s358
      %p365 = scmp.eq.s32.totalorder %s33, 1
      %p366 = por %p364, %p365
      %p367 = scmp.ne.s32.totalorder %s358, %s359
      %p368 = scmp.eq.s32.totalorder %s33, 0
      %p369 = por %p367, %p368
      %p370 = scmp.ne.s32.totalorder %s358, %s359
      %p371 = scmp.eq.s32.totalorder %s34, 1
      %p372 = por %p370, %p371
      %p374 = scmp.ne.s32.totalorder %s359, %s373
      %p375 = scmp.eq.s32.totalorder %s34, 0
      %p376 = por %p374, %p375
      %s378 = sadd.s32 %s377, 1
      %p381 = scmp.eq.s32.totalorder %s28, 1
      %p382 = scmp.ne.s32.totalorder %s377, %s379
      %p383 = scmp.eq.s32.totalorder %s28, 0
      %p384 = por %p382, %p383
      %p385 = scmp.ne.s32.totalorder %s377, %s379
      %p386 = scmp.eq.s32.totalorder %s33, 1
      %p387 = por %p385, %p386
      %p388 = scmp.ne.s32.totalorder %s379, %s380
      %p389 = scmp.eq.s32.totalorder %s33, 0
      %p390 = por %p388, %p389
      %p391 = scmp.ne.s32.totalorder %s379, %s380
      %p392 = scmp.eq.s32.totalorder %s34, 1
      %p393 = por %p391, %p392
      %p395 = scmp.ne.s32.totalorder %s380, %s394
      %p396 = scmp.eq.s32.totalorder %s34, 0
      %p397 = por %p395, %p396
      %s398 = ssub.s32 %s28, %s35
      %p399 = scmp.eq.s32.totalorder %s398, 0
      %s401 = sadd.s32 %s400, 1
      %s402 = scalar_select %p399, %s400, %s401
      %p405 = pneg %p399
      %p406 = scmp.eq.s32.totalorder %s28, 1
      %p407 = por %p405, %p406
      %p408 = scmp.ne.s32.totalorder %s400, %s403
      %p409 = scmp.eq.s32.totalorder %s28, 0
      %p410 = por %p408, %p409
      %p411 = scmp.ne.s32.totalorder %s400, %s403
      %p412 = scmp.eq.s32.totalorder %s33, 1
      %p413 = por %p411, %p412
      %p414 = scmp.ne.s32.totalorder %s403, %s404
      %p415 = scmp.eq.s32.totalorder %s33, 0
      %p416 = por %p414, %p415
      %p417 = scmp.ne.s32.totalorder %s403, %s404
      %p418 = scmp.eq.s32.totalorder %s34, 1
      %p419 = por %p417, %p418
      %p421 = scmp.ne.s32.totalorder %s404, %s420
      %p422 = scmp.eq.s32.totalorder %s34, 0
      %p423 = por %p421, %p422
      %p424 = scmp.le.s32.totalorder 1, %s28
      %p425 = scmp.lt.s32.totalorder %s28, 3
      %p426 = pnand %p424, %p425
      %p427 = pneg %p426
      // Predicated region
      $region9: #{tpu_custom_call.1} parent=5 // pred_check
        _
      $region10: #{tpu_custom_call.1} parent=5 // pred_check_branch
        %429 = sbr.rel (%p426) target = $region12
      $region11: #{tpu_custom_call.1} parent=5 // pred_region
        %s430 = ssub.s32 %s28, 1
        // Predicated region
        $region13: #{tpu_custom_call.1} parent=11 // pred_check
          %p431 = pneg %p75
        $region14: #{tpu_custom_call.1} parent=11 // pred_check_branch
          %433 = sbr.rel (%p431) target = $region16
        $region15: #{tpu_custom_call.1} parent=11 // pred_region
          %s435 = ssub.s32 16, 16
          %436 = vsyncadd [#allocation3], %s435
          %s438 = sshll.u32 [#allocation2], 4
          %s439 = int_to_ptr.vmem [resolvable:$true] %s438
          %441 = dma.hbm_to_vmem [thread:$0]  %s1, 16, %s439, [#allocation3]
        $region16: #{tpu_custom_call.1} parent=11 // pred_fallthru
          _
        // Predicated region
        $region17: #{tpu_custom_call.1} parent=11 // pred_check
          %p442 = pneg %p96
        $region18: #{tpu_custom_call.1} parent=11 // pred_check_branch
          %444 = sbr.rel (%p442) target = $region20
        $region19: #{tpu_custom_call.1} parent=11 // pred_region
          %s446 = ssub.s32 16, 16
          %447 = vsyncadd [#allocation6], %s446
          %s449 = sshll.u32 [#allocation5], 4
          %s450 = int_to_ptr.vmem [resolvable:$true] %s449
          %452 = dma.hbm_to_vmem [thread:$0]  %s2, 16, %s450, [#allocation6]
        $region20: #{tpu_custom_call.1} parent=11 // pred_fallthru
          _
        // Predicated region
        $region21: #{tpu_custom_call.1} parent=11 // pred_check
          %p453 = pneg %p117
        $region22: #{tpu_custom_call.1} parent=11 // pred_check_branch
          %455 = sbr.rel (%p453) target = $region24
        $region23: #{tpu_custom_call.1} parent=11 // pred_region
          _
        $region24: #{tpu_custom_call.1} parent=11 // pred_fallthru
          _
        // Predicated region
        $region25: #{tpu_custom_call.1} parent=11 // pred_check
          %p456 = pneg %p138
        $region26: #{tpu_custom_call.1} parent=11 // pred_check_branch
          %458 = sbr.rel (%p456) target = $region28
        $region27: #{tpu_custom_call.1} parent=11 // pred_region
          _
        $region28: #{tpu_custom_call.1} parent=11 // pred_fallthru
          _
        // Predicated region
        $region29: #{tpu_custom_call.1} parent=11 // pred_check
          %p459 = pneg %p159
        $region30: #{tpu_custom_call.1} parent=11 // pred_check_branch
          %461 = sbr.rel (%p459) target = $region32
        $region31: #{tpu_custom_call.1} parent=11 // pred_region
          _
        $region32: #{tpu_custom_call.1} parent=11 // pred_fallthru
          _
        // Predicated region
        $region33: #{tpu_custom_call.1} parent=11 // pred_check
          %p462 = pneg %p180
        $region34: #{tpu_custom_call.1} parent=11 // pred_check_branch
          %464 = sbr.rel (%p462) target = $region36
        $region35: #{tpu_custom_call.1} parent=11 // pred_region
          _
        $region36: #{tpu_custom_call.1} parent=11 // pred_fallthru
          _
        // Predicated region
        $region37: #{tpu_custom_call.1} parent=11 // pred_check
          %p465 = pneg %p201
        $region38: #{tpu_custom_call.1} parent=11 // pred_check_branch
          %467 = sbr.rel (%p465) target = $region40
        $region39: #{tpu_custom_call.1} parent=11 // pred_region
          _
        $region40: #{tpu_custom_call.1} parent=11 // pred_fallthru
          _
        // Predicated region
        $region41: #{tpu_custom_call.1} parent=11 // pred_check
          %p468 = pneg %p222
        $region42: #{tpu_custom_call.1} parent=11 // pred_check_branch
          %470 = sbr.rel (%p468) target = $region44
        $region43: #{tpu_custom_call.1} parent=11 // pred_region
          _
        $region44: #{tpu_custom_call.1} parent=11 // pred_fallthru
          _
        // Predicated region
        $region45: #{tpu_custom_call.1} parent=11 // pred_check
          %p471 = pneg %p243
        $region46: #{tpu_custom_call.1} parent=11 // pred_check_branch
          %473 = sbr.rel (%p471) target = $region48
        $region47: #{tpu_custom_call.1} parent=11 // pred_region
          _
        $region48: #{tpu_custom_call.1} parent=11 // pred_fallthru
          _
        // Predicated region
        $region49: #{tpu_custom_call.1} parent=11 // pred_check
          %p474 = pneg %p264
        $region50: #{tpu_custom_call.1} parent=11 // pred_check_branch
          %476 = sbr.rel (%p474) target = $region52
        $region51: #{tpu_custom_call.1} parent=11 // pred_region
          _
        $region52: #{tpu_custom_call.1} parent=11 // pred_fallthru
          _
        // Predicated region
        $region53: #{tpu_custom_call.1} parent=11 // pred_check
          %p477 = pneg %p285
        $region54: #{tpu_custom_call.1} parent=11 // pred_check_branch
          %479 = sbr.rel (%p477) target = $region56
        $region55: #{tpu_custom_call.1} parent=11 // pred_region
          _
        $region56: #{tpu_custom_call.1} parent=11 // pred_fallthru
          _
        // Predicated region
        $region57: #{tpu_custom_call.1} parent=11 // pred_check
          %p480 = pneg %p306
        $region58: #{tpu_custom_call.1} parent=11 // pred_check_branch
          %482 = sbr.rel (%p480) target = $region60
        $region59: #{tpu_custom_call.1} parent=11 // pred_region
          _
        $region60: #{tpu_custom_call.1} parent=11 // pred_fallthru
          _
        // Predicated region
        $region61: #{tpu_custom_call.1} parent=11 // pred_check
          %p483 = pneg %p327
        $region62: #{tpu_custom_call.1} parent=11 // pred_check_branch
          %485 = sbr.rel (%p483) target = $region64
        $region63: #{tpu_custom_call.1} parent=11 // pred_region
          _
        $region64: #{tpu_custom_call.1} parent=11 // pred_fallthru
          _
        // Predicated region
        $region65: #{tpu_custom_call.1} parent=11 // pred_check
          %p486 = pneg %p348
        $region66: #{tpu_custom_call.1} parent=11 // pred_check_branch
          %488 = sbr.rel (%p486) target = $region68
        $region67: #{tpu_custom_call.1} parent=11 // pred_region
          _
        $region68: #{tpu_custom_call.1} parent=11 // pred_fallthru
          _
        // Predicated region
        $region69: #{tpu_custom_call.1} parent=11 // pred_check
          %p489 = pneg %p369
        $region70: #{tpu_custom_call.1} parent=11 // pred_check_branch
          %491 = sbr.rel (%p489) target = $region72
        $region71: #{tpu_custom_call.1} parent=11 // pred_region
          _
        $region72: #{tpu_custom_call.1} parent=11 // pred_fallthru
          _
        // Predicated region
        $region73: #{tpu_custom_call.1} parent=11 // pred_check
          %p492 = pneg %p390
        $region74: #{tpu_custom_call.1} parent=11 // pred_check_branch
          %494 = sbr.rel (%p492) target = $region76
        $region75: #{tpu_custom_call.1} parent=11 // pred_region
          _
        $region76: #{tpu_custom_call.1} parent=11 // pred_fallthru
          _
      $region12: #{tpu_custom_call.1} parent=5 // pred_fallthru
        _
      %p495 = scmp.lt.s32.totalorder %s28, 2
      // Predicated region
      $region77: #{tpu_custom_call.1} parent=5 // pred_check
        %p496 = pneg %p495
      $region78: #{tpu_custom_call.1} parent=5 // pred_check_branch
        %498 = sbr.rel (%p496) target = $region80
      $region79: #{tpu_custom_call.1} parent=5 // pred_region
        // Predicated region
        $region81: #{tpu_custom_call.1} parent=79 // pred_check
          %p499 = pneg %p48
        $region82: #{tpu_custom_call.1} parent=79 // pred_check_branch
          %501 = sbr.rel (%p499) target = $region84
        $region83: #{tpu_custom_call.1} parent=79 // pred_region
          %p502 = scmp.lt.s32.totalorder %s28, 1
          %s503 = scalar_select %p502, %s28, 1
          %s504 = smul.addr %s503, 16
          %s505 = smul.addr %s504, 8
          %s506 = scalar_lea.vmem %s0, %s505
        $region84: #{tpu_custom_call.1} parent=79 // pred_fallthru
          _
      $region80: #{tpu_custom_call.1} parent=5 // pred_fallthru
        _
      %p507 = scmp.le.s32.totalorder 1, %s28
      %p508 = scmp.lt.s32.totalorder %s28, 3
      %p509 = pnand %p507, %p508
      %p510 = pneg %p509
      // Predicated region
      $region85: #{tpu_custom_call.1} parent=5 // pred_check
        _
      $region86: #{tpu_custom_call.1} parent=5 // pred_check_branch
        %512 = sbr.rel (%p509) target = $region88
      $region87: #{tpu_custom_call.1} parent=5 // pred_region
        %s513 = ssub.s32 %s28, 1
        // Predicated region
        $region89: #{tpu_custom_call.1} parent=87 // pred_check
          %p514 = pneg %p75
        $region90: #{tpu_custom_call.1} parent=87 // pred_check_branch
          %516 = sbr.rel (%p514) target = $region92
        $region91: #{tpu_custom_call.1} parent=87 // pred_region
          %517 = dma.done [#allocation3], 16
        $region92: #{tpu_custom_call.1} parent=87 // pred_fallthru
          _
        // Predicated region
        $region93: #{tpu_custom_call.1} parent=87 // pred_check
          %p518 = pneg %p96
        $region94: #{tpu_custom_call.1} parent=87 // pred_check_branch
          %520 = sbr.rel (%p518) target = $region96
        $region95: #{tpu_custom_call.1} parent=87 // pred_region
          %521 = dma.done [#allocation6], 16
        $region96: #{tpu_custom_call.1} parent=87 // pred_fallthru
          _
        %p522 = scmp.lt.s32.totalorder %s33, 1
        %s523 = scalar_select %p522, %s33, 1
        %s524 = smul.addr %s523, 16
        %s525 = smul.addr %s524, 8
        %s526 = scalar_lea.vmem %s0, %s525
        %p527 = pneg %p54
        %p528 = pneg %p51
        %p529 = pneg %p75
        %p530 = pneg %p72
        %p531 = pneg %p96
        %p532 = pneg %p93
        %p533 = pneg %p117
        %p534 = pneg %p114
        %p535 = pneg %p138
        %p536 = pneg %p135
        %p537 = pneg %p159
        %p538 = pneg %p156
        %p539 = pneg %p180
        %p540 = pneg %p177
        %p541 = pneg %p201
        %p542 = pneg %p198
        %p543 = pneg %p222
        %p544 = pneg %p219
        %p545 = pneg %p243
        %p546 = pneg %p240
        %p547 = pneg %p264
        %p548 = pneg %p261
        %p549 = pneg %p285
        %p550 = pneg %p282
        %p551 = pneg %p306
        %p552 = pneg %p303
        %p553 = pneg %p327
        %p554 = pneg %p324
        %p555 = pneg %p348
        %p556 = pneg %p345
        %p557 = pneg %p369
        %p558 = pneg %p366
        %p559 = pneg %p390
        %p560 = pneg %p387
        %p561 = pneg %p416
        %p562 = pneg %p413
        %s563 = sand.u32 %s403, 1
        %s564 = scalar_lea.sflag [#allocation4], %s563
        %s565 = sand.u32 %s403, 1
        %s566 = smul.addr %s565, 128
        %s567 = scalar_lea.vmem [#allocation7], %s566
        %p568 = scmp.lt.s32.totalorder %s33, 1
        %s569 = scalar_select %p568, %s33, 1
        %s570 = smul.addr %s569, 16
        %s571 = smul.addr %s570, 8
        %s572 = scalar_lea.vmem %s0, %s571
        %v574 = vld [vmem:[%s572] sm:$0xff]
        %v575 = vld [vmem:[%s572 + $0x8] sm:$0xff]
        %v576 = vld [vmem:[%s572 + $0x10] sm:$0xff]
        %v577 = vld [vmem:[%s572 + $0x18] sm:$0xff]
        %v578 = vld [vmem:[%s572 + $0x20] sm:$0xff]
        %v579 = vld [vmem:[%s572 + $0x28] sm:$0xff]
        %v580 = vld [vmem:[%s572 + $0x30] sm:$0xff]
        %v581 = vld [vmem:[%s572 + $0x38] sm:$0xff]
        %v582 = vld [vmem:[%s572 + $0x40] sm:$0xff]
        %v583 = vld [vmem:[%s572 + $0x48] sm:$0xff]
        %v584 = vld [vmem:[%s572 + $0x50] sm:$0xff]
        %v585 = vld [vmem:[%s572 + $0x58] sm:$0xff]
        %v586 = vld [vmem:[%s572 + $0x60] sm:$0xff]
        %v587 = vld [vmem:[%s572 + $0x68] sm:$0xff]
        %v588 = vld [vmem:[%s572 + $0x70] sm:$0xff]
        %v589 = vld [vmem:[%s572 + $0x78] sm:$0xff]
        %v590 = vld [vmem:[#allocation2] sm:$0x1]
        %v591 = vld [vmem:[#allocation5] sm:$0x1]
        %592 = vadd.xlane.f32.xlu0 %v574
        %v593 = vpop.xlane.xlu0 %592
        %594 = vadd.xlane.f32.xlu0 %v575
        %v595 = vpop.xlane.xlu0 %594
        %596 = vadd.xlane.f32.xlu0 %v576
        %v597 = vpop.xlane.xlu0 %596
        %598 = vadd.xlane.f32.xlu0 %v577
        %v599 = vpop.xlane.xlu0 %598
        %600 = vadd.xlane.f32.xlu0 %v578
        %v601 = vpop.xlane.xlu0 %600
        %602 = vadd.xlane.f32.xlu0 %v579
        %v603 = vpop.xlane.xlu0 %602
        %604 = vadd.xlane.f32.xlu0 %v580
        %v605 = vpop.xlane.xlu0 %604
        %606 = vadd.xlane.f32.xlu0 %v581
        %v607 = vpop.xlane.xlu0 %606
        %608 = vadd.xlane.f32.xlu0 %v582
        %v609 = vpop.xlane.xlu0 %608
        %610 = vadd.xlane.f32.xlu0 %v583
        %v611 = vpop.xlane.xlu0 %610
        %612 = vadd.xlane.f32.xlu0 %v584
        %v613 = vpop.xlane.xlu0 %612
        %614 = vadd.xlane.f32.xlu0 %v585
        %v615 = vpop.xlane.xlu0 %614
        %616 = vadd.xlane.f32.xlu0 %v586
        %v617 = vpop.xlane.xlu0 %616
        %618 = vadd.xlane.f32.xlu0 %v587
        %v619 = vpop.xlane.xlu0 %618
        %620 = vadd.xlane.f32.xlu0 %v588
        %v621 = vpop.xlane.xlu0 %620
        %622 = vadd.xlane.f32.xlu0 %v589
        %v623 = vpop.xlane.xlu0 %622
        %v624 = vrcp.pop 128.0
        %v625 = vmul.f32 %v593, %v624
        %v626 = vmul.f32 %v595, %v624
        %v627 = vmul.f32 %v597, %v624
        %v628 = vmul.f32 %v599, %v624
        %v629 = vmul.f32 %v601, %v624
        %v630 = vmul.f32 %v603, %v624
        %v631 = vmul.f32 %v605, %v624
        %v632 = vmul.f32 %v607, %v624
        %v633 = vmul.f32 %v609, %v624
        %v634 = vmul.f32 %v611, %v624
        %v635 = vmul.f32 %v613, %v624
        %v636 = vmul.f32 %v615, %v624
        %v637 = vmul.f32 %v617, %v624
        %v638 = vmul.f32 %v619, %v624
        %v639 = vmul.f32 %v621, %v624
        %v640 = vmul.f32 %v623, %v624
        %v641 = vsub.f32 %v574, %v625
        %v642 = vsub.f32 %v575, %v626
        %v643 = vsub.f32 %v576, %v627
        %v644 = vsub.f32 %v577, %v628
        %v645 = vsub.f32 %v578, %v629
        %v646 = vsub.f32 %v579, %v630
        %v647 = vsub.f32 %v580, %v631
        %v648 = vsub.f32 %v581, %v632
        %v649 = vsub.f32 %v582, %v633
        %v650 = vsub.f32 %v583, %v634
        %v651 = vsub.f32 %v584, %v635
        %v652 = vsub.f32 %v585, %v636
        %v653 = vsub.f32 %v586, %v637
        %v654 = vsub.f32 %v587, %v638
        %v655 = vsub.f32 %v588, %v639
        %v656 = vsub.f32 %v589, %v640
        %v657 = vmul.f32 %v641, %v641
        %v658 = vmul.f32 %v642, %v642
        %v659 = vmul.f32 %v643, %v643
        %v660 = vmul.f32 %v644, %v644
        %v661 = vmul.f32 %v645, %v645
        %v662 = vmul.f32 %v646, %v646
        %v663 = vmul.f32 %v647, %v647
        %v664 = vmul.f32 %v648, %v648
        %v665 = vmul.f32 %v649, %v649
        %v666 = vmul.f32 %v650, %v650
        %v667 = vmul.f32 %v651, %v651
        %v668 = vmul.f32 %v652, %v652
        %v669 = vmul.f32 %v653, %v653
        %v670 = vmul.f32 %v654, %v654
        %v671 = vmul.f32 %v655, %v655
        %v672 = vmul.f32 %v656, %v656
        %673 = vadd.xlane.f32.xlu0 %v657
        %v674 = vpop.xlane.xlu0 %673
        %675 = vadd.xlane.f32.xlu0 %v658
        %v676 = vpop.xlane.xlu0 %675
        %677 = vadd.xlane.f32.xlu0 %v659
        %v678 = vpop.xlane.xlu0 %677
        %679 = vadd.xlane.f32.xlu0 %v660
        %v680 = vpop.xlane.xlu0 %679
        %681 = vadd.xlane.f32.xlu0 %v661
        %v682 = vpop.xlane.xlu0 %681
        %683 = vadd.xlane.f32.xlu0 %v662
        %v684 = vpop.xlane.xlu0 %683
        %685 = vadd.xlane.f32.xlu0 %v663
        %v686 = vpop.xlane.xlu0 %685
        %687 = vadd.xlane.f32.xlu0 %v664
        %v688 = vpop.xlane.xlu0 %687
        %689 = vadd.xlane.f32.xlu0 %v665
        %v690 = vpop.xlane.xlu0 %689
        %691 = vadd.xlane.f32.xlu0 %v666
        %v692 = vpop.xlane.xlu0 %691
        %693 = vadd.xlane.f32.xlu0 %v667
        %v694 = vpop.xlane.xlu0 %693
        %695 = vadd.xlane.f32.xlu0 %v668
        %v696 = vpop.xlane.xlu0 %695
        %697 = vadd.xlane.f32.xlu0 %v669
        %v698 = vpop.xlane.xlu0 %697
        %699 = vadd.xlane.f32.xlu0 %v670
        %v700 = vpop.xlane.xlu0 %699
        %701 = vadd.xlane.f32.xlu0 %v671
        %v702 = vpop.xlane.xlu0 %701
        %703 = vadd.xlane.f32.xlu0 %v672
        %v704 = vpop.xlane.xlu0 %703
        %v705 = vmul.f32 %v674, %v624
        %v706 = vmul.f32 %v676, %v624
        %v707 = vmul.f32 %v678, %v624
        %v708 = vmul.f32 %v680, %v624
        %v709 = vmul.f32 %v682, %v624
        %v710 = vmul.f32 %v684, %v624
        %v711 = vmul.f32 %v686, %v624
        %v712 = vmul.f32 %v688, %v624
        %v713 = vmul.f32 %v690, %v624
        %v714 = vmul.f32 %v692, %v624
        %v715 = vmul.f32 %v694, %v624
        %v716 = vmul.f32 %v696, %v624
        %v717 = vmul.f32 %v698, %v624
        %v718 = vmul.f32 %v700, %v624
        %v719 = vmul.f32 %v702, %v624
        %v720 = vmul.f32 %v704, %v624
        %v721 = vadd.f32 %v705, 1e-05
        %v722 = vadd.f32 %v706, 1e-05
        %v723 = vadd.f32 %v707, 1e-05
        %v724 = vadd.f32 %v708, 1e-05
        %v725 = vadd.f32 %v709, 1e-05
        %v726 = vadd.f32 %v710, 1e-05
        %v727 = vadd.f32 %v711, 1e-05
        %v728 = vadd.f32 %v712, 1e-05
        %v729 = vadd.f32 %v713, 1e-05
        %v730 = vadd.f32 %v714, 1e-05
        %v731 = vadd.f32 %v715, 1e-05
        %v732 = vadd.f32 %v716, 1e-05
        %v733 = vadd.f32 %v717, 1e-05
        %v734 = vadd.f32 %v718, 1e-05
        %v735 = vadd.f32 %v719, 1e-05
        %v736 = vadd.f32 %v720, 1e-05
        %v737 = vrsqrt.pop %v721
        %v738 = vrsqrt.pop %v722
        %v739 = vrsqrt.pop %v723
        %v740 = vrsqrt.pop %v724
        %v741 = vrsqrt.pop %v725
        %v742 = vrsqrt.pop %v726
        %v743 = vrsqrt.pop %v727
        %v744 = vrsqrt.pop %v728
        %v745 = vrsqrt.pop %v729
        %v746 = vrsqrt.pop %v730
        %v747 = vrsqrt.pop %v731
        %v748 = vrsqrt.pop %v732
        %v749 = vrsqrt.pop %v733
        %v750 = vrsqrt.pop %v734
        %v751 = vrsqrt.pop %v735
        %v752 = vrsqrt.pop %v736
        %v753 = vmul.f32 %v641, %v737
        %v754 = vmul.f32 %v642, %v738
        %v755 = vmul.f32 %v643, %v739
        %v756 = vmul.f32 %v644, %v740
        %v757 = vmul.f32 %v645, %v741
        %v758 = vmul.f32 %v646, %v742
        %v759 = vmul.f32 %v647, %v743
        %v760 = vmul.f32 %v648, %v744
        %v761 = vmul.f32 %v649, %v745
        %v762 = vmul.f32 %v650, %v746
        %v763 = vmul.f32 %v651, %v747
        %v764 = vmul.f32 %v652, %v748
        %v765 = vmul.f32 %v653, %v749
        %v766 = vmul.f32 %v654, %v750
        %v767 = vmul.f32 %v655, %v751
        %v768 = vmul.f32 %v656, %v752
        %v770 = vlaneseq
        %v771 = vshrl.u32 %v770, 7
        %v772 = vsub.s32 0, %v771
        %v773 = vrot.slane %v590, %v772
        %v775 = vmul.f32 %v753, %v773
        %v776 = vmul.f32 %v754, %v773
        %v777 = vmul.f32 %v755, %v773
        %v778 = vmul.f32 %v756, %v773
        %v779 = vmul.f32 %v757, %v773
        %v780 = vmul.f32 %v758, %v773
        %v781 = vmul.f32 %v759, %v773
        %v782 = vmul.f32 %v760, %v773
        %v783 = vmul.f32 %v761, %v773
        %v784 = vmul.f32 %v762, %v773
        %v785 = vmul.f32 %v763, %v773
        %v786 = vmul.f32 %v764, %v773
        %v787 = vmul.f32 %v765, %v773
        %v788 = vmul.f32 %v766, %v773
        %v789 = vmul.f32 %v767, %v773
        %v790 = vmul.f32 %v768, %v773
        %v792 = vlaneseq
        %v793 = vshrl.u32 %v792, 7
        %v794 = vsub.s32 0, %v793
        %v795 = vrot.slane %v591, %v794
        %v797 = vadd.f32 %v775, %v795
        %v798 = vadd.f32 %v776, %v795
        %v799 = vadd.f32 %v777, %v795
        %v800 = vadd.f32 %v778, %v795
        %v801 = vadd.f32 %v779, %v795
        %v802 = vadd.f32 %v780, %v795
        %v803 = vadd.f32 %v781, %v795
        %v804 = vadd.f32 %v782, %v795
        %v805 = vadd.f32 %v783, %v795
        %v806 = vadd.f32 %v784, %v795
        %v807 = vadd.f32 %v785, %v795
        %v808 = vadd.f32 %v786, %v795
        %v809 = vadd.f32 %v787, %v795
        %v810 = vadd.f32 %v788, %v795
        %v811 = vadd.f32 %v789, %v795
        %v812 = vadd.f32 %v790, %v795
        %v813 = vpack.c.bf16 %v798, %v797
        %v814 = vpack.c.bf16 %v800, %v799
        %v815 = vpack.c.bf16 %v802, %v801
        %v816 = vpack.c.bf16 %v804, %v803
        %v817 = vpack.c.bf16 %v806, %v805
        %v818 = vpack.c.bf16 %v808, %v807
        %v819 = vpack.c.bf16 %v810, %v809
        %v820 = vpack.c.bf16 %v812, %v811
        %v821 = vlaneseq
        %v822 = vshrl.u32 %v821, 7
        %v823 = vadd.s32 %v822, 8
        %v824 = vadd.s32 %v822, 16
        %v825 = vadd.s32 %v822, 24
        %v826 = vadd.s32 %v822, 32
        %v827 = vadd.s32 %v822, 40
        %v828 = vadd.s32 %v822, 48
        %v829 = vadd.s32 %v822, 56
        %v830 = vadd.s32 %v822, 64
        %v831 = vadd.s32 %v822, 72
        %v832 = vadd.s32 %v822, 80
        %v833 = vadd.s32 %v822, 88
        %v834 = vadd.s32 %v822, 96
        %v835 = vadd.s32 %v822, 104
        %v836 = vadd.s32 %v822, 112
        %v837 = vadd.s32 %v822, 120
        %v838 = vlaneseq
        %v839 = vand.u32 %v838, 127
        %vm840 = vcmp.ge.s32.totalorder %v822, %v839
        %vm841 = vcmp.ge.s32.totalorder %v823, %v839
        %vm842 = vcmp.ge.s32.totalorder %v824, %v839
        %vm843 = vcmp.ge.s32.totalorder %v825, %v839
        %vm844 = vcmp.ge.s32.totalorder %v826, %v839
        %vm845 = vcmp.ge.s32.totalorder %v827, %v839
        %vm846 = vcmp.ge.s32.totalorder %v828, %v839
        %vm847 = vcmp.ge.s32.totalorder %v829, %v839
        %vm848 = vcmp.ge.s32.totalorder %v830, %v839
        %vm849 = vcmp.ge.s32.totalorder %v831, %v839
        %vm850 = vcmp.ge.s32.totalorder %v832, %v839
        %vm851 = vcmp.ge.s32.totalorder %v833, %v839
        %vm852 = vcmp.ge.s32.totalorder %v834, %v839
        %vm853 = vcmp.ge.s32.totalorder %v835, %v839
        %vm854 = vcmp.ge.s32.totalorder %v836, %v839
        %vm855 = vcmp.ge.s32.totalorder %v837, %v839
        %v856 = vld [vmem:[%s3] sm:$0xf]
        %v857 = vld [vmem:[%s3 + $0x4] sm:$0xf]
        %v858 = vld [vmem:[%s3 + $0x8] sm:$0xf]
        %v859 = vld [vmem:[%s3 + $0xc] sm:$0xf]
        %v860 = vld [vmem:[%s3 + $0x10] sm:$0xf]
        %v861 = vld [vmem:[%s3 + $0x14] sm:$0xf]
        %v862 = vld [vmem:[%s3 + $0x18] sm:$0xf]
        %v863 = vld [vmem:[%s3 + $0x1c] sm:$0xf]
        %v864 = vld [vmem:[%s3 + $0x20] sm:$0xf]
        %v865 = vld [vmem:[%s3 + $0x24] sm:$0xf]
        %v866 = vld [vmem:[%s3 + $0x28] sm:$0xf]
        %v867 = vld [vmem:[%s3 + $0x2c] sm:$0xf]
        %v868 = vld [vmem:[%s3 + $0x30] sm:$0xf]
        %v869 = vld [vmem:[%s3 + $0x34] sm:$0xf]
        %v870 = vld [vmem:[%s3 + $0x38] sm:$0xf]
        %v871 = vld [vmem:[%s3 + $0x3c] sm:$0xf]
        %v872 = vld [vmem:[%s6] sm:$0x1]
        %v874 = vlaneseq
        %v875 = vshrl.u32 %v874, 7
        %v876 = vsub.s32 0, %v875
        %v877 = vrot.slane %v872, %v876
        %v895 = vunpack.c.l.b16 %v856
        %v896 = vunpack.c.l.b16 %v857
        %v897 = vunpack.c.l.b16 %v858
        %v898 = vunpack.c.l.b16 %v859
        %v899 = vunpack.c.l.b16 %v860
        %v900 = vunpack.c.l.b16 %v861
        %v901 = vunpack.c.l.b16 %v862
        %v902 = vunpack.c.l.b16 %v863
        %v903 = vunpack.c.l.b16 %v864
        %v904 = vunpack.c.l.b16 %v865
        %v905 = vunpack.c.l.b16 %v866
        %v906 = vunpack.c.l.b16 %v867
        %v907 = vunpack.c.l.b16 %v868
        %v908 = vunpack.c.l.b16 %v869
        %v909 = vunpack.c.l.b16 %v870
        %v910 = vunpack.c.l.b16 %v871
        %v911 = vpack.c.b16 %v896, %v895
        %v912 = vpack.c.b16 %v898, %v897
        %v913 = vpack.c.b16 %v900, %v899
        %v914 = vpack.c.b16 %v902, %v901
        %v915 = vpack.c.b16 %v904, %v903
        %v916 = vpack.c.b16 %v906, %v905
        %v917 = vpack.c.b16 %v908, %v907
        %v918 = vpack.c.b16 %v910, %v909
        %927 = vmatprep.subr.bf16.mxu0 0
        %928 = vmatpush1.bf16.msra.mxu0 %v911
        %929 = vmatprep.subr.bf16.mxu0 0
        %930 = vmatpush1.bf16.msra.mxu0 %v912
        %931 = vmatprep.subr.bf16.mxu0 0
        %932 = vmatpush1.bf16.msra.mxu0 %v913
        %933 = vmatprep.subr.bf16.mxu0 0
        %934 = vmatpush1.bf16.msra.mxu0 %v914
        %935 = vmatprep.subr.bf16.mxu0 0
        %936 = vmatpush1.bf16.msra.mxu0 %v915
        %937 = vmatprep.subr.bf16.mxu0 0
        %938 = vmatpush1.bf16.msra.mxu0 %v916
        %939 = vmatprep.subr.bf16.mxu0 0
        %940 = vmatpush1.bf16.msra.mxu0 %v917
        %941 = vmatprep.subr.bf16.mxu0 0
        %942 = vmatpush1.bf16.msra.mxu0 %v918
        %943 = vmatprep.subr.bf16.mxu0 0
        %944 = vmatpush1.bf16.msra.mxu0 0
        %945 = vmatprep.subr.bf16.mxu0 0
        %946 = vmatpush1.bf16.msra.mxu0 0
        %947 = vmatprep.subr.bf16.mxu0 0
        %948 = vmatpush1.bf16.msra.mxu0 0
        %949 = vmatprep.subr.bf16.mxu0 0
        %950 = vmatpush1.bf16.msra.mxu0 0
        %951 = vmatprep.subr.bf16.mxu0 0
        %952 = vmatpush1.bf16.msra.mxu0 0
        %953 = vmatprep.subr.bf16.mxu0 0
        %954 = vmatpush1.bf16.msra.mxu0 0
        %955 = vmatprep.subr.bf16.mxu0 0
        %956 = vmatpush1.bf16.msra.mxu0 0
        %957 = vmatprep.subr.bf16.mxu0 0
        %958 = vmatpush1.bf16.msra.mxu0 0
        %959 = vmatprep.mubr.bf16.mxu0 0
        %960 = vmatmul.mubr.bf16.gmra.mrb[0].mxu0 %v813
        %v961 = vpop.f32.mrb[0].mxu0
        %v962 = vadd.f32 %v877, %v961
        %v963 = vpop.f32.mrb[0].mxu0
        %v964 = vpop.f32.mrb[0].mxu0
        %v965 = vadd.f32 %v877, %v964
        %v966 = vpop.f32.mrb[0].mxu0
        %967 = vmatprep.mubr.bf16.mxu0 0
        %968 = vmatmul.mubr.bf16.gmra.mrb[0].mxu0 %v814
        %v969 = vpop.f32.mrb[0].mxu0
        %v970 = vadd.f32 %v877, %v969
        %v971 = vpop.f32.mrb[0].mxu0
        %v972 = vpop.f32.mrb[0].mxu0
        %v973 = vadd.f32 %v877, %v972
        %v974 = vpop.f32.mrb[0].mxu0
        %975 = vmatprep.mubr.bf16.mxu0 0
        %976 = vmatmul.mubr.bf16.gmra.mrb[0].mxu0 %v815
        %v977 = vpop.f32.mrb[0].mxu0
        %v978 = vadd.f32 %v877, %v977
        %v979 = vpop.f32.mrb[0].mxu0
        %v980 = vpop.f32.mrb[0].mxu0
        %v981 = vadd.f32 %v877, %v980
        %v982 = vpop.f32.mrb[0].mxu0
        %983 = vmatprep.mubr.bf16.mxu0 0
        %984 = vmatmul.mubr.bf16.gmra.mrb[0].mxu0 %v816
        %v985 = vpop.f32.mrb[0].mxu0
        %v986 = vadd.f32 %v877, %v985
        %v987 = vpop.f32.mrb[0].mxu0
        %v988 = vpop.f32.mrb[0].mxu0
        %v989 = vadd.f32 %v877, %v988
        %v990 = vpop.f32.mrb[0].mxu0
        %991 = vmatprep.mubr.bf16.mxu0 0
        %992 = vmatmul.mubr.bf16.gmra.mrb[0].mxu0 %v817
        %v993 = vpop.f32.mrb[0].mxu0
        %v994 = vadd.f32 %v877, %v993
        %v995 = vpop.f32.mrb[0].mxu0
        %v996 = vpop.f32.mrb[0].mxu0
        %v997 = vadd.f32 %v877, %v996
        %v998 = vpop.f32.mrb[0].mxu0
        %999 = vmatprep.mubr.bf16.mxu0 0
        %1000 = vmatmul.mubr.bf16.gmra.mrb[0].mxu0 %v818
        %v1001 = vpop.f32.mrb[0].mxu0
        %v1002 = vadd.f32 %v877, %v1001
        %v1003 = vpop.f32.mrb[0].mxu0
        %v1004 = vpop.f32.mrb[0].mxu0
        %v1005 = vadd.f32 %v877, %v1004
        %v1006 = vpop.f32.mrb[0].mxu0
        %1007 = vmatprep.mubr.bf16.mxu0 0
        %1008 = vmatmul.mubr.bf16.gmra.mrb[0].mxu0 %v819
        %v1009 = vpop.f32.mrb[0].mxu0
        %v1010 = vadd.f32 %v877, %v1009
        %v1011 = vpop.f32.mrb[0].mxu0
        %v1012 = vpop.f32.mrb[0].mxu0
        %v1013 = vadd.f32 %v877, %v1012
        %v1014 = vpop.f32.mrb[0].mxu0
        %1015 = vmatprep.mubr.bf16.mxu0 0
        %1016 = vmatmul.mubr.bf16.gmra.mrb[0].mxu0 %v820
        %v1017 = vpop.f32.mrb[0].mxu0
        %v1018 = vadd.f32 %v877, %v1017
        %v1019 = vpop.f32.mrb[0].mxu0
        %v1020 = vpop.f32.mrb[0].mxu0
        %v1021 = vadd.f32 %v877, %v1020
        %v1022 = vpop.f32.mrb[0].mxu0
        %1023 = vdwg.mxu0
        %v1024 = vld [vmem:[%s4] sm:$0xf]
        %v1025 = vld [vmem:[%s4 + $0x4] sm:$0xf]
        %v1026 = vld [vmem:[%s4 + $0x8] sm:$0xf]
        %v1027 = vld [vmem:[%s4 + $0xc] sm:$0xf]
        %v1028 = vld [vmem:[%s4 + $0x10] sm:$0xf]
        %v1029 = vld [vmem:[%s4 + $0x14] sm:$0xf]
        %v1030 = vld [vmem:[%s4 + $0x18] sm:$0xf]
        %v1031 = vld [vmem:[%s4 + $0x1c] sm:$0xf]
        %v1032 = vld [vmem:[%s4 + $0x20] sm:$0xf]
        %v1033 = vld [vmem:[%s4 + $0x24] sm:$0xf]
        %v1034 = vld [vmem:[%s4 + $0x28] sm:$0xf]
        %v1035 = vld [vmem:[%s4 + $0x2c] sm:$0xf]
        %v1036 = vld [vmem:[%s4 + $0x30] sm:$0xf]
        %v1037 = vld [vmem:[%s4 + $0x34] sm:$0xf]
        %v1038 = vld [vmem:[%s4 + $0x38] sm:$0xf]
        %v1039 = vld [vmem:[%s4 + $0x3c] sm:$0xf]
        %v1040 = vld [vmem:[%s7] sm:$0x1]
        %v1042 = vlaneseq
        %v1043 = vshrl.u32 %v1042, 7
        %v1044 = vsub.s32 0, %v1043
        %v1045 = vrot.slane %v1040, %v1044
        %v1063 = vunpack.c.l.b16 %v1024
        %v1064 = vunpack.c.l.b16 %v1025
        %v1065 = vunpack.c.l.b16 %v1026
        %v1066 = vunpack.c.l.b16 %v1027
        %v1067 = vunpack.c.l.b16 %v1028
        %v1068 = vunpack.c.l.b16 %v1029
        %v1069 = vunpack.c.l.b16 %v1030
        %v1070 = vunpack.c.l.b16 %v1031
        %v1071 = vunpack.c.l.b16 %v1032
        %v1072 = vunpack.c.l.b16 %v1033
        %v1073 = vunpack.c.l.b16 %v1034
        %v1074 = vunpack.c.l.b16 %v1035
        %v1075 = vunpack.c.l.b16 %v1036
        %v1076 = vunpack.c.l.b16 %v1037
        %v1077 = vunpack.c.l.b16 %v1038
        %v1078 = vunpack.c.l.b16 %v1039
        %v1079 = vpack.c.b16 %v1064, %v1063
        %v1080 = vpack.c.b16 %v1066, %v1065
        %v1081 = vpack.c.b16 %v1068, %v1067
        %v1082 = vpack.c.b16 %v1070, %v1069
        %v1083 = vpack.c.b16 %v1072, %v1071
        %v1084 = vpack.c.b16 %v1074, %v1073
        %v1085 = vpack.c.b16 %v1076, %v1075
        %v1086 = vpack.c.b16 %v1078, %v1077
        %1095 = vmatprep.subr.bf16.mxu0 0
        %1096 = vmatpush1.bf16.msra.mxu0 %v1079
        %1097 = vmatprep.subr.bf16.mxu0 0
        %1098 = vmatpush1.bf16.msra.mxu0 %v1080
        %1099 = vmatprep.subr.bf16.mxu0 0
        %1100 = vmatpush1.bf16.msra.mxu0 %v1081
        %1101 = vmatprep.subr.bf16.mxu0 0
        %1102 = vmatpush1.bf16.msra.mxu0 %v1082
        %1103 = vmatprep.subr.bf16.mxu0 0
        %1104 = vmatpush1.bf16.msra.mxu0 %v1083
        %1105 = vmatprep.subr.bf16.mxu0 0
        %1106 = vmatpush1.bf16.msra.mxu0 %v1084
        %1107 = vmatprep.subr.bf16.mxu0 0
        %1108 = vmatpush1.bf16.msra.mxu0 %v1085
        %1109 = vmatprep.subr.bf16.mxu0 0
        %1110 = vmatpush1.bf16.msra.mxu0 %v1086
        %1111 = vmatprep.subr.bf16.mxu0 0
        %1112 = vmatpush1.bf16.msra.mxu0 0
        %1113 = vmatprep.subr.bf16.mxu0 0
        %1114 = vmatpush1.bf16.msra.mxu0 0
        %1115 = vmatprep.subr.bf16.mxu0 0
        %1116 = vmatpush1.bf16.msra.mxu0 0
        %1117 = vmatprep.subr.bf16.mxu0 0
        %1118 = vmatpush1.bf16.msra.mxu0 0
        %1119 = vmatprep.subr.bf16.mxu0 0
        %1120 = vmatpush1.bf16.msra.mxu0 0
        %1121 = vmatprep.subr.bf16.mxu0 0
        %1122 = vmatpush1.bf16.msra.mxu0 0
        %1123 = vmatprep.subr.bf16.mxu0 0
        %1124 = vmatpush1.bf16.msra.mxu0 0
        %1125 = vmatprep.subr.bf16.mxu0 0
        %1126 = vmatpush1.bf16.msra.mxu0 0
        %1127 = vmatprep.mubr.bf16.mxu0 0
        %1128 = vmatmul.mubr.bf16.gmra.mrb[0].mxu0 %v813
        %v1129 = vpop.f32.mrb[0].mxu0
        %v1130 = vadd.f32 %v1045, %v1129
        %v1131 = vpop.f32.mrb[0].mxu0
        %v1132 = vpop.f32.mrb[0].mxu0
        %v1133 = vadd.f32 %v1045, %v1132
        %v1134 = vpop.f32.mrb[0].mxu0
        %1135 = vmatprep.mubr.bf16.mxu0 0
        %1136 = vmatmul.mubr.bf16.gmra.mrb[0].mxu0 %v814
        %v1137 = vpop.f32.mrb[0].mxu0
        %v1138 = vadd.f32 %v1045, %v1137
        %v1139 = vpop.f32.mrb[0].mxu0
        %v1140 = vpop.f32.mrb[0].mxu0
        %v1141 = vadd.f32 %v1045, %v1140
        %v1142 = vpop.f32.mrb[0].mxu0
        %1143 = vmatprep.mubr.bf16.mxu0 0
        %1144 = vmatmul.mubr.bf16.gmra.mrb[0].mxu0 %v815
        %v1145 = vpop.f32.mrb[0].mxu0
        %v1146 = vadd.f32 %v1045, %v1145
        %v1147 = vpop.f32.mrb[0].mxu0
        %v1148 = vpop.f32.mrb[0].mxu0
        %v1149 = vadd.f32 %v1045, %v1148
        %v1150 = vpop.f32.mrb[0].mxu0
        %1151 = vmatprep.mubr.bf16.mxu0 0
        %1152 = vmatmul.mubr.bf16.gmra.mrb[0].mxu0 %v816
        %v1153 = vpop.f32.mrb[0].mxu0
        %v1154 = vadd.f32 %v1045, %v1153
        %v1155 = vpop.f32.mrb[0].mxu0
        %v1156 = vpop.f32.mrb[0].mxu0
        %v1157 = vadd.f32 %v1045, %v1156
        %v1158 = vpop.f32.mrb[0].mxu0
        %1159 = vmatprep.mubr.bf16.mxu0 0
        %1160 = vmatmul.mubr.bf16.gmra.mrb[0].mxu0 %v817
        %v1161 = vpop.f32.mrb[0].mxu0
        %v1162 = vadd.f32 %v1045, %v1161
        %v1163 = vpop.f32.mrb[0].mxu0
        %v1164 = vpop.f32.mrb[0].mxu0
        %v1165 = vadd.f32 %v1045, %v1164
        %v1166 = vpop.f32.mrb[0].mxu0
        %1167 = vmatprep.mubr.bf16.mxu0 0
        %1168 = vmatmul.mubr.bf16.gmra.mrb[0].mxu0 %v818
        %v1169 = vpop.f32.mrb[0].mxu0
        %v1170 = vadd.f32 %v1045, %v1169
        %v1171 = vpop.f32.mrb[0].mxu0
        %v1172 = vpop.f32.mrb[0].mxu0
        %v1173 = vadd.f32 %v1045, %v1172
        %v1174 = vpop.f32.mrb[0].mxu0
        %1175 = vmatprep.mubr.bf16.mxu0 0
        %1176 = vmatmul.mubr.bf16.gmra.mrb[0].mxu0 %v819
        %v1177 = vpop.f32.mrb[0].mxu0
        %v1178 = vadd.f32 %v1045, %v1177
        %v1179 = vpop.f32.mrb[0].mxu0
        %v1180 = vpop.f32.mrb[0].mxu0
        %v1181 = vadd.f32 %v1045, %v1180
        %v1182 = vpop.f32.mrb[0].mxu0
        %1183 = vmatprep.mubr.bf16.mxu0 0
        %1184 = vmatmul.mubr.bf16.gmra.mrb[0].mxu0 %v820
        %v1185 = vpop.f32.mrb[0].mxu0
        %v1186 = vadd.f32 %v1045, %v1185
        %v1187 = vpop.f32.mrb[0].mxu0
        %v1188 = vpop.f32.mrb[0].mxu0
        %v1189 = vadd.f32 %v1045, %v1188
        %v1190 = vpop.f32.mrb[0].mxu0
        %1191 = vdwg.mxu0
        %v1192 = vld [vmem:[%s5] sm:$0xf]
        %v1193 = vld [vmem:[%s5 + $0x4] sm:$0xf]
        %v1194 = vld [vmem:[%s5 + $0x8] sm:$0xf]
        %v1195 = vld [vmem:[%s5 + $0xc] sm:$0xf]
        %v1196 = vld [vmem:[%s5 + $0x10] sm:$0xf]
        %v1197 = vld [vmem:[%s5 + $0x14] sm:$0xf]
        %v1198 = vld [vmem:[%s5 + $0x18] sm:$0xf]
        %v1199 = vld [vmem:[%s5 + $0x1c] sm:$0xf]
        %v1200 = vld [vmem:[%s5 + $0x20] sm:$0xf]
        %v1201 = vld [vmem:[%s5 + $0x24] sm:$0xf]
        %v1202 = vld [vmem:[%s5 + $0x28] sm:$0xf]
        %v1203 = vld [vmem:[%s5 + $0x2c] sm:$0xf]
        %v1204 = vld [vmem:[%s5 + $0x30] sm:$0xf]
        %v1205 = vld [vmem:[%s5 + $0x34] sm:$0xf]
        %v1206 = vld [vmem:[%s5 + $0x38] sm:$0xf]
        %v1207 = vld [vmem:[%s5 + $0x3c] sm:$0xf]
        %v1208 = vld [vmem:[%s8] sm:$0x1]
        %v1210 = vlaneseq
        %v1211 = vshrl.u32 %v1210, 7
        %v1212 = vsub.s32 0, %v1211
        %v1213 = vrot.slane %v1208, %v1212
        %v1231 = vunpack.c.l.b16 %v1192
        %v1232 = vunpack.c.l.b16 %v1193
        %v1233 = vunpack.c.l.b16 %v1194
        %v1234 = vunpack.c.l.b16 %v1195
        %v1235 = vunpack.c.l.b16 %v1196
        %v1236 = vunpack.c.l.b16 %v1197
        %v1237 = vunpack.c.l.b16 %v1198
        %v1238 = vunpack.c.l.b16 %v1199
        %v1239 = vunpack.c.l.b16 %v1200
        %v1240 = vunpack.c.l.b16 %v1201
        %v1241 = vunpack.c.l.b16 %v1202
        %v1242 = vunpack.c.l.b16 %v1203
        %v1243 = vunpack.c.l.b16 %v1204
        %v1244 = vunpack.c.l.b16 %v1205
        %v1245 = vunpack.c.l.b16 %v1206
        %v1246 = vunpack.c.l.b16 %v1207
        %v1247 = vpack.c.b16 %v1232, %v1231
        %v1248 = vpack.c.b16 %v1234, %v1233
        %v1249 = vpack.c.b16 %v1236, %v1235
        %v1250 = vpack.c.b16 %v1238, %v1237
        %v1251 = vpack.c.b16 %v1240, %v1239
        %v1252 = vpack.c.b16 %v1242, %v1241
        %v1253 = vpack.c.b16 %v1244, %v1243
        %v1254 = vpack.c.b16 %v1246, %v1245
        %1263 = vmatprep.subr.bf16.mxu0 0
        %1264 = vmatpush1.bf16.msra.mxu0 %v1247
        %1265 = vmatprep.subr.bf16.mxu0 0
        %1266 = vmatpush1.bf16.msra.mxu0 %v1248
        %1267 = vmatprep.subr.bf16.mxu0 0
        %1268 = vmatpush1.bf16.msra.mxu0 %v1249
        %1269 = vmatprep.subr.bf16.mxu0 0
        %1270 = vmatpush1.bf16.msra.mxu0 %v1250
        %1271 = vmatprep.subr.bf16.mxu0 0
        %1272 = vmatpush1.bf16.msra.mxu0 %v1251
        %1273 = vmatprep.subr.bf16.mxu0 0
        %1274 = vmatpush1.bf16.msra.mxu0 %v1252
        %1275 = vmatprep.subr.bf16.mxu0 0
        %1276 = vmatpush1.bf16.msra.mxu0 %v1253
        %1277 = vmatprep.subr.bf16.mxu0 0
        %1278 = vmatpush1.bf16.msra.mxu0 %v1254
        %1279 = vmatprep.subr.bf16.mxu0 0
        %1280 = vmatpush1.bf16.msra.mxu0 0
        %1281 = vmatprep.subr.bf16.mxu0 0
        %1282 = vmatpush1.bf16.msra.mxu0 0
        %1283 = vmatprep.subr.bf16.mxu0 0
        %1284 = vmatpush1.bf16.msra.mxu0 0
        %1285 = vmatprep.subr.bf16.mxu0 0
        %1286 = vmatpush1.bf16.msra.mxu0 0
        %1287 = vmatprep.subr.bf16.mxu0 0
        %1288 = vmatpush1.bf16.msra.mxu0 0
        %1289 = vmatprep.subr.bf16.mxu0 0
        %1290 = vmatpush1.bf16.msra.mxu0 0
        %1291 = vmatprep.subr.bf16.mxu0 0
        %1292 = vmatpush1.bf16.msra.mxu0 0
        %1293 = vmatprep.subr.bf16.mxu0 0
        %1294 = vmatpush1.bf16.msra.mxu0 0
        %1295 = vmatprep.mubr.bf16.mxu0 0
        %1296 = vmatmul.mubr.bf16.gmra.mrb[0].mxu0 %v813
        %v1297 = vpop.f32.mrb[0].mxu0
        %v1298 = vadd.f32 %v1213, %v1297
        %v1299 = vpop.f32.mrb[0].mxu0
        %v1300 = vpop.f32.mrb[0].mxu0
        %v1301 = vadd.f32 %v1213, %v1300
        %v1302 = vpop.f32.mrb[0].mxu0
        %1303 = vmatprep.mubr.bf16.mxu0 0
        %1304 = vmatmul.mubr.bf16.gmra.mrb[0].mxu0 %v814
        %v1305 = vpop.f32.mrb[0].mxu0
        %v1306 = vadd.f32 %v1213, %v1305
        %v1307 = vpop.f32.mrb[0].mxu0
        %v1308 = vpop.f32.mrb[0].mxu0
        %v1309 = vadd.f32 %v1213, %v1308
        %v1310 = vpop.f32.mrb[0].mxu0
        %1311 = vmatprep.mubr.bf16.mxu0 0
        %1312 = vmatmul.mubr.bf16.gmra.mrb[0].mxu0 %v815
        %v1313 = vpop.f32.mrb[0].mxu0
        %v1314 = vadd.f32 %v1213, %v1313
        %v1315 = vpop.f32.mrb[0].mxu0
        %v1316 = vpop.f32.mrb[0].mxu0
        %v1317 = vadd.f32 %v1213, %v1316
        %v1318 = vpop.f32.mrb[0].mxu0
        %1319 = vmatprep.mubr.bf16.mxu0 0
        %1320 = vmatmul.mubr.bf16.gmra.mrb[0].mxu0 %v816
        %v1321 = vpop.f32.mrb[0].mxu0
        %v1322 = vadd.f32 %v1213, %v1321
        %v1323 = vpop.f32.mrb[0].mxu0
        %v1324 = vpop.f32.mrb[0].mxu0
        %v1325 = vadd.f32 %v1213, %v1324
        %v1326 = vpop.f32.mrb[0].mxu0
        %1327 = vmatprep.mubr.bf16.mxu0 0
        %1328 = vmatmul.mubr.bf16.gmra.mrb[0].mxu0 %v817
        %v1329 = vpop.f32.mrb[0].mxu0
        %v1330 = vadd.f32 %v1213, %v1329
        %v1331 = vpop.f32.mrb[0].mxu0
        %v1332 = vpop.f32.mrb[0].mxu0
        %v1333 = vadd.f32 %v1213, %v1332
        %v1334 = vpop.f32.mrb[0].mxu0
        %1335 = vmatprep.mubr.bf16.mxu0 0
        %1336 = vmatmul.mubr.bf16.gmra.mrb[0].mxu0 %v818
        %v1337 = vpop.f32.mrb[0].mxu0
        %v1338 = vadd.f32 %v1213, %v1337
        %v1339 = vpop.f32.mrb[0].mxu0
        %v1340 = vpop.f32.mrb[0].mxu0
        %v1341 = vadd.f32 %v1213, %v1340
        %v1342 = vpop.f32.mrb[0].mxu0
        %1343 = vmatprep.mubr.bf16.mxu0 0
        %1344 = vmatmul.mubr.bf16.gmra.mrb[0].mxu0 %v819
        %v1345 = vpop.f32.mrb[0].mxu0
        %v1346 = vadd.f32 %v1213, %v1345
        %v1347 = vpop.f32.mrb[0].mxu0
        %v1348 = vpop.f32.mrb[0].mxu0
        %v1349 = vadd.f32 %v1213, %v1348
        %v1350 = vpop.f32.mrb[0].mxu0
        %1351 = vmatprep.mubr.bf16.mxu0 0
        %1352 = vmatmul.mubr.bf16.gmra.mrb[0].mxu0 %v820
        %v1353 = vpop.f32.mrb[0].mxu0
        %v1354 = vadd.f32 %v1213, %v1353
        %v1355 = vpop.f32.mrb[0].mxu0
        %v1356 = vpop.f32.mrb[0].mxu0
        %v1357 = vadd.f32 %v1213, %v1356
        %v1358 = vpop.f32.mrb[0].mxu0
        %1359 = vdwg.mxu0
        %v1360 = vpack.c.bf16 %v965, %v962
        %v1361 = vpack.c.bf16 %v973, %v970
        %v1362 = vpack.c.bf16 %v981, %v978
        %v1363 = vpack.c.bf16 %v989, %v986
        %v1364 = vpack.c.bf16 %v997, %v994
        %v1365 = vpack.c.bf16 %v1005, %v1002
        %v1366 = vpack.c.bf16 %v1013, %v1010
        %v1367 = vpack.c.bf16 %v1021, %v1018
        %v1368 = vpack.c.bf16 %v1133, %v1130
        %v1369 = vpack.c.bf16 %v1141, %v1138
        %v1370 = vpack.c.bf16 %v1149, %v1146
        %v1371 = vpack.c.bf16 %v1157, %v1154
        %v1372 = vpack.c.bf16 %v1165, %v1162
        %v1373 = vpack.c.bf16 %v1173, %v1170
        %v1374 = vpack.c.bf16 %v1181, %v1178
        %v1375 = vpack.c.bf16 %v1189, %v1186
        %vm1376 = vcmask 261120
        %v1378 = vsel %vm1376, %v1360, 0
        %v1381 = vsel %vm1376, %v1361, 0
        %v1384 = vsel %vm1376, %v1362, 0
        %v1387 = vsel %vm1376, %v1363, 0
        %v1390 = vsel %vm1376, %v1364, 0
        %v1393 = vsel %vm1376, %v1365, 0
        %v1396 = vsel %vm1376, %v1366, 0
        %v1399 = vsel %vm1376, %v1367, 0
        %v1402 = vsel %vm1376, %v1368, 0
        %v1405 = vsel %vm1376, %v1369, 0
        %v1408 = vsel %vm1376, %v1370, 0
        %v1411 = vsel %vm1376, %v1371, 0
        %v1414 = vsel %vm1376, %v1372, 0
        %v1417 = vsel %vm1376, %v1373, 0
        %v1420 = vsel %vm1376, %v1374, 0
        %v1423 = vsel %vm1376, %v1375, 0
        %1425 = vmatprep.subr.bf16.mxu0 0
        %1426 = vmatpush1.bf16.xpose.msra.mxu0 %v1402
        %1427 = vmatprep.subr.bf16.mxu0 0
        %1428 = vmatpush1.bf16.xpose.msra.mxu0 %v1405
        %1429 = vmatprep.subr.bf16.mxu0 0
        %1430 = vmatpush1.bf16.xpose.msra.mxu0 %v1408
        %1431 = vmatprep.subr.bf16.mxu0 0
        %1432 = vmatpush1.bf16.xpose.msra.mxu0 %v1411
        %1433 = vmatprep.subr.bf16.mxu0 0
        %1434 = vmatpush1.bf16.xpose.msra.mxu0 %v1414
        %1435 = vmatprep.subr.bf16.mxu0 0
        %1436 = vmatpush1.bf16.xpose.msra.mxu0 %v1417
        %1437 = vmatprep.subr.bf16.mxu0 0
        %1438 = vmatpush1.bf16.xpose.msra.mxu0 %v1420
        %1439 = vmatprep.subr.bf16.mxu0 0
        %1440 = vmatpush1.bf16.xpose.msra.mxu0 %v1423
        %1441 = vmatprep.subr.bf16.mxu0 0
        %1442 = vmatpush1.bf16.xpose.msra.mxu0 0
        %1443 = vmatprep.subr.bf16.mxu0 0
        %1444 = vmatpush1.bf16.xpose.msra.mxu0 0
        %1445 = vmatprep.subr.bf16.mxu0 0
        %1446 = vmatpush1.bf16.xpose.msra.mxu0 0
        %1447 = vmatprep.subr.bf16.mxu0 0
        %1448 = vmatpush1.bf16.xpose.msra.mxu0 0
        %1449 = vmatprep.subr.bf16.mxu0 0
        %1450 = vmatpush1.bf16.xpose.msra.mxu0 0
        %1451 = vmatprep.subr.bf16.mxu0 0
        %1452 = vmatpush1.bf16.xpose.msra.mxu0 0
        %1453 = vmatprep.subr.bf16.mxu0 0
        %1454 = vmatpush1.bf16.xpose.msra.mxu0 0
        %1455 = vmatprep.subr.bf16.mxu0 0
        %1456 = vmatpush1.bf16.xpose.msra.mxu0 0
        %1457 = vmatprep.mubr.bf16.mxu0 0
        %1458 = vmatmul.mubr.bf16.gmra.mrb[0].mxu0 %v1378
        %v1459 = vpop.f32.mrb[0].mxu0
        %v1460 = vadd.f32 0.0, %v1459
        %v1461 = vpop.f32.mrb[0].mxu0
        %v1462 = vpop.f32.mrb[0].mxu0
        %v1463 = vadd.f32 0.0, %v1462
        %v1464 = vpop.f32.mrb[0].mxu0
        %1465 = vmatprep.mubr.bf16.mxu0 0
        %1466 = vmatmul.mubr.bf16.gmra.mrb[0].mxu0 %v1381
        %v1467 = vpop.f32.mrb[0].mxu0
        %v1468 = vadd.f32 0.0, %v1467
        %v1469 = vpop.f32.mrb[0].mxu0
        %v1470 = vpop.f32.mrb[0].mxu0
        %v1471 = vadd.f32 0.0, %v1470
        %v1472 = vpop.f32.mrb[0].mxu0
        %1473 = vmatprep.mubr.bf16.mxu0 0
        %1474 = vmatmul.mubr.bf16.gmra.mrb[0].mxu0 %v1384
        %v1475 = vpop.f32.mrb[0].mxu0
        %v1476 = vadd.f32 0.0, %v1475
        %v1477 = vpop.f32.mrb[0].mxu0
        %v1478 = vpop.f32.mrb[0].mxu0
        %v1479 = vadd.f32 0.0, %v1478
        %v1480 = vpop.f32.mrb[0].mxu0
        %1481 = vmatprep.mubr.bf16.mxu0 0
        %1482 = vmatmul.mubr.bf16.gmra.mrb[0].mxu0 %v1387
        %v1483 = vpop.f32.mrb[0].mxu0
        %v1484 = vadd.f32 0.0, %v1483
        %v1485 = vpop.f32.mrb[0].mxu0
        %v1486 = vpop.f32.mrb[0].mxu0
        %v1487 = vadd.f32 0.0, %v1486
        %v1488 = vpop.f32.mrb[0].mxu0
        %1489 = vmatprep.mubr.bf16.mxu0 0
        %1490 = vmatmul.mubr.bf16.gmra.mrb[0].mxu0 %v1390
        %v1491 = vpop.f32.mrb[0].mxu0
        %v1492 = vadd.f32 0.0, %v1491
        %v1493 = vpop.f32.mrb[0].mxu0
        %v1494 = vpop.f32.mrb[0].mxu0
        %v1495 = vadd.f32 0.0, %v1494
        %v1496 = vpop.f32.mrb[0].mxu0
        %1497 = vmatprep.mubr.bf16.mxu0 0
        %1498 = vmatmul.mubr.bf16.gmra.mrb[0].mxu0 %v1393
        %v1499 = vpop.f32.mrb[0].mxu0
        %v1500 = vadd.f32 0.0, %v1499
        %v1501 = vpop.f32.mrb[0].mxu0
        %v1502 = vpop.f32.mrb[0].mxu0
        %v1503 = vadd.f32 0.0, %v1502
        %v1504 = vpop.f32.mrb[0].mxu0
        %1505 = vmatprep.mubr.bf16.mxu0 0
        %1506 = vmatmul.mubr.bf16.gmra.mrb[0].mxu0 %v1396
        %v1507 = vpop.f32.mrb[0].mxu0
        %v1508 = vadd.f32 0.0, %v1507
        %v1509 = vpop.f32.mrb[0].mxu0
        %v1510 = vpop.f32.mrb[0].mxu0
        %v1511 = vadd.f32 0.0, %v1510
        %v1512 = vpop.f32.mrb[0].mxu0
        %1513 = vmatprep.mubr.bf16.mxu0 0
        %1514 = vmatmul.mubr.bf16.gmra.mrb[0].mxu0 %v1399
        %v1515 = vpop.f32.mrb[0].mxu0
        %v1516 = vadd.f32 0.0, %v1515
        %v1517 = vpop.f32.mrb[0].mxu0
        %v1518 = vpop.f32.mrb[0].mxu0
        %v1519 = vadd.f32 0.0, %v1518
        %v1520 = vpop.f32.mrb[0].mxu0
        %1521 = vdwg.mxu0
        %v1522 = vmul.f32 %v1460, 0.17677669
        %v1523 = vmul.f32 %v1463, 0.17677669
        %v1524 = vmul.f32 %v1468, 0.17677669
        %v1525 = vmul.f32 %v1471, 0.17677669
        %v1526 = vmul.f32 %v1476, 0.17677669
        %v1527 = vmul.f32 %v1479, 0.17677669
        %v1528 = vmul.f32 %v1484, 0.17677669
        %v1529 = vmul.f32 %v1487, 0.17677669
        %v1530 = vmul.f32 %v1492, 0.17677669
        %v1531 = vmul.f32 %v1495, 0.17677669
        %v1532 = vmul.f32 %v1500, 0.17677669
        %v1533 = vmul.f32 %v1503, 0.17677669
        %v1534 = vmul.f32 %v1508, 0.17677669
        %v1535 = vmul.f32 %v1511, 0.17677669
        %v1536 = vmul.f32 %v1516, 0.17677669
        %v1537 = vmul.f32 %v1519, 0.17677669
        %v1538 = vsel %vm840, %v1522, -1e+30
        %v1539 = vsel %vm841, %v1523, -1e+30
        %v1540 = vsel %vm842, %v1524, -1e+30
        %v1541 = vsel %vm843, %v1525, -1e+30
        %v1542 = vsel %vm844, %v1526, -1e+30
        %v1543 = vsel %vm845, %v1527, -1e+30
        %v1544 = vsel %vm846, %v1528, -1e+30
        %v1545 = vsel %vm847, %v1529, -1e+30
        %v1546 = vsel %vm848, %v1530, -1e+30
        %v1547 = vsel %vm849, %v1531, -1e+30
        %v1548 = vsel %vm850, %v1532, -1e+30
        %v1549 = vsel %vm851, %v1533, -1e+30
        %v1550 = vsel %vm852, %v1534, -1e+30
        %v1551 = vsel %vm853, %v1535, -1e+30
        %v1552 = vsel %vm854, %v1536, -1e+30
        %v1553 = vsel %vm855, %v1537, -1e+30
        %1554 = vmax.xlane.f32.xlu0 %v1538
        %v1555 = vpop.xlane.xlu0 %1554
        %1556 = vmax.xlane.f32.xlu0 %v1539
        %v1557 = vpop.xlane.xlu0 %1556
        %1558 = vmax.xlane.f32.xlu0 %v1540
        %v1559 = vpop.xlane.xlu0 %1558
        %1560 = vmax.xlane.f32.xlu0 %v1541
        %v1561 = vpop.xlane.xlu0 %1560
        %1562 = vmax.xlane.f32.xlu0 %v1542
        %v1563 = vpop.xlane.xlu0 %1562
        %1564 = vmax.xlane.f32.xlu0 %v1543
        %v1565 = vpop.xlane.xlu0 %1564
        %1566 = vmax.xlane.f32.xlu0 %v1544
        %v1567 = vpop.xlane.xlu0 %1566
        %1568 = vmax.xlane.f32.xlu0 %v1545
        %v1569 = vpop.xlane.xlu0 %1568
        %1570 = vmax.xlane.f32.xlu0 %v1546
        %v1571 = vpop.xlane.xlu0 %1570
        %1572 = vmax.xlane.f32.xlu0 %v1547
        %v1573 = vpop.xlane.xlu0 %1572
        %1574 = vmax.xlane.f32.xlu0 %v1548
        %v1575 = vpop.xlane.xlu0 %1574
        %1576 = vmax.xlane.f32.xlu0 %v1549
        %v1577 = vpop.xlane.xlu0 %1576
        %1578 = vmax.xlane.f32.xlu0 %v1550
        %v1579 = vpop.xlane.xlu0 %1578
        %1580 = vmax.xlane.f32.xlu0 %v1551
        %v1581 = vpop.xlane.xlu0 %1580
        %1582 = vmax.xlane.f32.xlu0 %v1552
        %v1583 = vpop.xlane.xlu0 %1582
        %1584 = vmax.xlane.f32.xlu0 %v1553
        %v1585 = vpop.xlane.xlu0 %1584
        %v1586 = vsub.f32 %v1538, %v1555
        %v1587 = vsub.f32 %v1539, %v1557
        %v1588 = vsub.f32 %v1540, %v1559
        %v1589 = vsub.f32 %v1541, %v1561
        %v1590 = vsub.f32 %v1542, %v1563
        %v1591 = vsub.f32 %v1543, %v1565
        %v1592 = vsub.f32 %v1544, %v1567
        %v1593 = vsub.f32 %v1545, %v1569
        %v1594 = vsub.f32 %v1546, %v1571
        %v1595 = vsub.f32 %v1547, %v1573
        %v1596 = vsub.f32 %v1548, %v1575
        %v1597 = vsub.f32 %v1549, %v1577
        %v1598 = vsub.f32 %v1550, %v1579
        %v1599 = vsub.f32 %v1551, %v1581
        %v1600 = vsub.f32 %v1552, %v1583
        %v1601 = vsub.f32 %v1553, %v1585
        %v1602 = vmul.f32 %v1586, 1.442695
        %v1603 = vpow.pop %v1602
        %v1604 = vmul.f32 %v1587, 1.442695
        %v1605 = vpow.pop %v1604
        %v1606 = vmul.f32 %v1588, 1.442695
        %v1607 = vpow.pop %v1606
        %v1608 = vmul.f32 %v1589, 1.442695
        %v1609 = vpow.pop %v1608
        %v1610 = vmul.f32 %v1590, 1.442695
        %v1611 = vpow.pop %v1610
        %v1612 = vmul.f32 %v1591, 1.442695
        %v1613 = vpow.pop %v1612
        %v1614 = vmul.f32 %v1592, 1.442695
        %v1615 = vpow.pop %v1614
        %v1616 = vmul.f32 %v1593, 1.442695
        %v1617 = vpow.pop %v1616
        %v1618 = vmul.f32 %v1594, 1.442695
        %v1619 = vpow.pop %v1618
        %v1620 = vmul.f32 %v1595, 1.442695
        %v1621 = vpow.pop %v1620
        %v1622 = vmul.f32 %v1596, 1.442695
        %v1623 = vpow.pop %v1622
        %v1624 = vmul.f32 %v1597, 1.442695
        %v1625 = vpow.pop %v1624
        %v1626 = vmul.f32 %v1598, 1.442695
        %v1627 = vpow.pop %v1626
        %v1628 = vmul.f32 %v1599, 1.442695
        %v1629 = vpow.pop %v1628
        %v1630 = vmul.f32 %v1600, 1.442695
        %v1631 = vpow.pop %v1630
        %v1632 = vmul.f32 %v1601, 1.442695
        %v1633 = vpow.pop %v1632
        %1634 = vadd.xlane.f32.xlu0 %v1603
        %v1635 = vpop.xlane.xlu0 %1634
        %1636 = vadd.xlane.f32.xlu0 %v1605
        %v1637 = vpop.xlane.xlu0 %1636
        %1638 = vadd.xlane.f32.xlu0 %v1607
        %v1639 = vpop.xlane.xlu0 %1638
        %1640 = vadd.xlane.f32.xlu0 %v1609
        %v1641 = vpop.xlane.xlu0 %1640
        %1642 = vadd.xlane.f32.xlu0 %v1611
        %v1643 = vpop.xlane.xlu0 %1642
        %1644 = vadd.xlane.f32.xlu0 %v1613
        %v1645 = vpop.xlane.xlu0 %1644
        %1646 = vadd.xlane.f32.xlu0 %v1615
        %v1647 = vpop.xlane.xlu0 %1646
        %1648 = vadd.xlane.f32.xlu0 %v1617
        %v1649 = vpop.xlane.xlu0 %1648
        %1650 = vadd.xlane.f32.xlu0 %v1619
        %v1651 = vpop.xlane.xlu0 %1650
        %1652 = vadd.xlane.f32.xlu0 %v1621
        %v1653 = vpop.xlane.xlu0 %1652
        %1654 = vadd.xlane.f32.xlu0 %v1623
        %v1655 = vpop.xlane.xlu0 %1654
        %1656 = vadd.xlane.f32.xlu0 %v1625
        %v1657 = vpop.xlane.xlu0 %1656
        %1658 = vadd.xlane.f32.xlu0 %v1627
        %v1659 = vpop.xlane.xlu0 %1658
        %1660 = vadd.xlane.f32.xlu0 %v1629
        %v1661 = vpop.xlane.xlu0 %1660
        %1662 = vadd.xlane.f32.xlu0 %v1631
        %v1663 = vpop.xlane.xlu0 %1662
        %1664 = vadd.xlane.f32.xlu0 %v1633
        %v1665 = vpop.xlane.xlu0 %1664
        %v1666 = vrcp.pop %v1635
        %v1667 = vrcp.pop %v1637
        %v1668 = vrcp.pop %v1639
        %v1669 = vrcp.pop %v1641
        %v1670 = vrcp.pop %v1643
        %v1671 = vrcp.pop %v1645
        %v1672 = vrcp.pop %v1647
        %v1673 = vrcp.pop %v1649
        %v1674 = vrcp.pop %v1651
        %v1675 = vrcp.pop %v1653
        %v1676 = vrcp.pop %v1655
        %v1677 = vrcp.pop %v1657
        %v1678 = vrcp.pop %v1659
        %v1679 = vrcp.pop %v1661
        %v1680 = vrcp.pop %v1663
        %v1681 = vrcp.pop %v1665
        %v1682 = vmul.f32 %v1603, %v1666
        %v1683 = vmul.f32 %v1605, %v1667
        %v1684 = vmul.f32 %v1607, %v1668
        %v1685 = vmul.f32 %v1609, %v1669
        %v1686 = vmul.f32 %v1611, %v1670
        %v1687 = vmul.f32 %v1613, %v1671
        %v1688 = vmul.f32 %v1615, %v1672
        %v1689 = vmul.f32 %v1617, %v1673
        %v1690 = vmul.f32 %v1619, %v1674
        %v1691 = vmul.f32 %v1621, %v1675
        %v1692 = vmul.f32 %v1623, %v1676
        %v1693 = vmul.f32 %v1625, %v1677
        %v1694 = vmul.f32 %v1627, %v1678
        %v1695 = vmul.f32 %v1629, %v1679
        %v1696 = vmul.f32 %v1631, %v1680
        %v1697 = vmul.f32 %v1633, %v1681
        %v1698 = vpack.c.bf16 %v1683, %v1682
        %v1699 = vpack.c.bf16 %v1685, %v1684
        %v1700 = vpack.c.bf16 %v1687, %v1686
        %v1701 = vpack.c.bf16 %v1689, %v1688
        %v1702 = vpack.c.bf16 %v1691, %v1690
        %v1703 = vpack.c.bf16 %v1693, %v1692
        %v1704 = vpack.c.bf16 %v1695, %v1694
        %v1705 = vpack.c.bf16 %v1697, %v1696
        %v1706 = vpack.c.bf16 %v1301, %v1298
        %v1707 = vpack.c.bf16 %v1309, %v1306
        %v1708 = vpack.c.bf16 %v1317, %v1314
        %v1709 = vpack.c.bf16 %v1325, %v1322
        %v1710 = vpack.c.bf16 %v1333, %v1330
        %v1711 = vpack.c.bf16 %v1341, %v1338
        %v1712 = vpack.c.bf16 %v1349, %v1346
        %v1713 = vpack.c.bf16 %v1357, %v1354
        %1714 = vmatprep.subr.bf16.mxu0 0
        %1715 = vmatpush1.bf16.msra.mxu0 %v1706
        %1716 = vmatprep.subr.bf16.mxu0 0
        %1717 = vmatpush1.bf16.msra.mxu0 %v1707
        %1718 = vmatprep.subr.bf16.mxu0 0
        %1719 = vmatpush1.bf16.msra.mxu0 %v1708
        %1720 = vmatprep.subr.bf16.mxu0 0
        %1721 = vmatpush1.bf16.msra.mxu0 %v1709
        %1722 = vmatprep.subr.bf16.mxu0 0
        %1723 = vmatpush1.bf16.msra.mxu0 %v1710
        %1724 = vmatprep.subr.bf16.mxu0 0
        %1725 = vmatpush1.bf16.msra.mxu0 %v1711
        %1726 = vmatprep.subr.bf16.mxu0 0
        %1727 = vmatpush1.bf16.msra.mxu0 %v1712
        %1728 = vmatprep.subr.bf16.mxu0 0
        %1729 = vmatpush1.bf16.msra.mxu0 %v1713
        %1730 = vmatprep.subr.bf16.mxu0 0
        %1731 = vmatpush1.bf16.msra.mxu0 0
        %1732 = vmatprep.subr.bf16.mxu0 0
        %1733 = vmatpush1.bf16.msra.mxu0 0
        %1734 = vmatprep.subr.bf16.mxu0 0
        %1735 = vmatpush1.bf16.msra.mxu0 0
        %1736 = vmatprep.subr.bf16.mxu0 0
        %1737 = vmatpush1.bf16.msra.mxu0 0
        %1738 = vmatprep.subr.bf16.mxu0 0
        %1739 = vmatpush1.bf16.msra.mxu0 0
        %1740 = vmatprep.subr.bf16.mxu0 0
        %1741 = vmatpush1.bf16.msra.mxu0 0
        %1742 = vmatprep.subr.bf16.mxu0 0
        %1743 = vmatpush1.bf16.msra.mxu0 0
        %1744 = vmatprep.subr.bf16.mxu0 0
        %1745 = vmatpush1.bf16.msra.mxu0 0
        %1746 = vmatprep.mubr.bf16.mxu0 0
        %1747 = vmatmul.mubr.bf16.gmra.mrb[0].mxu0 %v1698
        %v1748 = vpop.f32.mrb[0].mxu0
        %v1749 = vadd.f32 0.0, %v1748
        %v1750 = vpop.f32.mrb[0].mxu0
        %v1751 = vpop.f32.mrb[0].mxu0
        %v1752 = vadd.f32 0.0, %v1751
        %v1753 = vpop.f32.mrb[0].mxu0
        %1754 = vmatprep.mubr.bf16.mxu0 0
        %1755 = vmatmul.mubr.bf16.gmra.mrb[0].mxu0 %v1699
        %v1756 = vpop.f32.mrb[0].mxu0
        %v1757 = vadd.f32 0.0, %v1756
        %v1758 = vpop.f32.mrb[0].mxu0
        %v1759 = vpop.f32.mrb[0].mxu0
        %v1760 = vadd.f32 0.0, %v1759
        %v1761 = vpop.f32.mrb[0].mxu0
        %1762 = vmatprep.mubr.bf16.mxu0 0
        %1763 = vmatmul.mubr.bf16.gmra.mrb[0].mxu0 %v1700
        %v1764 = vpop.f32.mrb[0].mxu0
        %v1765 = vadd.f32 0.0, %v1764
        %v1766 = vpop.f32.mrb[0].mxu0
        %v1767 = vpop.f32.mrb[0].mxu0
        %v1768 = vadd.f32 0.0, %v1767
        %v1769 = vpop.f32.mrb[0].mxu0
        %1770 = vmatprep.mubr.bf16.mxu0 0
        %1771 = vmatmul.mubr.bf16.gmra.mrb[0].mxu0 %v1701
        %v1772 = vpop.f32.mrb[0].mxu0
        %v1773 = vadd.f32 0.0, %v1772
        %v1774 = vpop.f32.mrb[0].mxu0
        %v1775 = vpop.f32.mrb[0].mxu0
        %v1776 = vadd.f32 0.0, %v1775
        %v1777 = vpop.f32.mrb[0].mxu0
        %1778 = vmatprep.mubr.bf16.mxu0 0
        %1779 = vmatmul.mubr.bf16.gmra.mrb[0].mxu0 %v1702
        %v1780 = vpop.f32.mrb[0].mxu0
        %v1781 = vadd.f32 0.0, %v1780
        %v1782 = vpop.f32.mrb[0].mxu0
        %v1783 = vpop.f32.mrb[0].mxu0
        %v1784 = vadd.f32 0.0, %v1783
        %v1785 = vpop.f32.mrb[0].mxu0
        %1786 = vmatprep.mubr.bf16.mxu0 0
        %1787 = vmatmul.mubr.bf16.gmra.mrb[0].mxu0 %v1703
        %v1788 = vpop.f32.mrb[0].mxu0
        %v1789 = vadd.f32 0.0, %v1788
        %v1790 = vpop.f32.mrb[0].mxu0
        %v1791 = vpop.f32.mrb[0].mxu0
        %v1792 = vadd.f32 0.0, %v1791
        %v1793 = vpop.f32.mrb[0].mxu0
        %1794 = vmatprep.mubr.bf16.mxu0 0
        %1795 = vmatmul.mubr.bf16.gmra.mrb[0].mxu0 %v1704
        %v1796 = vpop.f32.mrb[0].mxu0
        %v1797 = vadd.f32 0.0, %v1796
        %v1798 = vpop.f32.mrb[0].mxu0
        %v1799 = vpop.f32.mrb[0].mxu0
        %v1800 = vadd.f32 0.0, %v1799
        %v1801 = vpop.f32.mrb[0].mxu0
        %1802 = vmatprep.mubr.bf16.mxu0 0
        %1803 = vmatmul.mubr.bf16.gmra.mrb[0].mxu0 %v1705
        %v1804 = vpop.f32.mrb[0].mxu0
        %v1805 = vadd.f32 0.0, %v1804
        %v1806 = vpop.f32.mrb[0].mxu0
        %v1807 = vpop.f32.mrb[0].mxu0
        %v1808 = vadd.f32 0.0, %v1807
        %v1809 = vpop.f32.mrb[0].mxu0
        %1810 = vdwg.mxu0
        %v1811 = vpack.c.bf16 %v1752, %v1749
        %v1812 = vpack.c.bf16 %v1760, %v1757
        %v1813 = vpack.c.bf16 %v1768, %v1765
        %v1814 = vpack.c.bf16 %v1776, %v1773
        %v1815 = vpack.c.bf16 %v1784, %v1781
        %v1816 = vpack.c.bf16 %v1792, %v1789
        %v1817 = vpack.c.bf16 %v1800, %v1797
        %v1818 = vpack.c.bf16 %v1808, %v1805
        %v1819 = vld [vmem:[%s9] sm:$0xf]
        %v1820 = vld [vmem:[%s9 + $0x4] sm:$0xf]
        %v1821 = vld [vmem:[%s9 + $0x8] sm:$0xf]
        %v1822 = vld [vmem:[%s9 + $0xc] sm:$0xf]
        %s1823 = scalar_lea.vmem %s3, 64
        %v1824 = vld [vmem:[%s1823] sm:$0xf]
        %v1825 = vld [vmem:[%s1823 + $0x4] sm:$0xf]
        %v1826 = vld [vmem:[%s1823 + $0x8] sm:$0xf]
        %v1827 = vld [vmem:[%s1823 + $0xc] sm:$0xf]
        %v1828 = vld [vmem:[%s1823 + $0x10] sm:$0xf]
        %v1829 = vld [vmem:[%s1823 + $0x14] sm:$0xf]
        %v1830 = vld [vmem:[%s1823 + $0x18] sm:$0xf]
        %v1831 = vld [vmem:[%s1823 + $0x1c] sm:$0xf]
        %v1832 = vld [vmem:[%s1823 + $0x20] sm:$0xf]
        %v1833 = vld [vmem:[%s1823 + $0x24] sm:$0xf]
        %v1834 = vld [vmem:[%s1823 + $0x28] sm:$0xf]
        %v1835 = vld [vmem:[%s1823 + $0x2c] sm:$0xf]
        %v1836 = vld [vmem:[%s1823 + $0x30] sm:$0xf]
        %v1837 = vld [vmem:[%s1823 + $0x34] sm:$0xf]
        %v1838 = vld [vmem:[%s1823 + $0x38] sm:$0xf]
        %v1839 = vld [vmem:[%s1823 + $0x3c] sm:$0xf]
        %s1840 = scalar_lea.vmem %s6, 1
        %v1841 = vld [vmem:[%s1840] sm:$0x1]
        %v1843 = vlaneseq
        %v1844 = vshrl.u32 %v1843, 7
        %v1845 = vsub.s32 0, %v1844
        %v1846 = vrot.slane %v1841, %v1845
        %v1864 = vunpack.c.l.b16 %v1824
        %v1865 = vunpack.c.l.b16 %v1825
        %v1866 = vunpack.c.l.b16 %v1826
        %v1867 = vunpack.c.l.b16 %v1827
        %v1868 = vunpack.c.l.b16 %v1828
        %v1869 = vunpack.c.l.b16 %v1829
        %v1870 = vunpack.c.l.b16 %v1830
        %v1871 = vunpack.c.l.b16 %v1831
        %v1872 = vunpack.c.l.b16 %v1832
        %v1873 = vunpack.c.l.b16 %v1833
        %v1874 = vunpack.c.l.b16 %v1834
        %v1875 = vunpack.c.l.b16 %v1835
        %v1876 = vunpack.c.l.b16 %v1836
        %v1877 = vunpack.c.l.b16 %v1837
        %v1878 = vunpack.c.l.b16 %v1838
        %v1879 = vunpack.c.l.b16 %v1839
        %v1880 = vpack.c.b16 %v1865, %v1864
        %v1881 = vpack.c.b16 %v1867, %v1866
        %v1882 = vpack.c.b16 %v1869, %v1868
        %v1883 = vpack.c.b16 %v1871, %v1870
        %v1884 = vpack.c.b16 %v1873, %v1872
        %v1885 = vpack.c.b16 %v1875, %v1874
        %v1886 = vpack.c.b16 %v1877, %v1876
        %v1887 = vpack.c.b16 %v1879, %v1878
        %1896 = vmatprep.subr.bf16.mxu0 0
        %1897 = vmatpush1.bf16.msra.mxu0 %v1880
        %1898 = vmatprep.subr.bf16.mxu0 0
        %1899 = vmatpush1.bf16.msra.mxu0 %v1881
        %1900 = vmatprep.subr.bf16.mxu0 0
        %1901 = vmatpush1.bf16.msra.mxu0 %v1882
        %1902 = vmatprep.subr.bf16.mxu0 0
        %1903 = vmatpush1.bf16.msra.mxu0 %v1883
        %1904 = vmatprep.subr.bf16.mxu0 0
        %1905 = vmatpush1.bf16.msra.mxu0 %v1884
        %1906 = vmatprep.subr.bf16.mxu0 0
        %1907 = vmatpush1.bf16.msra.mxu0 %v1885
        %1908 = vmatprep.subr.bf16.mxu0 0
        %1909 = vmatpush1.bf16.msra.mxu0 %v1886
        %1910 = vmatprep.subr.bf16.mxu0 0
        %1911 = vmatpush1.bf16.msra.mxu0 %v1887
        %1912 = vmatprep.subr.bf16.mxu0 0
        %1913 = vmatpush1.bf16.msra.mxu0 0
        %1914 = vmatprep.subr.bf16.mxu0 0
        %1915 = vmatpush1.bf16.msra.mxu0 0
        %1916 = vmatprep.subr.bf16.mxu0 0
        %1917 = vmatpush1.bf16.msra.mxu0 0
        %1918 = vmatprep.subr.bf16.mxu0 0
        %1919 = vmatpush1.bf16.msra.mxu0 0
        %1920 = vmatprep.subr.bf16.mxu0 0
        %1921 = vmatpush1.bf16.msra.mxu0 0
        %1922 = vmatprep.subr.bf16.mxu0 0
        %1923 = vmatpush1.bf16.msra.mxu0 0
        %1924 = vmatprep.subr.bf16.mxu0 0
        %1925 = vmatpush1.bf16.msra.mxu0 0
        %1926 = vmatprep.subr.bf16.mxu0 0
        %1927 = vmatpush1.bf16.msra.mxu0 0
        %1928 = vmatprep.mubr.bf16.mxu0 0
        %1929 = vmatmul.mubr.bf16.gmra.mrb[0].mxu0 %v813
        %v1930 = vpop.f32.mrb[0].mxu0
        %v1931 = vadd.f32 %v1846, %v1930
        %v1932 = vpop.f32.mrb[0].mxu0
        %v1933 = vpop.f32.mrb[0].mxu0
        %v1934 = vadd.f32 %v1846, %v1933
        %v1935 = vpop.f32.mrb[0].mxu0
        %1936 = vmatprep.mubr.bf16.mxu0 0
        %1937 = vmatmul.mubr.bf16.gmra.mrb[0].mxu0 %v814
        %v1938 = vpop.f32.mrb[0].mxu0
        %v1939 = vadd.f32 %v1846, %v1938
        %v1940 = vpop.f32.mrb[0].mxu0
        %v1941 = vpop.f32.mrb[0].mxu0
        %v1942 = vadd.f32 %v1846, %v1941
        %v1943 = vpop.f32.mrb[0].mxu0
        %1944 = vmatprep.mubr.bf16.mxu0 0
        %1945 = vmatmul.mubr.bf16.gmra.mrb[0].mxu0 %v815
        %v1946 = vpop.f32.mrb[0].mxu0
        %v1947 = vadd.f32 %v1846, %v1946
        %v1948 = vpop.f32.mrb[0].mxu0
        %v1949 = vpop.f32.mrb[0].mxu0
        %v1950 = vadd.f32 %v1846, %v1949
        %v1951 = vpop.f32.mrb[0].mxu0
        %1952 = vmatprep.mubr.bf16.mxu0 0
        %1953 = vmatmul.mubr.bf16.gmra.mrb[0].mxu0 %v816
        %v1954 = vpop.f32.mrb[0].mxu0
        %v1955 = vadd.f32 %v1846, %v1954
        %v1956 = vpop.f32.mrb[0].mxu0
        %v1957 = vpop.f32.mrb[0].mxu0
        %v1958 = vadd.f32 %v1846, %v1957
        %v1959 = vpop.f32.mrb[0].mxu0
        %1960 = vmatprep.mubr.bf16.mxu0 0
        %1961 = vmatmul.mubr.bf16.gmra.mrb[0].mxu0 %v817
        %v1962 = vpop.f32.mrb[0].mxu0
        %v1963 = vadd.f32 %v1846, %v1962
        %v1964 = vpop.f32.mrb[0].mxu0
        %v1965 = vpop.f32.mrb[0].mxu0
        %v1966 = vadd.f32 %v1846, %v1965
        %v1967 = vpop.f32.mrb[0].mxu0
        %1968 = vmatprep.mubr.bf16.mxu0 0
        %1969 = vmatmul.mubr.bf16.gmra.mrb[0].mxu0 %v818
        %v1970 = vpop.f32.mrb[0].mxu0
        %v1971 = vadd.f32 %v1846, %v1970
        %v1972 = vpop.f32.mrb[0].mxu0
        %v1973 = vpop.f32.mrb[0].mxu0
        %v1974 = vadd.f32 %v1846, %v1973
        %v1975 = vpop.f32.mrb[0].mxu0
        %1976 = vmatprep.mubr.bf16.mxu0 0
        %1977 = vmatmul.mubr.bf16.gmra.mrb[0].mxu0 %v819
        %v1978 = vpop.f32.mrb[0].mxu0
        %v1979 = vadd.f32 %v1846, %v1978
        %v1980 = vpop.f32.mrb[0].mxu0
        %v1981 = vpop.f32.mrb[0].mxu0
        %v1982 = vadd.f32 %v1846, %v1981
        %v1983 = vpop.f32.mrb[0].mxu0
        %1984 = vmatprep.mubr.bf16.mxu0 0
        %1985 = vmatmul.mubr.bf16.gmra.mrb[0].mxu0 %v820
        %v1986 = vpop.f32.mrb[0].mxu0
        %v1987 = vadd.f32 %v1846, %v1986
        %v1988 = vpop.f32.mrb[0].mxu0
        %v1989 = vpop.f32.mrb[0].mxu0
        %v1990 = vadd.f32 %v1846, %v1989
        %v1991 = vpop.f32.mrb[0].mxu0
        %1992 = vdwg.mxu0
        %s1993 = scalar_lea.vmem %s4, 64
        %v1994 = vld [vmem:[%s1993] sm:$0xf]
        %v1995 = vld [vmem:[%s1993 + $0x4] sm:$0xf]
        %v1996 = vld [vmem:[%s1993 + $0x8] sm:$0xf]
        %v1997 = vld [vmem:[%s1993 + $0xc] sm:$0xf]
        %v1998 = vld [vmem:[%s1993 + $0x10] sm:$0xf]
        %v1999 = vld [vmem:[%s1993 + $0x14] sm:$0xf]
        %v2000 = vld [vmem:[%s1993 + $0x18] sm:$0xf]
        %v2001 = vld [vmem:[%s1993 + $0x1c] sm:$0xf]
        %v2002 = vld [vmem:[%s1993 + $0x20] sm:$0xf]
        %v2003 = vld [vmem:[%s1993 + $0x24] sm:$0xf]
        %v2004 = vld [vmem:[%s1993 + $0x28] sm:$0xf]
        %v2005 = vld [vmem:[%s1993 + $0x2c] sm:$0xf]
        %v2006 = vld [vmem:[%s1993 + $0x30] sm:$0xf]
        %v2007 = vld [vmem:[%s1993 + $0x34] sm:$0xf]
        %v2008 = vld [vmem:[%s1993 + $0x38] sm:$0xf]
        %v2009 = vld [vmem:[%s1993 + $0x3c] sm:$0xf]
        %s2010 = scalar_lea.vmem %s7, 1
        %v2011 = vld [vmem:[%s2010] sm:$0x1]
        %v2013 = vlaneseq
        %v2014 = vshrl.u32 %v2013, 7
        %v2015 = vsub.s32 0, %v2014
        %v2016 = vrot.slane %v2011, %v2015
        %v2034 = vunpack.c.l.b16 %v1994
        %v2035 = vunpack.c.l.b16 %v1995
        %v2036 = vunpack.c.l.b16 %v1996
        %v2037 = vunpack.c.l.b16 %v1997
        %v2038 = vunpack.c.l.b16 %v1998
        %v2039 = vunpack.c.l.b16 %v1999
        %v2040 = vunpack.c.l.b16 %v2000
        %v2041 = vunpack.c.l.b16 %v2001
        %v2042 = vunpack.c.l.b16 %v2002
        %v2043 = vunpack.c.l.b16 %v2003
        %v2044 = vunpack.c.l.b16 %v2004
        %v2045 = vunpack.c.l.b16 %v2005
        %v2046 = vunpack.c.l.b16 %v2006
        %v2047 = vunpack.c.l.b16 %v2007
        %v2048 = vunpack.c.l.b16 %v2008
        %v2049 = vunpack.c.l.b16 %v2009
        %v2050 = vpack.c.b16 %v2035, %v2034
        %v2051 = vpack.c.b16 %v2037, %v2036
        %v2052 = vpack.c.b16 %v2039, %v2038
        %v2053 = vpack.c.b16 %v2041, %v2040
        %v2054 = vpack.c.b16 %v2043, %v2042
        %v2055 = vpack.c.b16 %v2045, %v2044
        %v2056 = vpack.c.b16 %v2047, %v2046
        %v2057 = vpack.c.b16 %v2049, %v2048
        %2066 = vmatprep.subr.bf16.mxu0 0
        %2067 = vmatpush1.bf16.msra.mxu0 %v2050
        %2068 = vmatprep.subr.bf16.mxu0 0
        %2069 = vmatpush1.bf16.msra.mxu0 %v2051
        %2070 = vmatprep.subr.bf16.mxu0 0
        %2071 = vmatpush1.bf16.msra.mxu0 %v2052
        %2072 = vmatprep.subr.bf16.mxu0 0
        %2073 = vmatpush1.bf16.msra.mxu0 %v2053
        %2074 = vmatprep.subr.bf16.mxu0 0
        %2075 = vmatpush1.bf16.msra.mxu0 %v2054
        %2076 = vmatprep.subr.bf16.mxu0 0
        %2077 = vmatpush1.bf16.msra.mxu0 %v2055
        %2078 = vmatprep.subr.bf16.mxu0 0
        %2079 = vmatpush1.bf16.msra.mxu0 %v2056
        %2080 = vmatprep.subr.bf16.mxu0 0
        %2081 = vmatpush1.bf16.msra.mxu0 %v2057
        %2082 = vmatprep.subr.bf16.mxu0 0
        %2083 = vmatpush1.bf16.msra.mxu0 0
        %2084 = vmatprep.subr.bf16.mxu0 0
        %2085 = vmatpush1.bf16.msra.mxu0 0
        %2086 = vmatprep.subr.bf16.mxu0 0
        %2087 = vmatpush1.bf16.msra.mxu0 0
        %2088 = vmatprep.subr.bf16.mxu0 0
        %2089 = vmatpush1.bf16.msra.mxu0 0
        %2090 = vmatprep.subr.bf16.mxu0 0
        %2091 = vmatpush1.bf16.msra.mxu0 0
        %2092 = vmatprep.subr.bf16.mxu0 0
        %2093 = vmatpush1.bf16.msra.mxu0 0
        %2094 = vmatprep.subr.bf16.mxu0 0
        %2095 = vmatpush1.bf16.msra.mxu0 0
        %2096 = vmatprep.subr.bf16.mxu0 0
        %2097 = vmatpush1.bf16.msra.mxu0 0
        %2098 = vmatprep.mubr.bf16.mxu0 0
        %2099 = vmatmul.mubr.bf16.gmra.mrb[0].mxu0 %v813
        %v2100 = vpop.f32.mrb[0].mxu0
        %v2101 = vadd.f32 %v2016, %v2100
        %v2102 = vpop.f32.mrb[0].mxu0
        %v2103 = vpop.f32.mrb[0].mxu0
        %v2104 = vadd.f32 %v2016, %v2103
        %v2105 = vpop.f32.mrb[0].mxu0
        %2106 = vmatprep.mubr.bf16.mxu0 0
        %2107 = vmatmul.mubr.bf16.gmra.mrb[0].mxu0 %v814
        %v2108 = vpop.f32.mrb[0].mxu0
        %v2109 = vadd.f32 %v2016, %v2108
        %v2110 = vpop.f32.mrb[0].mxu0
        %v2111 = vpop.f32.mrb[0].mxu0
        %v2112 = vadd.f32 %v2016, %v2111
        %v2113 = vpop.f32.mrb[0].mxu0
        %2114 = vmatprep.mubr.bf16.mxu0 0
        %2115 = vmatmul.mubr.bf16.gmra.mrb[0].mxu0 %v815
        %v2116 = vpop.f32.mrb[0].mxu0
        %v2117 = vadd.f32 %v2016, %v2116
        %v2118 = vpop.f32.mrb[0].mxu0
        %v2119 = vpop.f32.mrb[0].mxu0
        %v2120 = vadd.f32 %v2016, %v2119
        %v2121 = vpop.f32.mrb[0].mxu0
        %2122 = vmatprep.mubr.bf16.mxu0 0
        %2123 = vmatmul.mubr.bf16.gmra.mrb[0].mxu0 %v816
        %v2124 = vpop.f32.mrb[0].mxu0
        %v2125 = vadd.f32 %v2016, %v2124
        %v2126 = vpop.f32.mrb[0].mxu0
        %v2127 = vpop.f32.mrb[0].mxu0
        %v2128 = vadd.f32 %v2016, %v2127
        %v2129 = vpop.f32.mrb[0].mxu0
        %2130 = vmatprep.mubr.bf16.mxu0 0
        %2131 = vmatmul.mubr.bf16.gmra.mrb[0].mxu0 %v817
        %v2132 = vpop.f32.mrb[0].mxu0
        %v2133 = vadd.f32 %v2016, %v2132
        %v2134 = vpop.f32.mrb[0].mxu0
        %v2135 = vpop.f32.mrb[0].mxu0
        %v2136 = vadd.f32 %v2016, %v2135
        %v2137 = vpop.f32.mrb[0].mxu0
        %2138 = vmatprep.mubr.bf16.mxu0 0
        %2139 = vmatmul.mubr.bf16.gmra.mrb[0].mxu0 %v818
        %v2140 = vpop.f32.mrb[0].mxu0
        %v2141 = vadd.f32 %v2016, %v2140
        %v2142 = vpop.f32.mrb[0].mxu0
        %v2143 = vpop.f32.mrb[0].mxu0
        %v2144 = vadd.f32 %v2016, %v2143
        %v2145 = vpop.f32.mrb[0].mxu0
        %2146 = vmatprep.mubr.bf16.mxu0 0
        %2147 = vmatmul.mubr.bf16.gmra.mrb[0].mxu0 %v819
        %v2148 = vpop.f32.mrb[0].mxu0
        %v2149 = vadd.f32 %v2016, %v2148
        %v2150 = vpop.f32.mrb[0].mxu0
        %v2151 = vpop.f32.mrb[0].mxu0
        %v2152 = vadd.f32 %v2016, %v2151
        %v2153 = vpop.f32.mrb[0].mxu0
        %2154 = vmatprep.mubr.bf16.mxu0 0
        %2155 = vmatmul.mubr.bf16.gmra.mrb[0].mxu0 %v820
        %v2156 = vpop.f32.mrb[0].mxu0
        %v2157 = vadd.f32 %v2016, %v2156
        %v2158 = vpop.f32.mrb[0].mxu0
        %v2159 = vpop.f32.mrb[0].mxu0
        %v2160 = vadd.f32 %v2016, %v2159
        %v2161 = vpop.f32.mrb[0].mxu0
        %2162 = vdwg.mxu0
        %s2163 = scalar_lea.vmem %s5, 64
        %v2164 = vld [vmem:[%s2163] sm:$0xf]
        %v2165 = vld [vmem:[%s2163 + $0x4] sm:$0xf]
        %v2166 = vld [vmem:[%s2163 + $0x8] sm:$0xf]
        %v2167 = vld [vmem:[%s2163 + $0xc] sm:$0xf]
        %v2168 = vld [vmem:[%s2163 + $0x10] sm:$0xf]
        %v2169 = vld [vmem:[%s2163 + $0x14] sm:$0xf]
        %v2170 = vld [vmem:[%s2163 + $0x18] sm:$0xf]
        %v2171 = vld [vmem:[%s2163 + $0x1c] sm:$0xf]
        %v2172 = vld [vmem:[%s2163 + $0x20] sm:$0xf]
        %v2173 = vld [vmem:[%s2163 + $0x24] sm:$0xf]
        %v2174 = vld [vmem:[%s2163 + $0x28] sm:$0xf]
        %v2175 = vld [vmem:[%s2163 + $0x2c] sm:$0xf]
        %v2176 = vld [vmem:[%s2163 + $0x30] sm:$0xf]
        %v2177 = vld [vmem:[%s2163 + $0x34] sm:$0xf]
        %v2178 = vld [vmem:[%s2163 + $0x38] sm:$0xf]
        %v2179 = vld [vmem:[%s2163 + $0x3c] sm:$0xf]
        %s2180 = scalar_lea.vmem %s8, 1
        %v2181 = vld [vmem:[%s2180] sm:$0x1]
        %v2183 = vlaneseq
        %v2184 = vshrl.u32 %v2183, 7
        %v2185 = vsub.s32 0, %v2184
        %v2186 = vrot.slane %v2181, %v2185
        %v2204 = vunpack.c.l.b16 %v2164
        %v2205 = vunpack.c.l.b16 %v2165
        %v2206 = vunpack.c.l.b16 %v2166
        %v2207 = vunpack.c.l.b16 %v2167
        %v2208 = vunpack.c.l.b16 %v2168
        %v2209 = vunpack.c.l.b16 %v2169
        %v2210 = vunpack.c.l.b16 %v2170
        %v2211 = vunpack.c.l.b16 %v2171
        %v2212 = vunpack.c.l.b16 %v2172
        %v2213 = vunpack.c.l.b16 %v2173
        %v2214 = vunpack.c.l.b16 %v2174
        %v2215 = vunpack.c.l.b16 %v2175
        %v2216 = vunpack.c.l.b16 %v2176
        %v2217 = vunpack.c.l.b16 %v2177
        %v2218 = vunpack.c.l.b16 %v2178
        %v2219 = vunpack.c.l.b16 %v2179
        %v2220 = vpack.c.b16 %v2205, %v2204
        %v2221 = vpack.c.b16 %v2207, %v2206
        %v2222 = vpack.c.b16 %v2209, %v2208
        %v2223 = vpack.c.b16 %v2211, %v2210
        %v2224 = vpack.c.b16 %v2213, %v2212
        %v2225 = vpack.c.b16 %v2215, %v2214
        %v2226 = vpack.c.b16 %v2217, %v2216
        %v2227 = vpack.c.b16 %v2219, %v2218
        %2236 = vmatprep.subr.bf16.mxu0 0
        %2237 = vmatpush1.bf16.msra.mxu0 %v2220
        %2238 = vmatprep.subr.bf16.mxu0 0
        %2239 = vmatpush1.bf16.msra.mxu0 %v2221
        %2240 = vmatprep.subr.bf16.mxu0 0
        %2241 = vmatpush1.bf16.msra.mxu0 %v2222
        %2242 = vmatprep.subr.bf16.mxu0 0
        %2243 = vmatpush1.bf16.msra.mxu0 %v2223
        %2244 = vmatprep.subr.bf16.mxu0 0
        %2245 = vmatpush1.bf16.msra.mxu0 %v2224
        %2246 = vmatprep.subr.bf16.mxu0 0
        %2247 = vmatpush1.bf16.msra.mxu0 %v2225
        %2248 = vmatprep.subr.bf16.mxu0 0
        %2249 = vmatpush1.bf16.msra.mxu0 %v2226
        %2250 = vmatprep.subr.bf16.mxu0 0
        %2251 = vmatpush1.bf16.msra.mxu0 %v2227
        %2252 = vmatprep.subr.bf16.mxu0 0
        %2253 = vmatpush1.bf16.msra.mxu0 0
        %2254 = vmatprep.subr.bf16.mxu0 0
        %2255 = vmatpush1.bf16.msra.mxu0 0
        %2256 = vmatprep.subr.bf16.mxu0 0
        %2257 = vmatpush1.bf16.msra.mxu0 0
        %2258 = vmatprep.subr.bf16.mxu0 0
        %2259 = vmatpush1.bf16.msra.mxu0 0
        %2260 = vmatprep.subr.bf16.mxu0 0
        %2261 = vmatpush1.bf16.msra.mxu0 0
        %2262 = vmatprep.subr.bf16.mxu0 0
        %2263 = vmatpush1.bf16.msra.mxu0 0
        %2264 = vmatprep.subr.bf16.mxu0 0
        %2265 = vmatpush1.bf16.msra.mxu0 0
        %2266 = vmatprep.subr.bf16.mxu0 0
        %2267 = vmatpush1.bf16.msra.mxu0 0
        %2268 = vmatprep.mubr.bf16.mxu0 0
        %2269 = vmatmul.mubr.bf16.gmra.mrb[0].mxu0 %v813
        %v2270 = vpop.f32.mrb[0].mxu0
        %v2271 = vadd.f32 %v2186, %v2270
        %v2272 = vpop.f32.mrb[0].mxu0
        %v2273 = vpop.f32.mrb[0].mxu0
        %v2274 = vadd.f32 %v2186, %v2273
        %v2275 = vpop.f32.mrb[0].mxu0
        %2276 = vmatprep.mubr.bf16.mxu0 0
        %2277 = vmatmul.mubr.bf16.gmra.mrb[0].mxu0 %v814
        %v2278 = vpop.f32.mrb[0].mxu0
        %v2279 = vadd.f32 %v2186, %v2278
        %v2280 = vpop.f32.mrb[0].mxu0
        %v2281 = vpop.f32.mrb[0].mxu0
        %v2282 = vadd.f32 %v2186, %v2281
        %v2283 = vpop.f32.mrb[0].mxu0
        %2284 = vmatprep.mubr.bf16.mxu0 0
        %2285 = vmatmul.mubr.bf16.gmra.mrb[0].mxu0 %v815
        %v2286 = vpop.f32.mrb[0].mxu0
        %v2287 = vadd.f32 %v2186, %v2286
        %v2288 = vpop.f32.mrb[0].mxu0
        %v2289 = vpop.f32.mrb[0].mxu0
        %v2290 = vadd.f32 %v2186, %v2289
        %v2291 = vpop.f32.mrb[0].mxu0
        %2292 = vmatprep.mubr.bf16.mxu0 0
        %2293 = vmatmul.mubr.bf16.gmra.mrb[0].mxu0 %v816
        %v2294 = vpop.f32.mrb[0].mxu0
        %v2295 = vadd.f32 %v2186, %v2294
        %v2296 = vpop.f32.mrb[0].mxu0
        %v2297 = vpop.f32.mrb[0].mxu0
        %v2298 = vadd.f32 %v2186, %v2297
        %v2299 = vpop.f32.mrb[0].mxu0
        %2300 = vmatprep.mubr.bf16.mxu0 0
        %2301 = vmatmul.mubr.bf16.gmra.mrb[0].mxu0 %v817
        %v2302 = vpop.f32.mrb[0].mxu0
        %v2303 = vadd.f32 %v2186, %v2302
        %v2304 = vpop.f32.mrb[0].mxu0
        %v2305 = vpop.f32.mrb[0].mxu0
        %v2306 = vadd.f32 %v2186, %v2305
        %v2307 = vpop.f32.mrb[0].mxu0
        %2308 = vmatprep.mubr.bf16.mxu0 0
        %2309 = vmatmul.mubr.bf16.gmra.mrb[0].mxu0 %v818
        %v2310 = vpop.f32.mrb[0].mxu0
        %v2311 = vadd.f32 %v2186, %v2310
        %v2312 = vpop.f32.mrb[0].mxu0
        %v2313 = vpop.f32.mrb[0].mxu0
        %v2314 = vadd.f32 %v2186, %v2313
        %v2315 = vpop.f32.mrb[0].mxu0
        %2316 = vmatprep.mubr.bf16.mxu0 0
        %2317 = vmatmul.mubr.bf16.gmra.mrb[0].mxu0 %v819
        %v2318 = vpop.f32.mrb[0].mxu0
        %v2319 = vadd.f32 %v2186, %v2318
        %v2320 = vpop.f32.mrb[0].mxu0
        %v2321 = vpop.f32.mrb[0].mxu0
        %v2322 = vadd.f32 %v2186, %v2321
        %v2323 = vpop.f32.mrb[0].mxu0
        %2324 = vmatprep.mubr.bf16.mxu0 0
        %2325 = vmatmul.mubr.bf16.gmra.mrb[0].mxu0 %v820
        %v2326 = vpop.f32.mrb[0].mxu0
        %v2327 = vadd.f32 %v2186, %v2326
        %v2328 = vpop.f32.mrb[0].mxu0
        %v2329 = vpop.f32.mrb[0].mxu0
        %v2330 = vadd.f32 %v2186, %v2329
        %v2331 = vpop.f32.mrb[0].mxu0
        %2332 = vdwg.mxu0
        %v2333 = vpack.c.bf16 %v1934, %v1931
        %v2334 = vpack.c.bf16 %v1942, %v1939
        %v2335 = vpack.c.bf16 %v1950, %v1947
        %v2336 = vpack.c.bf16 %v1958, %v1955
        %v2337 = vpack.c.bf16 %v1966, %v1963
        %v2338 = vpack.c.bf16 %v1974, %v1971
        %v2339 = vpack.c.bf16 %v1982, %v1979
        %v2340 = vpack.c.bf16 %v1990, %v1987
        %v2341 = vpack.c.bf16 %v2104, %v2101
        %v2342 = vpack.c.bf16 %v2112, %v2109
        %v2343 = vpack.c.bf16 %v2120, %v2117
        %v2344 = vpack.c.bf16 %v2128, %v2125
        %v2345 = vpack.c.bf16 %v2136, %v2133
        %v2346 = vpack.c.bf16 %v2144, %v2141
        %v2347 = vpack.c.bf16 %v2152, %v2149
        %v2348 = vpack.c.bf16 %v2160, %v2157
        %v2350 = vsel %vm1376, %v2333, 0
        %v2353 = vsel %vm1376, %v2334, 0
        %v2356 = vsel %vm1376, %v2335, 0
        %v2359 = vsel %vm1376, %v2336, 0
        %v2362 = vsel %vm1376, %v2337, 0
        %v2365 = vsel %vm1376, %v2338, 0
        %v2368 = vsel %vm1376, %v2339, 0
        %v2371 = vsel %vm1376, %v2340, 0
        %v2374 = vsel %vm1376, %v2341, 0
        %v2377 = vsel %vm1376, %v2342, 0
        %v2380 = vsel %vm1376, %v2343, 0
        %v2383 = vsel %vm1376, %v2344, 0
        %v2386 = vsel %vm1376, %v2345, 0
        %v2389 = vsel %vm1376, %v2346, 0
        %v2392 = vsel %vm1376, %v2347, 0
        %v2395 = vsel %vm1376, %v2348, 0
        %2397 = vmatprep.subr.bf16.mxu0 0
        %2398 = vmatpush1.bf16.xpose.msra.mxu0 %v2374
        %2399 = vmatprep.subr.bf16.mxu0 0
        %2400 = vmatpush1.bf16.xpose.msra.mxu0 %v2377
        %2401 = vmatprep.subr.bf16.mxu0 0
        %2402 = vmatpush1.bf16.xpose.msra.mxu0 %v2380
        %2403 = vmatprep.subr.bf16.mxu0 0
        %2404 = vmatpush1.bf16.xpose.msra.mxu0 %v2383
        %2405 = vmatprep.subr.bf16.mxu0 0
        %2406 = vmatpush1.bf16.xpose.msra.mxu0 %v2386
        %2407 = vmatprep.subr.bf16.mxu0 0
        %2408 = vmatpush1.bf16.xpose.msra.mxu0 %v2389
        %2409 = vmatprep.subr.bf16.mxu0 0
        %2410 = vmatpush1.bf16.xpose.msra.mxu0 %v2392
        %2411 = vmatprep.subr.bf16.mxu0 0
        %2412 = vmatpush1.bf16.xpose.msra.mxu0 %v2395
        %2413 = vmatprep.subr.bf16.mxu0 0
        %2414 = vmatpush1.bf16.xpose.msra.mxu0 0
        %2415 = vmatprep.subr.bf16.mxu0 0
        %2416 = vmatpush1.bf16.xpose.msra.mxu0 0
        %2417 = vmatprep.subr.bf16.mxu0 0
        %2418 = vmatpush1.bf16.xpose.msra.mxu0 0
        %2419 = vmatprep.subr.bf16.mxu0 0
        %2420 = vmatpush1.bf16.xpose.msra.mxu0 0
        %2421 = vmatprep.subr.bf16.mxu0 0
        %2422 = vmatpush1.bf16.xpose.msra.mxu0 0
        %2423 = vmatprep.subr.bf16.mxu0 0
        %2424 = vmatpush1.bf16.xpose.msra.mxu0 0
        %2425 = vmatprep.subr.bf16.mxu0 0
        %2426 = vmatpush1.bf16.xpose.msra.mxu0 0
        %2427 = vmatprep.subr.bf16.mxu0 0
        %2428 = vmatpush1.bf16.xpose.msra.mxu0 0
        %2429 = vmatprep.mubr.bf16.mxu0 0
        %2430 = vmatmul.mubr.bf16.gmra.mrb[0].mxu0 %v2350
        %v2431 = vpop.f32.mrb[0].mxu0
        %v2432 = vadd.f32 0.0, %v2431
        %v2433 = vpop.f32.mrb[0].mxu0
        %v2434 = vpop.f32.mrb[0].mxu0
        %v2435 = vadd.f32 0.0, %v2434
        %v2436 = vpop.f32.mrb[0].mxu0
        %2437 = vmatprep.mubr.bf16.mxu0 0
        %2438 = vmatmul.mubr.bf16.gmra.mrb[0].mxu0 %v2353
        %v2439 = vpop.f32.mrb[0].mxu0
        %v2440 = vadd.f32 0.0, %v2439
        %v2441 = vpop.f32.mrb[0].mxu0
        %v2442 = vpop.f32.mrb[0].mxu0
        %v2443 = vadd.f32 0.0, %v2442
        %v2444 = vpop.f32.mrb[0].mxu0
        %2445 = vmatprep.mubr.bf16.mxu0 0
        %2446 = vmatmul.mubr.bf16.gmra.mrb[0].mxu0 %v2356
        %v2447 = vpop.f32.mrb[0].mxu0
        %v2448 = vadd.f32 0.0, %v2447
        %v2449 = vpop.f32.mrb[0].mxu0
        %v2450 = vpop.f32.mrb[0].mxu0
        %v2451 = vadd.f32 0.0, %v2450
        %v2452 = vpop.f32.mrb[0].mxu0
        %2453 = vmatprep.mubr.bf16.mxu0 0
        %2454 = vmatmul.mubr.bf16.gmra.mrb[0].mxu0 %v2359
        %v2455 = vpop.f32.mrb[0].mxu0
        %v2456 = vadd.f32 0.0, %v2455
        %v2457 = vpop.f32.mrb[0].mxu0
        %v2458 = vpop.f32.mrb[0].mxu0
        %v2459 = vadd.f32 0.0, %v2458
        %v2460 = vpop.f32.mrb[0].mxu0
        %2461 = vmatprep.mubr.bf16.mxu0 0
        %2462 = vmatmul.mubr.bf16.gmra.mrb[0].mxu0 %v2362
        %v2463 = vpop.f32.mrb[0].mxu0
        %v2464 = vadd.f32 0.0, %v2463
        %v2465 = vpop.f32.mrb[0].mxu0
        %v2466 = vpop.f32.mrb[0].mxu0
        %v2467 = vadd.f32 0.0, %v2466
        %v2468 = vpop.f32.mrb[0].mxu0
        %2469 = vmatprep.mubr.bf16.mxu0 0
        %2470 = vmatmul.mubr.bf16.gmra.mrb[0].mxu0 %v2365
        %v2471 = vpop.f32.mrb[0].mxu0
        %v2472 = vadd.f32 0.0, %v2471
        %v2473 = vpop.f32.mrb[0].mxu0
        %v2474 = vpop.f32.mrb[0].mxu0
        %v2475 = vadd.f32 0.0, %v2474
        %v2476 = vpop.f32.mrb[0].mxu0
        %2477 = vmatprep.mubr.bf16.mxu0 0
        %2478 = vmatmul.mubr.bf16.gmra.mrb[0].mxu0 %v2368
        %v2479 = vpop.f32.mrb[0].mxu0
        %v2480 = vadd.f32 0.0, %v2479
        %v2481 = vpop.f32.mrb[0].mxu0
        %v2482 = vpop.f32.mrb[0].mxu0
        %v2483 = vadd.f32 0.0, %v2482
        %v2484 = vpop.f32.mrb[0].mxu0
        %2485 = vmatprep.mubr.bf16.mxu0 0
        %2486 = vmatmul.mubr.bf16.gmra.mrb[0].mxu0 %v2371
        %v2487 = vpop.f32.mrb[0].mxu0
        %v2488 = vadd.f32 0.0, %v2487
        %v2489 = vpop.f32.mrb[0].mxu0
        %v2490 = vpop.f32.mrb[0].mxu0
        %v2491 = vadd.f32 0.0, %v2490
        %v2492 = vpop.f32.mrb[0].mxu0
        %2493 = vdwg.mxu0
        %v2494 = vmul.f32 %v2432, 0.17677669
        %v2495 = vmul.f32 %v2435, 0.17677669
        %v2496 = vmul.f32 %v2440, 0.17677669
        %v2497 = vmul.f32 %v2443, 0.17677669
        %v2498 = vmul.f32 %v2448, 0.17677669
        %v2499 = vmul.f32 %v2451, 0.17677669
        %v2500 = vmul.f32 %v2456, 0.17677669
        %v2501 = vmul.f32 %v2459, 0.17677669
        %v2502 = vmul.f32 %v2464, 0.17677669
        %v2503 = vmul.f32 %v2467, 0.17677669
        %v2504 = vmul.f32 %v2472, 0.17677669
        %v2505 = vmul.f32 %v2475, 0.17677669
        %v2506 = vmul.f32 %v2480, 0.17677669
        %v2507 = vmul.f32 %v2483, 0.17677669
        %v2508 = vmul.f32 %v2488, 0.17677669
        %v2509 = vmul.f32 %v2491, 0.17677669
        %v2510 = vsel %vm840, %v2494, -1e+30
        %v2511 = vsel %vm841, %v2495, -1e+30
        %v2512 = vsel %vm842, %v2496, -1e+30
        %v2513 = vsel %vm843, %v2497, -1e+30
        %v2514 = vsel %vm844, %v2498, -1e+30
        %v2515 = vsel %vm845, %v2499, -1e+30
        %v2516 = vsel %vm846, %v2500, -1e+30
        %v2517 = vsel %vm847, %v2501, -1e+30
        %v2518 = vsel %vm848, %v2502, -1e+30
        %v2519 = vsel %vm849, %v2503, -1e+30
        %v2520 = vsel %vm850, %v2504, -1e+30
        %v2521 = vsel %vm851, %v2505, -1e+30
        %v2522 = vsel %vm852, %v2506, -1e+30
        %v2523 = vsel %vm853, %v2507, -1e+30
        %v2524 = vsel %vm854, %v2508, -1e+30
        %v2525 = vsel %vm855, %v2509, -1e+30
        %2526 = vmax.xlane.f32.xlu0 %v2510
        %v2527 = vpop.xlane.xlu0 %2526
        %2528 = vmax.xlane.f32.xlu0 %v2511
        %v2529 = vpop.xlane.xlu0 %2528
        %2530 = vmax.xlane.f32.xlu0 %v2512
        %v2531 = vpop.xlane.xlu0 %2530
        %2532 = vmax.xlane.f32.xlu0 %v2513
        %v2533 = vpop.xlane.xlu0 %2532
        %2534 = vmax.xlane.f32.xlu0 %v2514
        %v2535 = vpop.xlane.xlu0 %2534
        %2536 = vmax.xlane.f32.xlu0 %v2515
        %v2537 = vpop.xlane.xlu0 %2536
        %2538 = vmax.xlane.f32.xlu0 %v2516
        %v2539 = vpop.xlane.xlu0 %2538
        %2540 = vmax.xlane.f32.xlu0 %v2517
        %v2541 = vpop.xlane.xlu0 %2540
        %2542 = vmax.xlane.f32.xlu0 %v2518
        %v2543 = vpop.xlane.xlu0 %2542
        %2544 = vmax.xlane.f32.xlu0 %v2519
        %v2545 = vpop.xlane.xlu0 %2544
        %2546 = vmax.xlane.f32.xlu0 %v2520
        %v2547 = vpop.xlane.xlu0 %2546
        %2548 = vmax.xlane.f32.xlu0 %v2521
        %v2549 = vpop.xlane.xlu0 %2548
        %2550 = vmax.xlane.f32.xlu0 %v2522
        %v2551 = vpop.xlane.xlu0 %2550
        %2552 = vmax.xlane.f32.xlu0 %v2523
        %v2553 = vpop.xlane.xlu0 %2552
        %2554 = vmax.xlane.f32.xlu0 %v2524
        %v2555 = vpop.xlane.xlu0 %2554
        %2556 = vmax.xlane.f32.xlu0 %v2525
        %v2557 = vpop.xlane.xlu0 %2556
        %v2558 = vsub.f32 %v2510, %v2527
        %v2559 = vsub.f32 %v2511, %v2529
        %v2560 = vsub.f32 %v2512, %v2531
        %v2561 = vsub.f32 %v2513, %v2533
        %v2562 = vsub.f32 %v2514, %v2535
        %v2563 = vsub.f32 %v2515, %v2537
        %v2564 = vsub.f32 %v2516, %v2539
        %v2565 = vsub.f32 %v2517, %v2541
        %v2566 = vsub.f32 %v2518, %v2543
        %v2567 = vsub.f32 %v2519, %v2545
        %v2568 = vsub.f32 %v2520, %v2547
        %v2569 = vsub.f32 %v2521, %v2549
        %v2570 = vsub.f32 %v2522, %v2551
        %v2571 = vsub.f32 %v2523, %v2553
        %v2572 = vsub.f32 %v2524, %v2555
        %v2573 = vsub.f32 %v2525, %v2557
        %v2574 = vmul.f32 %v2558, 1.442695
        %v2575 = vpow.pop %v2574
        %v2576 = vmul.f32 %v2559, 1.442695
        %v2577 = vpow.pop %v2576
        %v2578 = vmul.f32 %v2560, 1.442695
        %v2579 = vpow.pop %v2578
        %v2580 = vmul.f32 %v2561, 1.442695
        %v2581 = vpow.pop %v2580
        %v2582 = vmul.f32 %v2562, 1.442695
        %v2583 = vpow.pop %v2582
        %v2584 = vmul.f32 %v2563, 1.442695
        %v2585 = vpow.pop %v2584
        %v2586 = vmul.f32 %v2564, 1.442695
        %v2587 = vpow.pop %v2586
        %v2588 = vmul.f32 %v2565, 1.442695
        %v2589 = vpow.pop %v2588
        %v2590 = vmul.f32 %v2566, 1.442695
        %v2591 = vpow.pop %v2590
        %v2592 = vmul.f32 %v2567, 1.442695
        %v2593 = vpow.pop %v2592
        %v2594 = vmul.f32 %v2568, 1.442695
        %v2595 = vpow.pop %v2594
        %v2596 = vmul.f32 %v2569, 1.442695
        %v2597 = vpow.pop %v2596
        %v2598 = vmul.f32 %v2570, 1.442695
        %v2599 = vpow.pop %v2598
        %v2600 = vmul.f32 %v2571, 1.442695
        %v2601 = vpow.pop %v2600
        %v2602 = vmul.f32 %v2572, 1.442695
        %v2603 = vpow.pop %v2602
        %v2604 = vmul.f32 %v2573, 1.442695
        %v2605 = vpow.pop %v2604
        %2606 = vadd.xlane.f32.xlu0 %v2575
        %v2607 = vpop.xlane.xlu0 %2606
        %2608 = vadd.xlane.f32.xlu0 %v2577
        %v2609 = vpop.xlane.xlu0 %2608
        %2610 = vadd.xlane.f32.xlu0 %v2579
        %v2611 = vpop.xlane.xlu0 %2610
        %2612 = vadd.xlane.f32.xlu0 %v2581
        %v2613 = vpop.xlane.xlu0 %2612
        %2614 = vadd.xlane.f32.xlu0 %v2583
        %v2615 = vpop.xlane.xlu0 %2614
        %2616 = vadd.xlane.f32.xlu0 %v2585
        %v2617 = vpop.xlane.xlu0 %2616
        %2618 = vadd.xlane.f32.xlu0 %v2587
        %v2619 = vpop.xlane.xlu0 %2618
        %2620 = vadd.xlane.f32.xlu0 %v2589
        %v2621 = vpop.xlane.xlu0 %2620
        %2622 = vadd.xlane.f32.xlu0 %v2591
        %v2623 = vpop.xlane.xlu0 %2622
        %2624 = vadd.xlane.f32.xlu0 %v2593
        %v2625 = vpop.xlane.xlu0 %2624
        %2626 = vadd.xlane.f32.xlu0 %v2595
        %v2627 = vpop.xlane.xlu0 %2626
        %2628 = vadd.xlane.f32.xlu0 %v2597
        %v2629 = vpop.xlane.xlu0 %2628
        %2630 = vadd.xlane.f32.xlu0 %v2599
        %v2631 = vpop.xlane.xlu0 %2630
        %2632 = vadd.xlane.f32.xlu0 %v2601
        %v2633 = vpop.xlane.xlu0 %2632
        %2634 = vadd.xlane.f32.xlu0 %v2603
        %v2635 = vpop.xlane.xlu0 %2634
        %2636 = vadd.xlane.f32.xlu0 %v2605
        %v2637 = vpop.xlane.xlu0 %2636
        %v2638 = vrcp.pop %v2607
        %v2639 = vrcp.pop %v2609
        %v2640 = vrcp.pop %v2611
        %v2641 = vrcp.pop %v2613
        %v2642 = vrcp.pop %v2615
        %v2643 = vrcp.pop %v2617
        %v2644 = vrcp.pop %v2619
        %v2645 = vrcp.pop %v2621
        %v2646 = vrcp.pop %v2623
        %v2647 = vrcp.pop %v2625
        %v2648 = vrcp.pop %v2627
        %v2649 = vrcp.pop %v2629
        %v2650 = vrcp.pop %v2631
        %v2651 = vrcp.pop %v2633
        %v2652 = vrcp.pop %v2635
        %v2653 = vrcp.pop %v2637
        %v2654 = vmul.f32 %v2575, %v2638
        %v2655 = vmul.f32 %v2577, %v2639
        %v2656 = vmul.f32 %v2579, %v2640
        %v2657 = vmul.f32 %v2581, %v2641
        %v2658 = vmul.f32 %v2583, %v2642
        %v2659 = vmul.f32 %v2585, %v2643
        %v2660 = vmul.f32 %v2587, %v2644
        %v2661 = vmul.f32 %v2589, %v2645
        %v2662 = vmul.f32 %v2591, %v2646
        %v2663 = vmul.f32 %v2593, %v2647
        %v2664 = vmul.f32 %v2595, %v2648
        %v2665 = vmul.f32 %v2597, %v2649
        %v2666 = vmul.f32 %v2599, %v2650
        %v2667 = vmul.f32 %v2601, %v2651
        %v2668 = vmul.f32 %v2603, %v2652
        %v2669 = vmul.f32 %v2605, %v2653
        %v2670 = vpack.c.bf16 %v2655, %v2654
        %v2671 = vpack.c.bf16 %v2657, %v2656
        %v2672 = vpack.c.bf16 %v2659, %v2658
        %v2673 = vpack.c.bf16 %v2661, %v2660
        %v2674 = vpack.c.bf16 %v2663, %v2662
        %v2675 = vpack.c.bf16 %v2665, %v2664
        %v2676 = vpack.c.bf16 %v2667, %v2666
        %v2677 = vpack.c.bf16 %v2669, %v2668
        %v2678 = vpack.c.bf16 %v2274, %v2271
        %v2679 = vpack.c.bf16 %v2282, %v2279
        %v2680 = vpack.c.bf16 %v2290, %v2287
        %v2681 = vpack.c.bf16 %v2298, %v2295
        %v2682 = vpack.c.bf16 %v2306, %v2303
        %v2683 = vpack.c.bf16 %v2314, %v2311
        %v2684 = vpack.c.bf16 %v2322, %v2319
        %v2685 = vpack.c.bf16 %v2330, %v2327
        %2686 = vmatprep.subr.bf16.mxu0 0
        %2687 = vmatpush1.bf16.msra.mxu0 %v2678
        %2688 = vmatprep.subr.bf16.mxu0 0
        %2689 = vmatpush1.bf16.msra.mxu0 %v2679
        %2690 = vmatprep.subr.bf16.mxu0 0
        %2691 = vmatpush1.bf16.msra.mxu0 %v2680
        %2692 = vmatprep.subr.bf16.mxu0 0
        %2693 = vmatpush1.bf16.msra.mxu0 %v2681
        %2694 = vmatprep.subr.bf16.mxu0 0
        %2695 = vmatpush1.bf16.msra.mxu0 %v2682
        %2696 = vmatprep.subr.bf16.mxu0 0
        %2697 = vmatpush1.bf16.msra.mxu0 %v2683
        %2698 = vmatprep.subr.bf16.mxu0 0
        %2699 = vmatpush1.bf16.msra.mxu0 %v2684
        %2700 = vmatprep.subr.bf16.mxu0 0
        %2701 = vmatpush1.bf16.msra.mxu0 %v2685
        %2702 = vmatprep.subr.bf16.mxu0 0
        %2703 = vmatpush1.bf16.msra.mxu0 0
        %2704 = vmatprep.subr.bf16.mxu0 0
        %2705 = vmatpush1.bf16.msra.mxu0 0
        %2706 = vmatprep.subr.bf16.mxu0 0
        %2707 = vmatpush1.bf16.msra.mxu0 0
        %2708 = vmatprep.subr.bf16.mxu0 0
        %2709 = vmatpush1.bf16.msra.mxu0 0
        %2710 = vmatprep.subr.bf16.mxu0 0
        %2711 = vmatpush1.bf16.msra.mxu0 0
        %2712 = vmatprep.subr.bf16.mxu0 0
        %2713 = vmatpush1.bf16.msra.mxu0 0
        %2714 = vmatprep.subr.bf16.mxu0 0
        %2715 = vmatpush1.bf16.msra.mxu0 0
        %2716 = vmatprep.subr.bf16.mxu0 0
        %2717 = vmatpush1.bf16.msra.mxu0 0
        %2718 = vmatprep.mubr.bf16.mxu0 0
        %2719 = vmatmul.mubr.bf16.gmra.mrb[0].mxu0 %v2670
        %v2720 = vpop.f32.mrb[0].mxu0
        %v2721 = vadd.f32 0.0, %v2720
        %v2722 = vpop.f32.mrb[0].mxu0
        %v2723 = vpop.f32.mrb[0].mxu0
        %v2724 = vadd.f32 0.0, %v2723
        %v2725 = vpop.f32.mrb[0].mxu0
        %2726 = vmatprep.mubr.bf16.mxu0 0
        %2727 = vmatmul.mubr.bf16.gmra.mrb[0].mxu0 %v2671
        %v2728 = vpop.f32.mrb[0].mxu0
        %v2729 = vadd.f32 0.0, %v2728
        %v2730 = vpop.f32.mrb[0].mxu0
        %v2731 = vpop.f32.mrb[0].mxu0
        %v2732 = vadd.f32 0.0, %v2731
        %v2733 = vpop.f32.mrb[0].mxu0
        %2734 = vmatprep.mubr.bf16.mxu0 0
        %2735 = vmatmul.mubr.bf16.gmra.mrb[0].mxu0 %v2672
        %v2736 = vpop.f32.mrb[0].mxu0
        %v2737 = vadd.f32 0.0, %v2736
        %v2738 = vpop.f32.mrb[0].mxu0
        %v2739 = vpop.f32.mrb[0].mxu0
        %v2740 = vadd.f32 0.0, %v2739
        %v2741 = vpop.f32.mrb[0].mxu0
        %2742 = vmatprep.mubr.bf16.mxu0 0
        %2743 = vmatmul.mubr.bf16.gmra.mrb[0].mxu0 %v2673
        %v2744 = vpop.f32.mrb[0].mxu0
        %v2745 = vadd.f32 0.0, %v2744
        %v2746 = vpop.f32.mrb[0].mxu0
        %v2747 = vpop.f32.mrb[0].mxu0
        %v2748 = vadd.f32 0.0, %v2747
        %v2749 = vpop.f32.mrb[0].mxu0
        %2750 = vmatprep.mubr.bf16.mxu0 0
        %2751 = vmatmul.mubr.bf16.gmra.mrb[0].mxu0 %v2674
        %v2752 = vpop.f32.mrb[0].mxu0
        %v2753 = vadd.f32 0.0, %v2752
        %v2754 = vpop.f32.mrb[0].mxu0
        %v2755 = vpop.f32.mrb[0].mxu0
        %v2756 = vadd.f32 0.0, %v2755
        %v2757 = vpop.f32.mrb[0].mxu0
        %2758 = vmatprep.mubr.bf16.mxu0 0
        %2759 = vmatmul.mubr.bf16.gmra.mrb[0].mxu0 %v2675
        %v2760 = vpop.f32.mrb[0].mxu0
        %v2761 = vadd.f32 0.0, %v2760
        %v2762 = vpop.f32.mrb[0].mxu0
        %v2763 = vpop.f32.mrb[0].mxu0
        %v2764 = vadd.f32 0.0, %v2763
        %v2765 = vpop.f32.mrb[0].mxu0
        %2766 = vmatprep.mubr.bf16.mxu0 0
        %2767 = vmatmul.mubr.bf16.gmra.mrb[0].mxu0 %v2676
        %v2768 = vpop.f32.mrb[0].mxu0
        %v2769 = vadd.f32 0.0, %v2768
        %v2770 = vpop.f32.mrb[0].mxu0
        %v2771 = vpop.f32.mrb[0].mxu0
        %v2772 = vadd.f32 0.0, %v2771
        %v2773 = vpop.f32.mrb[0].mxu0
        %2774 = vmatprep.mubr.bf16.mxu0 0
        %2775 = vmatmul.mubr.bf16.gmra.mrb[0].mxu0 %v2677
        %v2776 = vpop.f32.mrb[0].mxu0
        %v2777 = vadd.f32 0.0, %v2776
        %v2778 = vpop.f32.mrb[0].mxu0
        %v2779 = vpop.f32.mrb[0].mxu0
        %v2780 = vadd.f32 0.0, %v2779
        %v2781 = vpop.f32.mrb[0].mxu0
        %2782 = vdwg.mxu0
        %v2783 = vpack.c.bf16 %v2724, %v2721
        %v2784 = vpack.c.bf16 %v2732, %v2729
        %v2785 = vpack.c.bf16 %v2740, %v2737
        %v2786 = vpack.c.bf16 %v2748, %v2745
        %v2787 = vpack.c.bf16 %v2756, %v2753
        %v2788 = vpack.c.bf16 %v2764, %v2761
        %v2789 = vpack.c.bf16 %v2772, %v2769
        %v2790 = vpack.c.bf16 %v2780, %v2777
        %s2791 = scalar_lea.vmem %s9, 16
        %v2792 = vld [vmem:[%s2791] sm:$0xf]
        %v2793 = vld [vmem:[%s2791 + $0x4] sm:$0xf]
        %v2794 = vld [vmem:[%s2791 + $0x8] sm:$0xf]
        %v2795 = vld [vmem:[%s2791 + $0xc] sm:$0xf]
        %v2800 = vunpack.c.l.b16 %v2792
        %v2801 = vunpack.c.l.b16 %v2793
        %v2802 = vunpack.c.l.b16 %v2794
        %v2803 = vunpack.c.l.b16 %v2795
        %v2804 = vpack.c.b16 %v2801, %v2800
        %v2805 = vpack.c.b16 %v2803, %v2802
        %v2809 = vsel %vm1376, %v2783, 0
        %v2812 = vsel %vm1376, %v2784, 0
        %v2815 = vsel %vm1376, %v2785, 0
        %v2818 = vsel %vm1376, %v2786, 0
        %v2821 = vsel %vm1376, %v2787, 0
        %v2824 = vsel %vm1376, %v2788, 0
        %v2827 = vsel %vm1376, %v2789, 0
        %v2830 = vsel %vm1376, %v2790, 0
        %2832 = vmatprep.subr.bf16.mxu0 0
        %2833 = vmatpush1.bf16.msra.mxu0 %v2804
        %2834 = vmatprep.subr.bf16.mxu0 0
        %2835 = vmatpush1.bf16.msra.mxu0 %v2805
        %2836 = vmatprep.subr.bf16.mxu0 0
        %2837 = vmatpush1.bf16.msra.mxu0 0
        %2838 = vmatprep.subr.bf16.mxu0 0
        %2839 = vmatpush1.bf16.msra.mxu0 0
        %2840 = vmatprep.subr.bf16.mxu0 0
        %2841 = vmatpush1.bf16.msra.mxu0 0
        %2842 = vmatprep.subr.bf16.mxu0 0
        %2843 = vmatpush1.bf16.msra.mxu0 0
        %2844 = vmatprep.subr.bf16.mxu0 0
        %2845 = vmatpush1.bf16.msra.mxu0 0
        %2846 = vmatprep.subr.bf16.mxu0 0
        %2847 = vmatpush1.bf16.msra.mxu0 0
        %2848 = vmatprep.subr.bf16.mxu0 0
        %2849 = vmatpush1.bf16.msra.mxu0 0
        %2850 = vmatprep.subr.bf16.mxu0 0
        %2851 = vmatpush1.bf16.msra.mxu0 0
        %2852 = vmatprep.subr.bf16.mxu0 0
        %2853 = vmatpush1.bf16.msra.mxu0 0
        %2854 = vmatprep.subr.bf16.mxu0 0
        %2855 = vmatpush1.bf16.msra.mxu0 0
        %2856 = vmatprep.subr.bf16.mxu0 0
        %2857 = vmatpush1.bf16.msra.mxu0 0
        %2858 = vmatprep.subr.bf16.mxu0 0
        %2859 = vmatpush1.bf16.msra.mxu0 0
        %2860 = vmatprep.subr.bf16.mxu0 0
        %2861 = vmatpush1.bf16.msra.mxu0 0
        %2862 = vmatprep.subr.bf16.mxu0 0
        %2863 = vmatpush1.bf16.msra.mxu0 0
        %2864 = vmatprep.mubr.bf16.mxu0 0
        %2865 = vmatmul.mubr.bf16.gmra.mrb[0].mxu0 %v2809
        %v2866 = vpop.f32.mrb[0].mxu0
        %v2867 = vadd.f32 0.0, %v2866
        %v2868 = vpop.f32.mrb[0].mxu0
        %v2869 = vpop.f32.mrb[0].mxu0
        %v2870 = vadd.f32 0.0, %v2869
        %v2871 = vpop.f32.mrb[0].mxu0
        %2872 = vmatprep.mubr.bf16.mxu0 0
        %2873 = vmatmul.mubr.bf16.gmra.mrb[0].mxu0 %v2812
        %v2874 = vpop.f32.mrb[0].mxu0
        %v2875 = vadd.f32 0.0, %v2874
        %v2876 = vpop.f32.mrb[0].mxu0
        %v2877 = vpop.f32.mrb[0].mxu0
        %v2878 = vadd.f32 0.0, %v2877
        %v2879 = vpop.f32.mrb[0].mxu0
        %2880 = vmatprep.mubr.bf16.mxu0 0
        %2881 = vmatmul.mubr.bf16.gmra.mrb[0].mxu0 %v2815
        %v2882 = vpop.f32.mrb[0].mxu0
        %v2883 = vadd.f32 0.0, %v2882
        %v2884 = vpop.f32.mrb[0].mxu0
        %v2885 = vpop.f32.mrb[0].mxu0
        %v2886 = vadd.f32 0.0, %v2885
        %v2887 = vpop.f32.mrb[0].mxu0
        %2888 = vmatprep.mubr.bf16.mxu0 0
        %2889 = vmatmul.mubr.bf16.gmra.mrb[0].mxu0 %v2818
        %v2890 = vpop.f32.mrb[0].mxu0
        %v2891 = vadd.f32 0.0, %v2890
        %v2892 = vpop.f32.mrb[0].mxu0
        %v2893 = vpop.f32.mrb[0].mxu0
        %v2894 = vadd.f32 0.0, %v2893
        %v2895 = vpop.f32.mrb[0].mxu0
        %2896 = vmatprep.mubr.bf16.mxu0 0
        %2897 = vmatmul.mubr.bf16.gmra.mrb[0].mxu0 %v2821
        %v2898 = vpop.f32.mrb[0].mxu0
        %v2899 = vadd.f32 0.0, %v2898
        %v2900 = vpop.f32.mrb[0].mxu0
        %v2901 = vpop.f32.mrb[0].mxu0
        %v2902 = vadd.f32 0.0, %v2901
        %v2903 = vpop.f32.mrb[0].mxu0
        %2904 = vmatprep.mubr.bf16.mxu0 0
        %2905 = vmatmul.mubr.bf16.gmra.mrb[0].mxu0 %v2824
        %v2906 = vpop.f32.mrb[0].mxu0
        %v2907 = vadd.f32 0.0, %v2906
        %v2908 = vpop.f32.mrb[0].mxu0
        %v2909 = vpop.f32.mrb[0].mxu0
        %v2910 = vadd.f32 0.0, %v2909
        %v2911 = vpop.f32.mrb[0].mxu0
        %2912 = vmatprep.mubr.bf16.mxu0 0
        %2913 = vmatmul.mubr.bf16.gmra.mrb[0].mxu0 %v2827
        %v2914 = vpop.f32.mrb[0].mxu0
        %v2915 = vadd.f32 0.0, %v2914
        %v2916 = vpop.f32.mrb[0].mxu0
        %v2917 = vpop.f32.mrb[0].mxu0
        %v2918 = vadd.f32 0.0, %v2917
        %v2919 = vpop.f32.mrb[0].mxu0
        %2920 = vmatprep.mubr.bf16.mxu0 0
        %2921 = vmatmul.mubr.bf16.gmra.mrb[0].mxu0 %v2830
        %v2922 = vpop.f32.mrb[0].mxu0
        %v2923 = vadd.f32 0.0, %v2922
        %v2924 = vpop.f32.mrb[0].mxu0
        %v2925 = vpop.f32.mrb[0].mxu0
        %v2926 = vadd.f32 0.0, %v2925
        %v2927 = vpop.f32.mrb[0].mxu0
        %2928 = vdwg.mxu0
        %v2933 = vunpack.c.l.b16 %v1819
        %v2934 = vunpack.c.l.b16 %v1820
        %v2935 = vunpack.c.l.b16 %v1821
        %v2936 = vunpack.c.l.b16 %v1822
        %v2937 = vpack.c.b16 %v2934, %v2933
        %v2938 = vpack.c.b16 %v2936, %v2935
        %v2942 = vsel %vm1376, %v1811, 0
        %v2945 = vsel %vm1376, %v1812, 0
        %v2948 = vsel %vm1376, %v1813, 0
        %v2951 = vsel %vm1376, %v1814, 0
        %v2954 = vsel %vm1376, %v1815, 0
        %v2957 = vsel %vm1376, %v1816, 0
        %v2960 = vsel %vm1376, %v1817, 0
        %v2963 = vsel %vm1376, %v1818, 0
        %2965 = vmatprep.subr.bf16.mxu0 0
        %2966 = vmatpush1.bf16.msra.mxu0 %v2937
        %2967 = vmatprep.subr.bf16.mxu0 0
        %2968 = vmatpush1.bf16.msra.mxu0 %v2938
        %2969 = vmatprep.subr.bf16.mxu0 0
        %2970 = vmatpush1.bf16.msra.mxu0 0
        %2971 = vmatprep.subr.bf16.mxu0 0
        %2972 = vmatpush1.bf16.msra.mxu0 0
        %2973 = vmatprep.subr.bf16.mxu0 0
        %2974 = vmatpush1.bf16.msra.mxu0 0
        %2975 = vmatprep.subr.bf16.mxu0 0
        %2976 = vmatpush1.bf16.msra.mxu0 0
        %2977 = vmatprep.subr.bf16.mxu0 0
        %2978 = vmatpush1.bf16.msra.mxu0 0
        %2979 = vmatprep.subr.bf16.mxu0 0
        %2980 = vmatpush1.bf16.msra.mxu0 0
        %2981 = vmatprep.subr.bf16.mxu0 0
        %2982 = vmatpush1.bf16.msra.mxu0 0
        %2983 = vmatprep.subr.bf16.mxu0 0
        %2984 = vmatpush1.bf16.msra.mxu0 0
        %2985 = vmatprep.subr.bf16.mxu0 0
        %2986 = vmatpush1.bf16.msra.mxu0 0
        %2987 = vmatprep.subr.bf16.mxu0 0
        %2988 = vmatpush1.bf16.msra.mxu0 0
        %2989 = vmatprep.subr.bf16.mxu0 0
        %2990 = vmatpush1.bf16.msra.mxu0 0
        %2991 = vmatprep.subr.bf16.mxu0 0
        %2992 = vmatpush1.bf16.msra.mxu0 0
        %2993 = vmatprep.subr.bf16.mxu0 0
        %2994 = vmatpush1.bf16.msra.mxu0 0
        %2995 = vmatprep.subr.bf16.mxu0 0
        %2996 = vmatpush1.bf16.msra.mxu0 0
        %2997 = vmatprep.mubr.bf16.mxu0 0
        %2998 = vmatmul.mubr.bf16.gmra.mrb[0].mxu0 %v2942
        %v2999 = vpop.f32.mrb[0].mxu0
        %v3000 = vadd.f32 %v2867, %v2999
        %v3001 = vpop.f32.mrb[0].mxu0
        %v3002 = vpop.f32.mrb[0].mxu0
        %v3003 = vadd.f32 %v2870, %v3002
        %v3004 = vpop.f32.mrb[0].mxu0
        %3005 = vmatprep.mubr.bf16.mxu0 0
        %3006 = vmatmul.mubr.bf16.gmra.mrb[0].mxu0 %v2945
        %v3007 = vpop.f32.mrb[0].mxu0
        %v3008 = vadd.f32 %v2875, %v3007
        %v3009 = vpop.f32.mrb[0].mxu0
        %v3010 = vpop.f32.mrb[0].mxu0
        %v3011 = vadd.f32 %v2878, %v3010
        %v3012 = vpop.f32.mrb[0].mxu0
        %3013 = vmatprep.mubr.bf16.mxu0 0
        %3014 = vmatmul.mubr.bf16.gmra.mrb[0].mxu0 %v2948
        %v3015 = vpop.f32.mrb[0].mxu0
        %v3016 = vadd.f32 %v2883, %v3015
        %v3017 = vpop.f32.mrb[0].mxu0
        %v3018 = vpop.f32.mrb[0].mxu0
        %v3019 = vadd.f32 %v2886, %v3018
        %v3020 = vpop.f32.mrb[0].mxu0
        %3021 = vmatprep.mubr.bf16.mxu0 0
        %3022 = vmatmul.mubr.bf16.gmra.mrb[0].mxu0 %v2951
        %v3023 = vpop.f32.mrb[0].mxu0
        %v3024 = vadd.f32 %v2891, %v3023
        %v3025 = vpop.f32.mrb[0].mxu0
        %v3026 = vpop.f32.mrb[0].mxu0
        %v3027 = vadd.f32 %v2894, %v3026
        %v3028 = vpop.f32.mrb[0].mxu0
        %3029 = vmatprep.mubr.bf16.mxu0 0
        %3030 = vmatmul.mubr.bf16.gmra.mrb[0].mxu0 %v2954
        %v3031 = vpop.f32.mrb[0].mxu0
        %v3032 = vadd.f32 %v2899, %v3031
        %v3033 = vpop.f32.mrb[0].mxu0
        %v3034 = vpop.f32.mrb[0].mxu0
        %v3035 = vadd.f32 %v2902, %v3034
        %v3036 = vpop.f32.mrb[0].mxu0
        %3037 = vmatprep.mubr.bf16.mxu0 0
        %3038 = vmatmul.mubr.bf16.gmra.mrb[0].mxu0 %v2957
        %v3039 = vpop.f32.mrb[0].mxu0
        %v3040 = vadd.f32 %v2907, %v3039
        %v3041 = vpop.f32.mrb[0].mxu0
        %v3042 = vpop.f32.mrb[0].mxu0
        %v3043 = vadd.f32 %v2910, %v3042
        %v3044 = vpop.f32.mrb[0].mxu0
        %3045 = vmatprep.mubr.bf16.mxu0 0
        %3046 = vmatmul.mubr.bf16.gmra.mrb[0].mxu0 %v2960
        %v3047 = vpop.f32.mrb[0].mxu0
        %v3048 = vadd.f32 %v2915, %v3047
        %v3049 = vpop.f32.mrb[0].mxu0
        %v3050 = vpop.f32.mrb[0].mxu0
        %v3051 = vadd.f32 %v2918, %v3050
        %v3052 = vpop.f32.mrb[0].mxu0
        %3053 = vmatprep.mubr.bf16.mxu0 0
        %3054 = vmatmul.mubr.bf16.gmra.mrb[0].mxu0 %v2963
        %v3055 = vpop.f32.mrb[0].mxu0
        %v3056 = vadd.f32 %v2923, %v3055
        %v3057 = vpop.f32.mrb[0].mxu0
        %v3058 = vpop.f32.mrb[0].mxu0
        %v3059 = vadd.f32 %v2926, %v3058
        %v3060 = vpop.f32.mrb[0].mxu0
        %3061 = vdwg.mxu0
        %s3062 = scalar_lea.vmem %s3, 128
        %v3063 = vld [vmem:[%s3062] sm:$0xf]
        %v3064 = vld [vmem:[%s3062 + $0x4] sm:$0xf]
        %v3065 = vld [vmem:[%s3062 + $0x8] sm:$0xf]
        %v3066 = vld [vmem:[%s3062 + $0xc] sm:$0xf]
        %v3067 = vld [vmem:[%s3062 + $0x10] sm:$0xf]
        %v3068 = vld [vmem:[%s3062 + $0x14] sm:$0xf]
        %v3069 = vld [vmem:[%s3062 + $0x18] sm:$0xf]
        %v3070 = vld [vmem:[%s3062 + $0x1c] sm:$0xf]
        %v3071 = vld [vmem:[%s3062 + $0x20] sm:$0xf]
        %v3072 = vld [vmem:[%s3062 + $0x24] sm:$0xf]
        %v3073 = vld [vmem:[%s3062 + $0x28] sm:$0xf]
        %v3074 = vld [vmem:[%s3062 + $0x2c] sm:$0xf]
        %v3075 = vld [vmem:[%s3062 + $0x30] sm:$0xf]
        %v3076 = vld [vmem:[%s3062 + $0x34] sm:$0xf]
        %v3077 = vld [vmem:[%s3062 + $0x38] sm:$0xf]
        %v3078 = vld [vmem:[%s3062 + $0x3c] sm:$0xf]
        %s3079 = scalar_lea.vmem %s6, 2
        %v3080 = vld [vmem:[%s3079] sm:$0x1]
        %v3082 = vlaneseq
        %v3083 = vshrl.u32 %v3082, 7
        %v3084 = vsub.s32 0, %v3083
        %v3085 = vrot.slane %v3080, %v3084
        %v3103 = vunpack.c.l.b16 %v3063
        %v3104 = vunpack.c.l.b16 %v3064
        %v3105 = vunpack.c.l.b16 %v3065
        %v3106 = vunpack.c.l.b16 %v3066
        %v3107 = vunpack.c.l.b16 %v3067
        %v3108 = vunpack.c.l.b16 %v3068
        %v3109 = vunpack.c.l.b16 %v3069
        %v3110 = vunpack.c.l.b16 %v3070
        %v3111 = vunpack.c.l.b16 %v3071
        %v3112 = vunpack.c.l.b16 %v3072
        %v3113 = vunpack.c.l.b16 %v3073
        %v3114 = vunpack.c.l.b16 %v3074
        %v3115 = vunpack.c.l.b16 %v3075
        %v3116 = vunpack.c.l.b16 %v3076
        %v3117 = vunpack.c.l.b16 %v3077
        %v3118 = vunpack.c.l.b16 %v3078
        %v3119 = vpack.c.b16 %v3104, %v3103
        %v3120 = vpack.c.b16 %v3106, %v3105
        %v3121 = vpack.c.b16 %v3108, %v3107
        %v3122 = vpack.c.b16 %v3110, %v3109
        %v3123 = vpack.c.b16 %v3112, %v3111
        %v3124 = vpack.c.b16 %v3114, %v3113
        %v3125 = vpack.c.b16 %v3116, %v3115
        %v3126 = vpack.c.b16 %v3118, %v3117
        %3135 = vmatprep.subr.bf16.mxu0 0
        %3136 = vmatpush1.bf16.msra.mxu0 %v3119
        %3137 = vmatprep.subr.bf16.mxu0 0
        %3138 = vmatpush1.bf16.msra.mxu0 %v3120
        %3139 = vmatprep.subr.bf16.mxu0 0
        %3140 = vmatpush1.bf16.msra.mxu0 %v3121
        %3141 = vmatprep.subr.bf16.mxu0 0
        %3142 = vmatpush1.bf16.msra.mxu0 %v3122
        %3143 = vmatprep.subr.bf16.mxu0 0
        %3144 = vmatpush1.bf16.msra.mxu0 %v3123
        %3145 = vmatprep.subr.bf16.mxu0 0
        %3146 = vmatpush1.bf16.msra.mxu0 %v3124
        %3147 = vmatprep.subr.bf16.mxu0 0
        %3148 = vmatpush1.bf16.msra.mxu0 %v3125
        %3149 = vmatprep.subr.bf16.mxu0 0
        %3150 = vmatpush1.bf16.msra.mxu0 %v3126
        %3151 = vmatprep.subr.bf16.mxu0 0
        %3152 = vmatpush1.bf16.msra.mxu0 0
        %3153 = vmatprep.subr.bf16.mxu0 0
        %3154 = vmatpush1.bf16.msra.mxu0 0
        %3155 = vmatprep.subr.bf16.mxu0 0
        %3156 = vmatpush1.bf16.msra.mxu0 0
        %3157 = vmatprep.subr.bf16.mxu0 0
        %3158 = vmatpush1.bf16.msra.mxu0 0
        %3159 = vmatprep.subr.bf16.mxu0 0
        %3160 = vmatpush1.bf16.msra.mxu0 0
        %3161 = vmatprep.subr.bf16.mxu0 0
        %3162 = vmatpush1.bf16.msra.mxu0 0
        %3163 = vmatprep.subr.bf16.mxu0 0
        %3164 = vmatpush1.bf16.msra.mxu0 0
        %3165 = vmatprep.subr.bf16.mxu0 0
        %3166 = vmatpush1.bf16.msra.mxu0 0
        %3167 = vmatprep.mubr.bf16.mxu0 0
        %3168 = vmatmul.mubr.bf16.gmra.mrb[0].mxu0 %v813
        %v3169 = vpop.f32.mrb[0].mxu0
        %v3170 = vadd.f32 %v3085, %v3169
        %v3171 = vpop.f32.mrb[0].mxu0
        %v3172 = vpop.f32.mrb[0].mxu0
        %v3173 = vadd.f32 %v3085, %v3172
        %v3174 = vpop.f32.mrb[0].mxu0
        %3175 = vmatprep.mubr.bf16.mxu0 0
        %3176 = vmatmul.mubr.bf16.gmra.mrb[0].mxu0 %v814
        %v3177 = vpop.f32.mrb[0].mxu0
        %v3178 = vadd.f32 %v3085, %v3177
        %v3179 = vpop.f32.mrb[0].mxu0
        %v3180 = vpop.f32.mrb[0].mxu0
        %v3181 = vadd.f32 %v3085, %v3180
        %v3182 = vpop.f32.mrb[0].mxu0
        %3183 = vmatprep.mubr.bf16.mxu0 0
        %3184 = vmatmul.mubr.bf16.gmra.mrb[0].mxu0 %v815
        %v3185 = vpop.f32.mrb[0].mxu0
        %v3186 = vadd.f32 %v3085, %v3185
        %v3187 = vpop.f32.mrb[0].mxu0
        %v3188 = vpop.f32.mrb[0].mxu0
        %v3189 = vadd.f32 %v3085, %v3188
        %v3190 = vpop.f32.mrb[0].mxu0
        %3191 = vmatprep.mubr.bf16.mxu0 0
        %3192 = vmatmul.mubr.bf16.gmra.mrb[0].mxu0 %v816
        %v3193 = vpop.f32.mrb[0].mxu0
        %v3194 = vadd.f32 %v3085, %v3193
        %v3195 = vpop.f32.mrb[0].mxu0
        %v3196 = vpop.f32.mrb[0].mxu0
        %v3197 = vadd.f32 %v3085, %v3196
        %v3198 = vpop.f32.mrb[0].mxu0
        %3199 = vmatprep.mubr.bf16.mxu0 0
        %3200 = vmatmul.mubr.bf16.gmra.mrb[0].mxu0 %v817
        %v3201 = vpop.f32.mrb[0].mxu0
        %v3202 = vadd.f32 %v3085, %v3201
        %v3203 = vpop.f32.mrb[0].mxu0
        %v3204 = vpop.f32.mrb[0].mxu0
        %v3205 = vadd.f32 %v3085, %v3204
        %v3206 = vpop.f32.mrb[0].mxu0
        %3207 = vmatprep.mubr.bf16.mxu0 0
        %3208 = vmatmul.mubr.bf16.gmra.mrb[0].mxu0 %v818
        %v3209 = vpop.f32.mrb[0].mxu0
        %v3210 = vadd.f32 %v3085, %v3209
        %v3211 = vpop.f32.mrb[0].mxu0
        %v3212 = vpop.f32.mrb[0].mxu0
        %v3213 = vadd.f32 %v3085, %v3212
        %v3214 = vpop.f32.mrb[0].mxu0
        %3215 = vmatprep.mubr.bf16.mxu0 0
        %3216 = vmatmul.mubr.bf16.gmra.mrb[0].mxu0 %v819
        %v3217 = vpop.f32.mrb[0].mxu0
        %v3218 = vadd.f32 %v3085, %v3217
        %v3219 = vpop.f32.mrb[0].mxu0
        %v3220 = vpop.f32.mrb[0].mxu0
        %v3221 = vadd.f32 %v3085, %v3220
        %v3222 = vpop.f32.mrb[0].mxu0
        %3223 = vmatprep.mubr.bf16.mxu0 0
        %3224 = vmatmul.mubr.bf16.gmra.mrb[0].mxu0 %v820
        %v3225 = vpop.f32.mrb[0].mxu0
        %v3226 = vadd.f32 %v3085, %v3225
        %v3227 = vpop.f32.mrb[0].mxu0
        %v3228 = vpop.f32.mrb[0].mxu0
        %v3229 = vadd.f32 %v3085, %v3228
        %v3230 = vpop.f32.mrb[0].mxu0
        %3231 = vdwg.mxu0
        %s3232 = scalar_lea.vmem %s4, 128
        %v3233 = vld [vmem:[%s3232] sm:$0xf]
        %v3234 = vld [vmem:[%s3232 + $0x4] sm:$0xf]
        %v3235 = vld [vmem:[%s3232 + $0x8] sm:$0xf]
        %v3236 = vld [vmem:[%s3232 + $0xc] sm:$0xf]
        %v3237 = vld [vmem:[%s3232 + $0x10] sm:$0xf]
        %v3238 = vld [vmem:[%s3232 + $0x14] sm:$0xf]
        %v3239 = vld [vmem:[%s3232 + $0x18] sm:$0xf]
        %v3240 = vld [vmem:[%s3232 + $0x1c] sm:$0xf]
        %v3241 = vld [vmem:[%s3232 + $0x20] sm:$0xf]
        %v3242 = vld [vmem:[%s3232 + $0x24] sm:$0xf]
        %v3243 = vld [vmem:[%s3232 + $0x28] sm:$0xf]
        %v3244 = vld [vmem:[%s3232 + $0x2c] sm:$0xf]
        %v3245 = vld [vmem:[%s3232 + $0x30] sm:$0xf]
        %v3246 = vld [vmem:[%s3232 + $0x34] sm:$0xf]
        %v3247 = vld [vmem:[%s3232 + $0x38] sm:$0xf]
        %v3248 = vld [vmem:[%s3232 + $0x3c] sm:$0xf]
        %s3249 = scalar_lea.vmem %s7, 2
        %v3250 = vld [vmem:[%s3249] sm:$0x1]
        %v3252 = vlaneseq
        %v3253 = vshrl.u32 %v3252, 7
        %v3254 = vsub.s32 0, %v3253
        %v3255 = vrot.slane %v3250, %v3254
        %v3273 = vunpack.c.l.b16 %v3233
        %v3274 = vunpack.c.l.b16 %v3234
        %v3275 = vunpack.c.l.b16 %v3235
        %v3276 = vunpack.c.l.b16 %v3236
        %v3277 = vunpack.c.l.b16 %v3237
        %v3278 = vunpack.c.l.b16 %v3238
        %v3279 = vunpack.c.l.b16 %v3239
        %v3280 = vunpack.c.l.b16 %v3240
        %v3281 = vunpack.c.l.b16 %v3241
        %v3282 = vunpack.c.l.b16 %v3242
        %v3283 = vunpack.c.l.b16 %v3243
        %v3284 = vunpack.c.l.b16 %v3244
        %v3285 = vunpack.c.l.b16 %v3245
        %v3286 = vunpack.c.l.b16 %v3246
        %v3287 = vunpack.c.l.b16 %v3247
        %v3288 = vunpack.c.l.b16 %v3248
        %v3289 = vpack.c.b16 %v3274, %v3273
        %v3290 = vpack.c.b16 %v3276, %v3275
        %v3291 = vpack.c.b16 %v3278, %v3277
        %v3292 = vpack.c.b16 %v3280, %v3279
        %v3293 = vpack.c.b16 %v3282, %v3281
        %v3294 = vpack.c.b16 %v3284, %v3283
        %v3295 = vpack.c.b16 %v3286, %v3285
        %v3296 = vpack.c.b16 %v3288, %v3287
        %3305 = vmatprep.subr.bf16.mxu0 0
        %3306 = vmatpush1.bf16.msra.mxu0 %v3289
        %3307 = vmatprep.subr.bf16.mxu0 0
        %3308 = vmatpush1.bf16.msra.mxu0 %v3290
        %3309 = vmatprep.subr.bf16.mxu0 0
        %3310 = vmatpush1.bf16.msra.mxu0 %v3291
        %3311 = vmatprep.subr.bf16.mxu0 0
        %3312 = vmatpush1.bf16.msra.mxu0 %v3292
        %3313 = vmatprep.subr.bf16.mxu0 0
        %3314 = vmatpush1.bf16.msra.mxu0 %v3293
        %3315 = vmatprep.subr.bf16.mxu0 0
        %3316 = vmatpush1.bf16.msra.mxu0 %v3294
        %3317 = vmatprep.subr.bf16.mxu0 0
        %3318 = vmatpush1.bf16.msra.mxu0 %v3295
        %3319 = vmatprep.subr.bf16.mxu0 0
        %3320 = vmatpush1.bf16.msra.mxu0 %v3296
        %3321 = vmatprep.subr.bf16.mxu0 0
        %3322 = vmatpush1.bf16.msra.mxu0 0
        %3323 = vmatprep.subr.bf16.mxu0 0
        %3324 = vmatpush1.bf16.msra.mxu0 0
        %3325 = vmatprep.subr.bf16.mxu0 0
        %3326 = vmatpush1.bf16.msra.mxu0 0
        %3327 = vmatprep.subr.bf16.mxu0 0
        %3328 = vmatpush1.bf16.msra.mxu0 0
        %3329 = vmatprep.subr.bf16.mxu0 0
        %3330 = vmatpush1.bf16.msra.mxu0 0
        %3331 = vmatprep.subr.bf16.mxu0 0
        %3332 = vmatpush1.bf16.msra.mxu0 0
        %3333 = vmatprep.subr.bf16.mxu0 0
        %3334 = vmatpush1.bf16.msra.mxu0 0
        %3335 = vmatprep.subr.bf16.mxu0 0
        %3336 = vmatpush1.bf16.msra.mxu0 0
        %3337 = vmatprep.mubr.bf16.mxu0 0
        %3338 = vmatmul.mubr.bf16.gmra.mrb[0].mxu0 %v813
        %v3339 = vpop.f32.mrb[0].mxu0
        %v3340 = vadd.f32 %v3255, %v3339
        %v3341 = vpop.f32.mrb[0].mxu0
        %v3342 = vpop.f32.mrb[0].mxu0
        %v3343 = vadd.f32 %v3255, %v3342
        %v3344 = vpop.f32.mrb[0].mxu0
        %3345 = vmatprep.mubr.bf16.mxu0 0
        %3346 = vmatmul.mubr.bf16.gmra.mrb[0].mxu0 %v814
        %v3347 = vpop.f32.mrb[0].mxu0
        %v3348 = vadd.f32 %v3255, %v3347
        %v3349 = vpop.f32.mrb[0].mxu0
        %v3350 = vpop.f32.mrb[0].mxu0
        %v3351 = vadd.f32 %v3255, %v3350
        %v3352 = vpop.f32.mrb[0].mxu0
        %3353 = vmatprep.mubr.bf16.mxu0 0
        %3354 = vmatmul.mubr.bf16.gmra.mrb[0].mxu0 %v815
        %v3355 = vpop.f32.mrb[0].mxu0
        %v3356 = vadd.f32 %v3255, %v3355
        %v3357 = vpop.f32.mrb[0].mxu0
        %v3358 = vpop.f32.mrb[0].mxu0
        %v3359 = vadd.f32 %v3255, %v3358
        %v3360 = vpop.f32.mrb[0].mxu0
        %3361 = vmatprep.mubr.bf16.mxu0 0
        %3362 = vmatmul.mubr.bf16.gmra.mrb[0].mxu0 %v816
        %v3363 = vpop.f32.mrb[0].mxu0
        %v3364 = vadd.f32 %v3255, %v3363
        %v3365 = vpop.f32.mrb[0].mxu0
        %v3366 = vpop.f32.mrb[0].mxu0
        %v3367 = vadd.f32 %v3255, %v3366
        %v3368 = vpop.f32.mrb[0].mxu0
        %3369 = vmatprep.mubr.bf16.mxu0 0
        %3370 = vmatmul.mubr.bf16.gmra.mrb[0].mxu0 %v817
        %v3371 = vpop.f32.mrb[0].mxu0
        %v3372 = vadd.f32 %v3255, %v3371
        %v3373 = vpop.f32.mrb[0].mxu0
        %v3374 = vpop.f32.mrb[0].mxu0
        %v3375 = vadd.f32 %v3255, %v3374
        %v3376 = vpop.f32.mrb[0].mxu0
        %3377 = vmatprep.mubr.bf16.mxu0 0
        %3378 = vmatmul.mubr.bf16.gmra.mrb[0].mxu0 %v818
        %v3379 = vpop.f32.mrb[0].mxu0
        %v3380 = vadd.f32 %v3255, %v3379
        %v3381 = vpop.f32.mrb[0].mxu0
        %v3382 = vpop.f32.mrb[0].mxu0
        %v3383 = vadd.f32 %v3255, %v3382
        %v3384 = vpop.f32.mrb[0].mxu0
        %3385 = vmatprep.mubr.bf16.mxu0 0
        %3386 = vmatmul.mubr.bf16.gmra.mrb[0].mxu0 %v819
        %v3387 = vpop.f32.mrb[0].mxu0
        %v3388 = vadd.f32 %v3255, %v3387
        %v3389 = vpop.f32.mrb[0].mxu0
        %v3390 = vpop.f32.mrb[0].mxu0
        %v3391 = vadd.f32 %v3255, %v3390
        %v3392 = vpop.f32.mrb[0].mxu0
        %3393 = vmatprep.mubr.bf16.mxu0 0
        %3394 = vmatmul.mubr.bf16.gmra.mrb[0].mxu0 %v820
        %v3395 = vpop.f32.mrb[0].mxu0
        %v3396 = vadd.f32 %v3255, %v3395
        %v3397 = vpop.f32.mrb[0].mxu0
        %v3398 = vpop.f32.mrb[0].mxu0
        %v3399 = vadd.f32 %v3255, %v3398
        %v3400 = vpop.f32.mrb[0].mxu0
        %3401 = vdwg.mxu0
        %s3402 = scalar_lea.vmem %s5, 128
        %v3403 = vld [vmem:[%s3402] sm:$0xf]
        %v3404 = vld [vmem:[%s3402 + $0x4] sm:$0xf]
        %v3405 = vld [vmem:[%s3402 + $0x8] sm:$0xf]
        %v3406 = vld [vmem:[%s3402 + $0xc] sm:$0xf]
        %v3407 = vld [vmem:[%s3402 + $0x10] sm:$0xf]
        %v3408 = vld [vmem:[%s3402 + $0x14] sm:$0xf]
        %v3409 = vld [vmem:[%s3402 + $0x18] sm:$0xf]
        %v3410 = vld [vmem:[%s3402 + $0x1c] sm:$0xf]
        %v3411 = vld [vmem:[%s3402 + $0x20] sm:$0xf]
        %v3412 = vld [vmem:[%s3402 + $0x24] sm:$0xf]
        %v3413 = vld [vmem:[%s3402 + $0x28] sm:$0xf]
        %v3414 = vld [vmem:[%s3402 + $0x2c] sm:$0xf]
        %v3415 = vld [vmem:[%s3402 + $0x30] sm:$0xf]
        %v3416 = vld [vmem:[%s3402 + $0x34] sm:$0xf]
        %v3417 = vld [vmem:[%s3402 + $0x38] sm:$0xf]
        %v3418 = vld [vmem:[%s3402 + $0x3c] sm:$0xf]
        %s3419 = scalar_lea.vmem %s8, 2
        %v3420 = vld [vmem:[%s3419] sm:$0x1]
        %v3422 = vlaneseq
        %v3423 = vshrl.u32 %v3422, 7
        %v3424 = vsub.s32 0, %v3423
        %v3425 = vrot.slane %v3420, %v3424
        %v3443 = vunpack.c.l.b16 %v3403
        %v3444 = vunpack.c.l.b16 %v3404
        %v3445 = vunpack.c.l.b16 %v3405
        %v3446 = vunpack.c.l.b16 %v3406
        %v3447 = vunpack.c.l.b16 %v3407
        %v3448 = vunpack.c.l.b16 %v3408
        %v3449 = vunpack.c.l.b16 %v3409
        %v3450 = vunpack.c.l.b16 %v3410
        %v3451 = vunpack.c.l.b16 %v3411
        %v3452 = vunpack.c.l.b16 %v3412
        %v3453 = vunpack.c.l.b16 %v3413
        %v3454 = vunpack.c.l.b16 %v3414
        %v3455 = vunpack.c.l.b16 %v3415
        %v3456 = vunpack.c.l.b16 %v3416
        %v3457 = vunpack.c.l.b16 %v3417
        %v3458 = vunpack.c.l.b16 %v3418
        %v3459 = vpack.c.b16 %v3444, %v3443
        %v3460 = vpack.c.b16 %v3446, %v3445
        %v3461 = vpack.c.b16 %v3448, %v3447
        %v3462 = vpack.c.b16 %v3450, %v3449
        %v3463 = vpack.c.b16 %v3452, %v3451
        %v3464 = vpack.c.b16 %v3454, %v3453
        %v3465 = vpack.c.b16 %v3456, %v3455
        %v3466 = vpack.c.b16 %v3458, %v3457
        %3475 = vmatprep.subr.bf16.mxu0 0
        %3476 = vmatpush1.bf16.msra.mxu0 %v3459
        %3477 = vmatprep.subr.bf16.mxu0 0
        %3478 = vmatpush1.bf16.msra.mxu0 %v3460
        %3479 = vmatprep.subr.bf16.mxu0 0
        %3480 = vmatpush1.bf16.msra.mxu0 %v3461
        %3481 = vmatprep.subr.bf16.mxu0 0
        %3482 = vmatpush1.bf16.msra.mxu0 %v3462
        %3483 = vmatprep.subr.bf16.mxu0 0
        %3484 = vmatpush1.bf16.msra.mxu0 %v3463
        %3485 = vmatprep.subr.bf16.mxu0 0
        %3486 = vmatpush1.bf16.msra.mxu0 %v3464
        %3487 = vmatprep.subr.bf16.mxu0 0
        %3488 = vmatpush1.bf16.msra.mxu0 %v3465
        %3489 = vmatprep.subr.bf16.mxu0 0
        %3490 = vmatpush1.bf16.msra.mxu0 %v3466
        %3491 = vmatprep.subr.bf16.mxu0 0
        %3492 = vmatpush1.bf16.msra.mxu0 0
        %3493 = vmatprep.subr.bf16.mxu0 0
        %3494 = vmatpush1.bf16.msra.mxu0 0
        %3495 = vmatprep.subr.bf16.mxu0 0
        %3496 = vmatpush1.bf16.msra.mxu0 0
        %3497 = vmatprep.subr.bf16.mxu0 0
        %3498 = vmatpush1.bf16.msra.mxu0 0
        %3499 = vmatprep.subr.bf16.mxu0 0
        %3500 = vmatpush1.bf16.msra.mxu0 0
        %3501 = vmatprep.subr.bf16.mxu0 0
        %3502 = vmatpush1.bf16.msra.mxu0 0
        %3503 = vmatprep.subr.bf16.mxu0 0
        %3504 = vmatpush1.bf16.msra.mxu0 0
        %3505 = vmatprep.subr.bf16.mxu0 0
        %3506 = vmatpush1.bf16.msra.mxu0 0
        %3507 = vmatprep.mubr.bf16.mxu0 0
        %3508 = vmatmul.mubr.bf16.gmra.mrb[0].mxu0 %v813
        %v3509 = vpop.f32.mrb[0].mxu0
        %v3510 = vadd.f32 %v3425, %v3509
        %v3511 = vpop.f32.mrb[0].mxu0
        %v3512 = vpop.f32.mrb[0].mxu0
        %v3513 = vadd.f32 %v3425, %v3512
        %v3514 = vpop.f32.mrb[0].mxu0
        %3515 = vmatprep.mubr.bf16.mxu0 0
        %3516 = vmatmul.mubr.bf16.gmra.mrb[0].mxu0 %v814
        %v3517 = vpop.f32.mrb[0].mxu0
        %v3518 = vadd.f32 %v3425, %v3517
        %v3519 = vpop.f32.mrb[0].mxu0
        %v3520 = vpop.f32.mrb[0].mxu0
        %v3521 = vadd.f32 %v3425, %v3520
        %v3522 = vpop.f32.mrb[0].mxu0
        %3523 = vmatprep.mubr.bf16.mxu0 0
        %3524 = vmatmul.mubr.bf16.gmra.mrb[0].mxu0 %v815
        %v3525 = vpop.f32.mrb[0].mxu0
        %v3526 = vadd.f32 %v3425, %v3525
        %v3527 = vpop.f32.mrb[0].mxu0
        %v3528 = vpop.f32.mrb[0].mxu0
        %v3529 = vadd.f32 %v3425, %v3528
        %v3530 = vpop.f32.mrb[0].mxu0
        %3531 = vmatprep.mubr.bf16.mxu0 0
        %3532 = vmatmul.mubr.bf16.gmra.mrb[0].mxu0 %v816
        %v3533 = vpop.f32.mrb[0].mxu0
        %v3534 = vadd.f32 %v3425, %v3533
        %v3535 = vpop.f32.mrb[0].mxu0
        %v3536 = vpop.f32.mrb[0].mxu0
        %v3537 = vadd.f32 %v3425, %v3536
        %v3538 = vpop.f32.mrb[0].mxu0
        %3539 = vmatprep.mubr.bf16.mxu0 0
        %3540 = vmatmul.mubr.bf16.gmra.mrb[0].mxu0 %v817
        %v3541 = vpop.f32.mrb[0].mxu0
        %v3542 = vadd.f32 %v3425, %v3541
        %v3543 = vpop.f32.mrb[0].mxu0
        %v3544 = vpop.f32.mrb[0].mxu0
        %v3545 = vadd.f32 %v3425, %v3544
        %v3546 = vpop.f32.mrb[0].mxu0
        %3547 = vmatprep.mubr.bf16.mxu0 0
        %3548 = vmatmul.mubr.bf16.gmra.mrb[0].mxu0 %v818
        %v3549 = vpop.f32.mrb[0].mxu0
        %v3550 = vadd.f32 %v3425, %v3549
        %v3551 = vpop.f32.mrb[0].mxu0
        %v3552 = vpop.f32.mrb[0].mxu0
        %v3553 = vadd.f32 %v3425, %v3552
        %v3554 = vpop.f32.mrb[0].mxu0
        %3555 = vmatprep.mubr.bf16.mxu0 0
        %3556 = vmatmul.mubr.bf16.gmra.mrb[0].mxu0 %v819
        %v3557 = vpop.f32.mrb[0].mxu0
        %v3558 = vadd.f32 %v3425, %v3557
        %v3559 = vpop.f32.mrb[0].mxu0
        %v3560 = vpop.f32.mrb[0].mxu0
        %v3561 = vadd.f32 %v3425, %v3560
        %v3562 = vpop.f32.mrb[0].mxu0
        %3563 = vmatprep.mubr.bf16.mxu0 0
        %3564 = vmatmul.mubr.bf16.gmra.mrb[0].mxu0 %v820
        %v3565 = vpop.f32.mrb[0].mxu0
        %v3566 = vadd.f32 %v3425, %v3565
        %v3567 = vpop.f32.mrb[0].mxu0
        %v3568 = vpop.f32.mrb[0].mxu0
        %v3569 = vadd.f32 %v3425, %v3568
        %v3570 = vpop.f32.mrb[0].mxu0
        %3571 = vdwg.mxu0
        %v3572 = vpack.c.bf16 %v3173, %v3170
        %v3573 = vpack.c.bf16 %v3181, %v3178
        %v3574 = vpack.c.bf16 %v3189, %v3186
        %v3575 = vpack.c.bf16 %v3197, %v3194
        %v3576 = vpack.c.bf16 %v3205, %v3202
        %v3577 = vpack.c.bf16 %v3213, %v3210
        %v3578 = vpack.c.bf16 %v3221, %v3218
        %v3579 = vpack.c.bf16 %v3229, %v3226
        %v3580 = vpack.c.bf16 %v3343, %v3340
        %v3581 = vpack.c.bf16 %v3351, %v3348
        %v3582 = vpack.c.bf16 %v3359, %v3356
        %v3583 = vpack.c.bf16 %v3367, %v3364
        %v3584 = vpack.c.bf16 %v3375, %v3372
        %v3585 = vpack.c.bf16 %v3383, %v3380
        %v3586 = vpack.c.bf16 %v3391, %v3388
        %v3587 = vpack.c.bf16 %v3399, %v3396
        %v3589 = vsel %vm1376, %v3572, 0
        %v3592 = vsel %vm1376, %v3573, 0
        %v3595 = vsel %vm1376, %v3574, 0
        %v3598 = vsel %vm1376, %v3575, 0
        %v3601 = vsel %vm1376, %v3576, 0
        %v3604 = vsel %vm1376, %v3577, 0
        %v3607 = vsel %vm1376, %v3578, 0
        %v3610 = vsel %vm1376, %v3579, 0
        %v3613 = vsel %vm1376, %v3580, 0
        %v3616 = vsel %vm1376, %v3581, 0
        %v3619 = vsel %vm1376, %v3582, 0
        %v3622 = vsel %vm1376, %v3583, 0
        %v3625 = vsel %vm1376, %v3584, 0
        %v3628 = vsel %vm1376, %v3585, 0
        %v3631 = vsel %vm1376, %v3586, 0
        %v3634 = vsel %vm1376, %v3587, 0
        %3636 = vmatprep.subr.bf16.mxu0 0
        %3637 = vmatpush1.bf16.xpose.msra.mxu0 %v3613
        %3638 = vmatprep.subr.bf16.mxu0 0
        %3639 = vmatpush1.bf16.xpose.msra.mxu0 %v3616
        %3640 = vmatprep.subr.bf16.mxu0 0
        %3641 = vmatpush1.bf16.xpose.msra.mxu0 %v3619
        %3642 = vmatprep.subr.bf16.mxu0 0
        %3643 = vmatpush1.bf16.xpose.msra.mxu0 %v3622
        %3644 = vmatprep.subr.bf16.mxu0 0
        %3645 = vmatpush1.bf16.xpose.msra.mxu0 %v3625
        %3646 = vmatprep.subr.bf16.mxu0 0
        %3647 = vmatpush1.bf16.xpose.msra.mxu0 %v3628
        %3648 = vmatprep.subr.bf16.mxu0 0
        %3649 = vmatpush1.bf16.xpose.msra.mxu0 %v3631
        %3650 = vmatprep.subr.bf16.mxu0 0
        %3651 = vmatpush1.bf16.xpose.msra.mxu0 %v3634
        %3652 = vmatprep.subr.bf16.mxu0 0
        %3653 = vmatpush1.bf16.xpose.msra.mxu0 0
        %3654 = vmatprep.subr.bf16.mxu0 0
        %3655 = vmatpush1.bf16.xpose.msra.mxu0 0
        %3656 = vmatprep.subr.bf16.mxu0 0
        %3657 = vmatpush1.bf16.xpose.msra.mxu0 0
        %3658 = vmatprep.subr.bf16.mxu0 0
        %3659 = vmatpush1.bf16.xpose.msra.mxu0 0
        %3660 = vmatprep.subr.bf16.mxu0 0
        %3661 = vmatpush1.bf16.xpose.msra.mxu0 0
        %3662 = vmatprep.subr.bf16.mxu0 0
        %3663 = vmatpush1.bf16.xpose.msra.mxu0 0
        %3664 = vmatprep.subr.bf16.mxu0 0
        %3665 = vmatpush1.bf16.xpose.msra.mxu0 0
        %3666 = vmatprep.subr.bf16.mxu0 0
        %3667 = vmatpush1.bf16.xpose.msra.mxu0 0
        %3668 = vmatprep.mubr.bf16.mxu0 0
        %3669 = vmatmul.mubr.bf16.gmra.mrb[0].mxu0 %v3589
        %v3670 = vpop.f32.mrb[0].mxu0
        %v3671 = vadd.f32 0.0, %v3670
        %v3672 = vpop.f32.mrb[0].mxu0
        %v3673 = vpop.f32.mrb[0].mxu0
        %v3674 = vadd.f32 0.0, %v3673
        %v3675 = vpop.f32.mrb[0].mxu0
        %3676 = vmatprep.mubr.bf16.mxu0 0
        %3677 = vmatmul.mubr.bf16.gmra.mrb[0].mxu0 %v3592
        %v3678 = vpop.f32.mrb[0].mxu0
        %v3679 = vadd.f32 0.0, %v3678
        %v3680 = vpop.f32.mrb[0].mxu0
        %v3681 = vpop.f32.mrb[0].mxu0
        %v3682 = vadd.f32 0.0, %v3681
        %v3683 = vpop.f32.mrb[0].mxu0
        %3684 = vmatprep.mubr.bf16.mxu0 0
        %3685 = vmatmul.mubr.bf16.gmra.mrb[0].mxu0 %v3595
        %v3686 = vpop.f32.mrb[0].mxu0
        %v3687 = vadd.f32 0.0, %v3686
        %v3688 = vpop.f32.mrb[0].mxu0
        %v3689 = vpop.f32.mrb[0].mxu0
        %v3690 = vadd.f32 0.0, %v3689
        %v3691 = vpop.f32.mrb[0].mxu0
        %3692 = vmatprep.mubr.bf16.mxu0 0
        %3693 = vmatmul.mubr.bf16.gmra.mrb[0].mxu0 %v3598
        %v3694 = vpop.f32.mrb[0].mxu0
        %v3695 = vadd.f32 0.0, %v3694
        %v3696 = vpop.f32.mrb[0].mxu0
        %v3697 = vpop.f32.mrb[0].mxu0
        %v3698 = vadd.f32 0.0, %v3697
        %v3699 = vpop.f32.mrb[0].mxu0
        %3700 = vmatprep.mubr.bf16.mxu0 0
        %3701 = vmatmul.mubr.bf16.gmra.mrb[0].mxu0 %v3601
        %v3702 = vpop.f32.mrb[0].mxu0
        %v3703 = vadd.f32 0.0, %v3702
        %v3704 = vpop.f32.mrb[0].mxu0
        %v3705 = vpop.f32.mrb[0].mxu0
        %v3706 = vadd.f32 0.0, %v3705
        %v3707 = vpop.f32.mrb[0].mxu0
        %3708 = vmatprep.mubr.bf16.mxu0 0
        %3709 = vmatmul.mubr.bf16.gmra.mrb[0].mxu0 %v3604
        %v3710 = vpop.f32.mrb[0].mxu0
        %v3711 = vadd.f32 0.0, %v3710
        %v3712 = vpop.f32.mrb[0].mxu0
        %v3713 = vpop.f32.mrb[0].mxu0
        %v3714 = vadd.f32 0.0, %v3713
        %v3715 = vpop.f32.mrb[0].mxu0
        %3716 = vmatprep.mubr.bf16.mxu0 0
        %3717 = vmatmul.mubr.bf16.gmra.mrb[0].mxu0 %v3607
        %v3718 = vpop.f32.mrb[0].mxu0
        %v3719 = vadd.f32 0.0, %v3718
        %v3720 = vpop.f32.mrb[0].mxu0
        %v3721 = vpop.f32.mrb[0].mxu0
        %v3722 = vadd.f32 0.0, %v3721
        %v3723 = vpop.f32.mrb[0].mxu0
        %3724 = vmatprep.mubr.bf16.mxu0 0
        %3725 = vmatmul.mubr.bf16.gmra.mrb[0].mxu0 %v3610
        %v3726 = vpop.f32.mrb[0].mxu0
        %v3727 = vadd.f32 0.0, %v3726
        %v3728 = vpop.f32.mrb[0].mxu0
        %v3729 = vpop.f32.mrb[0].mxu0
        %v3730 = vadd.f32 0.0, %v3729
        %v3731 = vpop.f32.mrb[0].mxu0
        %3732 = vdwg.mxu0
        %v3733 = vmul.f32 %v3671, 0.17677669
        %v3734 = vmul.f32 %v3674, 0.17677669
        %v3735 = vmul.f32 %v3679, 0.17677669
        %v3736 = vmul.f32 %v3682, 0.17677669
        %v3737 = vmul.f32 %v3687, 0.17677669
        %v3738 = vmul.f32 %v3690, 0.17677669
        %v3739 = vmul.f32 %v3695, 0.17677669
        %v3740 = vmul.f32 %v3698, 0.17677669
        %v3741 = vmul.f32 %v3703, 0.17677669
        %v3742 = vmul.f32 %v3706, 0.17677669
        %v3743 = vmul.f32 %v3711, 0.17677669
        %v3744 = vmul.f32 %v3714, 0.17677669
        %v3745 = vmul.f32 %v3719, 0.17677669
        %v3746 = vmul.f32 %v3722, 0.17677669
        %v3747 = vmul.f32 %v3727, 0.17677669
        %v3748 = vmul.f32 %v3730, 0.17677669
        %v3749 = vsel %vm840, %v3733, -1e+30
        %v3750 = vsel %vm841, %v3734, -1e+30
        %v3751 = vsel %vm842, %v3735, -1e+30
        %v3752 = vsel %vm843, %v3736, -1e+30
        %v3753 = vsel %vm844, %v3737, -1e+30
        %v3754 = vsel %vm845, %v3738, -1e+30
        %v3755 = vsel %vm846, %v3739, -1e+30
        %v3756 = vsel %vm847, %v3740, -1e+30
        %v3757 = vsel %vm848, %v3741, -1e+30
        %v3758 = vsel %vm849, %v3742, -1e+30
        %v3759 = vsel %vm850, %v3743, -1e+30
        %v3760 = vsel %vm851, %v3744, -1e+30
        %v3761 = vsel %vm852, %v3745, -1e+30
        %v3762 = vsel %vm853, %v3746, -1e+30
        %v3763 = vsel %vm854, %v3747, -1e+30
        %v3764 = vsel %vm855, %v3748, -1e+30
        %3765 = vmax.xlane.f32.xlu0 %v3749
        %v3766 = vpop.xlane.xlu0 %3765
        %3767 = vmax.xlane.f32.xlu0 %v3750
        %v3768 = vpop.xlane.xlu0 %3767
        %3769 = vmax.xlane.f32.xlu0 %v3751
        %v3770 = vpop.xlane.xlu0 %3769
        %3771 = vmax.xlane.f32.xlu0 %v3752
        %v3772 = vpop.xlane.xlu0 %3771
        %3773 = vmax.xlane.f32.xlu0 %v3753
        %v3774 = vpop.xlane.xlu0 %3773
        %3775 = vmax.xlane.f32.xlu0 %v3754
        %v3776 = vpop.xlane.xlu0 %3775
        %3777 = vmax.xlane.f32.xlu0 %v3755
        %v3778 = vpop.xlane.xlu0 %3777
        %3779 = vmax.xlane.f32.xlu0 %v3756
        %v3780 = vpop.xlane.xlu0 %3779
        %3781 = vmax.xlane.f32.xlu0 %v3757
        %v3782 = vpop.xlane.xlu0 %3781
        %3783 = vmax.xlane.f32.xlu0 %v3758
        %v3784 = vpop.xlane.xlu0 %3783
        %3785 = vmax.xlane.f32.xlu0 %v3759
        %v3786 = vpop.xlane.xlu0 %3785
        %3787 = vmax.xlane.f32.xlu0 %v3760
        %v3788 = vpop.xlane.xlu0 %3787
        %3789 = vmax.xlane.f32.xlu0 %v3761
        %v3790 = vpop.xlane.xlu0 %3789
        %3791 = vmax.xlane.f32.xlu0 %v3762
        %v3792 = vpop.xlane.xlu0 %3791
        %3793 = vmax.xlane.f32.xlu0 %v3763
        %v3794 = vpop.xlane.xlu0 %3793
        %3795 = vmax.xlane.f32.xlu0 %v3764
        %v3796 = vpop.xlane.xlu0 %3795
        %v3797 = vsub.f32 %v3749, %v3766
        %v3798 = vsub.f32 %v3750, %v3768
        %v3799 = vsub.f32 %v3751, %v3770
        %v3800 = vsub.f32 %v3752, %v3772
        %v3801 = vsub.f32 %v3753, %v3774
        %v3802 = vsub.f32 %v3754, %v3776
        %v3803 = vsub.f32 %v3755, %v3778
        %v3804 = vsub.f32 %v3756, %v3780
        %v3805 = vsub.f32 %v3757, %v3782
        %v3806 = vsub.f32 %v3758, %v3784
        %v3807 = vsub.f32 %v3759, %v3786
        %v3808 = vsub.f32 %v3760, %v3788
        %v3809 = vsub.f32 %v3761, %v3790
        %v3810 = vsub.f32 %v3762, %v3792
        %v3811 = vsub.f32 %v3763, %v3794
        %v3812 = vsub.f32 %v3764, %v3796
        %v3813 = vmul.f32 %v3797, 1.442695
        %v3814 = vpow.pop %v3813
        %v3815 = vmul.f32 %v3798, 1.442695
        %v3816 = vpow.pop %v3815
        %v3817 = vmul.f32 %v3799, 1.442695
        %v3818 = vpow.pop %v3817
        %v3819 = vmul.f32 %v3800, 1.442695
        %v3820 = vpow.pop %v3819
        %v3821 = vmul.f32 %v3801, 1.442695
        %v3822 = vpow.pop %v3821
        %v3823 = vmul.f32 %v3802, 1.442695
        %v3824 = vpow.pop %v3823
        %v3825 = vmul.f32 %v3803, 1.442695
        %v3826 = vpow.pop %v3825
        %v3827 = vmul.f32 %v3804, 1.442695
        %v3828 = vpow.pop %v3827
        %v3829 = vmul.f32 %v3805, 1.442695
        %v3830 = vpow.pop %v3829
        %v3831 = vmul.f32 %v3806, 1.442695
        %v3832 = vpow.pop %v3831
        %v3833 = vmul.f32 %v3807, 1.442695
        %v3834 = vpow.pop %v3833
        %v3835 = vmul.f32 %v3808, 1.442695
        %v3836 = vpow.pop %v3835
        %v3837 = vmul.f32 %v3809, 1.442695
        %v3838 = vpow.pop %v3837
        %v3839 = vmul.f32 %v3810, 1.442695
        %v3840 = vpow.pop %v3839
        %v3841 = vmul.f32 %v3811, 1.442695
        %v3842 = vpow.pop %v3841
        %v3843 = vmul.f32 %v3812, 1.442695
        %v3844 = vpow.pop %v3843
        %3845 = vadd.xlane.f32.xlu0 %v3814
        %v3846 = vpop.xlane.xlu0 %3845
        %3847 = vadd.xlane.f32.xlu0 %v3816
        %v3848 = vpop.xlane.xlu0 %3847
        %3849 = vadd.xlane.f32.xlu0 %v3818
        %v3850 = vpop.xlane.xlu0 %3849
        %3851 = vadd.xlane.f32.xlu0 %v3820
        %v3852 = vpop.xlane.xlu0 %3851
        %3853 = vadd.xlane.f32.xlu0 %v3822
        %v3854 = vpop.xlane.xlu0 %3853
        %3855 = vadd.xlane.f32.xlu0 %v3824
        %v3856 = vpop.xlane.xlu0 %3855
        %3857 = vadd.xlane.f32.xlu0 %v3826
        %v3858 = vpop.xlane.xlu0 %3857
        %3859 = vadd.xlane.f32.xlu0 %v3828
        %v3860 = vpop.xlane.xlu0 %3859
        %3861 = vadd.xlane.f32.xlu0 %v3830
        %v3862 = vpop.xlane.xlu0 %3861
        %3863 = vadd.xlane.f32.xlu0 %v3832
        %v3864 = vpop.xlane.xlu0 %3863
        %3865 = vadd.xlane.f32.xlu0 %v3834
        %v3866 = vpop.xlane.xlu0 %3865
        %3867 = vadd.xlane.f32.xlu0 %v3836
        %v3868 = vpop.xlane.xlu0 %3867
        %3869 = vadd.xlane.f32.xlu0 %v3838
        %v3870 = vpop.xlane.xlu0 %3869
        %3871 = vadd.xlane.f32.xlu0 %v3840
        %v3872 = vpop.xlane.xlu0 %3871
        %3873 = vadd.xlane.f32.xlu0 %v3842
        %v3874 = vpop.xlane.xlu0 %3873
        %3875 = vadd.xlane.f32.xlu0 %v3844
        %v3876 = vpop.xlane.xlu0 %3875
        %v3877 = vrcp.pop %v3846
        %v3878 = vrcp.pop %v3848
        %v3879 = vrcp.pop %v3850
        %v3880 = vrcp.pop %v3852
        %v3881 = vrcp.pop %v3854
        %v3882 = vrcp.pop %v3856
        %v3883 = vrcp.pop %v3858
        %v3884 = vrcp.pop %v3860
        %v3885 = vrcp.pop %v3862
        %v3886 = vrcp.pop %v3864
        %v3887 = vrcp.pop %v3866
        %v3888 = vrcp.pop %v3868
        %v3889 = vrcp.pop %v3870
        %v3890 = vrcp.pop %v3872
        %v3891 = vrcp.pop %v3874
        %v3892 = vrcp.pop %v3876
        %v3893 = vmul.f32 %v3814, %v3877
        %v3894 = vmul.f32 %v3816, %v3878
        %v3895 = vmul.f32 %v3818, %v3879
        %v3896 = vmul.f32 %v3820, %v3880
        %v3897 = vmul.f32 %v3822, %v3881
        %v3898 = vmul.f32 %v3824, %v3882
        %v3899 = vmul.f32 %v3826, %v3883
        %v3900 = vmul.f32 %v3828, %v3884
        %v3901 = vmul.f32 %v3830, %v3885
        %v3902 = vmul.f32 %v3832, %v3886
        %v3903 = vmul.f32 %v3834, %v3887
        %v3904 = vmul.f32 %v3836, %v3888
        %v3905 = vmul.f32 %v3838, %v3889
        %v3906 = vmul.f32 %v3840, %v3890
        %v3907 = vmul.f32 %v3842, %v3891
        %v3908 = vmul.f32 %v3844, %v3892
        %v3909 = vpack.c.bf16 %v3894, %v3893
        %v3910 = vpack.c.bf16 %v3896, %v3895
        %v3911 = vpack.c.bf16 %v3898, %v3897
        %v3912 = vpack.c.bf16 %v3900, %v3899
        %v3913 = vpack.c.bf16 %v3902, %v3901
        %v3914 = vpack.c.bf16 %v3904, %v3903
        %v3915 = vpack.c.bf16 %v3906, %v3905
        %v3916 = vpack.c.bf16 %v3908, %v3907
        %v3917 = vpack.c.bf16 %v3513, %v3510
        %v3918 = vpack.c.bf16 %v3521, %v3518
        %v3919 = vpack.c.bf16 %v3529, %v3526
        %v3920 = vpack.c.bf16 %v3537, %v3534
        %v3921 = vpack.c.bf16 %v3545, %v3542
        %v3922 = vpack.c.bf16 %v3553, %v3550
        %v3923 = vpack.c.bf16 %v3561, %v3558
        %v3924 = vpack.c.bf16 %v3569, %v3566
        %3925 = vmatprep.subr.bf16.mxu0 0
        %3926 = vmatpush1.bf16.msra.mxu0 %v3917
        %3927 = vmatprep.subr.bf16.mxu0 0
        %3928 = vmatpush1.bf16.msra.mxu0 %v3918
        %3929 = vmatprep.subr.bf16.mxu0 0
        %3930 = vmatpush1.bf16.msra.mxu0 %v3919
        %3931 = vmatprep.subr.bf16.mxu0 0
        %3932 = vmatpush1.bf16.msra.mxu0 %v3920
        %3933 = vmatprep.subr.bf16.mxu0 0
        %3934 = vmatpush1.bf16.msra.mxu0 %v3921
        %3935 = vmatprep.subr.bf16.mxu0 0
        %3936 = vmatpush1.bf16.msra.mxu0 %v3922
        %3937 = vmatprep.subr.bf16.mxu0 0
        %3938 = vmatpush1.bf16.msra.mxu0 %v3923
        %3939 = vmatprep.subr.bf16.mxu0 0
        %3940 = vmatpush1.bf16.msra.mxu0 %v3924
        %3941 = vmatprep.subr.bf16.mxu0 0
        %3942 = vmatpush1.bf16.msra.mxu0 0
        %3943 = vmatprep.subr.bf16.mxu0 0
        %3944 = vmatpush1.bf16.msra.mxu0 0
        %3945 = vmatprep.subr.bf16.mxu0 0
        %3946 = vmatpush1.bf16.msra.mxu0 0
        %3947 = vmatprep.subr.bf16.mxu0 0
        %3948 = vmatpush1.bf16.msra.mxu0 0
        %3949 = vmatprep.subr.bf16.mxu0 0
        %3950 = vmatpush1.bf16.msra.mxu0 0
        %3951 = vmatprep.subr.bf16.mxu0 0
        %3952 = vmatpush1.bf16.msra.mxu0 0
        %3953 = vmatprep.subr.bf16.mxu0 0
        %3954 = vmatpush1.bf16.msra.mxu0 0
        %3955 = vmatprep.subr.bf16.mxu0 0
        %3956 = vmatpush1.bf16.msra.mxu0 0
        %3957 = vmatprep.mubr.bf16.mxu0 0
        %3958 = vmatmul.mubr.bf16.gmra.mrb[0].mxu0 %v3909
        %v3959 = vpop.f32.mrb[0].mxu0
        %v3960 = vadd.f32 0.0, %v3959
        %v3961 = vpop.f32.mrb[0].mxu0
        %v3962 = vpop.f32.mrb[0].mxu0
        %v3963 = vadd.f32 0.0, %v3962
        %v3964 = vpop.f32.mrb[0].mxu0
        %3965 = vmatprep.mubr.bf16.mxu0 0
        %3966 = vmatmul.mubr.bf16.gmra.mrb[0].mxu0 %v3910
        %v3967 = vpop.f32.mrb[0].mxu0
        %v3968 = vadd.f32 0.0, %v3967
        %v3969 = vpop.f32.mrb[0].mxu0
        %v3970 = vpop.f32.mrb[0].mxu0
        %v3971 = vadd.f32 0.0, %v3970
        %v3972 = vpop.f32.mrb[0].mxu0
        %3973 = vmatprep.mubr.bf16.mxu0 0
        %3974 = vmatmul.mubr.bf16.gmra.mrb[0].mxu0 %v3911
        %v3975 = vpop.f32.mrb[0].mxu0
        %v3976 = vadd.f32 0.0, %v3975
        %v3977 = vpop.f32.mrb[0].mxu0
        %v3978 = vpop.f32.mrb[0].mxu0
        %v3979 = vadd.f32 0.0, %v3978
        %v3980 = vpop.f32.mrb[0].mxu0
        %3981 = vmatprep.mubr.bf16.mxu0 0
        %3982 = vmatmul.mubr.bf16.gmra.mrb[0].mxu0 %v3912
        %v3983 = vpop.f32.mrb[0].mxu0
        %v3984 = vadd.f32 0.0, %v3983
        %v3985 = vpop.f32.mrb[0].mxu0
        %v3986 = vpop.f32.mrb[0].mxu0
        %v3987 = vadd.f32 0.0, %v3986
        %v3988 = vpop.f32.mrb[0].mxu0
        %3989 = vmatprep.mubr.bf16.mxu0 0
        %3990 = vmatmul.mubr.bf16.gmra.mrb[0].mxu0 %v3913
        %v3991 = vpop.f32.mrb[0].mxu0
        %v3992 = vadd.f32 0.0, %v3991
        %v3993 = vpop.f32.mrb[0].mxu0
        %v3994 = vpop.f32.mrb[0].mxu0
        %v3995 = vadd.f32 0.0, %v3994
        %v3996 = vpop.f32.mrb[0].mxu0
        %3997 = vmatprep.mubr.bf16.mxu0 0
        %3998 = vmatmul.mubr.bf16.gmra.mrb[0].mxu0 %v3914
        %v3999 = vpop.f32.mrb[0].mxu0
        %v4000 = vadd.f32 0.0, %v3999
        %v4001 = vpop.f32.mrb[0].mxu0
        %v4002 = vpop.f32.mrb[0].mxu0
        %v4003 = vadd.f32 0.0, %v4002
        %v4004 = vpop.f32.mrb[0].mxu0
        %4005 = vmatprep.mubr.bf16.mxu0 0
        %4006 = vmatmul.mubr.bf16.gmra.mrb[0].mxu0 %v3915
        %v4007 = vpop.f32.mrb[0].mxu0
        %v4008 = vadd.f32 0.0, %v4007
        %v4009 = vpop.f32.mrb[0].mxu0
        %v4010 = vpop.f32.mrb[0].mxu0
        %v4011 = vadd.f32 0.0, %v4010
        %v4012 = vpop.f32.mrb[0].mxu0
        %4013 = vmatprep.mubr.bf16.mxu0 0
        %4014 = vmatmul.mubr.bf16.gmra.mrb[0].mxu0 %v3916
        %v4015 = vpop.f32.mrb[0].mxu0
        %v4016 = vadd.f32 0.0, %v4015
        %v4017 = vpop.f32.mrb[0].mxu0
        %v4018 = vpop.f32.mrb[0].mxu0
        %v4019 = vadd.f32 0.0, %v4018
        %v4020 = vpop.f32.mrb[0].mxu0
        %4021 = vdwg.mxu0
        %v4022 = vpack.c.bf16 %v3963, %v3960
        %v4023 = vpack.c.bf16 %v3971, %v3968
        %v4024 = vpack.c.bf16 %v3979, %v3976
        %v4025 = vpack.c.bf16 %v3987, %v3984
        %v4026 = vpack.c.bf16 %v3995, %v3992
        %v4027 = vpack.c.bf16 %v4003, %v4000
        %v4028 = vpack.c.bf16 %v4011, %v4008
        %v4029 = vpack.c.bf16 %v4019, %v4016
        %s4030 = scalar_lea.vmem %s9, 32
        %v4031 = vld [vmem:[%s4030] sm:$0xf]
        %v4032 = vld [vmem:[%s4030 + $0x4] sm:$0xf]
        %v4033 = vld [vmem:[%s4030 + $0x8] sm:$0xf]
        %v4034 = vld [vmem:[%s4030 + $0xc] sm:$0xf]
        %v4039 = vunpack.c.l.b16 %v4031
        %v4040 = vunpack.c.l.b16 %v4032
        %v4041 = vunpack.c.l.b16 %v4033
        %v4042 = vunpack.c.l.b16 %v4034
        %v4043 = vpack.c.b16 %v4040, %v4039
        %v4044 = vpack.c.b16 %v4042, %v4041
        %v4048 = vsel %vm1376, %v4022, 0
        %v4051 = vsel %vm1376, %v4023, 0
        %v4054 = vsel %vm1376, %v4024, 0
        %v4057 = vsel %vm1376, %v4025, 0
        %v4060 = vsel %vm1376, %v4026, 0
        %v4063 = vsel %vm1376, %v4027, 0
        %v4066 = vsel %vm1376, %v4028, 0
        %v4069 = vsel %vm1376, %v4029, 0
        %4071 = vmatprep.subr.bf16.mxu0 0
        %4072 = vmatpush1.bf16.msra.mxu0 %v4043
        %4073 = vmatprep.subr.bf16.mxu0 0
        %4074 = vmatpush1.bf16.msra.mxu0 %v4044
        %4075 = vmatprep.subr.bf16.mxu0 0
        %4076 = vmatpush1.bf16.msra.mxu0 0
        %4077 = vmatprep.subr.bf16.mxu0 0
        %4078 = vmatpush1.bf16.msra.mxu0 0
        %4079 = vmatprep.subr.bf16.mxu0 0
        %4080 = vmatpush1.bf16.msra.mxu0 0
        %4081 = vmatprep.subr.bf16.mxu0 0
        %4082 = vmatpush1.bf16.msra.mxu0 0
        %4083 = vmatprep.subr.bf16.mxu0 0
        %4084 = vmatpush1.bf16.msra.mxu0 0
        %4085 = vmatprep.subr.bf16.mxu0 0
        %4086 = vmatpush1.bf16.msra.mxu0 0
        %4087 = vmatprep.subr.bf16.mxu0 0
        %4088 = vmatpush1.bf16.msra.mxu0 0
        %4089 = vmatprep.subr.bf16.mxu0 0
        %4090 = vmatpush1.bf16.msra.mxu0 0
        %4091 = vmatprep.subr.bf16.mxu0 0
        %4092 = vmatpush1.bf16.msra.mxu0 0
        %4093 = vmatprep.subr.bf16.mxu0 0
        %4094 = vmatpush1.bf16.msra.mxu0 0
        %4095 = vmatprep.subr.bf16.mxu0 0
        %4096 = vmatpush1.bf16.msra.mxu0 0
        %4097 = vmatprep.subr.bf16.mxu0 0
        %4098 = vmatpush1.bf16.msra.mxu0 0
        %4099 = vmatprep.subr.bf16.mxu0 0
        %4100 = vmatpush1.bf16.msra.mxu0 0
        %4101 = vmatprep.subr.bf16.mxu0 0
        %4102 = vmatpush1.bf16.msra.mxu0 0
        %4103 = vmatprep.mubr.bf16.mxu0 0
        %4104 = vmatmul.mubr.bf16.gmra.mrb[0].mxu0 %v4048
        %v4105 = vpop.f32.mrb[0].mxu0
        %v4106 = vadd.f32 0.0, %v4105
        %v4107 = vpop.f32.mrb[0].mxu0
        %v4108 = vpop.f32.mrb[0].mxu0
        %v4109 = vadd.f32 0.0, %v4108
        %v4110 = vpop.f32.mrb[0].mxu0
        %4111 = vmatprep.mubr.bf16.mxu0 0
        %4112 = vmatmul.mubr.bf16.gmra.mrb[0].mxu0 %v4051
        %v4113 = vpop.f32.mrb[0].mxu0
        %v4114 = vadd.f32 0.0, %v4113
        %v4115 = vpop.f32.mrb[0].mxu0
        %v4116 = vpop.f32.mrb[0].mxu0
        %v4117 = vadd.f32 0.0, %v4116
        %v4118 = vpop.f32.mrb[0].mxu0
        %4119 = vmatprep.mubr.bf16.mxu0 0
        %4120 = vmatmul.mubr.bf16.gmra.mrb[0].mxu0 %v4054
        %v4121 = vpop.f32.mrb[0].mxu0
        %v4122 = vadd.f32 0.0, %v4121
        %v4123 = vpop.f32.mrb[0].mxu0
        %v4124 = vpop.f32.mrb[0].mxu0
        %v4125 = vadd.f32 0.0, %v4124
        %v4126 = vpop.f32.mrb[0].mxu0
        %4127 = vmatprep.mubr.bf16.mxu0 0
        %4128 = vmatmul.mubr.bf16.gmra.mrb[0].mxu0 %v4057
        %v4129 = vpop.f32.mrb[0].mxu0
        %v4130 = vadd.f32 0.0, %v4129
        %v4131 = vpop.f32.mrb[0].mxu0
        %v4132 = vpop.f32.mrb[0].mxu0
        %v4133 = vadd.f32 0.0, %v4132
        %v4134 = vpop.f32.mrb[0].mxu0
        %4135 = vmatprep.mubr.bf16.mxu0 0
        %4136 = vmatmul.mubr.bf16.gmra.mrb[0].mxu0 %v4060
        %v4137 = vpop.f32.mrb[0].mxu0
        %v4138 = vadd.f32 0.0, %v4137
        %v4139 = vpop.f32.mrb[0].mxu0
        %v4140 = vpop.f32.mrb[0].mxu0
        %v4141 = vadd.f32 0.0, %v4140
        %v4142 = vpop.f32.mrb[0].mxu0
        %4143 = vmatprep.mubr.bf16.mxu0 0
        %4144 = vmatmul.mubr.bf16.gmra.mrb[0].mxu0 %v4063
        %v4145 = vpop.f32.mrb[0].mxu0
        %v4146 = vadd.f32 0.0, %v4145
        %v4147 = vpop.f32.mrb[0].mxu0
        %v4148 = vpop.f32.mrb[0].mxu0
        %v4149 = vadd.f32 0.0, %v4148
        %v4150 = vpop.f32.mrb[0].mxu0
        %4151 = vmatprep.mubr.bf16.mxu0 0
        %4152 = vmatmul.mubr.bf16.gmra.mrb[0].mxu0 %v4066
        %v4153 = vpop.f32.mrb[0].mxu0
        %v4154 = vadd.f32 0.0, %v4153
        %v4155 = vpop.f32.mrb[0].mxu0
        %v4156 = vpop.f32.mrb[0].mxu0
        %v4157 = vadd.f32 0.0, %v4156
        %v4158 = vpop.f32.mrb[0].mxu0
        %4159 = vmatprep.mubr.bf16.mxu0 0
        %4160 = vmatmul.mubr.bf16.gmra.mrb[0].mxu0 %v4069
        %v4161 = vpop.f32.mrb[0].mxu0
        %v4162 = vadd.f32 0.0, %v4161
        %v4163 = vpop.f32.mrb[0].mxu0
        %v4164 = vpop.f32.mrb[0].mxu0
        %v4165 = vadd.f32 0.0, %v4164
        %v4166 = vpop.f32.mrb[0].mxu0
        %4167 = vdwg.mxu0
        %v4168 = vadd.f32 %v3000, %v4106
        %v4169 = vadd.f32 %v3003, %v4109
        %v4170 = vadd.f32 %v3008, %v4114
        %v4171 = vadd.f32 %v3011, %v4117
        %v4172 = vadd.f32 %v3016, %v4122
        %v4173 = vadd.f32 %v3019, %v4125
        %v4174 = vadd.f32 %v3024, %v4130
        %v4175 = vadd.f32 %v3027, %v4133
        %v4176 = vadd.f32 %v3032, %v4138
        %v4177 = vadd.f32 %v3035, %v4141
        %v4178 = vadd.f32 %v3040, %v4146
        %v4179 = vadd.f32 %v3043, %v4149
        %v4180 = vadd.f32 %v3048, %v4154
        %v4181 = vadd.f32 %v3051, %v4157
        %v4182 = vadd.f32 %v3056, %v4162
        %v4183 = vadd.f32 %v3059, %v4165
        %s4184 = scalar_lea.vmem %s3, 192
        %v4185 = vld [vmem:[%s4184] sm:$0xf]
        %v4186 = vld [vmem:[%s4184 + $0x4] sm:$0xf]
        %v4187 = vld [vmem:[%s4184 + $0x8] sm:$0xf]
        %v4188 = vld [vmem:[%s4184 + $0xc] sm:$0xf]
        %v4189 = vld [vmem:[%s4184 + $0x10] sm:$0xf]
        %v4190 = vld [vmem:[%s4184 + $0x14] sm:$0xf]
        %v4191 = vld [vmem:[%s4184 + $0x18] sm:$0xf]
        %v4192 = vld [vmem:[%s4184 + $0x1c] sm:$0xf]
        %v4193 = vld [vmem:[%s4184 + $0x20] sm:$0xf]
        %v4194 = vld [vmem:[%s4184 + $0x24] sm:$0xf]
        %v4195 = vld [vmem:[%s4184 + $0x28] sm:$0xf]
        %v4196 = vld [vmem:[%s4184 + $0x2c] sm:$0xf]
        %v4197 = vld [vmem:[%s4184 + $0x30] sm:$0xf]
        %v4198 = vld [vmem:[%s4184 + $0x34] sm:$0xf]
        %v4199 = vld [vmem:[%s4184 + $0x38] sm:$0xf]
        %v4200 = vld [vmem:[%s4184 + $0x3c] sm:$0xf]
        %s4201 = scalar_lea.vmem %s6, 3
        %v4202 = vld [vmem:[%s4201] sm:$0x1]
        %v4204 = vlaneseq
        %v4205 = vshrl.u32 %v4204, 7
        %v4206 = vsub.s32 0, %v4205
        %v4207 = vrot.slane %v4202, %v4206
        %v4225 = vunpack.c.l.b16 %v4185
        %v4226 = vunpack.c.l.b16 %v4186
        %v4227 = vunpack.c.l.b16 %v4187
        %v4228 = vunpack.c.l.b16 %v4188
        %v4229 = vunpack.c.l.b16 %v4189
        %v4230 = vunpack.c.l.b16 %v4190
        %v4231 = vunpack.c.l.b16 %v4191
        %v4232 = vunpack.c.l.b16 %v4192
        %v4233 = vunpack.c.l.b16 %v4193
        %v4234 = vunpack.c.l.b16 %v4194
        %v4235 = vunpack.c.l.b16 %v4195
        %v4236 = vunpack.c.l.b16 %v4196
        %v4237 = vunpack.c.l.b16 %v4197
        %v4238 = vunpack.c.l.b16 %v4198
        %v4239 = vunpack.c.l.b16 %v4199
        %v4240 = vunpack.c.l.b16 %v4200
        %v4241 = vpack.c.b16 %v4226, %v4225
        %v4242 = vpack.c.b16 %v4228, %v4227
        %v4243 = vpack.c.b16 %v4230, %v4229
        %v4244 = vpack.c.b16 %v4232, %v4231
        %v4245 = vpack.c.b16 %v4234, %v4233
        %v4246 = vpack.c.b16 %v4236, %v4235
        %v4247 = vpack.c.b16 %v4238, %v4237
        %v4248 = vpack.c.b16 %v4240, %v4239
        %4257 = vmatprep.subr.bf16.mxu0 0
        %4258 = vmatpush1.bf16.msra.mxu0 %v4241
        %4259 = vmatprep.subr.bf16.mxu0 0
        %4260 = vmatpush1.bf16.msra.mxu0 %v4242
        %4261 = vmatprep.subr.bf16.mxu0 0
        %4262 = vmatpush1.bf16.msra.mxu0 %v4243
        %4263 = vmatprep.subr.bf16.mxu0 0
        %4264 = vmatpush1.bf16.msra.mxu0 %v4244
        %4265 = vmatprep.subr.bf16.mxu0 0
        %4266 = vmatpush1.bf16.msra.mxu0 %v4245
        %4267 = vmatprep.subr.bf16.mxu0 0
        %4268 = vmatpush1.bf16.msra.mxu0 %v4246
        %4269 = vmatprep.subr.bf16.mxu0 0
        %4270 = vmatpush1.bf16.msra.mxu0 %v4247
        %4271 = vmatprep.subr.bf16.mxu0 0
        %4272 = vmatpush1.bf16.msra.mxu0 %v4248
        %4273 = vmatprep.subr.bf16.mxu0 0
        %4274 = vmatpush1.bf16.msra.mxu0 0
        %4275 = vmatprep.subr.bf16.mxu0 0
        %4276 = vmatpush1.bf16.msra.mxu0 0
        %4277 = vmatprep.subr.bf16.mxu0 0
        %4278 = vmatpush1.bf16.msra.mxu0 0
        %4279 = vmatprep.subr.bf16.mxu0 0
        %4280 = vmatpush1.bf16.msra.mxu0 0
        %4281 = vmatprep.subr.bf16.mxu0 0
        %4282 = vmatpush1.bf16.msra.mxu0 0
        %4283 = vmatprep.subr.bf16.mxu0 0
        %4284 = vmatpush1.bf16.msra.mxu0 0
        %4285 = vmatprep.subr.bf16.mxu0 0
        %4286 = vmatpush1.bf16.msra.mxu0 0
        %4287 = vmatprep.subr.bf16.mxu0 0
        %4288 = vmatpush1.bf16.msra.mxu0 0
        %4289 = vmatprep.mubr.bf16.mxu0 0
        %4290 = vmatmul.mubr.bf16.gmra.mrb[0].mxu0 %v813
        %v4291 = vpop.f32.mrb[0].mxu0
        %v4292 = vadd.f32 %v4207, %v4291
        %v4293 = vpop.f32.mrb[0].mxu0
        %v4294 = vpop.f32.mrb[0].mxu0
        %v4295 = vadd.f32 %v4207, %v4294
        %v4296 = vpop.f32.mrb[0].mxu0
        %4297 = vmatprep.mubr.bf16.mxu0 0
        %4298 = vmatmul.mubr.bf16.gmra.mrb[0].mxu0 %v814
        %v4299 = vpop.f32.mrb[0].mxu0
        %v4300 = vadd.f32 %v4207, %v4299
        %v4301 = vpop.f32.mrb[0].mxu0
        %v4302 = vpop.f32.mrb[0].mxu0
        %v4303 = vadd.f32 %v4207, %v4302
        %v4304 = vpop.f32.mrb[0].mxu0
        %4305 = vmatprep.mubr.bf16.mxu0 0
        %4306 = vmatmul.mubr.bf16.gmra.mrb[0].mxu0 %v815
        %v4307 = vpop.f32.mrb[0].mxu0
        %v4308 = vadd.f32 %v4207, %v4307
        %v4309 = vpop.f32.mrb[0].mxu0
        %v4310 = vpop.f32.mrb[0].mxu0
        %v4311 = vadd.f32 %v4207, %v4310
        %v4312 = vpop.f32.mrb[0].mxu0
        %4313 = vmatprep.mubr.bf16.mxu0 0
        %4314 = vmatmul.mubr.bf16.gmra.mrb[0].mxu0 %v816
        %v4315 = vpop.f32.mrb[0].mxu0
        %v4316 = vadd.f32 %v4207, %v4315
        %v4317 = vpop.f32.mrb[0].mxu0
        %v4318 = vpop.f32.mrb[0].mxu0
        %v4319 = vadd.f32 %v4207, %v4318
        %v4320 = vpop.f32.mrb[0].mxu0
        %4321 = vmatprep.mubr.bf16.mxu0 0
        %4322 = vmatmul.mubr.bf16.gmra.mrb[0].mxu0 %v817
        %v4323 = vpop.f32.mrb[0].mxu0
        %v4324 = vadd.f32 %v4207, %v4323
        %v4325 = vpop.f32.mrb[0].mxu0
        %v4326 = vpop.f32.mrb[0].mxu0
        %v4327 = vadd.f32 %v4207, %v4326
        %v4328 = vpop.f32.mrb[0].mxu0
        %4329 = vmatprep.mubr.bf16.mxu0 0
        %4330 = vmatmul.mubr.bf16.gmra.mrb[0].mxu0 %v818
        %v4331 = vpop.f32.mrb[0].mxu0
        %v4332 = vadd.f32 %v4207, %v4331
        %v4333 = vpop.f32.mrb[0].mxu0
        %v4334 = vpop.f32.mrb[0].mxu0
        %v4335 = vadd.f32 %v4207, %v4334
        %v4336 = vpop.f32.mrb[0].mxu0
        %4337 = vmatprep.mubr.bf16.mxu0 0
        %4338 = vmatmul.mubr.bf16.gmra.mrb[0].mxu0 %v819
        %v4339 = vpop.f32.mrb[0].mxu0
        %v4340 = vadd.f32 %v4207, %v4339
        %v4341 = vpop.f32.mrb[0].mxu0
        %v4342 = vpop.f32.mrb[0].mxu0
        %v4343 = vadd.f32 %v4207, %v4342
        %v4344 = vpop.f32.mrb[0].mxu0
        %4345 = vmatprep.mubr.bf16.mxu0 0
        %4346 = vmatmul.mubr.bf16.gmra.mrb[0].mxu0 %v820
        %v4347 = vpop.f32.mrb[0].mxu0
        %v4348 = vadd.f32 %v4207, %v4347
        %v4349 = vpop.f32.mrb[0].mxu0
        %v4350 = vpop.f32.mrb[0].mxu0
        %v4351 = vadd.f32 %v4207, %v4350
        %v4352 = vpop.f32.mrb[0].mxu0
        %4353 = vdwg.mxu0
        %s4354 = scalar_lea.vmem %s4, 192
        %v4355 = vld [vmem:[%s4354] sm:$0xf]
        %v4356 = vld [vmem:[%s4354 + $0x4] sm:$0xf]
        %v4357 = vld [vmem:[%s4354 + $0x8] sm:$0xf]
        %v4358 = vld [vmem:[%s4354 + $0xc] sm:$0xf]
        %v4359 = vld [vmem:[%s4354 + $0x10] sm:$0xf]
        %v4360 = vld [vmem:[%s4354 + $0x14] sm:$0xf]
        %v4361 = vld [vmem:[%s4354 + $0x18] sm:$0xf]
        %v4362 = vld [vmem:[%s4354 + $0x1c] sm:$0xf]
        %v4363 = vld [vmem:[%s4354 + $0x20] sm:$0xf]
        %v4364 = vld [vmem:[%s4354 + $0x24] sm:$0xf]
        %v4365 = vld [vmem:[%s4354 + $0x28] sm:$0xf]
        %v4366 = vld [vmem:[%s4354 + $0x2c] sm:$0xf]
        %v4367 = vld [vmem:[%s4354 + $0x30] sm:$0xf]
        %v4368 = vld [vmem:[%s4354 + $0x34] sm:$0xf]
        %v4369 = vld [vmem:[%s4354 + $0x38] sm:$0xf]
        %v4370 = vld [vmem:[%s4354 + $0x3c] sm:$0xf]
        %s4371 = scalar_lea.vmem %s7, 3
        %v4372 = vld [vmem:[%s4371] sm:$0x1]
        %v4374 = vlaneseq
        %v4375 = vshrl.u32 %v4374, 7
        %v4376 = vsub.s32 0, %v4375
        %v4377 = vrot.slane %v4372, %v4376
        %v4395 = vunpack.c.l.b16 %v4355
        %v4396 = vunpack.c.l.b16 %v4356
        %v4397 = vunpack.c.l.b16 %v4357
        %v4398 = vunpack.c.l.b16 %v4358
        %v4399 = vunpack.c.l.b16 %v4359
        %v4400 = vunpack.c.l.b16 %v4360
        %v4401 = vunpack.c.l.b16 %v4361
        %v4402 = vunpack.c.l.b16 %v4362
        %v4403 = vunpack.c.l.b16 %v4363
        %v4404 = vunpack.c.l.b16 %v4364
        %v4405 = vunpack.c.l.b16 %v4365
        %v4406 = vunpack.c.l.b16 %v4366
        %v4407 = vunpack.c.l.b16 %v4367
        %v4408 = vunpack.c.l.b16 %v4368
        %v4409 = vunpack.c.l.b16 %v4369
        %v4410 = vunpack.c.l.b16 %v4370
        %v4411 = vpack.c.b16 %v4396, %v4395
        %v4412 = vpack.c.b16 %v4398, %v4397
        %v4413 = vpack.c.b16 %v4400, %v4399
        %v4414 = vpack.c.b16 %v4402, %v4401
        %v4415 = vpack.c.b16 %v4404, %v4403
        %v4416 = vpack.c.b16 %v4406, %v4405
        %v4417 = vpack.c.b16 %v4408, %v4407
        %v4418 = vpack.c.b16 %v4410, %v4409
        %4427 = vmatprep.subr.bf16.mxu0 0
        %4428 = vmatpush1.bf16.msra.mxu0 %v4411
        %4429 = vmatprep.subr.bf16.mxu0 0
        %4430 = vmatpush1.bf16.msra.mxu0 %v4412
        %4431 = vmatprep.subr.bf16.mxu0 0
        %4432 = vmatpush1.bf16.msra.mxu0 %v4413
        %4433 = vmatprep.subr.bf16.mxu0 0
        %4434 = vmatpush1.bf16.msra.mxu0 %v4414
        %4435 = vmatprep.subr.bf16.mxu0 0
        %4436 = vmatpush1.bf16.msra.mxu0 %v4415
        %4437 = vmatprep.subr.bf16.mxu0 0
        %4438 = vmatpush1.bf16.msra.mxu0 %v4416
        %4439 = vmatprep.subr.bf16.mxu0 0
        %4440 = vmatpush1.bf16.msra.mxu0 %v4417
        %4441 = vmatprep.subr.bf16.mxu0 0
        %4442 = vmatpush1.bf16.msra.mxu0 %v4418
        %4443 = vmatprep.subr.bf16.mxu0 0
        %4444 = vmatpush1.bf16.msra.mxu0 0
        %4445 = vmatprep.subr.bf16.mxu0 0
        %4446 = vmatpush1.bf16.msra.mxu0 0
        %4447 = vmatprep.subr.bf16.mxu0 0
        %4448 = vmatpush1.bf16.msra.mxu0 0
        %4449 = vmatprep.subr.bf16.mxu0 0
        %4450 = vmatpush1.bf16.msra.mxu0 0
        %4451 = vmatprep.subr.bf16.mxu0 0
        %4452 = vmatpush1.bf16.msra.mxu0 0
        %4453 = vmatprep.subr.bf16.mxu0 0
        %4454 = vmatpush1.bf16.msra.mxu0 0
        %4455 = vmatprep.subr.bf16.mxu0 0
        %4456 = vmatpush1.bf16.msra.mxu0 0
        %4457 = vmatprep.subr.bf16.mxu0 0
        %4458 = vmatpush1.bf16.msra.mxu0 0
        %4459 = vmatprep.mubr.bf16.mxu0 0
        %4460 = vmatmul.mubr.bf16.gmra.mrb[0].mxu0 %v813
        %v4461 = vpop.f32.mrb[0].mxu0
        %v4462 = vadd.f32 %v4377, %v4461
        %v4463 = vpop.f32.mrb[0].mxu0
        %v4464 = vpop.f32.mrb[0].mxu0
        %v4465 = vadd.f32 %v4377, %v4464
        %v4466 = vpop.f32.mrb[0].mxu0
        %4467 = vmatprep.mubr.bf16.mxu0 0
        %4468 = vmatmul.mubr.bf16.gmra.mrb[0].mxu0 %v814
        %v4469 = vpop.f32.mrb[0].mxu0
        %v4470 = vadd.f32 %v4377, %v4469
        %v4471 = vpop.f32.mrb[0].mxu0
        %v4472 = vpop.f32.mrb[0].mxu0
        %v4473 = vadd.f32 %v4377, %v4472
        %v4474 = vpop.f32.mrb[0].mxu0
        %4475 = vmatprep.mubr.bf16.mxu0 0
        %4476 = vmatmul.mubr.bf16.gmra.mrb[0].mxu0 %v815
        %v4477 = vpop.f32.mrb[0].mxu0
        %v4478 = vadd.f32 %v4377, %v4477
        %v4479 = vpop.f32.mrb[0].mxu0
        %v4480 = vpop.f32.mrb[0].mxu0
        %v4481 = vadd.f32 %v4377, %v4480
        %v4482 = vpop.f32.mrb[0].mxu0
        %4483 = vmatprep.mubr.bf16.mxu0 0
        %4484 = vmatmul.mubr.bf16.gmra.mrb[0].mxu0 %v816
        %v4485 = vpop.f32.mrb[0].mxu0
        %v4486 = vadd.f32 %v4377, %v4485
        %v4487 = vpop.f32.mrb[0].mxu0
        %v4488 = vpop.f32.mrb[0].mxu0
        %v4489 = vadd.f32 %v4377, %v4488
        %v4490 = vpop.f32.mrb[0].mxu0
        %4491 = vmatprep.mubr.bf16.mxu0 0
        %4492 = vmatmul.mubr.bf16.gmra.mrb[0].mxu0 %v817
        %v4493 = vpop.f32.mrb[0].mxu0
        %v4494 = vadd.f32 %v4377, %v4493
        %v4495 = vpop.f32.mrb[0].mxu0
        %v4496 = vpop.f32.mrb[0].mxu0
        %v4497 = vadd.f32 %v4377, %v4496
        %v4498 = vpop.f32.mrb[0].mxu0
        %4499 = vmatprep.mubr.bf16.mxu0 0
        %4500 = vmatmul.mubr.bf16.gmra.mrb[0].mxu0 %v818
        %v4501 = vpop.f32.mrb[0].mxu0
        %v4502 = vadd.f32 %v4377, %v4501
        %v4503 = vpop.f32.mrb[0].mxu0
        %v4504 = vpop.f32.mrb[0].mxu0
        %v4505 = vadd.f32 %v4377, %v4504
        %v4506 = vpop.f32.mrb[0].mxu0
        %4507 = vmatprep.mubr.bf16.mxu0 0
        %4508 = vmatmul.mubr.bf16.gmra.mrb[0].mxu0 %v819
        %v4509 = vpop.f32.mrb[0].mxu0
        %v4510 = vadd.f32 %v4377, %v4509
        %v4511 = vpop.f32.mrb[0].mxu0
        %v4512 = vpop.f32.mrb[0].mxu0
        %v4513 = vadd.f32 %v4377, %v4512
        %v4514 = vpop.f32.mrb[0].mxu0
        %4515 = vmatprep.mubr.bf16.mxu0 0
        %4516 = vmatmul.mubr.bf16.gmra.mrb[0].mxu0 %v820
        %v4517 = vpop.f32.mrb[0].mxu0
        %v4518 = vadd.f32 %v4377, %v4517
        %v4519 = vpop.f32.mrb[0].mxu0
        %v4520 = vpop.f32.mrb[0].mxu0
        %v4521 = vadd.f32 %v4377, %v4520
        %v4522 = vpop.f32.mrb[0].mxu0
        %4523 = vdwg.mxu0
        %s4524 = scalar_lea.vmem %s5, 192
        %v4525 = vld [vmem:[%s4524] sm:$0xf]
        %v4526 = vld [vmem:[%s4524 + $0x4] sm:$0xf]
        %v4527 = vld [vmem:[%s4524 + $0x8] sm:$0xf]
        %v4528 = vld [vmem:[%s4524 + $0xc] sm:$0xf]
        %v4529 = vld [vmem:[%s4524 + $0x10] sm:$0xf]
        %v4530 = vld [vmem:[%s4524 + $0x14] sm:$0xf]
        %v4531 = vld [vmem:[%s4524 + $0x18] sm:$0xf]
        %v4532 = vld [vmem:[%s4524 + $0x1c] sm:$0xf]
        %v4533 = vld [vmem:[%s4524 + $0x20] sm:$0xf]
        %v4534 = vld [vmem:[%s4524 + $0x24] sm:$0xf]
        %v4535 = vld [vmem:[%s4524 + $0x28] sm:$0xf]
        %v4536 = vld [vmem:[%s4524 + $0x2c] sm:$0xf]
        %v4537 = vld [vmem:[%s4524 + $0x30] sm:$0xf]
        %v4538 = vld [vmem:[%s4524 + $0x34] sm:$0xf]
        %v4539 = vld [vmem:[%s4524 + $0x38] sm:$0xf]
        %v4540 = vld [vmem:[%s4524 + $0x3c] sm:$0xf]
        %s4541 = scalar_lea.vmem %s8, 3
        %v4542 = vld [vmem:[%s4541] sm:$0x1]
        %v4544 = vlaneseq
        %v4545 = vshrl.u32 %v4544, 7
        %v4546 = vsub.s32 0, %v4545
        %v4547 = vrot.slane %v4542, %v4546
        %v4565 = vunpack.c.l.b16 %v4525
        %v4566 = vunpack.c.l.b16 %v4526
        %v4567 = vunpack.c.l.b16 %v4527
        %v4568 = vunpack.c.l.b16 %v4528
        %v4569 = vunpack.c.l.b16 %v4529
        %v4570 = vunpack.c.l.b16 %v4530
        %v4571 = vunpack.c.l.b16 %v4531
        %v4572 = vunpack.c.l.b16 %v4532
        %v4573 = vunpack.c.l.b16 %v4533
        %v4574 = vunpack.c.l.b16 %v4534
        %v4575 = vunpack.c.l.b16 %v4535
        %v4576 = vunpack.c.l.b16 %v4536
        %v4577 = vunpack.c.l.b16 %v4537
        %v4578 = vunpack.c.l.b16 %v4538
        %v4579 = vunpack.c.l.b16 %v4539
        %v4580 = vunpack.c.l.b16 %v4540
        %v4581 = vpack.c.b16 %v4566, %v4565
        %v4582 = vpack.c.b16 %v4568, %v4567
        %v4583 = vpack.c.b16 %v4570, %v4569
        %v4584 = vpack.c.b16 %v4572, %v4571
        %v4585 = vpack.c.b16 %v4574, %v4573
        %v4586 = vpack.c.b16 %v4576, %v4575
        %v4587 = vpack.c.b16 %v4578, %v4577
        %v4588 = vpack.c.b16 %v4580, %v4579
        %4597 = vmatprep.subr.bf16.mxu0 0
        %4598 = vmatpush1.bf16.msra.mxu0 %v4581
        %4599 = vmatprep.subr.bf16.mxu0 0
        %4600 = vmatpush1.bf16.msra.mxu0 %v4582
        %4601 = vmatprep.subr.bf16.mxu0 0
        %4602 = vmatpush1.bf16.msra.mxu0 %v4583
        %4603 = vmatprep.subr.bf16.mxu0 0
        %4604 = vmatpush1.bf16.msra.mxu0 %v4584
        %4605 = vmatprep.subr.bf16.mxu0 0
        %4606 = vmatpush1.bf16.msra.mxu0 %v4585
        %4607 = vmatprep.subr.bf16.mxu0 0
        %4608 = vmatpush1.bf16.msra.mxu0 %v4586
        %4609 = vmatprep.subr.bf16.mxu0 0
        %4610 = vmatpush1.bf16.msra.mxu0 %v4587
        %4611 = vmatprep.subr.bf16.mxu0 0
        %4612 = vmatpush1.bf16.msra.mxu0 %v4588
        %4613 = vmatprep.subr.bf16.mxu0 0
        %4614 = vmatpush1.bf16.msra.mxu0 0
        %4615 = vmatprep.subr.bf16.mxu0 0
        %4616 = vmatpush1.bf16.msra.mxu0 0
        %4617 = vmatprep.subr.bf16.mxu0 0
        %4618 = vmatpush1.bf16.msra.mxu0 0
        %4619 = vmatprep.subr.bf16.mxu0 0
        %4620 = vmatpush1.bf16.msra.mxu0 0
        %4621 = vmatprep.subr.bf16.mxu0 0
        %4622 = vmatpush1.bf16.msra.mxu0 0
        %4623 = vmatprep.subr.bf16.mxu0 0
        %4624 = vmatpush1.bf16.msra.mxu0 0
        %4625 = vmatprep.subr.bf16.mxu0 0
        %4626 = vmatpush1.bf16.msra.mxu0 0
        %4627 = vmatprep.subr.bf16.mxu0 0
        %4628 = vmatpush1.bf16.msra.mxu0 0
        %4629 = vmatprep.mubr.bf16.mxu0 0
        %4630 = vmatmul.mubr.bf16.gmra.mrb[0].mxu0 %v813
        %v4631 = vpop.f32.mrb[0].mxu0
        %v4632 = vadd.f32 %v4547, %v4631
        %v4633 = vpop.f32.mrb[0].mxu0
        %v4634 = vpop.f32.mrb[0].mxu0
        %v4635 = vadd.f32 %v4547, %v4634
        %v4636 = vpop.f32.mrb[0].mxu0
        %4637 = vmatprep.mubr.bf16.mxu0 0
        %4638 = vmatmul.mubr.bf16.gmra.mrb[0].mxu0 %v814
        %v4639 = vpop.f32.mrb[0].mxu0
        %v4640 = vadd.f32 %v4547, %v4639
        %v4641 = vpop.f32.mrb[0].mxu0
        %v4642 = vpop.f32.mrb[0].mxu0
        %v4643 = vadd.f32 %v4547, %v4642
        %v4644 = vpop.f32.mrb[0].mxu0
        %4645 = vmatprep.mubr.bf16.mxu0 0
        %4646 = vmatmul.mubr.bf16.gmra.mrb[0].mxu0 %v815
        %v4647 = vpop.f32.mrb[0].mxu0
        %v4648 = vadd.f32 %v4547, %v4647
        %v4649 = vpop.f32.mrb[0].mxu0
        %v4650 = vpop.f32.mrb[0].mxu0
        %v4651 = vadd.f32 %v4547, %v4650
        %v4652 = vpop.f32.mrb[0].mxu0
        %4653 = vmatprep.mubr.bf16.mxu0 0
        %4654 = vmatmul.mubr.bf16.gmra.mrb[0].mxu0 %v816
        %v4655 = vpop.f32.mrb[0].mxu0
        %v4656 = vadd.f32 %v4547, %v4655
        %v4657 = vpop.f32.mrb[0].mxu0
        %v4658 = vpop.f32.mrb[0].mxu0
        %v4659 = vadd.f32 %v4547, %v4658
        %v4660 = vpop.f32.mrb[0].mxu0
        %4661 = vmatprep.mubr.bf16.mxu0 0
        %4662 = vmatmul.mubr.bf16.gmra.mrb[0].mxu0 %v817
        %v4663 = vpop.f32.mrb[0].mxu0
        %v4664 = vadd.f32 %v4547, %v4663
        %v4665 = vpop.f32.mrb[0].mxu0
        %v4666 = vpop.f32.mrb[0].mxu0
        %v4667 = vadd.f32 %v4547, %v4666
        %v4668 = vpop.f32.mrb[0].mxu0
        %4669 = vmatprep.mubr.bf16.mxu0 0
        %4670 = vmatmul.mubr.bf16.gmra.mrb[0].mxu0 %v818
        %v4671 = vpop.f32.mrb[0].mxu0
        %v4672 = vadd.f32 %v4547, %v4671
        %v4673 = vpop.f32.mrb[0].mxu0
        %v4674 = vpop.f32.mrb[0].mxu0
        %v4675 = vadd.f32 %v4547, %v4674
        %v4676 = vpop.f32.mrb[0].mxu0
        %4677 = vmatprep.mubr.bf16.mxu0 0
        %4678 = vmatmul.mubr.bf16.gmra.mrb[0].mxu0 %v819
        %v4679 = vpop.f32.mrb[0].mxu0
        %v4680 = vadd.f32 %v4547, %v4679
        %v4681 = vpop.f32.mrb[0].mxu0
        %v4682 = vpop.f32.mrb[0].mxu0
        %v4683 = vadd.f32 %v4547, %v4682
        %v4684 = vpop.f32.mrb[0].mxu0
        %4685 = vmatprep.mubr.bf16.mxu0 0
        %4686 = vmatmul.mubr.bf16.gmra.mrb[0].mxu0 %v820
        %v4687 = vpop.f32.mrb[0].mxu0
        %v4688 = vadd.f32 %v4547, %v4687
        %v4689 = vpop.f32.mrb[0].mxu0
        %v4690 = vpop.f32.mrb[0].mxu0
        %v4691 = vadd.f32 %v4547, %v4690
        %v4692 = vpop.f32.mrb[0].mxu0
        %4693 = vdwg.mxu0
        %v4694 = vpack.c.bf16 %v4295, %v4292
        %v4695 = vpack.c.bf16 %v4303, %v4300
        %v4696 = vpack.c.bf16 %v4311, %v4308
        %v4697 = vpack.c.bf16 %v4319, %v4316
        %v4698 = vpack.c.bf16 %v4327, %v4324
        %v4699 = vpack.c.bf16 %v4335, %v4332
        %v4700 = vpack.c.bf16 %v4343, %v4340
        %v4701 = vpack.c.bf16 %v4351, %v4348
        %v4702 = vpack.c.bf16 %v4465, %v4462
        %v4703 = vpack.c.bf16 %v4473, %v4470
        %v4704 = vpack.c.bf16 %v4481, %v4478
        %v4705 = vpack.c.bf16 %v4489, %v4486
        %v4706 = vpack.c.bf16 %v4497, %v4494
        %v4707 = vpack.c.bf16 %v4505, %v4502
        %v4708 = vpack.c.bf16 %v4513, %v4510
        %v4709 = vpack.c.bf16 %v4521, %v4518
        %v4711 = vsel %vm1376, %v4694, 0
        %v4714 = vsel %vm1376, %v4695, 0
        %v4717 = vsel %vm1376, %v4696, 0
        %v4720 = vsel %vm1376, %v4697, 0
        %v4723 = vsel %vm1376, %v4698, 0
        %v4726 = vsel %vm1376, %v4699, 0
        %v4729 = vsel %vm1376, %v4700, 0
        %v4732 = vsel %vm1376, %v4701, 0
        %v4735 = vsel %vm1376, %v4702, 0
        %v4738 = vsel %vm1376, %v4703, 0
        %v4741 = vsel %vm1376, %v4704, 0
        %v4744 = vsel %vm1376, %v4705, 0
        %v4747 = vsel %vm1376, %v4706, 0
        %v4750 = vsel %vm1376, %v4707, 0
        %v4753 = vsel %vm1376, %v4708, 0
        %v4756 = vsel %vm1376, %v4709, 0
        %4758 = vmatprep.subr.bf16.mxu0 0
        %4759 = vmatpush1.bf16.xpose.msra.mxu0 %v4735
        %4760 = vmatprep.subr.bf16.mxu0 0
        %4761 = vmatpush1.bf16.xpose.msra.mxu0 %v4738
        %4762 = vmatprep.subr.bf16.mxu0 0
        %4763 = vmatpush1.bf16.xpose.msra.mxu0 %v4741
        %4764 = vmatprep.subr.bf16.mxu0 0
        %4765 = vmatpush1.bf16.xpose.msra.mxu0 %v4744
        %4766 = vmatprep.subr.bf16.mxu0 0
        %4767 = vmatpush1.bf16.xpose.msra.mxu0 %v4747
        %4768 = vmatprep.subr.bf16.mxu0 0
        %4769 = vmatpush1.bf16.xpose.msra.mxu0 %v4750
        %4770 = vmatprep.subr.bf16.mxu0 0
        %4771 = vmatpush1.bf16.xpose.msra.mxu0 %v4753
        %4772 = vmatprep.subr.bf16.mxu0 0
        %4773 = vmatpush1.bf16.xpose.msra.mxu0 %v4756
        %4774 = vmatprep.subr.bf16.mxu0 0
        %4775 = vmatpush1.bf16.xpose.msra.mxu0 0
        %4776 = vmatprep.subr.bf16.mxu0 0
        %4777 = vmatpush1.bf16.xpose.msra.mxu0 0
        %4778 = vmatprep.subr.bf16.mxu0 0
        %4779 = vmatpush1.bf16.xpose.msra.mxu0 0
        %4780 = vmatprep.subr.bf16.mxu0 0
        %4781 = vmatpush1.bf16.xpose.msra.mxu0 0
        %4782 = vmatprep.subr.bf16.mxu0 0
        %4783 = vmatpush1.bf16.xpose.msra.mxu0 0
        %4784 = vmatprep.subr.bf16.mxu0 0
        %4785 = vmatpush1.bf16.xpose.msra.mxu0 0
        %4786 = vmatprep.subr.bf16.mxu0 0
        %4787 = vmatpush1.bf16.xpose.msra.mxu0 0
        %4788 = vmatprep.subr.bf16.mxu0 0
        %4789 = vmatpush1.bf16.xpose.msra.mxu0 0
        %4790 = vmatprep.mubr.bf16.mxu0 0
        %4791 = vmatmul.mubr.bf16.gmra.mrb[0].mxu0 %v4711
        %v4792 = vpop.f32.mrb[0].mxu0
        %v4793 = vadd.f32 0.0, %v4792
        %v4794 = vpop.f32.mrb[0].mxu0
        %v4795 = vpop.f32.mrb[0].mxu0
        %v4796 = vadd.f32 0.0, %v4795
        %v4797 = vpop.f32.mrb[0].mxu0
        %4798 = vmatprep.mubr.bf16.mxu0 0
        %4799 = vmatmul.mubr.bf16.gmra.mrb[0].mxu0 %v4714
        %v4800 = vpop.f32.mrb[0].mxu0
        %v4801 = vadd.f32 0.0, %v4800
        %v4802 = vpop.f32.mrb[0].mxu0
        %v4803 = vpop.f32.mrb[0].mxu0
        %v4804 = vadd.f32 0.0, %v4803
        %v4805 = vpop.f32.mrb[0].mxu0
        %4806 = vmatprep.mubr.bf16.mxu0 0
        %4807 = vmatmul.mubr.bf16.gmra.mrb[0].mxu0 %v4717
        %v4808 = vpop.f32.mrb[0].mxu0
        %v4809 = vadd.f32 0.0, %v4808
        %v4810 = vpop.f32.mrb[0].mxu0
        %v4811 = vpop.f32.mrb[0].mxu0
        %v4812 = vadd.f32 0.0, %v4811
        %v4813 = vpop.f32.mrb[0].mxu0
        %4814 = vmatprep.mubr.bf16.mxu0 0
        %4815 = vmatmul.mubr.bf16.gmra.mrb[0].mxu0 %v4720
        %v4816 = vpop.f32.mrb[0].mxu0
        %v4817 = vadd.f32 0.0, %v4816
        %v4818 = vpop.f32.mrb[0].mxu0
        %v4819 = vpop.f32.mrb[0].mxu0
        %v4820 = vadd.f32 0.0, %v4819
        %v4821 = vpop.f32.mrb[0].mxu0
        %4822 = vmatprep.mubr.bf16.mxu0 0
        %4823 = vmatmul.mubr.bf16.gmra.mrb[0].mxu0 %v4723
        %v4824 = vpop.f32.mrb[0].mxu0
        %v4825 = vadd.f32 0.0, %v4824
        %v4826 = vpop.f32.mrb[0].mxu0
        %v4827 = vpop.f32.mrb[0].mxu0
        %v4828 = vadd.f32 0.0, %v4827
        %v4829 = vpop.f32.mrb[0].mxu0
        %4830 = vmatprep.mubr.bf16.mxu0 0
        %4831 = vmatmul.mubr.bf16.gmra.mrb[0].mxu0 %v4726
        %v4832 = vpop.f32.mrb[0].mxu0
        %v4833 = vadd.f32 0.0, %v4832
        %v4834 = vpop.f32.mrb[0].mxu0
        %v4835 = vpop.f32.mrb[0].mxu0
        %v4836 = vadd.f32 0.0, %v4835
        %v4837 = vpop.f32.mrb[0].mxu0
        %4838 = vmatprep.mubr.bf16.mxu0 0
        %4839 = vmatmul.mubr.bf16.gmra.mrb[0].mxu0 %v4729
        %v4840 = vpop.f32.mrb[0].mxu0
        %v4841 = vadd.f32 0.0, %v4840
        %v4842 = vpop.f32.mrb[0].mxu0
        %v4843 = vpop.f32.mrb[0].mxu0
        %v4844 = vadd.f32 0.0, %v4843
        %v4845 = vpop.f32.mrb[0].mxu0
        %4846 = vmatprep.mubr.bf16.mxu0 0
        %4847 = vmatmul.mubr.bf16.gmra.mrb[0].mxu0 %v4732
        %v4848 = vpop.f32.mrb[0].mxu0
        %v4849 = vadd.f32 0.0, %v4848
        %v4850 = vpop.f32.mrb[0].mxu0
        %v4851 = vpop.f32.mrb[0].mxu0
        %v4852 = vadd.f32 0.0, %v4851
        %v4853 = vpop.f32.mrb[0].mxu0
        %4854 = vdwg.mxu0
        %v4855 = vmul.f32 %v4793, 0.17677669
        %v4856 = vmul.f32 %v4796, 0.17677669
        %v4857 = vmul.f32 %v4801, 0.17677669
        %v4858 = vmul.f32 %v4804, 0.17677669
        %v4859 = vmul.f32 %v4809, 0.17677669
        %v4860 = vmul.f32 %v4812, 0.17677669
        %v4861 = vmul.f32 %v4817, 0.17677669
        %v4862 = vmul.f32 %v4820, 0.17677669
        %v4863 = vmul.f32 %v4825, 0.17677669
        %v4864 = vmul.f32 %v4828, 0.17677669
        %v4865 = vmul.f32 %v4833, 0.17677669
        %v4866 = vmul.f32 %v4836, 0.17677669
        %v4867 = vmul.f32 %v4841, 0.17677669
        %v4868 = vmul.f32 %v4844, 0.17677669
        %v4869 = vmul.f32 %v4849, 0.17677669
        %v4870 = vmul.f32 %v4852, 0.17677669
        %v4871 = vsel %vm840, %v4855, -1e+30
        %v4872 = vsel %vm841, %v4856, -1e+30
        %v4873 = vsel %vm842, %v4857, -1e+30
        %v4874 = vsel %vm843, %v4858, -1e+30
        %v4875 = vsel %vm844, %v4859, -1e+30
        %v4876 = vsel %vm845, %v4860, -1e+30
        %v4877 = vsel %vm846, %v4861, -1e+30
        %v4878 = vsel %vm847, %v4862, -1e+30
        %v4879 = vsel %vm848, %v4863, -1e+30
        %v4880 = vsel %vm849, %v4864, -1e+30
        %v4881 = vsel %vm850, %v4865, -1e+30
        %v4882 = vsel %vm851, %v4866, -1e+30
        %v4883 = vsel %vm852, %v4867, -1e+30
        %v4884 = vsel %vm853, %v4868, -1e+30
        %v4885 = vsel %vm854, %v4869, -1e+30
        %v4886 = vsel %vm855, %v4870, -1e+30
        %4887 = vmax.xlane.f32.xlu0 %v4871
        %v4888 = vpop.xlane.xlu0 %4887
        %4889 = vmax.xlane.f32.xlu0 %v4872
        %v4890 = vpop.xlane.xlu0 %4889
        %4891 = vmax.xlane.f32.xlu0 %v4873
        %v4892 = vpop.xlane.xlu0 %4891
        %4893 = vmax.xlane.f32.xlu0 %v4874
        %v4894 = vpop.xlane.xlu0 %4893
        %4895 = vmax.xlane.f32.xlu0 %v4875
        %v4896 = vpop.xlane.xlu0 %4895
        %4897 = vmax.xlane.f32.xlu0 %v4876
        %v4898 = vpop.xlane.xlu0 %4897
        %4899 = vmax.xlane.f32.xlu0 %v4877
        %v4900 = vpop.xlane.xlu0 %4899
        %4901 = vmax.xlane.f32.xlu0 %v4878
        %v4902 = vpop.xlane.xlu0 %4901
        %4903 = vmax.xlane.f32.xlu0 %v4879
        %v4904 = vpop.xlane.xlu0 %4903
        %4905 = vmax.xlane.f32.xlu0 %v4880
        %v4906 = vpop.xlane.xlu0 %4905
        %4907 = vmax.xlane.f32.xlu0 %v4881
        %v4908 = vpop.xlane.xlu0 %4907
        %4909 = vmax.xlane.f32.xlu0 %v4882
        %v4910 = vpop.xlane.xlu0 %4909
        %4911 = vmax.xlane.f32.xlu0 %v4883
        %v4912 = vpop.xlane.xlu0 %4911
        %4913 = vmax.xlane.f32.xlu0 %v4884
        %v4914 = vpop.xlane.xlu0 %4913
        %4915 = vmax.xlane.f32.xlu0 %v4885
        %v4916 = vpop.xlane.xlu0 %4915
        %4917 = vmax.xlane.f32.xlu0 %v4886
        %v4918 = vpop.xlane.xlu0 %4917
        %v4919 = vsub.f32 %v4871, %v4888
        %v4920 = vsub.f32 %v4872, %v4890
        %v4921 = vsub.f32 %v4873, %v4892
        %v4922 = vsub.f32 %v4874, %v4894
        %v4923 = vsub.f32 %v4875, %v4896
        %v4924 = vsub.f32 %v4876, %v4898
        %v4925 = vsub.f32 %v4877, %v4900
        %v4926 = vsub.f32 %v4878, %v4902
        %v4927 = vsub.f32 %v4879, %v4904
        %v4928 = vsub.f32 %v4880, %v4906
        %v4929 = vsub.f32 %v4881, %v4908
        %v4930 = vsub.f32 %v4882, %v4910
        %v4931 = vsub.f32 %v4883, %v4912
        %v4932 = vsub.f32 %v4884, %v4914
        %v4933 = vsub.f32 %v4885, %v4916
        %v4934 = vsub.f32 %v4886, %v4918
        %v4935 = vmul.f32 %v4919, 1.442695
        %v4936 = vpow.pop %v4935
        %v4937 = vmul.f32 %v4920, 1.442695
        %v4938 = vpow.pop %v4937
        %v4939 = vmul.f32 %v4921, 1.442695
        %v4940 = vpow.pop %v4939
        %v4941 = vmul.f32 %v4922, 1.442695
        %v4942 = vpow.pop %v4941
        %v4943 = vmul.f32 %v4923, 1.442695
        %v4944 = vpow.pop %v4943
        %v4945 = vmul.f32 %v4924, 1.442695
        %v4946 = vpow.pop %v4945
        %v4947 = vmul.f32 %v4925, 1.442695
        %v4948 = vpow.pop %v4947
        %v4949 = vmul.f32 %v4926, 1.442695
        %v4950 = vpow.pop %v4949
        %v4951 = vmul.f32 %v4927, 1.442695
        %v4952 = vpow.pop %v4951
        %v4953 = vmul.f32 %v4928, 1.442695
        %v4954 = vpow.pop %v4953
        %v4955 = vmul.f32 %v4929, 1.442695
        %v4956 = vpow.pop %v4955
        %v4957 = vmul.f32 %v4930, 1.442695
        %v4958 = vpow.pop %v4957
        %v4959 = vmul.f32 %v4931, 1.442695
        %v4960 = vpow.pop %v4959
        %v4961 = vmul.f32 %v4932, 1.442695
        %v4962 = vpow.pop %v4961
        %v4963 = vmul.f32 %v4933, 1.442695
        %v4964 = vpow.pop %v4963
        %v4965 = vmul.f32 %v4934, 1.442695
        %v4966 = vpow.pop %v4965
        %4967 = vadd.xlane.f32.xlu0 %v4936
        %v4968 = vpop.xlane.xlu0 %4967
        %4969 = vadd.xlane.f32.xlu0 %v4938
        %v4970 = vpop.xlane.xlu0 %4969
        %4971 = vadd.xlane.f32.xlu0 %v4940
        %v4972 = vpop.xlane.xlu0 %4971
        %4973 = vadd.xlane.f32.xlu0 %v4942
        %v4974 = vpop.xlane.xlu0 %4973
        %4975 = vadd.xlane.f32.xlu0 %v4944
        %v4976 = vpop.xlane.xlu0 %4975
        %4977 = vadd.xlane.f32.xlu0 %v4946
        %v4978 = vpop.xlane.xlu0 %4977
        %4979 = vadd.xlane.f32.xlu0 %v4948
        %v4980 = vpop.xlane.xlu0 %4979
        %4981 = vadd.xlane.f32.xlu0 %v4950
        %v4982 = vpop.xlane.xlu0 %4981
        %4983 = vadd.xlane.f32.xlu0 %v4952
        %v4984 = vpop.xlane.xlu0 %4983
        %4985 = vadd.xlane.f32.xlu0 %v4954
        %v4986 = vpop.xlane.xlu0 %4985
        %4987 = vadd.xlane.f32.xlu0 %v4956
        %v4988 = vpop.xlane.xlu0 %4987
        %4989 = vadd.xlane.f32.xlu0 %v4958
        %v4990 = vpop.xlane.xlu0 %4989
        %4991 = vadd.xlane.f32.xlu0 %v4960
        %v4992 = vpop.xlane.xlu0 %4991
        %4993 = vadd.xlane.f32.xlu0 %v4962
        %v4994 = vpop.xlane.xlu0 %4993
        %4995 = vadd.xlane.f32.xlu0 %v4964
        %v4996 = vpop.xlane.xlu0 %4995
        %4997 = vadd.xlane.f32.xlu0 %v4966
        %v4998 = vpop.xlane.xlu0 %4997
        %v4999 = vrcp.pop %v4968
        %v5000 = vrcp.pop %v4970
        %v5001 = vrcp.pop %v4972
        %v5002 = vrcp.pop %v4974
        %v5003 = vrcp.pop %v4976
        %v5004 = vrcp.pop %v4978
        %v5005 = vrcp.pop %v4980
        %v5006 = vrcp.pop %v4982
        %v5007 = vrcp.pop %v4984
        %v5008 = vrcp.pop %v4986
        %v5009 = vrcp.pop %v4988
        %v5010 = vrcp.pop %v4990
        %v5011 = vrcp.pop %v4992
        %v5012 = vrcp.pop %v4994
        %v5013 = vrcp.pop %v4996
        %v5014 = vrcp.pop %v4998
        %v5015 = vmul.f32 %v4936, %v4999
        %v5016 = vmul.f32 %v4938, %v5000
        %v5017 = vmul.f32 %v4940, %v5001
        %v5018 = vmul.f32 %v4942, %v5002
        %v5019 = vmul.f32 %v4944, %v5003
        %v5020 = vmul.f32 %v4946, %v5004
        %v5021 = vmul.f32 %v4948, %v5005
        %v5022 = vmul.f32 %v4950, %v5006
        %v5023 = vmul.f32 %v4952, %v5007
        %v5024 = vmul.f32 %v4954, %v5008
        %v5025 = vmul.f32 %v4956, %v5009
        %v5026 = vmul.f32 %v4958, %v5010
        %v5027 = vmul.f32 %v4960, %v5011
        %v5028 = vmul.f32 %v4962, %v5012
        %v5029 = vmul.f32 %v4964, %v5013
        %v5030 = vmul.f32 %v4966, %v5014
        %v5031 = vpack.c.bf16 %v5016, %v5015
        %v5032 = vpack.c.bf16 %v5018, %v5017
        %v5033 = vpack.c.bf16 %v5020, %v5019
        %v5034 = vpack.c.bf16 %v5022, %v5021
        %v5035 = vpack.c.bf16 %v5024, %v5023
        %v5036 = vpack.c.bf16 %v5026, %v5025
        %v5037 = vpack.c.bf16 %v5028, %v5027
        %v5038 = vpack.c.bf16 %v5030, %v5029
        %v5039 = vpack.c.bf16 %v4635, %v4632
        %v5040 = vpack.c.bf16 %v4643, %v4640
        %v5041 = vpack.c.bf16 %v4651, %v4648
        %v5042 = vpack.c.bf16 %v4659, %v4656
        %v5043 = vpack.c.bf16 %v4667, %v4664
        %v5044 = vpack.c.bf16 %v4675, %v4672
        %v5045 = vpack.c.bf16 %v4683, %v4680
        %v5046 = vpack.c.bf16 %v4691, %v4688
        %5047 = vmatprep.subr.bf16.mxu0 0
        %5048 = vmatpush1.bf16.msra.mxu0 %v5039
        %5049 = vmatprep.subr.bf16.mxu0 0
        %5050 = vmatpush1.bf16.msra.mxu0 %v5040
        %5051 = vmatprep.subr.bf16.mxu0 0
        %5052 = vmatpush1.bf16.msra.mxu0 %v5041
        %5053 = vmatprep.subr.bf16.mxu0 0
        %5054 = vmatpush1.bf16.msra.mxu0 %v5042
        %5055 = vmatprep.subr.bf16.mxu0 0
        %5056 = vmatpush1.bf16.msra.mxu0 %v5043
        %5057 = vmatprep.subr.bf16.mxu0 0
        %5058 = vmatpush1.bf16.msra.mxu0 %v5044
        %5059 = vmatprep.subr.bf16.mxu0 0
        %5060 = vmatpush1.bf16.msra.mxu0 %v5045
        %5061 = vmatprep.subr.bf16.mxu0 0
        %5062 = vmatpush1.bf16.msra.mxu0 %v5046
        %5063 = vmatprep.subr.bf16.mxu0 0
        %5064 = vmatpush1.bf16.msra.mxu0 0
        %5065 = vmatprep.subr.bf16.mxu0 0
        %5066 = vmatpush1.bf16.msra.mxu0 0
        %5067 = vmatprep.subr.bf16.mxu0 0
        %5068 = vmatpush1.bf16.msra.mxu0 0
        %5069 = vmatprep.subr.bf16.mxu0 0
        %5070 = vmatpush1.bf16.msra.mxu0 0
        %5071 = vmatprep.subr.bf16.mxu0 0
        %5072 = vmatpush1.bf16.msra.mxu0 0
        %5073 = vmatprep.subr.bf16.mxu0 0
        %5074 = vmatpush1.bf16.msra.mxu0 0
        %5075 = vmatprep.subr.bf16.mxu0 0
        %5076 = vmatpush1.bf16.msra.mxu0 0
        %5077 = vmatprep.subr.bf16.mxu0 0
        %5078 = vmatpush1.bf16.msra.mxu0 0
        %5079 = vmatprep.mubr.bf16.mxu0 0
        %5080 = vmatmul.mubr.bf16.gmra.mrb[0].mxu0 %v5031
        %v5081 = vpop.f32.mrb[0].mxu0
        %v5082 = vadd.f32 0.0, %v5081
        %v5083 = vpop.f32.mrb[0].mxu0
        %v5084 = vpop.f32.mrb[0].mxu0
        %v5085 = vadd.f32 0.0, %v5084
        %v5086 = vpop.f32.mrb[0].mxu0
        %5087 = vmatprep.mubr.bf16.mxu0 0
        %5088 = vmatmul.mubr.bf16.gmra.mrb[0].mxu0 %v5032
        %v5089 = vpop.f32.mrb[0].mxu0
        %v5090 = vadd.f32 0.0, %v5089
        %v5091 = vpop.f32.mrb[0].mxu0
        %v5092 = vpop.f32.mrb[0].mxu0
        %v5093 = vadd.f32 0.0, %v5092
        %v5094 = vpop.f32.mrb[0].mxu0
        %5095 = vmatprep.mubr.bf16.mxu0 0
        %5096 = vmatmul.mubr.bf16.gmra.mrb[0].mxu0 %v5033
        %v5097 = vpop.f32.mrb[0].mxu0
        %v5098 = vadd.f32 0.0, %v5097
        %v5099 = vpop.f32.mrb[0].mxu0
        %v5100 = vpop.f32.mrb[0].mxu0
        %v5101 = vadd.f32 0.0, %v5100
        %v5102 = vpop.f32.mrb[0].mxu0
        %5103 = vmatprep.mubr.bf16.mxu0 0
        %5104 = vmatmul.mubr.bf16.gmra.mrb[0].mxu0 %v5034
        %v5105 = vpop.f32.mrb[0].mxu0
        %v5106 = vadd.f32 0.0, %v5105
        %v5107 = vpop.f32.mrb[0].mxu0
        %v5108 = vpop.f32.mrb[0].mxu0
        %v5109 = vadd.f32 0.0, %v5108
        %v5110 = vpop.f32.mrb[0].mxu0
        %5111 = vmatprep.mubr.bf16.mxu0 0
        %5112 = vmatmul.mubr.bf16.gmra.mrb[0].mxu0 %v5035
        %v5113 = vpop.f32.mrb[0].mxu0
        %v5114 = vadd.f32 0.0, %v5113
        %v5115 = vpop.f32.mrb[0].mxu0
        %v5116 = vpop.f32.mrb[0].mxu0
        %v5117 = vadd.f32 0.0, %v5116
        %v5118 = vpop.f32.mrb[0].mxu0
        %5119 = vmatprep.mubr.bf16.mxu0 0
        %5120 = vmatmul.mubr.bf16.gmra.mrb[0].mxu0 %v5036
        %v5121 = vpop.f32.mrb[0].mxu0
        %v5122 = vadd.f32 0.0, %v5121
        %v5123 = vpop.f32.mrb[0].mxu0
        %v5124 = vpop.f32.mrb[0].mxu0
        %v5125 = vadd.f32 0.0, %v5124
        %v5126 = vpop.f32.mrb[0].mxu0
        %5127 = vmatprep.mubr.bf16.mxu0 0
        %5128 = vmatmul.mubr.bf16.gmra.mrb[0].mxu0 %v5037
        %v5129 = vpop.f32.mrb[0].mxu0
        %v5130 = vadd.f32 0.0, %v5129
        %v5131 = vpop.f32.mrb[0].mxu0
        %v5132 = vpop.f32.mrb[0].mxu0
        %v5133 = vadd.f32 0.0, %v5132
        %v5134 = vpop.f32.mrb[0].mxu0
        %5135 = vmatprep.mubr.bf16.mxu0 0
        %5136 = vmatmul.mubr.bf16.gmra.mrb[0].mxu0 %v5038
        %v5137 = vpop.f32.mrb[0].mxu0
        %v5138 = vadd.f32 0.0, %v5137
        %v5139 = vpop.f32.mrb[0].mxu0
        %v5140 = vpop.f32.mrb[0].mxu0
        %v5141 = vadd.f32 0.0, %v5140
        %v5142 = vpop.f32.mrb[0].mxu0
        %5143 = vdwg.mxu0
        %v5144 = vpack.c.bf16 %v5085, %v5082
        %v5145 = vpack.c.bf16 %v5093, %v5090
        %v5146 = vpack.c.bf16 %v5101, %v5098
        %v5147 = vpack.c.bf16 %v5109, %v5106
        %v5148 = vpack.c.bf16 %v5117, %v5114
        %v5149 = vpack.c.bf16 %v5125, %v5122
        %v5150 = vpack.c.bf16 %v5133, %v5130
        %v5151 = vpack.c.bf16 %v5141, %v5138
        %s5152 = scalar_lea.vmem %s9, 48
        %v5153 = vld [vmem:[%s5152] sm:$0xf]
        %v5154 = vld [vmem:[%s5152 + $0x4] sm:$0xf]
        %v5155 = vld [vmem:[%s5152 + $0x8] sm:$0xf]
        %v5156 = vld [vmem:[%s5152 + $0xc] sm:$0xf]
        %v5161 = vunpack.c.l.b16 %v5153
        %v5162 = vunpack.c.l.b16 %v5154
        %v5163 = vunpack.c.l.b16 %v5155
        %v5164 = vunpack.c.l.b16 %v5156
        %v5165 = vpack.c.b16 %v5162, %v5161
        %v5166 = vpack.c.b16 %v5164, %v5163
        %v5170 = vsel %vm1376, %v5144, 0
        %v5173 = vsel %vm1376, %v5145, 0
        %v5176 = vsel %vm1376, %v5146, 0
        %v5179 = vsel %vm1376, %v5147, 0
        %v5182 = vsel %vm1376, %v5148, 0
        %v5185 = vsel %vm1376, %v5149, 0
        %v5188 = vsel %vm1376, %v5150, 0
        %v5191 = vsel %vm1376, %v5151, 0
        %5193 = vmatprep.subr.bf16.mxu0 0
        %5194 = vmatpush1.bf16.msra.mxu0 %v5165
        %5195 = vmatprep.subr.bf16.mxu0 0
        %5196 = vmatpush1.bf16.msra.mxu0 %v5166
        %5197 = vmatprep.subr.bf16.mxu0 0
        %5198 = vmatpush1.bf16.msra.mxu0 0
        %5199 = vmatprep.subr.bf16.mxu0 0
        %5200 = vmatpush1.bf16.msra.mxu0 0
        %5201 = vmatprep.subr.bf16.mxu0 0
        %5202 = vmatpush1.bf16.msra.mxu0 0
        %5203 = vmatprep.subr.bf16.mxu0 0
        %5204 = vmatpush1.bf16.msra.mxu0 0
        %5205 = vmatprep.subr.bf16.mxu0 0
        %5206 = vmatpush1.bf16.msra.mxu0 0
        %5207 = vmatprep.subr.bf16.mxu0 0
        %5208 = vmatpush1.bf16.msra.mxu0 0
        %5209 = vmatprep.subr.bf16.mxu0 0
        %5210 = vmatpush1.bf16.msra.mxu0 0
        %5211 = vmatprep.subr.bf16.mxu0 0
        %5212 = vmatpush1.bf16.msra.mxu0 0
        %5213 = vmatprep.subr.bf16.mxu0 0
        %5214 = vmatpush1.bf16.msra.mxu0 0
        %5215 = vmatprep.subr.bf16.mxu0 0
        %5216 = vmatpush1.bf16.msra.mxu0 0
        %5217 = vmatprep.subr.bf16.mxu0 0
        %5218 = vmatpush1.bf16.msra.mxu0 0
        %5219 = vmatprep.subr.bf16.mxu0 0
        %5220 = vmatpush1.bf16.msra.mxu0 0
        %5221 = vmatprep.subr.bf16.mxu0 0
        %5222 = vmatpush1.bf16.msra.mxu0 0
        %5223 = vmatprep.subr.bf16.mxu0 0
        %5224 = vmatpush1.bf16.msra.mxu0 0
        %5225 = vmatprep.mubr.bf16.mxu0 0
        %5226 = vmatmul.mubr.bf16.gmra.mrb[0].mxu0 %v5170
        %v5227 = vpop.f32.mrb[0].mxu0
        %v5228 = vadd.f32 0.0, %v5227
        %v5229 = vpop.f32.mrb[0].mxu0
        %v5230 = vpop.f32.mrb[0].mxu0
        %v5231 = vadd.f32 0.0, %v5230
        %v5232 = vpop.f32.mrb[0].mxu0
        %5233 = vmatprep.mubr.bf16.mxu0 0
        %5234 = vmatmul.mubr.bf16.gmra.mrb[0].mxu0 %v5173
        %v5235 = vpop.f32.mrb[0].mxu0
        %v5236 = vadd.f32 0.0, %v5235
        %v5237 = vpop.f32.mrb[0].mxu0
        %v5238 = vpop.f32.mrb[0].mxu0
        %v5239 = vadd.f32 0.0, %v5238
        %v5240 = vpop.f32.mrb[0].mxu0
        %5241 = vmatprep.mubr.bf16.mxu0 0
        %5242 = vmatmul.mubr.bf16.gmra.mrb[0].mxu0 %v5176
        %v5243 = vpop.f32.mrb[0].mxu0
        %v5244 = vadd.f32 0.0, %v5243
        %v5245 = vpop.f32.mrb[0].mxu0
        %v5246 = vpop.f32.mrb[0].mxu0
        %v5247 = vadd.f32 0.0, %v5246
        %v5248 = vpop.f32.mrb[0].mxu0
        %5249 = vmatprep.mubr.bf16.mxu0 0
        %5250 = vmatmul.mubr.bf16.gmra.mrb[0].mxu0 %v5179
        %v5251 = vpop.f32.mrb[0].mxu0
        %v5252 = vadd.f32 0.0, %v5251
        %v5253 = vpop.f32.mrb[0].mxu0
        %v5254 = vpop.f32.mrb[0].mxu0
        %v5255 = vadd.f32 0.0, %v5254
        %v5256 = vpop.f32.mrb[0].mxu0
        %5257 = vmatprep.mubr.bf16.mxu0 0
        %5258 = vmatmul.mubr.bf16.gmra.mrb[0].mxu0 %v5182
        %v5259 = vpop.f32.mrb[0].mxu0
        %v5260 = vadd.f32 0.0, %v5259
        %v5261 = vpop.f32.mrb[0].mxu0
        %v5262 = vpop.f32.mrb[0].mxu0
        %v5263 = vadd.f32 0.0, %v5262
        %v5264 = vpop.f32.mrb[0].mxu0
        %5265 = vmatprep.mubr.bf16.mxu0 0
        %5266 = vmatmul.mubr.bf16.gmra.mrb[0].mxu0 %v5185
        %v5267 = vpop.f32.mrb[0].mxu0
        %v5268 = vadd.f32 0.0, %v5267
        %v5269 = vpop.f32.mrb[0].mxu0
        %v5270 = vpop.f32.mrb[0].mxu0
        %v5271 = vadd.f32 0.0, %v5270
        %v5272 = vpop.f32.mrb[0].mxu0
        %5273 = vmatprep.mubr.bf16.mxu0 0
        %5274 = vmatmul.mubr.bf16.gmra.mrb[0].mxu0 %v5188
        %v5275 = vpop.f32.mrb[0].mxu0
        %v5276 = vadd.f32 0.0, %v5275
        %v5277 = vpop.f32.mrb[0].mxu0
        %v5278 = vpop.f32.mrb[0].mxu0
        %v5279 = vadd.f32 0.0, %v5278
        %v5280 = vpop.f32.mrb[0].mxu0
        %5281 = vmatprep.mubr.bf16.mxu0 0
        %5282 = vmatmul.mubr.bf16.gmra.mrb[0].mxu0 %v5191
        %v5283 = vpop.f32.mrb[0].mxu0
        %v5284 = vadd.f32 0.0, %v5283
        %v5285 = vpop.f32.mrb[0].mxu0
        %v5286 = vpop.f32.mrb[0].mxu0
        %v5287 = vadd.f32 0.0, %v5286
        %v5288 = vpop.f32.mrb[0].mxu0
        %5289 = vdwg.mxu0
        %v5290 = vadd.f32 %v4168, %v5228
        %v5291 = vadd.f32 %v4169, %v5231
        %v5292 = vadd.f32 %v4170, %v5236
        %v5293 = vadd.f32 %v4171, %v5239
        %v5294 = vadd.f32 %v4172, %v5244
        %v5295 = vadd.f32 %v4173, %v5247
        %v5296 = vadd.f32 %v4174, %v5252
        %v5297 = vadd.f32 %v4175, %v5255
        %v5298 = vadd.f32 %v4176, %v5260
        %v5299 = vadd.f32 %v4177, %v5263
        %v5300 = vadd.f32 %v4178, %v5268
        %v5301 = vadd.f32 %v4179, %v5271
        %v5302 = vadd.f32 %v4180, %v5276
        %v5303 = vadd.f32 %v4181, %v5279
        %v5304 = vadd.f32 %v4182, %v5284
        %v5305 = vadd.f32 %v4183, %v5287
        %v5306 = vadd.f32 %v574, %v5290
        %v5307 = vadd.f32 %v575, %v5291
        %v5308 = vadd.f32 %v576, %v5292
        %v5309 = vadd.f32 %v577, %v5293
        %v5310 = vadd.f32 %v578, %v5294
        %v5311 = vadd.f32 %v579, %v5295
        %v5312 = vadd.f32 %v580, %v5296
        %v5313 = vadd.f32 %v581, %v5297
        %v5314 = vadd.f32 %v582, %v5298
        %v5315 = vadd.f32 %v583, %v5299
        %v5316 = vadd.f32 %v584, %v5300
        %v5317 = vadd.f32 %v585, %v5301
        %v5318 = vadd.f32 %v586, %v5302
        %v5319 = vadd.f32 %v587, %v5303
        %v5320 = vadd.f32 %v588, %v5304
        %v5321 = vadd.f32 %v589, %v5305
        %v5322 = vld [vmem:[%s10] sm:$0x1]
        %v5324 = vlaneseq
        %v5325 = vshrl.u32 %v5324, 7
        %v5326 = vsub.s32 0, %v5325
        %v5327 = vrot.slane %v5322, %v5326
        %v5329 = vadd.f32 %v5306, %v5327
        %v5330 = vadd.f32 %v5307, %v5327
        %v5331 = vadd.f32 %v5308, %v5327
        %v5332 = vadd.f32 %v5309, %v5327
        %v5333 = vadd.f32 %v5310, %v5327
        %v5334 = vadd.f32 %v5311, %v5327
        %v5335 = vadd.f32 %v5312, %v5327
        %v5336 = vadd.f32 %v5313, %v5327
        %v5337 = vadd.f32 %v5314, %v5327
        %v5338 = vadd.f32 %v5315, %v5327
        %v5339 = vadd.f32 %v5316, %v5327
        %v5340 = vadd.f32 %v5317, %v5327
        %v5341 = vadd.f32 %v5318, %v5327
        %v5342 = vadd.f32 %v5319, %v5327
        %v5343 = vadd.f32 %v5320, %v5327
        %v5344 = vadd.f32 %v5321, %v5327
        %v5345 = vld [vmem:[%s11] sm:$0x1]
        %v5346 = vld [vmem:[%s12] sm:$0x1]
        %5347 = vadd.xlane.f32.xlu0 %v5329
        %v5348 = vpop.xlane.xlu0 %5347
        %5349 = vadd.xlane.f32.xlu0 %v5330
        %v5350 = vpop.xlane.xlu0 %5349
        %5351 = vadd.xlane.f32.xlu0 %v5331
        %v5352 = vpop.xlane.xlu0 %5351
        %5353 = vadd.xlane.f32.xlu0 %v5332
        %v5354 = vpop.xlane.xlu0 %5353
        %5355 = vadd.xlane.f32.xlu0 %v5333
        %v5356 = vpop.xlane.xlu0 %5355
        %5357 = vadd.xlane.f32.xlu0 %v5334
        %v5358 = vpop.xlane.xlu0 %5357
        %5359 = vadd.xlane.f32.xlu0 %v5335
        %v5360 = vpop.xlane.xlu0 %5359
        %5361 = vadd.xlane.f32.xlu0 %v5336
        %v5362 = vpop.xlane.xlu0 %5361
        %5363 = vadd.xlane.f32.xlu0 %v5337
        %v5364 = vpop.xlane.xlu0 %5363
        %5365 = vadd.xlane.f32.xlu0 %v5338
        %v5366 = vpop.xlane.xlu0 %5365
        %5367 = vadd.xlane.f32.xlu0 %v5339
        %v5368 = vpop.xlane.xlu0 %5367
        %5369 = vadd.xlane.f32.xlu0 %v5340
        %v5370 = vpop.xlane.xlu0 %5369
        %5371 = vadd.xlane.f32.xlu0 %v5341
        %v5372 = vpop.xlane.xlu0 %5371
        %5373 = vadd.xlane.f32.xlu0 %v5342
        %v5374 = vpop.xlane.xlu0 %5373
        %5375 = vadd.xlane.f32.xlu0 %v5343
        %v5376 = vpop.xlane.xlu0 %5375
        %5377 = vadd.xlane.f32.xlu0 %v5344
        %v5378 = vpop.xlane.xlu0 %5377
        %v5379 = vmul.f32 %v5348, %v624
        %v5380 = vmul.f32 %v5350, %v624
        %v5381 = vmul.f32 %v5352, %v624
        %v5382 = vmul.f32 %v5354, %v624
        %v5383 = vmul.f32 %v5356, %v624
        %v5384 = vmul.f32 %v5358, %v624
        %v5385 = vmul.f32 %v5360, %v624
        %v5386 = vmul.f32 %v5362, %v624
        %v5387 = vmul.f32 %v5364, %v624
        %v5388 = vmul.f32 %v5366, %v624
        %v5389 = vmul.f32 %v5368, %v624
        %v5390 = vmul.f32 %v5370, %v624
        %v5391 = vmul.f32 %v5372, %v624
        %v5392 = vmul.f32 %v5374, %v624
        %v5393 = vmul.f32 %v5376, %v624
        %v5394 = vmul.f32 %v5378, %v624
        %v5395 = vsub.f32 %v5329, %v5379
        %v5396 = vsub.f32 %v5330, %v5380
        %v5397 = vsub.f32 %v5331, %v5381
        %v5398 = vsub.f32 %v5332, %v5382
        %v5399 = vsub.f32 %v5333, %v5383
        %v5400 = vsub.f32 %v5334, %v5384
        %v5401 = vsub.f32 %v5335, %v5385
        %v5402 = vsub.f32 %v5336, %v5386
        %v5403 = vsub.f32 %v5337, %v5387
        %v5404 = vsub.f32 %v5338, %v5388
        %v5405 = vsub.f32 %v5339, %v5389
        %v5406 = vsub.f32 %v5340, %v5390
        %v5407 = vsub.f32 %v5341, %v5391
        %v5408 = vsub.f32 %v5342, %v5392
        %v5409 = vsub.f32 %v5343, %v5393
        %v5410 = vsub.f32 %v5344, %v5394
        %v5411 = vmul.f32 %v5395, %v5395
        %v5412 = vmul.f32 %v5396, %v5396
        %v5413 = vmul.f32 %v5397, %v5397
        %v5414 = vmul.f32 %v5398, %v5398
        %v5415 = vmul.f32 %v5399, %v5399
        %v5416 = vmul.f32 %v5400, %v5400
        %v5417 = vmul.f32 %v5401, %v5401
        %v5418 = vmul.f32 %v5402, %v5402
        %v5419 = vmul.f32 %v5403, %v5403
        %v5420 = vmul.f32 %v5404, %v5404
        %v5421 = vmul.f32 %v5405, %v5405
        %v5422 = vmul.f32 %v5406, %v5406
        %v5423 = vmul.f32 %v5407, %v5407
        %v5424 = vmul.f32 %v5408, %v5408
        %v5425 = vmul.f32 %v5409, %v5409
        %v5426 = vmul.f32 %v5410, %v5410
        %5427 = vadd.xlane.f32.xlu0 %v5411
        %v5428 = vpop.xlane.xlu0 %5427
        %5429 = vadd.xlane.f32.xlu0 %v5412
        %v5430 = vpop.xlane.xlu0 %5429
        %5431 = vadd.xlane.f32.xlu0 %v5413
        %v5432 = vpop.xlane.xlu0 %5431
        %5433 = vadd.xlane.f32.xlu0 %v5414
        %v5434 = vpop.xlane.xlu0 %5433
        %5435 = vadd.xlane.f32.xlu0 %v5415
        %v5436 = vpop.xlane.xlu0 %5435
        %5437 = vadd.xlane.f32.xlu0 %v5416
        %v5438 = vpop.xlane.xlu0 %5437
        %5439 = vadd.xlane.f32.xlu0 %v5417
        %v5440 = vpop.xlane.xlu0 %5439
        %5441 = vadd.xlane.f32.xlu0 %v5418
        %v5442 = vpop.xlane.xlu0 %5441
        %5443 = vadd.xlane.f32.xlu0 %v5419
        %v5444 = vpop.xlane.xlu0 %5443
        %5445 = vadd.xlane.f32.xlu0 %v5420
        %v5446 = vpop.xlane.xlu0 %5445
        %5447 = vadd.xlane.f32.xlu0 %v5421
        %v5448 = vpop.xlane.xlu0 %5447
        %5449 = vadd.xlane.f32.xlu0 %v5422
        %v5450 = vpop.xlane.xlu0 %5449
        %5451 = vadd.xlane.f32.xlu0 %v5423
        %v5452 = vpop.xlane.xlu0 %5451
        %5453 = vadd.xlane.f32.xlu0 %v5424
        %v5454 = vpop.xlane.xlu0 %5453
        %5455 = vadd.xlane.f32.xlu0 %v5425
        %v5456 = vpop.xlane.xlu0 %5455
        %5457 = vadd.xlane.f32.xlu0 %v5426
        %v5458 = vpop.xlane.xlu0 %5457
        %v5459 = vmul.f32 %v5428, %v624
        %v5460 = vmul.f32 %v5430, %v624
        %v5461 = vmul.f32 %v5432, %v624
        %v5462 = vmul.f32 %v5434, %v624
        %v5463 = vmul.f32 %v5436, %v624
        %v5464 = vmul.f32 %v5438, %v624
        %v5465 = vmul.f32 %v5440, %v624
        %v5466 = vmul.f32 %v5442, %v624
        %v5467 = vmul.f32 %v5444, %v624
        %v5468 = vmul.f32 %v5446, %v624
        %v5469 = vmul.f32 %v5448, %v624
        %v5470 = vmul.f32 %v5450, %v624
        %v5471 = vmul.f32 %v5452, %v624
        %v5472 = vmul.f32 %v5454, %v624
        %v5473 = vmul.f32 %v5456, %v624
        %v5474 = vmul.f32 %v5458, %v624
        %v5475 = vadd.f32 %v5459, 1e-05
        %v5476 = vadd.f32 %v5460, 1e-05
        %v5477 = vadd.f32 %v5461, 1e-05
        %v5478 = vadd.f32 %v5462, 1e-05
        %v5479 = vadd.f32 %v5463, 1e-05
        %v5480 = vadd.f32 %v5464, 1e-05
        %v5481 = vadd.f32 %v5465, 1e-05
        %v5482 = vadd.f32 %v5466, 1e-05
        %v5483 = vadd.f32 %v5467, 1e-05
        %v5484 = vadd.f32 %v5468, 1e-05
        %v5485 = vadd.f32 %v5469, 1e-05
        %v5486 = vadd.f32 %v5470, 1e-05
        %v5487 = vadd.f32 %v5471, 1e-05
        %v5488 = vadd.f32 %v5472, 1e-05
        %v5489 = vadd.f32 %v5473, 1e-05
        %v5490 = vadd.f32 %v5474, 1e-05
        %v5491 = vrsqrt.pop %v5475
        %v5492 = vrsqrt.pop %v5476
        %v5493 = vrsqrt.pop %v5477
        %v5494 = vrsqrt.pop %v5478
        %v5495 = vrsqrt.pop %v5479
        %v5496 = vrsqrt.pop %v5480
        %v5497 = vrsqrt.pop %v5481
        %v5498 = vrsqrt.pop %v5482
        %v5499 = vrsqrt.pop %v5483
        %v5500 = vrsqrt.pop %v5484
        %v5501 = vrsqrt.pop %v5485
        %v5502 = vrsqrt.pop %v5486
        %v5503 = vrsqrt.pop %v5487
        %v5504 = vrsqrt.pop %v5488
        %v5505 = vrsqrt.pop %v5489
        %v5506 = vrsqrt.pop %v5490
        %v5507 = vmul.f32 %v5395, %v5491
        %v5508 = vmul.f32 %v5396, %v5492
        %v5509 = vmul.f32 %v5397, %v5493
        %v5510 = vmul.f32 %v5398, %v5494
        %v5511 = vmul.f32 %v5399, %v5495
        %v5512 = vmul.f32 %v5400, %v5496
        %v5513 = vmul.f32 %v5401, %v5497
        %v5514 = vmul.f32 %v5402, %v5498
        %v5515 = vmul.f32 %v5403, %v5499
        %v5516 = vmul.f32 %v5404, %v5500
        %v5517 = vmul.f32 %v5405, %v5501
        %v5518 = vmul.f32 %v5406, %v5502
        %v5519 = vmul.f32 %v5407, %v5503
        %v5520 = vmul.f32 %v5408, %v5504
        %v5521 = vmul.f32 %v5409, %v5505
        %v5522 = vmul.f32 %v5410, %v5506
        %v5524 = vlaneseq
        %v5525 = vshrl.u32 %v5524, 7
        %v5526 = vsub.s32 0, %v5525
        %v5527 = vrot.slane %v5345, %v5526
        %v5529 = vmul.f32 %v5507, %v5527
        %v5530 = vmul.f32 %v5508, %v5527
        %v5531 = vmul.f32 %v5509, %v5527
        %v5532 = vmul.f32 %v5510, %v5527
        %v5533 = vmul.f32 %v5511, %v5527
        %v5534 = vmul.f32 %v5512, %v5527
        %v5535 = vmul.f32 %v5513, %v5527
        %v5536 = vmul.f32 %v5514, %v5527
        %v5537 = vmul.f32 %v5515, %v5527
        %v5538 = vmul.f32 %v5516, %v5527
        %v5539 = vmul.f32 %v5517, %v5527
        %v5540 = vmul.f32 %v5518, %v5527
        %v5541 = vmul.f32 %v5519, %v5527
        %v5542 = vmul.f32 %v5520, %v5527
        %v5543 = vmul.f32 %v5521, %v5527
        %v5544 = vmul.f32 %v5522, %v5527
        %v5546 = vlaneseq
        %v5547 = vshrl.u32 %v5546, 7
        %v5548 = vsub.s32 0, %v5547
        %v5549 = vrot.slane %v5346, %v5548
        %v5551 = vadd.f32 %v5529, %v5549
        %v5552 = vadd.f32 %v5530, %v5549
        %v5553 = vadd.f32 %v5531, %v5549
        %v5554 = vadd.f32 %v5532, %v5549
        %v5555 = vadd.f32 %v5533, %v5549
        %v5556 = vadd.f32 %v5534, %v5549
        %v5557 = vadd.f32 %v5535, %v5549
        %v5558 = vadd.f32 %v5536, %v5549
        %v5559 = vadd.f32 %v5537, %v5549
        %v5560 = vadd.f32 %v5538, %v5549
        %v5561 = vadd.f32 %v5539, %v5549
        %v5562 = vadd.f32 %v5540, %v5549
        %v5563 = vadd.f32 %v5541, %v5549
        %v5564 = vadd.f32 %v5542, %v5549
        %v5565 = vadd.f32 %v5543, %v5549
        %v5566 = vadd.f32 %v5544, %v5549
        %v5567 = vpack.c.bf16 %v5552, %v5551
        %v5568 = vpack.c.bf16 %v5554, %v5553
        %v5569 = vpack.c.bf16 %v5556, %v5555
        %v5570 = vpack.c.bf16 %v5558, %v5557
        %v5571 = vpack.c.bf16 %v5560, %v5559
        %v5572 = vpack.c.bf16 %v5562, %v5561
        %v5573 = vpack.c.bf16 %v5564, %v5563
        %v5574 = vpack.c.bf16 %v5566, %v5565
        %v5575 = vld [vmem:[%s13] sm:$0xff]
        %v5576 = vld [vmem:[%s13 + $0x8] sm:$0xff]
        %v5577 = vld [vmem:[%s13 + $0x10] sm:$0xff]
        %v5578 = vld [vmem:[%s13 + $0x18] sm:$0xff]
        %v5579 = vld [vmem:[%s13 + $0x20] sm:$0xff]
        %v5580 = vld [vmem:[%s13 + $0x28] sm:$0xff]
        %v5581 = vld [vmem:[%s13 + $0x30] sm:$0xff]
        %v5582 = vld [vmem:[%s13 + $0x38] sm:$0xff]
        %v5583 = vld [vmem:[%s13 + $0x40] sm:$0xff]
        %v5584 = vld [vmem:[%s13 + $0x48] sm:$0xff]
        %v5585 = vld [vmem:[%s13 + $0x50] sm:$0xff]
        %v5586 = vld [vmem:[%s13 + $0x58] sm:$0xff]
        %v5587 = vld [vmem:[%s13 + $0x60] sm:$0xff]
        %v5588 = vld [vmem:[%s13 + $0x68] sm:$0xff]
        %v5589 = vld [vmem:[%s13 + $0x70] sm:$0xff]
        %v5590 = vld [vmem:[%s13 + $0x78] sm:$0xff]
        %v5591 = vld [vmem:[%s13 + $0x80] sm:$0xff]
        %v5592 = vld [vmem:[%s13 + $0x88] sm:$0xff]
        %v5593 = vld [vmem:[%s13 + $0x90] sm:$0xff]
        %v5594 = vld [vmem:[%s13 + $0x98] sm:$0xff]
        %v5595 = vld [vmem:[%s13 + $0xa0] sm:$0xff]
        %v5596 = vld [vmem:[%s13 + $0xa8] sm:$0xff]
        %v5597 = vld [vmem:[%s13 + $0xb0] sm:$0xff]
        %v5598 = vld [vmem:[%s13 + $0xb8] sm:$0xff]
        %v5599 = vld [vmem:[%s13 + $0xc0] sm:$0xff]
        %v5600 = vld [vmem:[%s13 + $0xc8] sm:$0xff]
        %v5601 = vld [vmem:[%s13 + $0xd0] sm:$0xff]
        %v5602 = vld [vmem:[%s13 + $0xd8] sm:$0xff]
        %v5603 = vld [vmem:[%s13 + $0xe0] sm:$0xff]
        %v5604 = vld [vmem:[%s13 + $0xe8] sm:$0xff]
        %v5605 = vld [vmem:[%s13 + $0xf0] sm:$0xff]
        %v5606 = vld [vmem:[%s13 + $0xf8] sm:$0xff]
        %v5607 = vld [vmem:[%s14] sm:$0xf]
        %v5609 = vlaneseq
        %v5610 = vshrl.u32 %v5609, 7
        %v5611 = vsub.s32 0, %v5610
        %v5612 = vrot.slane %v5607, %v5611
        %v5613 = vlaneseq
        %v5614 = vshrl.u32 %v5613, 7
        %v5615 = vsub.s32 1, %v5614
        %v5616 = vrot.slane %v5607, %v5615
        %v5617 = vlaneseq
        %v5618 = vshrl.u32 %v5617, 7
        %v5619 = vsub.s32 2, %v5618
        %v5620 = vrot.slane %v5607, %v5619
        %v5621 = vlaneseq
        %v5622 = vshrl.u32 %v5621, 7
        %v5623 = vsub.s32 3, %v5622
        %v5624 = vrot.slane %v5607, %v5623
        %v5661 = vunpack.c.l.b16 %v5575
        %v5662 = vunpack.c.h.b16 %v5575
        %v5663 = vunpack.c.l.b16 %v5576
        %v5664 = vunpack.c.h.b16 %v5576
        %v5665 = vunpack.c.l.b16 %v5577
        %v5666 = vunpack.c.h.b16 %v5577
        %v5667 = vunpack.c.l.b16 %v5578
        %v5668 = vunpack.c.h.b16 %v5578
        %v5669 = vunpack.c.l.b16 %v5579
        %v5670 = vunpack.c.h.b16 %v5579
        %v5671 = vunpack.c.l.b16 %v5580
        %v5672 = vunpack.c.h.b16 %v5580
        %v5673 = vunpack.c.l.b16 %v5581
        %v5674 = vunpack.c.h.b16 %v5581
        %v5675 = vunpack.c.l.b16 %v5582
        %v5676 = vunpack.c.h.b16 %v5582
        %v5677 = vunpack.c.l.b16 %v5583
        %v5678 = vunpack.c.h.b16 %v5583
        %v5679 = vunpack.c.l.b16 %v5584
        %v5680 = vunpack.c.h.b16 %v5584
        %v5681 = vunpack.c.l.b16 %v5585
        %v5682 = vunpack.c.h.b16 %v5585
        %v5683 = vunpack.c.l.b16 %v5586
        %v5684 = vunpack.c.h.b16 %v5586
        %v5685 = vunpack.c.l.b16 %v5587
        %v5686 = vunpack.c.h.b16 %v5587
        %v5687 = vunpack.c.l.b16 %v5588
        %v5688 = vunpack.c.h.b16 %v5588
        %v5689 = vunpack.c.l.b16 %v5589
        %v5690 = vunpack.c.h.b16 %v5589
        %v5691 = vunpack.c.l.b16 %v5590
        %v5692 = vunpack.c.h.b16 %v5590
        %v5693 = vunpack.c.l.b16 %v5591
        %v5694 = vunpack.c.h.b16 %v5591
        %v5695 = vunpack.c.l.b16 %v5592
        %v5696 = vunpack.c.h.b16 %v5592
        %v5697 = vunpack.c.l.b16 %v5593
        %v5698 = vunpack.c.h.b16 %v5593
        %v5699 = vunpack.c.l.b16 %v5594
        %v5700 = vunpack.c.h.b16 %v5594
        %v5701 = vunpack.c.l.b16 %v5595
        %v5702 = vunpack.c.h.b16 %v5595
        %v5703 = vunpack.c.l.b16 %v5596
        %v5704 = vunpack.c.h.b16 %v5596
        %v5705 = vunpack.c.l.b16 %v5597
        %v5706 = vunpack.c.h.b16 %v5597
        %v5707 = vunpack.c.l.b16 %v5598
        %v5708 = vunpack.c.h.b16 %v5598
        %v5709 = vunpack.c.l.b16 %v5599
        %v5710 = vunpack.c.h.b16 %v5599
        %v5711 = vunpack.c.l.b16 %v5600
        %v5712 = vunpack.c.h.b16 %v5600
        %v5713 = vunpack.c.l.b16 %v5601
        %v5714 = vunpack.c.h.b16 %v5601
        %v5715 = vunpack.c.l.b16 %v5602
        %v5716 = vunpack.c.h.b16 %v5602
        %v5717 = vunpack.c.l.b16 %v5603
        %v5718 = vunpack.c.h.b16 %v5603
        %v5719 = vunpack.c.l.b16 %v5604
        %v5720 = vunpack.c.h.b16 %v5604
        %v5721 = vunpack.c.l.b16 %v5605
        %v5722 = vunpack.c.h.b16 %v5605
        %v5723 = vunpack.c.l.b16 %v5606
        %v5724 = vunpack.c.h.b16 %v5606
        %v5725 = vpack.c.b16 %v5665, %v5661
        %v5726 = vpack.c.b16 %v5666, %v5662
        %v5727 = vpack.c.b16 %v5667, %v5663
        %v5728 = vpack.c.b16 %v5668, %v5664
        %v5729 = vpack.c.b16 %v5673, %v5669
        %v5730 = vpack.c.b16 %v5674, %v5670
        %v5731 = vpack.c.b16 %v5675, %v5671
        %v5732 = vpack.c.b16 %v5676, %v5672
        %v5733 = vpack.c.b16 %v5681, %v5677
        %v5734 = vpack.c.b16 %v5682, %v5678
        %v5735 = vpack.c.b16 %v5683, %v5679
        %v5736 = vpack.c.b16 %v5684, %v5680
        %v5737 = vpack.c.b16 %v5689, %v5685
        %v5738 = vpack.c.b16 %v5690, %v5686
        %v5739 = vpack.c.b16 %v5691, %v5687
        %v5740 = vpack.c.b16 %v5692, %v5688
        %v5741 = vpack.c.b16 %v5697, %v5693
        %v5742 = vpack.c.b16 %v5698, %v5694
        %v5743 = vpack.c.b16 %v5699, %v5695
        %v5744 = vpack.c.b16 %v5700, %v5696
        %v5745 = vpack.c.b16 %v5705, %v5701
        %v5746 = vpack.c.b16 %v5706, %v5702
        %v5747 = vpack.c.b16 %v5707, %v5703
        %v5748 = vpack.c.b16 %v5708, %v5704
        %v5749 = vpack.c.b16 %v5713, %v5709
        %v5750 = vpack.c.b16 %v5714, %v5710
        %v5751 = vpack.c.b16 %v5715, %v5711
        %v5752 = vpack.c.b16 %v5716, %v5712
        %v5753 = vpack.c.b16 %v5721, %v5717
        %v5754 = vpack.c.b16 %v5722, %v5718
        %v5755 = vpack.c.b16 %v5723, %v5719
        %v5756 = vpack.c.b16 %v5724, %v5720
        %5789 = vmatprep.subr.bf16.mxu0 %v5726
        %5790 = vmatpush1.bf16.msra.mxu0 %v5725
        %5791 = vmatprep.subr.bf16.mxu0 %v5730
        %5792 = vmatpush1.bf16.msra.mxu0 %v5729
        %5793 = vmatprep.subr.bf16.mxu0 %v5734
        %5794 = vmatpush1.bf16.msra.mxu0 %v5733
        %5795 = vmatprep.subr.bf16.mxu0 %v5738
        %5796 = vmatpush1.bf16.msra.mxu0 %v5737
        %5797 = vmatprep.subr.bf16.mxu0 %v5742
        %5798 = vmatpush1.bf16.msra.mxu0 %v5741
        %5799 = vmatprep.subr.bf16.mxu0 %v5746
        %5800 = vmatpush1.bf16.msra.mxu0 %v5745
        %5801 = vmatprep.subr.bf16.mxu0 %v5750
        %5802 = vmatpush1.bf16.msra.mxu0 %v5749
        %5803 = vmatprep.subr.bf16.mxu0 %v5754
        %5804 = vmatpush1.bf16.msra.mxu0 %v5753
        %5805 = vmatprep.subr.bf16.mxu0 0
        %5806 = vmatpush1.bf16.msra.mxu0 0
        %5807 = vmatprep.subr.bf16.mxu0 0
        %5808 = vmatpush1.bf16.msra.mxu0 0
        %5809 = vmatprep.subr.bf16.mxu0 0
        %5810 = vmatpush1.bf16.msra.mxu0 0
        %5811 = vmatprep.subr.bf16.mxu0 0
        %5812 = vmatpush1.bf16.msra.mxu0 0
        %5813 = vmatprep.subr.bf16.mxu0 0
        %5814 = vmatpush1.bf16.msra.mxu0 0
        %5815 = vmatprep.subr.bf16.mxu0 0
        %5816 = vmatpush1.bf16.msra.mxu0 0
        %5817 = vmatprep.subr.bf16.mxu0 0
        %5818 = vmatpush1.bf16.msra.mxu0 0
        %5819 = vmatprep.subr.bf16.mxu0 0
        %5820 = vmatpush1.bf16.msra.mxu0 0
        %5821 = vmatprep.mubr.bf16.mxu0 0
        %5822 = vmatmul.mubr.bf16.gmra.mrb[0].mxu0 %v5567
        %v5823 = vpop.f32.mrb[0].mxu0
        %v5824 = vadd.f32 %v5612, %v5823
        %v5825 = vpop.f32.mrb[0].mxu0
        %v5826 = vadd.f32 %v5616, %v5825
        %v5827 = vpop.f32.mrb[0].mxu0
        %v5828 = vadd.f32 %v5612, %v5827
        %v5829 = vpop.f32.mrb[0].mxu0
        %v5830 = vadd.f32 %v5616, %v5829
        %5831 = vmatprep.mubr.bf16.mxu0 0
        %5832 = vmatmul.mubr.bf16.gmra.mrb[0].mxu0 %v5568
        %v5833 = vpop.f32.mrb[0].mxu0
        %v5834 = vadd.f32 %v5612, %v5833
        %v5835 = vpop.f32.mrb[0].mxu0
        %v5836 = vadd.f32 %v5616, %v5835
        %v5837 = vpop.f32.mrb[0].mxu0
        %v5838 = vadd.f32 %v5612, %v5837
        %v5839 = vpop.f32.mrb[0].mxu0
        %v5840 = vadd.f32 %v5616, %v5839
        %5841 = vmatprep.mubr.bf16.mxu0 0
        %5842 = vmatmul.mubr.bf16.gmra.mrb[0].mxu0 %v5569
        %v5843 = vpop.f32.mrb[0].mxu0
        %v5844 = vadd.f32 %v5612, %v5843
        %v5845 = vpop.f32.mrb[0].mxu0
        %v5846 = vadd.f32 %v5616, %v5845
        %v5847 = vpop.f32.mrb[0].mxu0
        %v5848 = vadd.f32 %v5612, %v5847
        %v5849 = vpop.f32.mrb[0].mxu0
        %v5850 = vadd.f32 %v5616, %v5849
        %5851 = vmatprep.mubr.bf16.mxu0 0
        %5852 = vmatmul.mubr.bf16.gmra.mrb[0].mxu0 %v5570
        %v5853 = vpop.f32.mrb[0].mxu0
        %v5854 = vadd.f32 %v5612, %v5853
        %v5855 = vpop.f32.mrb[0].mxu0
        %v5856 = vadd.f32 %v5616, %v5855
        %v5857 = vpop.f32.mrb[0].mxu0
        %v5858 = vadd.f32 %v5612, %v5857
        %v5859 = vpop.f32.mrb[0].mxu0
        %v5860 = vadd.f32 %v5616, %v5859
        %5861 = vmatprep.mubr.bf16.mxu0 0
        %5862 = vmatmul.mubr.bf16.gmra.mrb[0].mxu0 %v5571
        %v5863 = vpop.f32.mrb[0].mxu0
        %v5864 = vadd.f32 %v5612, %v5863
        %v5865 = vpop.f32.mrb[0].mxu0
        %v5866 = vadd.f32 %v5616, %v5865
        %v5867 = vpop.f32.mrb[0].mxu0
        %v5868 = vadd.f32 %v5612, %v5867
        %v5869 = vpop.f32.mrb[0].mxu0
        %v5870 = vadd.f32 %v5616, %v5869
        %5871 = vmatprep.mubr.bf16.mxu0 0
        %5872 = vmatmul.mubr.bf16.gmra.mrb[0].mxu0 %v5572
        %v5873 = vpop.f32.mrb[0].mxu0
        %v5874 = vadd.f32 %v5612, %v5873
        %v5875 = vpop.f32.mrb[0].mxu0
        %v5876 = vadd.f32 %v5616, %v5875
        %v5877 = vpop.f32.mrb[0].mxu0
        %v5878 = vadd.f32 %v5612, %v5877
        %v5879 = vpop.f32.mrb[0].mxu0
        %v5880 = vadd.f32 %v5616, %v5879
        %5881 = vmatprep.mubr.bf16.mxu0 0
        %5882 = vmatmul.mubr.bf16.gmra.mrb[0].mxu0 %v5573
        %v5883 = vpop.f32.mrb[0].mxu0
        %v5884 = vadd.f32 %v5612, %v5883
        %v5885 = vpop.f32.mrb[0].mxu0
        %v5886 = vadd.f32 %v5616, %v5885
        %v5887 = vpop.f32.mrb[0].mxu0
        %v5888 = vadd.f32 %v5612, %v5887
        %v5889 = vpop.f32.mrb[0].mxu0
        %v5890 = vadd.f32 %v5616, %v5889
        %5891 = vmatprep.mubr.bf16.mxu0 0
        %5892 = vmatmul.mubr.bf16.gmra.mrb[0].mxu0 %v5574
        %v5893 = vpop.f32.mrb[0].mxu0
        %v5894 = vadd.f32 %v5612, %v5893
        %v5895 = vpop.f32.mrb[0].mxu0
        %v5896 = vadd.f32 %v5616, %v5895
        %v5897 = vpop.f32.mrb[0].mxu0
        %v5898 = vadd.f32 %v5612, %v5897
        %v5899 = vpop.f32.mrb[0].mxu0
        %v5900 = vadd.f32 %v5616, %v5899
        %5901 = vdwg.mxu0
        %5902 = vmatprep.subr.bf16.mxu0 %v5728
        %5903 = vmatpush1.bf16.msra.mxu0 %v5727
        %5904 = vmatprep.subr.bf16.mxu0 %v5732
        %5905 = vmatpush1.bf16.msra.mxu0 %v5731
        %5906 = vmatprep.subr.bf16.mxu0 %v5736
        %5907 = vmatpush1.bf16.msra.mxu0 %v5735
        %5908 = vmatprep.subr.bf16.mxu0 %v5740
        %5909 = vmatpush1.bf16.msra.mxu0 %v5739
        %5910 = vmatprep.subr.bf16.mxu0 %v5744
        %5911 = vmatpush1.bf16.msra.mxu0 %v5743
        %5912 = vmatprep.subr.bf16.mxu0 %v5748
        %5913 = vmatpush1.bf16.msra.mxu0 %v5747
        %5914 = vmatprep.subr.bf16.mxu0 %v5752
        %5915 = vmatpush1.bf16.msra.mxu0 %v5751
        %5916 = vmatprep.subr.bf16.mxu0 %v5756
        %5917 = vmatpush1.bf16.msra.mxu0 %v5755
        %5918 = vmatprep.subr.bf16.mxu0 0
        %5919 = vmatpush1.bf16.msra.mxu0 0
        %5920 = vmatprep.subr.bf16.mxu0 0
        %5921 = vmatpush1.bf16.msra.mxu0 0
        %5922 = vmatprep.subr.bf16.mxu0 0
        %5923 = vmatpush1.bf16.msra.mxu0 0
        %5924 = vmatprep.subr.bf16.mxu0 0
        %5925 = vmatpush1.bf16.msra.mxu0 0
        %5926 = vmatprep.subr.bf16.mxu0 0
        %5927 = vmatpush1.bf16.msra.mxu0 0
        %5928 = vmatprep.subr.bf16.mxu0 0
        %5929 = vmatpush1.bf16.msra.mxu0 0
        %5930 = vmatprep.subr.bf16.mxu0 0
        %5931 = vmatpush1.bf16.msra.mxu0 0
        %5932 = vmatprep.subr.bf16.mxu0 0
        %5933 = vmatpush1.bf16.msra.mxu0 0
        %5934 = vmatprep.mubr.bf16.mxu0 0
        %5935 = vmatmul.mubr.bf16.gmra.mrb[0].mxu0 %v5567
        %v5936 = vpop.f32.mrb[0].mxu0
        %v5937 = vadd.f32 %v5620, %v5936
        %v5938 = vpop.f32.mrb[0].mxu0
        %v5939 = vadd.f32 %v5624, %v5938
        %v5940 = vpop.f32.mrb[0].mxu0
        %v5941 = vadd.f32 %v5620, %v5940
        %v5942 = vpop.f32.mrb[0].mxu0
        %v5943 = vadd.f32 %v5624, %v5942
        %5944 = vmatprep.mubr.bf16.mxu0 0
        %5945 = vmatmul.mubr.bf16.gmra.mrb[0].mxu0 %v5568
        %v5946 = vpop.f32.mrb[0].mxu0
        %v5947 = vadd.f32 %v5620, %v5946
        %v5948 = vpop.f32.mrb[0].mxu0
        %v5949 = vadd.f32 %v5624, %v5948
        %v5950 = vpop.f32.mrb[0].mxu0
        %v5951 = vadd.f32 %v5620, %v5950
        %v5952 = vpop.f32.mrb[0].mxu0
        %v5953 = vadd.f32 %v5624, %v5952
        %5954 = vmatprep.mubr.bf16.mxu0 0
        %5955 = vmatmul.mubr.bf16.gmra.mrb[0].mxu0 %v5569
        %v5956 = vpop.f32.mrb[0].mxu0
        %v5957 = vadd.f32 %v5620, %v5956
        %v5958 = vpop.f32.mrb[0].mxu0
        %v5959 = vadd.f32 %v5624, %v5958
        %v5960 = vpop.f32.mrb[0].mxu0
        %v5961 = vadd.f32 %v5620, %v5960
        %v5962 = vpop.f32.mrb[0].mxu0
        %v5963 = vadd.f32 %v5624, %v5962
        %5964 = vmatprep.mubr.bf16.mxu0 0
        %5965 = vmatmul.mubr.bf16.gmra.mrb[0].mxu0 %v5570
        %v5966 = vpop.f32.mrb[0].mxu0
        %v5967 = vadd.f32 %v5620, %v5966
        %v5968 = vpop.f32.mrb[0].mxu0
        %v5969 = vadd.f32 %v5624, %v5968
        %v5970 = vpop.f32.mrb[0].mxu0
        %v5971 = vadd.f32 %v5620, %v5970
        %v5972 = vpop.f32.mrb[0].mxu0
        %v5973 = vadd.f32 %v5624, %v5972
        %5974 = vmatprep.mubr.bf16.mxu0 0
        %5975 = vmatmul.mubr.bf16.gmra.mrb[0].mxu0 %v5571
        %v5976 = vpop.f32.mrb[0].mxu0
        %v5977 = vadd.f32 %v5620, %v5976
        %v5978 = vpop.f32.mrb[0].mxu0
        %v5979 = vadd.f32 %v5624, %v5978
        %v5980 = vpop.f32.mrb[0].mxu0
        %v5981 = vadd.f32 %v5620, %v5980
        %v5982 = vpop.f32.mrb[0].mxu0
        %v5983 = vadd.f32 %v5624, %v5982
        %5984 = vmatprep.mubr.bf16.mxu0 0
        %5985 = vmatmul.mubr.bf16.gmra.mrb[0].mxu0 %v5572
        %v5986 = vpop.f32.mrb[0].mxu0
        %v5987 = vadd.f32 %v5620, %v5986
        %v5988 = vpop.f32.mrb[0].mxu0
        %v5989 = vadd.f32 %v5624, %v5988
        %v5990 = vpop.f32.mrb[0].mxu0
        %v5991 = vadd.f32 %v5620, %v5990
        %v5992 = vpop.f32.mrb[0].mxu0
        %v5993 = vadd.f32 %v5624, %v5992
        %5994 = vmatprep.mubr.bf16.mxu0 0
        %5995 = vmatmul.mubr.bf16.gmra.mrb[0].mxu0 %v5573
        %v5996 = vpop.f32.mrb[0].mxu0
        %v5997 = vadd.f32 %v5620, %v5996
        %v5998 = vpop.f32.mrb[0].mxu0
        %v5999 = vadd.f32 %v5624, %v5998
        %v6000 = vpop.f32.mrb[0].mxu0
        %v6001 = vadd.f32 %v5620, %v6000
        %v6002 = vpop.f32.mrb[0].mxu0
        %v6003 = vadd.f32 %v5624, %v6002
        %6004 = vmatprep.mubr.bf16.mxu0 0
        %6005 = vmatmul.mubr.bf16.gmra.mrb[0].mxu0 %v5574
        %v6006 = vpop.f32.mrb[0].mxu0
        %v6007 = vadd.f32 %v5620, %v6006
        %v6008 = vpop.f32.mrb[0].mxu0
        %v6009 = vadd.f32 %v5624, %v6008
        %v6010 = vpop.f32.mrb[0].mxu0
        %v6011 = vadd.f32 %v5620, %v6010
        %v6012 = vpop.f32.mrb[0].mxu0
        %v6013 = vadd.f32 %v5624, %v6012
        %6014 = vdwg.mxu0
        %v6015 = vmul.f32 %v5824, %v5824
        %v6016 = vmul.f32 %v5826, %v5826
        %v6017 = vmul.f32 %v5937, %v5937
        %v6018 = vmul.f32 %v5939, %v5939
        %v6019 = vmul.f32 %v5828, %v5828
        %v6020 = vmul.f32 %v5830, %v5830
        %v6021 = vmul.f32 %v5941, %v5941
        %v6022 = vmul.f32 %v5943, %v5943
        %v6023 = vmul.f32 %v5834, %v5834
        %v6024 = vmul.f32 %v5836, %v5836
        %v6025 = vmul.f32 %v5947, %v5947
        %v6026 = vmul.f32 %v5949, %v5949
        %v6027 = vmul.f32 %v5838, %v5838
        %v6028 = vmul.f32 %v5840, %v5840
        %v6029 = vmul.f32 %v5951, %v5951
        %v6030 = vmul.f32 %v5953, %v5953
        %v6031 = vmul.f32 %v5844, %v5844
        %v6032 = vmul.f32 %v5846, %v5846
        %v6033 = vmul.f32 %v5957, %v5957
        %v6034 = vmul.f32 %v5959, %v5959
        %v6035 = vmul.f32 %v5848, %v5848
        %v6036 = vmul.f32 %v5850, %v5850
        %v6037 = vmul.f32 %v5961, %v5961
        %v6038 = vmul.f32 %v5963, %v5963
        %v6039 = vmul.f32 %v5854, %v5854
        %v6040 = vmul.f32 %v5856, %v5856
        %v6041 = vmul.f32 %v5967, %v5967
        %v6042 = vmul.f32 %v5969, %v5969
        %v6043 = vmul.f32 %v5858, %v5858
        %v6044 = vmul.f32 %v5860, %v5860
        %v6045 = vmul.f32 %v5971, %v5971
        %v6046 = vmul.f32 %v5973, %v5973
        %v6047 = vmul.f32 %v5864, %v5864
        %v6048 = vmul.f32 %v5866, %v5866
        %v6049 = vmul.f32 %v5977, %v5977
        %v6050 = vmul.f32 %v5979, %v5979
        %v6051 = vmul.f32 %v5868, %v5868
        %v6052 = vmul.f32 %v5870, %v5870
        %v6053 = vmul.f32 %v5981, %v5981
        %v6054 = vmul.f32 %v5983, %v5983
        %v6055 = vmul.f32 %v5874, %v5874
        %v6056 = vmul.f32 %v5876, %v5876
        %v6057 = vmul.f32 %v5987, %v5987
        %v6058 = vmul.f32 %v5989, %v5989
        %v6059 = vmul.f32 %v5878, %v5878
        %v6060 = vmul.f32 %v5880, %v5880
        %v6061 = vmul.f32 %v5991, %v5991
        %v6062 = vmul.f32 %v5993, %v5993
        %v6063 = vmul.f32 %v5884, %v5884
        %v6064 = vmul.f32 %v5886, %v5886
        %v6065 = vmul.f32 %v5997, %v5997
        %v6066 = vmul.f32 %v5999, %v5999
        %v6067 = vmul.f32 %v5888, %v5888
        %v6068 = vmul.f32 %v5890, %v5890
        %v6069 = vmul.f32 %v6001, %v6001
        %v6070 = vmul.f32 %v6003, %v6003
        %v6071 = vmul.f32 %v5894, %v5894
        %v6072 = vmul.f32 %v5896, %v5896
        %v6073 = vmul.f32 %v6007, %v6007
        %v6074 = vmul.f32 %v6009, %v6009
        %v6075 = vmul.f32 %v5898, %v5898
        %v6076 = vmul.f32 %v5900, %v5900
        %v6077 = vmul.f32 %v6011, %v6011
        %v6078 = vmul.f32 %v6013, %v6013
        %v6079 = vmul.f32 %v5824, %v6015
        %v6080 = vmul.f32 %v5826, %v6016
        %v6081 = vmul.f32 %v5937, %v6017
        %v6082 = vmul.f32 %v5939, %v6018
        %v6083 = vmul.f32 %v5828, %v6019
        %v6084 = vmul.f32 %v5830, %v6020
        %v6085 = vmul.f32 %v5941, %v6021
        %v6086 = vmul.f32 %v5943, %v6022
        %v6087 = vmul.f32 %v5834, %v6023
        %v6088 = vmul.f32 %v5836, %v6024
        %v6089 = vmul.f32 %v5947, %v6025
        %v6090 = vmul.f32 %v5949, %v6026
        %v6091 = vmul.f32 %v5838, %v6027
        %v6092 = vmul.f32 %v5840, %v6028
        %v6093 = vmul.f32 %v5951, %v6029
        %v6094 = vmul.f32 %v5953, %v6030
        %v6095 = vmul.f32 %v5844, %v6031
        %v6096 = vmul.f32 %v5846, %v6032
        %v6097 = vmul.f32 %v5957, %v6033
        %v6098 = vmul.f32 %v5959, %v6034
        %v6099 = vmul.f32 %v5848, %v6035
        %v6100 = vmul.f32 %v5850, %v6036
        %v6101 = vmul.f32 %v5961, %v6037
        %v6102 = vmul.f32 %v5963, %v6038
        %v6103 = vmul.f32 %v5854, %v6039
        %v6104 = vmul.f32 %v5856, %v6040
        %v6105 = vmul.f32 %v5967, %v6041
        %v6106 = vmul.f32 %v5969, %v6042
        %v6107 = vmul.f32 %v5858, %v6043
        %v6108 = vmul.f32 %v5860, %v6044
        %v6109 = vmul.f32 %v5971, %v6045
        %v6110 = vmul.f32 %v5973, %v6046
        %v6111 = vmul.f32 %v5864, %v6047
        %v6112 = vmul.f32 %v5866, %v6048
        %v6113 = vmul.f32 %v5977, %v6049
        %v6114 = vmul.f32 %v5979, %v6050
        %v6115 = vmul.f32 %v5868, %v6051
        %v6116 = vmul.f32 %v5870, %v6052
        %v6117 = vmul.f32 %v5981, %v6053
        %v6118 = vmul.f32 %v5983, %v6054
        %v6119 = vmul.f32 %v5874, %v6055
        %v6120 = vmul.f32 %v5876, %v6056
        %v6121 = vmul.f32 %v5987, %v6057
        %v6122 = vmul.f32 %v5989, %v6058
        %v6123 = vmul.f32 %v5878, %v6059
        %v6124 = vmul.f32 %v5880, %v6060
        %v6125 = vmul.f32 %v5991, %v6061
        %v6126 = vmul.f32 %v5993, %v6062
        %v6127 = vmul.f32 %v5884, %v6063
        %v6128 = vmul.f32 %v5886, %v6064
        %v6129 = vmul.f32 %v5997, %v6065
        %v6130 = vmul.f32 %v5999, %v6066
        %v6131 = vmul.f32 %v5888, %v6067
        %v6132 = vmul.f32 %v5890, %v6068
        %v6133 = vmul.f32 %v6001, %v6069
        %v6134 = vmul.f32 %v6003, %v6070
        %v6135 = vmul.f32 %v5894, %v6071
        %v6136 = vmul.f32 %v5896, %v6072
        %v6137 = vmul.f32 %v6007, %v6073
        %v6138 = vmul.f32 %v6009, %v6074
        %v6139 = vmul.f32 %v5898, %v6075
        %v6140 = vmul.f32 %v5900, %v6076
        %v6141 = vmul.f32 %v6011, %v6077
        %v6142 = vmul.f32 %v6013, %v6078
        %v6143 = vmul.f32 %v6079, 0.044715
        %v6144 = vmul.f32 %v6080, 0.044715
        %v6145 = vmul.f32 %v6081, 0.044715
        %v6146 = vmul.f32 %v6082, 0.044715
        %v6147 = vmul.f32 %v6083, 0.044715
        %v6148 = vmul.f32 %v6084, 0.044715
        %v6149 = vmul.f32 %v6085, 0.044715
        %v6150 = vmul.f32 %v6086, 0.044715
        %v6151 = vmul.f32 %v6087, 0.044715
        %v6152 = vmul.f32 %v6088, 0.044715
        %v6153 = vmul.f32 %v6089, 0.044715
        %v6154 = vmul.f32 %v6090, 0.044715
        %v6155 = vmul.f32 %v6091, 0.044715
        %v6156 = vmul.f32 %v6092, 0.044715
        %v6157 = vmul.f32 %v6093, 0.044715
        %v6158 = vmul.f32 %v6094, 0.044715
        %v6159 = vmul.f32 %v6095, 0.044715
        %v6160 = vmul.f32 %v6096, 0.044715
        %v6161 = vmul.f32 %v6097, 0.044715
        %v6162 = vmul.f32 %v6098, 0.044715
        %v6163 = vmul.f32 %v6099, 0.044715
        %v6164 = vmul.f32 %v6100, 0.044715
        %v6165 = vmul.f32 %v6101, 0.044715
        %v6166 = vmul.f32 %v6102, 0.044715
        %v6167 = vmul.f32 %v6103, 0.044715
        %v6168 = vmul.f32 %v6104, 0.044715
        %v6169 = vmul.f32 %v6105, 0.044715
        %v6170 = vmul.f32 %v6106, 0.044715
        %v6171 = vmul.f32 %v6107, 0.044715
        %v6172 = vmul.f32 %v6108, 0.044715
        %v6173 = vmul.f32 %v6109, 0.044715
        %v6174 = vmul.f32 %v6110, 0.044715
        %v6175 = vmul.f32 %v6111, 0.044715
        %v6176 = vmul.f32 %v6112, 0.044715
        %v6177 = vmul.f32 %v6113, 0.044715
        %v6178 = vmul.f32 %v6114, 0.044715
        %v6179 = vmul.f32 %v6115, 0.044715
        %v6180 = vmul.f32 %v6116, 0.044715
        %v6181 = vmul.f32 %v6117, 0.044715
        %v6182 = vmul.f32 %v6118, 0.044715
        %v6183 = vmul.f32 %v6119, 0.044715
        %v6184 = vmul.f32 %v6120, 0.044715
        %v6185 = vmul.f32 %v6121, 0.044715
        %v6186 = vmul.f32 %v6122, 0.044715
        %v6187 = vmul.f32 %v6123, 0.044715
        %v6188 = vmul.f32 %v6124, 0.044715
        %v6189 = vmul.f32 %v6125, 0.044715
        %v6190 = vmul.f32 %v6126, 0.044715
        %v6191 = vmul.f32 %v6127, 0.044715
        %v6192 = vmul.f32 %v6128, 0.044715
        %v6193 = vmul.f32 %v6129, 0.044715
        %v6194 = vmul.f32 %v6130, 0.044715
        %v6195 = vmul.f32 %v6131, 0.044715
        %v6196 = vmul.f32 %v6132, 0.044715
        %v6197 = vmul.f32 %v6133, 0.044715
        %v6198 = vmul.f32 %v6134, 0.044715
        %v6199 = vmul.f32 %v6135, 0.044715
        %v6200 = vmul.f32 %v6136, 0.044715
        %v6201 = vmul.f32 %v6137, 0.044715
        %v6202 = vmul.f32 %v6138, 0.044715
        %v6203 = vmul.f32 %v6139, 0.044715
        %v6204 = vmul.f32 %v6140, 0.044715
        %v6205 = vmul.f32 %v6141, 0.044715
        %v6206 = vmul.f32 %v6142, 0.044715
        %v6207 = vadd.f32 %v5824, %v6143
        %v6208 = vadd.f32 %v5826, %v6144
        %v6209 = vadd.f32 %v5937, %v6145
        %v6210 = vadd.f32 %v5939, %v6146
        %v6211 = vadd.f32 %v5828, %v6147
        %v6212 = vadd.f32 %v5830, %v6148
        %v6213 = vadd.f32 %v5941, %v6149
        %v6214 = vadd.f32 %v5943, %v6150
        %v6215 = vadd.f32 %v5834, %v6151
        %v6216 = vadd.f32 %v5836, %v6152
        %v6217 = vadd.f32 %v5947, %v6153
        %v6218 = vadd.f32 %v5949, %v6154
        %v6219 = vadd.f32 %v5838, %v6155
        %v6220 = vadd.f32 %v5840, %v6156
        %v6221 = vadd.f32 %v5951, %v6157
        %v6222 = vadd.f32 %v5953, %v6158
        %v6223 = vadd.f32 %v5844, %v6159
        %v6224 = vadd.f32 %v5846, %v6160
        %v6225 = vadd.f32 %v5957, %v6161
        %v6226 = vadd.f32 %v5959, %v6162
        %v6227 = vadd.f32 %v5848, %v6163
        %v6228 = vadd.f32 %v5850, %v6164
        %v6229 = vadd.f32 %v5961, %v6165
        %v6230 = vadd.f32 %v5963, %v6166
        %v6231 = vadd.f32 %v5854, %v6167
        %v6232 = vadd.f32 %v5856, %v6168
        %v6233 = vadd.f32 %v5967, %v6169
        %v6234 = vadd.f32 %v5969, %v6170
        %v6235 = vadd.f32 %v5858, %v6171
        %v6236 = vadd.f32 %v5860, %v6172
        %v6237 = vadd.f32 %v5971, %v6173
        %v6238 = vadd.f32 %v5973, %v6174
        %v6239 = vadd.f32 %v5864, %v6175
        %v6240 = vadd.f32 %v5866, %v6176
        %v6241 = vadd.f32 %v5977, %v6177
        %v6242 = vadd.f32 %v5979, %v6178
        %v6243 = vadd.f32 %v5868, %v6179
        %v6244 = vadd.f32 %v5870, %v6180
        %v6245 = vadd.f32 %v5981, %v6181
        %v6246 = vadd.f32 %v5983, %v6182
        %v6247 = vadd.f32 %v5874, %v6183
        %v6248 = vadd.f32 %v5876, %v6184
        %v6249 = vadd.f32 %v5987, %v6185
        %v6250 = vadd.f32 %v5989, %v6186
        %v6251 = vadd.f32 %v5878, %v6187
        %v6252 = vadd.f32 %v5880, %v6188
        %v6253 = vadd.f32 %v5991, %v6189
        %v6254 = vadd.f32 %v5993, %v6190
        %v6255 = vadd.f32 %v5884, %v6191
        %v6256 = vadd.f32 %v5886, %v6192
        %v6257 = vadd.f32 %v5997, %v6193
        %v6258 = vadd.f32 %v5999, %v6194
        %v6259 = vadd.f32 %v5888, %v6195
        %v6260 = vadd.f32 %v5890, %v6196
        %v6261 = vadd.f32 %v6001, %v6197
        %v6262 = vadd.f32 %v6003, %v6198
        %v6263 = vadd.f32 %v5894, %v6199
        %v6264 = vadd.f32 %v5896, %v6200
        %v6265 = vadd.f32 %v6007, %v6201
        %v6266 = vadd.f32 %v6009, %v6202
        %v6267 = vadd.f32 %v5898, %v6203
        %v6268 = vadd.f32 %v5900, %v6204
        %v6269 = vadd.f32 %v6011, %v6205
        %v6270 = vadd.f32 %v6013, %v6206
        %v6271 = vmul.f32 %v6207, 0.7978846
        %v6272 = vmul.f32 %v6208, 0.7978846
        %v6273 = vmul.f32 %v6209, 0.7978846
        %v6274 = vmul.f32 %v6210, 0.7978846
        %v6275 = vmul.f32 %v6211, 0.7978846
        %v6276 = vmul.f32 %v6212, 0.7978846
        %v6277 = vmul.f32 %v6213, 0.7978846
        %v6278 = vmul.f32 %v6214, 0.7978846
        %v6279 = vmul.f32 %v6215, 0.7978846
        %v6280 = vmul.f32 %v6216, 0.7978846
        %v6281 = vmul.f32 %v6217, 0.7978846
        %v6282 = vmul.f32 %v6218, 0.7978846
        %v6283 = vmul.f32 %v6219, 0.7978846
        %v6284 = vmul.f32 %v6220, 0.7978846
        %v6285 = vmul.f32 %v6221, 0.7978846
        %v6286 = vmul.f32 %v6222, 0.7978846
        %v6287 = vmul.f32 %v6223, 0.7978846
        %v6288 = vmul.f32 %v6224, 0.7978846
        %v6289 = vmul.f32 %v6225, 0.7978846
        %v6290 = vmul.f32 %v6226, 0.7978846
        %v6291 = vmul.f32 %v6227, 0.7978846
        %v6292 = vmul.f32 %v6228, 0.7978846
        %v6293 = vmul.f32 %v6229, 0.7978846
        %v6294 = vmul.f32 %v6230, 0.7978846
        %v6295 = vmul.f32 %v6231, 0.7978846
        %v6296 = vmul.f32 %v6232, 0.7978846
        %v6297 = vmul.f32 %v6233, 0.7978846
        %v6298 = vmul.f32 %v6234, 0.7978846
        %v6299 = vmul.f32 %v6235, 0.7978846
        %v6300 = vmul.f32 %v6236, 0.7978846
        %v6301 = vmul.f32 %v6237, 0.7978846
        %v6302 = vmul.f32 %v6238, 0.7978846
        %v6303 = vmul.f32 %v6239, 0.7978846
        %v6304 = vmul.f32 %v6240, 0.7978846
        %v6305 = vmul.f32 %v6241, 0.7978846
        %v6306 = vmul.f32 %v6242, 0.7978846
        %v6307 = vmul.f32 %v6243, 0.7978846
        %v6308 = vmul.f32 %v6244, 0.7978846
        %v6309 = vmul.f32 %v6245, 0.7978846
        %v6310 = vmul.f32 %v6246, 0.7978846
        %v6311 = vmul.f32 %v6247, 0.7978846
        %v6312 = vmul.f32 %v6248, 0.7978846
        %v6313 = vmul.f32 %v6249, 0.7978846
        %v6314 = vmul.f32 %v6250, 0.7978846
        %v6315 = vmul.f32 %v6251, 0.7978846
        %v6316 = vmul.f32 %v6252, 0.7978846
        %v6317 = vmul.f32 %v6253, 0.7978846
        %v6318 = vmul.f32 %v6254, 0.7978846
        %v6319 = vmul.f32 %v6255, 0.7978846
        %v6320 = vmul.f32 %v6256, 0.7978846
        %v6321 = vmul.f32 %v6257, 0.7978846
        %v6322 = vmul.f32 %v6258, 0.7978846
        %v6323 = vmul.f32 %v6259, 0.7978846
        %v6324 = vmul.f32 %v6260, 0.7978846
        %v6325 = vmul.f32 %v6261, 0.7978846
        %v6326 = vmul.f32 %v6262, 0.7978846
        %v6327 = vmul.f32 %v6263, 0.7978846
        %v6328 = vmul.f32 %v6264, 0.7978846
        %v6329 = vmul.f32 %v6265, 0.7978846
        %v6330 = vmul.f32 %v6266, 0.7978846
        %v6331 = vmul.f32 %v6267, 0.7978846
        %v6332 = vmul.f32 %v6268, 0.7978846
        %v6333 = vmul.f32 %v6269, 0.7978846
        %v6334 = vmul.f32 %v6270, 0.7978846
        %v6335 = vtanh.pop %v6271
        %v6336 = vtanh.pop %v6272
        %v6337 = vtanh.pop %v6273
        %v6338 = vtanh.pop %v6274
        %v6339 = vtanh.pop %v6275
        %v6340 = vtanh.pop %v6276
        %v6341 = vtanh.pop %v6277
        %v6342 = vtanh.pop %v6278
        %v6343 = vtanh.pop %v6279
        %v6344 = vtanh.pop %v6280
        %v6345 = vtanh.pop %v6281
        %v6346 = vtanh.pop %v6282
        %v6347 = vtanh.pop %v6283
        %v6348 = vtanh.pop %v6284
        %v6349 = vtanh.pop %v6285
        %v6350 = vtanh.pop %v6286
        %v6351 = vtanh.pop %v6287
        %v6352 = vtanh.pop %v6288
        %v6353 = vtanh.pop %v6289
        %v6354 = vtanh.pop %v6290
        %v6355 = vtanh.pop %v6291
        %v6356 = vtanh.pop %v6292
        %v6357 = vtanh.pop %v6293
        %v6358 = vtanh.pop %v6294
        %v6359 = vtanh.pop %v6295
        %v6360 = vtanh.pop %v6296
        %v6361 = vtanh.pop %v6297
        %v6362 = vtanh.pop %v6298
        %v6363 = vtanh.pop %v6299
        %v6364 = vtanh.pop %v6300
        %v6365 = vtanh.pop %v6301
        %v6366 = vtanh.pop %v6302
        %v6367 = vtanh.pop %v6303
        %v6368 = vtanh.pop %v6304
        %v6369 = vtanh.pop %v6305
        %v6370 = vtanh.pop %v6306
        %v6371 = vtanh.pop %v6307
        %v6372 = vtanh.pop %v6308
        %v6373 = vtanh.pop %v6309
        %v6374 = vtanh.pop %v6310
        %v6375 = vtanh.pop %v6311
        %v6376 = vtanh.pop %v6312
        %v6377 = vtanh.pop %v6313
        %v6378 = vtanh.pop %v6314
        %v6379 = vtanh.pop %v6315
        %v6380 = vtanh.pop %v6316
        %v6381 = vtanh.pop %v6317
        %v6382 = vtanh.pop %v6318
        %v6383 = vtanh.pop %v6319
        %v6384 = vtanh.pop %v6320
        %v6385 = vtanh.pop %v6321
        %v6386 = vtanh.pop %v6322
        %v6387 = vtanh.pop %v6323
        %v6388 = vtanh.pop %v6324
        %v6389 = vtanh.pop %v6325
        %v6390 = vtanh.pop %v6326
        %v6391 = vtanh.pop %v6327
        %v6392 = vtanh.pop %v6328
        %v6393 = vtanh.pop %v6329
        %v6394 = vtanh.pop %v6330
        %v6395 = vtanh.pop %v6331
        %v6396 = vtanh.pop %v6332
        %v6397 = vtanh.pop %v6333
        %v6398 = vtanh.pop %v6334
        %v6399 = vadd.f32 %v6335, 1.0
        %v6400 = vadd.f32 %v6336, 1.0
        %v6401 = vadd.f32 %v6337, 1.0
        %v6402 = vadd.f32 %v6338, 1.0
        %v6403 = vadd.f32 %v6339, 1.0
        %v6404 = vadd.f32 %v6340, 1.0
        %v6405 = vadd.f32 %v6341, 1.0
        %v6406 = vadd.f32 %v6342, 1.0
        %v6407 = vadd.f32 %v6343, 1.0
        %v6408 = vadd.f32 %v6344, 1.0
        %v6409 = vadd.f32 %v6345, 1.0
        %v6410 = vadd.f32 %v6346, 1.0
        %v6411 = vadd.f32 %v6347, 1.0
        %v6412 = vadd.f32 %v6348, 1.0
        %v6413 = vadd.f32 %v6349, 1.0
        %v6414 = vadd.f32 %v6350, 1.0
        %v6415 = vadd.f32 %v6351, 1.0
        %v6416 = vadd.f32 %v6352, 1.0
        %v6417 = vadd.f32 %v6353, 1.0
        %v6418 = vadd.f32 %v6354, 1.0
        %v6419 = vadd.f32 %v6355, 1.0
        %v6420 = vadd.f32 %v6356, 1.0
        %v6421 = vadd.f32 %v6357, 1.0
        %v6422 = vadd.f32 %v6358, 1.0
        %v6423 = vadd.f32 %v6359, 1.0
        %v6424 = vadd.f32 %v6360, 1.0
        %v6425 = vadd.f32 %v6361, 1.0
        %v6426 = vadd.f32 %v6362, 1.0
        %v6427 = vadd.f32 %v6363, 1.0
        %v6428 = vadd.f32 %v6364, 1.0
        %v6429 = vadd.f32 %v6365, 1.0
        %v6430 = vadd.f32 %v6366, 1.0
        %v6431 = vadd.f32 %v6367, 1.0
        %v6432 = vadd.f32 %v6368, 1.0
        %v6433 = vadd.f32 %v6369, 1.0
        %v6434 = vadd.f32 %v6370, 1.0
        %v6435 = vadd.f32 %v6371, 1.0
        %v6436 = vadd.f32 %v6372, 1.0
        %v6437 = vadd.f32 %v6373, 1.0
        %v6438 = vadd.f32 %v6374, 1.0
        %v6439 = vadd.f32 %v6375, 1.0
        %v6440 = vadd.f32 %v6376, 1.0
        %v6441 = vadd.f32 %v6377, 1.0
        %v6442 = vadd.f32 %v6378, 1.0
        %v6443 = vadd.f32 %v6379, 1.0
        %v6444 = vadd.f32 %v6380, 1.0
        %v6445 = vadd.f32 %v6381, 1.0
        %v6446 = vadd.f32 %v6382, 1.0
        %v6447 = vadd.f32 %v6383, 1.0
        %v6448 = vadd.f32 %v6384, 1.0
        %v6449 = vadd.f32 %v6385, 1.0
        %v6450 = vadd.f32 %v6386, 1.0
        %v6451 = vadd.f32 %v6387, 1.0
        %v6452 = vadd.f32 %v6388, 1.0
        %v6453 = vadd.f32 %v6389, 1.0
        %v6454 = vadd.f32 %v6390, 1.0
        %v6455 = vadd.f32 %v6391, 1.0
        %v6456 = vadd.f32 %v6392, 1.0
        %v6457 = vadd.f32 %v6393, 1.0
        %v6458 = vadd.f32 %v6394, 1.0
        %v6459 = vadd.f32 %v6395, 1.0
        %v6460 = vadd.f32 %v6396, 1.0
        %v6461 = vadd.f32 %v6397, 1.0
        %v6462 = vadd.f32 %v6398, 1.0
        %v6463 = vmul.f32 %v6399, 0.5
        %v6464 = vmul.f32 %v6400, 0.5
        %v6465 = vmul.f32 %v6401, 0.5
        %v6466 = vmul.f32 %v6402, 0.5
        %v6467 = vmul.f32 %v6403, 0.5
        %v6468 = vmul.f32 %v6404, 0.5
        %v6469 = vmul.f32 %v6405, 0.5
        %v6470 = vmul.f32 %v6406, 0.5
        %v6471 = vmul.f32 %v6407, 0.5
        %v6472 = vmul.f32 %v6408, 0.5
        %v6473 = vmul.f32 %v6409, 0.5
        %v6474 = vmul.f32 %v6410, 0.5
        %v6475 = vmul.f32 %v6411, 0.5
        %v6476 = vmul.f32 %v6412, 0.5
        %v6477 = vmul.f32 %v6413, 0.5
        %v6478 = vmul.f32 %v6414, 0.5
        %v6479 = vmul.f32 %v6415, 0.5
        %v6480 = vmul.f32 %v6416, 0.5
        %v6481 = vmul.f32 %v6417, 0.5
        %v6482 = vmul.f32 %v6418, 0.5
        %v6483 = vmul.f32 %v6419, 0.5
        %v6484 = vmul.f32 %v6420, 0.5
        %v6485 = vmul.f32 %v6421, 0.5
        %v6486 = vmul.f32 %v6422, 0.5
        %v6487 = vmul.f32 %v6423, 0.5
        %v6488 = vmul.f32 %v6424, 0.5
        %v6489 = vmul.f32 %v6425, 0.5
        %v6490 = vmul.f32 %v6426, 0.5
        %v6491 = vmul.f32 %v6427, 0.5
        %v6492 = vmul.f32 %v6428, 0.5
        %v6493 = vmul.f32 %v6429, 0.5
        %v6494 = vmul.f32 %v6430, 0.5
        %v6495 = vmul.f32 %v6431, 0.5
        %v6496 = vmul.f32 %v6432, 0.5
        %v6497 = vmul.f32 %v6433, 0.5
        %v6498 = vmul.f32 %v6434, 0.5
        %v6499 = vmul.f32 %v6435, 0.5
        %v6500 = vmul.f32 %v6436, 0.5
        %v6501 = vmul.f32 %v6437, 0.5
        %v6502 = vmul.f32 %v6438, 0.5
        %v6503 = vmul.f32 %v6439, 0.5
        %v6504 = vmul.f32 %v6440, 0.5
        %v6505 = vmul.f32 %v6441, 0.5
        %v6506 = vmul.f32 %v6442, 0.5
        %v6507 = vmul.f32 %v6443, 0.5
        %v6508 = vmul.f32 %v6444, 0.5
        %v6509 = vmul.f32 %v6445, 0.5
        %v6510 = vmul.f32 %v6446, 0.5
        %v6511 = vmul.f32 %v6447, 0.5
        %v6512 = vmul.f32 %v6448, 0.5
        %v6513 = vmul.f32 %v6449, 0.5
        %v6514 = vmul.f32 %v6450, 0.5
        %v6515 = vmul.f32 %v6451, 0.5
        %v6516 = vmul.f32 %v6452, 0.5
        %v6517 = vmul.f32 %v6453, 0.5
        %v6518 = vmul.f32 %v6454, 0.5
        %v6519 = vmul.f32 %v6455, 0.5
        %v6520 = vmul.f32 %v6456, 0.5
        %v6521 = vmul.f32 %v6457, 0.5
        %v6522 = vmul.f32 %v6458, 0.5
        %v6523 = vmul.f32 %v6459, 0.5
        %v6524 = vmul.f32 %v6460, 0.5
        %v6525 = vmul.f32 %v6461, 0.5
        %v6526 = vmul.f32 %v6462, 0.5
        %v6527 = vmul.f32 %v5824, %v6463
        %v6528 = vmul.f32 %v5826, %v6464
        %v6529 = vmul.f32 %v5937, %v6465
        %v6530 = vmul.f32 %v5939, %v6466
        %v6531 = vmul.f32 %v5828, %v6467
        %v6532 = vmul.f32 %v5830, %v6468
        %v6533 = vmul.f32 %v5941, %v6469
        %v6534 = vmul.f32 %v5943, %v6470
        %v6535 = vmul.f32 %v5834, %v6471
        %v6536 = vmul.f32 %v5836, %v6472
        %v6537 = vmul.f32 %v5947, %v6473
        %v6538 = vmul.f32 %v5949, %v6474
        %v6539 = vmul.f32 %v5838, %v6475
        %v6540 = vmul.f32 %v5840, %v6476
        %v6541 = vmul.f32 %v5951, %v6477
        %v6542 = vmul.f32 %v5953, %v6478
        %v6543 = vmul.f32 %v5844, %v6479
        %v6544 = vmul.f32 %v5846, %v6480
        %v6545 = vmul.f32 %v5957, %v6481
        %v6546 = vmul.f32 %v5959, %v6482
        %v6547 = vmul.f32 %v5848, %v6483
        %v6548 = vmul.f32 %v5850, %v6484
        %v6549 = vmul.f32 %v5961, %v6485
        %v6550 = vmul.f32 %v5963, %v6486
        %v6551 = vmul.f32 %v5854, %v6487
        %v6552 = vmul.f32 %v5856, %v6488
        %v6553 = vmul.f32 %v5967, %v6489
        %v6554 = vmul.f32 %v5969, %v6490
        %v6555 = vmul.f32 %v5858, %v6491
        %v6556 = vmul.f32 %v5860, %v6492
        %v6557 = vmul.f32 %v5971, %v6493
        %v6558 = vmul.f32 %v5973, %v6494
        %v6559 = vmul.f32 %v5864, %v6495
        %v6560 = vmul.f32 %v5866, %v6496
        %v6561 = vmul.f32 %v5977, %v6497
        %v6562 = vmul.f32 %v5979, %v6498
        %v6563 = vmul.f32 %v5868, %v6499
        %v6564 = vmul.f32 %v5870, %v6500
        %v6565 = vmul.f32 %v5981, %v6501
        %v6566 = vmul.f32 %v5983, %v6502
        %v6567 = vmul.f32 %v5874, %v6503
        %v6568 = vmul.f32 %v5876, %v6504
        %v6569 = vmul.f32 %v5987, %v6505
        %v6570 = vmul.f32 %v5989, %v6506
        %v6571 = vmul.f32 %v5878, %v6507
        %v6572 = vmul.f32 %v5880, %v6508
        %v6573 = vmul.f32 %v5991, %v6509
        %v6574 = vmul.f32 %v5993, %v6510
        %v6575 = vmul.f32 %v5884, %v6511
        %v6576 = vmul.f32 %v5886, %v6512
        %v6577 = vmul.f32 %v5997, %v6513
        %v6578 = vmul.f32 %v5999, %v6514
        %v6579 = vmul.f32 %v5888, %v6515
        %v6580 = vmul.f32 %v5890, %v6516
        %v6581 = vmul.f32 %v6001, %v6517
        %v6582 = vmul.f32 %v6003, %v6518
        %v6583 = vmul.f32 %v5894, %v6519
        %v6584 = vmul.f32 %v5896, %v6520
        %v6585 = vmul.f32 %v6007, %v6521
        %v6586 = vmul.f32 %v6009, %v6522
        %v6587 = vmul.f32 %v5898, %v6523
        %v6588 = vmul.f32 %v5900, %v6524
        %v6589 = vmul.f32 %v6011, %v6525
        %v6590 = vmul.f32 %v6013, %v6526
        %v6591 = vpack.c.bf16 %v6531, %v6527
        %v6592 = vpack.c.bf16 %v6532, %v6528
        %v6593 = vpack.c.bf16 %v6533, %v6529
        %v6594 = vpack.c.bf16 %v6534, %v6530
        %v6595 = vpack.c.bf16 %v6539, %v6535
        %v6596 = vpack.c.bf16 %v6540, %v6536
        %v6597 = vpack.c.bf16 %v6541, %v6537
        %v6598 = vpack.c.bf16 %v6542, %v6538
        %v6599 = vpack.c.bf16 %v6547, %v6543
        %v6600 = vpack.c.bf16 %v6548, %v6544
        %v6601 = vpack.c.bf16 %v6549, %v6545
        %v6602 = vpack.c.bf16 %v6550, %v6546
        %v6603 = vpack.c.bf16 %v6555, %v6551
        %v6604 = vpack.c.bf16 %v6556, %v6552
        %v6605 = vpack.c.bf16 %v6557, %v6553
        %v6606 = vpack.c.bf16 %v6558, %v6554
        %v6607 = vpack.c.bf16 %v6563, %v6559
        %v6608 = vpack.c.bf16 %v6564, %v6560
        %v6609 = vpack.c.bf16 %v6565, %v6561
        %v6610 = vpack.c.bf16 %v6566, %v6562
        %v6611 = vpack.c.bf16 %v6571, %v6567
        %v6612 = vpack.c.bf16 %v6572, %v6568
        %v6613 = vpack.c.bf16 %v6573, %v6569
        %v6614 = vpack.c.bf16 %v6574, %v6570
        %v6615 = vpack.c.bf16 %v6579, %v6575
        %v6616 = vpack.c.bf16 %v6580, %v6576
        %v6617 = vpack.c.bf16 %v6581, %v6577
        %v6618 = vpack.c.bf16 %v6582, %v6578
        %v6619 = vpack.c.bf16 %v6587, %v6583
        %v6620 = vpack.c.bf16 %v6588, %v6584
        %v6621 = vpack.c.bf16 %v6589, %v6585
        %v6622 = vpack.c.bf16 %v6590, %v6586
        %v6623 = vld [vmem:[%s15] sm:$0xf]
        %v6624 = vld [vmem:[%s15 + $0x4] sm:$0xf]
        %v6625 = vld [vmem:[%s15 + $0x8] sm:$0xf]
        %v6626 = vld [vmem:[%s15 + $0xc] sm:$0xf]
        %v6627 = vld [vmem:[%s15 + $0x10] sm:$0xf]
        %v6628 = vld [vmem:[%s15 + $0x14] sm:$0xf]
        %v6629 = vld [vmem:[%s15 + $0x18] sm:$0xf]
        %v6630 = vld [vmem:[%s15 + $0x1c] sm:$0xf]
        %v6631 = vld [vmem:[%s15 + $0x20] sm:$0xf]
        %v6632 = vld [vmem:[%s15 + $0x24] sm:$0xf]
        %v6633 = vld [vmem:[%s15 + $0x28] sm:$0xf]
        %v6634 = vld [vmem:[%s15 + $0x2c] sm:$0xf]
        %v6635 = vld [vmem:[%s15 + $0x30] sm:$0xf]
        %v6636 = vld [vmem:[%s15 + $0x34] sm:$0xf]
        %v6637 = vld [vmem:[%s15 + $0x38] sm:$0xf]
        %v6638 = vld [vmem:[%s15 + $0x3c] sm:$0xf]
        %v6639 = vld [vmem:[%s15 + $0x40] sm:$0xf]
        %v6640 = vld [vmem:[%s15 + $0x44] sm:$0xf]
        %v6641 = vld [vmem:[%s15 + $0x48] sm:$0xf]
        %v6642 = vld [vmem:[%s15 + $0x4c] sm:$0xf]
        %v6643 = vld [vmem:[%s15 + $0x50] sm:$0xf]
        %v6644 = vld [vmem:[%s15 + $0x54] sm:$0xf]
        %v6645 = vld [vmem:[%s15 + $0x58] sm:$0xf]
        %v6646 = vld [vmem:[%s15 + $0x5c] sm:$0xf]
        %v6647 = vld [vmem:[%s15 + $0x60] sm:$0xf]
        %v6648 = vld [vmem:[%s15 + $0x64] sm:$0xf]
        %v6649 = vld [vmem:[%s15 + $0x68] sm:$0xf]
        %v6650 = vld [vmem:[%s15 + $0x6c] sm:$0xf]
        %v6651 = vld [vmem:[%s15 + $0x70] sm:$0xf]
        %v6652 = vld [vmem:[%s15 + $0x74] sm:$0xf]
        %v6653 = vld [vmem:[%s15 + $0x78] sm:$0xf]
        %v6654 = vld [vmem:[%s15 + $0x7c] sm:$0xf]
        %v6655 = vld [vmem:[%s15 + $0x80] sm:$0xf]
        %v6656 = vld [vmem:[%s15 + $0x84] sm:$0xf]
        %v6657 = vld [vmem:[%s15 + $0x88] sm:$0xf]
        %v6658 = vld [vmem:[%s15 + $0x8c] sm:$0xf]
        %v6659 = vld [vmem:[%s15 + $0x90] sm:$0xf]
        %v6660 = vld [vmem:[%s15 + $0x94] sm:$0xf]
        %v6661 = vld [vmem:[%s15 + $0x98] sm:$0xf]
        %v6662 = vld [vmem:[%s15 + $0x9c] sm:$0xf]
        %v6663 = vld [vmem:[%s15 + $0xa0] sm:$0xf]
        %v6664 = vld [vmem:[%s15 + $0xa4] sm:$0xf]
        %v6665 = vld [vmem:[%s15 + $0xa8] sm:$0xf]
        %v6666 = vld [vmem:[%s15 + $0xac] sm:$0xf]
        %v6667 = vld [vmem:[%s15 + $0xb0] sm:$0xf]
        %v6668 = vld [vmem:[%s15 + $0xb4] sm:$0xf]
        %v6669 = vld [vmem:[%s15 + $0xb8] sm:$0xf]
        %v6670 = vld [vmem:[%s15 + $0xbc] sm:$0xf]
        %v6671 = vld [vmem:[%s15 + $0xc0] sm:$0xf]
        %v6672 = vld [vmem:[%s15 + $0xc4] sm:$0xf]
        %v6673 = vld [vmem:[%s15 + $0xc8] sm:$0xf]
        %v6674 = vld [vmem:[%s15 + $0xcc] sm:$0xf]
        %v6675 = vld [vmem:[%s15 + $0xd0] sm:$0xf]
        %v6676 = vld [vmem:[%s15 + $0xd4] sm:$0xf]
        %v6677 = vld [vmem:[%s15 + $0xd8] sm:$0xf]
        %v6678 = vld [vmem:[%s15 + $0xdc] sm:$0xf]
        %v6679 = vld [vmem:[%s15 + $0xe0] sm:$0xf]
        %v6680 = vld [vmem:[%s15 + $0xe4] sm:$0xf]
        %v6681 = vld [vmem:[%s15 + $0xe8] sm:$0xf]
        %v6682 = vld [vmem:[%s15 + $0xec] sm:$0xf]
        %v6683 = vld [vmem:[%s15 + $0xf0] sm:$0xf]
        %v6684 = vld [vmem:[%s15 + $0xf4] sm:$0xf]
        %v6685 = vld [vmem:[%s15 + $0xf8] sm:$0xf]
        %v6686 = vld [vmem:[%s15 + $0xfc] sm:$0xf]
        %v6687 = vld [vmem:[%s16] sm:$0x1]
        %v6689 = vlaneseq
        %v6690 = vshrl.u32 %v6689, 7
        %v6691 = vsub.s32 0, %v6690
        %v6692 = vrot.slane %v6687, %v6691
        %v6758 = vunpack.c.l.b16 %v6623
        %v6759 = vunpack.c.l.b16 %v6624
        %v6760 = vunpack.c.l.b16 %v6625
        %v6761 = vunpack.c.l.b16 %v6626
        %v6762 = vunpack.c.l.b16 %v6627
        %v6763 = vunpack.c.l.b16 %v6628
        %v6764 = vunpack.c.l.b16 %v6629
        %v6765 = vunpack.c.l.b16 %v6630
        %v6766 = vunpack.c.l.b16 %v6631
        %v6767 = vunpack.c.l.b16 %v6632
        %v6768 = vunpack.c.l.b16 %v6633
        %v6769 = vunpack.c.l.b16 %v6634
        %v6770 = vunpack.c.l.b16 %v6635
        %v6771 = vunpack.c.l.b16 %v6636
        %v6772 = vunpack.c.l.b16 %v6637
        %v6773 = vunpack.c.l.b16 %v6638
        %v6774 = vunpack.c.l.b16 %v6639
        %v6775 = vunpack.c.l.b16 %v6640
        %v6776 = vunpack.c.l.b16 %v6641
        %v6777 = vunpack.c.l.b16 %v6642
        %v6778 = vunpack.c.l.b16 %v6643
        %v6779 = vunpack.c.l.b16 %v6644
        %v6780 = vunpack.c.l.b16 %v6645
        %v6781 = vunpack.c.l.b16 %v6646
        %v6782 = vunpack.c.l.b16 %v6647
        %v6783 = vunpack.c.l.b16 %v6648
        %v6784 = vunpack.c.l.b16 %v6649
        %v6785 = vunpack.c.l.b16 %v6650
        %v6786 = vunpack.c.l.b16 %v6651
        %v6787 = vunpack.c.l.b16 %v6652
        %v6788 = vunpack.c.l.b16 %v6653
        %v6789 = vunpack.c.l.b16 %v6654
        %v6790 = vunpack.c.l.b16 %v6655
        %v6791 = vunpack.c.l.b16 %v6656
        %v6792 = vunpack.c.l.b16 %v6657
        %v6793 = vunpack.c.l.b16 %v6658
        %v6794 = vunpack.c.l.b16 %v6659
        %v6795 = vunpack.c.l.b16 %v6660
        %v6796 = vunpack.c.l.b16 %v6661
        %v6797 = vunpack.c.l.b16 %v6662
        %v6798 = vunpack.c.l.b16 %v6663
        %v6799 = vunpack.c.l.b16 %v6664
        %v6800 = vunpack.c.l.b16 %v6665
        %v6801 = vunpack.c.l.b16 %v6666
        %v6802 = vunpack.c.l.b16 %v6667
        %v6803 = vunpack.c.l.b16 %v6668
        %v6804 = vunpack.c.l.b16 %v6669
        %v6805 = vunpack.c.l.b16 %v6670
        %v6806 = vunpack.c.l.b16 %v6671
        %v6807 = vunpack.c.l.b16 %v6672
        %v6808 = vunpack.c.l.b16 %v6673
        %v6809 = vunpack.c.l.b16 %v6674
        %v6810 = vunpack.c.l.b16 %v6675
        %v6811 = vunpack.c.l.b16 %v6676
        %v6812 = vunpack.c.l.b16 %v6677
        %v6813 = vunpack.c.l.b16 %v6678
        %v6814 = vunpack.c.l.b16 %v6679
        %v6815 = vunpack.c.l.b16 %v6680
        %v6816 = vunpack.c.l.b16 %v6681
        %v6817 = vunpack.c.l.b16 %v6682
        %v6818 = vunpack.c.l.b16 %v6683
        %v6819 = vunpack.c.l.b16 %v6684
        %v6820 = vunpack.c.l.b16 %v6685
        %v6821 = vunpack.c.l.b16 %v6686
        %v6822 = vpack.c.b16 %v6759, %v6758
        %v6823 = vpack.c.b16 %v6761, %v6760
        %v6824 = vpack.c.b16 %v6763, %v6762
        %v6825 = vpack.c.b16 %v6765, %v6764
        %v6826 = vpack.c.b16 %v6767, %v6766
        %v6827 = vpack.c.b16 %v6769, %v6768
        %v6828 = vpack.c.b16 %v6771, %v6770
        %v6829 = vpack.c.b16 %v6773, %v6772
        %v6830 = vpack.c.b16 %v6775, %v6774
        %v6831 = vpack.c.b16 %v6777, %v6776
        %v6832 = vpack.c.b16 %v6779, %v6778
        %v6833 = vpack.c.b16 %v6781, %v6780
        %v6834 = vpack.c.b16 %v6783, %v6782
        %v6835 = vpack.c.b16 %v6785, %v6784
        %v6836 = vpack.c.b16 %v6787, %v6786
        %v6837 = vpack.c.b16 %v6789, %v6788
        %v6838 = vpack.c.b16 %v6791, %v6790
        %v6839 = vpack.c.b16 %v6793, %v6792
        %v6840 = vpack.c.b16 %v6795, %v6794
        %v6841 = vpack.c.b16 %v6797, %v6796
        %v6842 = vpack.c.b16 %v6799, %v6798
        %v6843 = vpack.c.b16 %v6801, %v6800
        %v6844 = vpack.c.b16 %v6803, %v6802
        %v6845 = vpack.c.b16 %v6805, %v6804
        %v6846 = vpack.c.b16 %v6807, %v6806
        %v6847 = vpack.c.b16 %v6809, %v6808
        %v6848 = vpack.c.b16 %v6811, %v6810
        %v6849 = vpack.c.b16 %v6813, %v6812
        %v6850 = vpack.c.b16 %v6815, %v6814
        %v6851 = vpack.c.b16 %v6817, %v6816
        %v6852 = vpack.c.b16 %v6819, %v6818
        %v6853 = vpack.c.b16 %v6821, %v6820
        %6886 = vmatprep.subr.bf16.mxu0 0
        %6887 = vmatpush1.bf16.msra.mxu0 %v6822
        %6888 = vmatprep.subr.bf16.mxu0 0
        %6889 = vmatpush1.bf16.msra.mxu0 %v6823
        %6890 = vmatprep.subr.bf16.mxu0 0
        %6891 = vmatpush1.bf16.msra.mxu0 %v6824
        %6892 = vmatprep.subr.bf16.mxu0 0
        %6893 = vmatpush1.bf16.msra.mxu0 %v6825
        %6894 = vmatprep.subr.bf16.mxu0 0
        %6895 = vmatpush1.bf16.msra.mxu0 %v6826
        %6896 = vmatprep.subr.bf16.mxu0 0
        %6897 = vmatpush1.bf16.msra.mxu0 %v6827
        %6898 = vmatprep.subr.bf16.mxu0 0
        %6899 = vmatpush1.bf16.msra.mxu0 %v6828
        %6900 = vmatprep.subr.bf16.mxu0 0
        %6901 = vmatpush1.bf16.msra.mxu0 %v6829
        %6902 = vmatprep.subr.bf16.mxu0 0
        %6903 = vmatpush1.bf16.msra.mxu0 %v6830
        %6904 = vmatprep.subr.bf16.mxu0 0
        %6905 = vmatpush1.bf16.msra.mxu0 %v6831
        %6906 = vmatprep.subr.bf16.mxu0 0
        %6907 = vmatpush1.bf16.msra.mxu0 %v6832
        %6908 = vmatprep.subr.bf16.mxu0 0
        %6909 = vmatpush1.bf16.msra.mxu0 %v6833
        %6910 = vmatprep.subr.bf16.mxu0 0
        %6911 = vmatpush1.bf16.msra.mxu0 %v6834
        %6912 = vmatprep.subr.bf16.mxu0 0
        %6913 = vmatpush1.bf16.msra.mxu0 %v6835
        %6914 = vmatprep.subr.bf16.mxu0 0
        %6915 = vmatpush1.bf16.msra.mxu0 %v6836
        %6916 = vmatprep.subr.bf16.mxu0 0
        %6917 = vmatpush1.bf16.msra.mxu0 %v6837
        %6918 = vmatprep.mubr.bf16.mxu0 %v6592
        %6919 = vmatmul.mubr.bf16.gmra.mrb[0].mxu0 %v6591
        %v6920 = vpop.f32.mrb[0].mxu0
        %v6921 = vadd.f32 %v6692, %v6920
        %v6922 = vpop.f32.mrb[0].mxu0
        %v6923 = vpop.f32.mrb[0].mxu0
        %v6924 = vadd.f32 %v6692, %v6923
        %v6925 = vpop.f32.mrb[0].mxu0
        %6926 = vmatprep.mubr.bf16.mxu0 %v6596
        %6927 = vmatmul.mubr.bf16.gmra.mrb[0].mxu0 %v6595
        %v6928 = vpop.f32.mrb[0].mxu0
        %v6929 = vadd.f32 %v6692, %v6928
        %v6930 = vpop.f32.mrb[0].mxu0
        %v6931 = vpop.f32.mrb[0].mxu0
        %v6932 = vadd.f32 %v6692, %v6931
        %v6933 = vpop.f32.mrb[0].mxu0
        %6934 = vmatprep.mubr.bf16.mxu0 %v6600
        %6935 = vmatmul.mubr.bf16.gmra.mrb[0].mxu0 %v6599
        %v6936 = vpop.f32.mrb[0].mxu0
        %v6937 = vadd.f32 %v6692, %v6936
        %v6938 = vpop.f32.mrb[0].mxu0
        %v6939 = vpop.f32.mrb[0].mxu0
        %v6940 = vadd.f32 %v6692, %v6939
        %v6941 = vpop.f32.mrb[0].mxu0
        %6942 = vmatprep.mubr.bf16.mxu0 %v6604
        %6943 = vmatmul.mubr.bf16.gmra.mrb[0].mxu0 %v6603
        %v6944 = vpop.f32.mrb[0].mxu0
        %v6945 = vadd.f32 %v6692, %v6944
        %v6946 = vpop.f32.mrb[0].mxu0
        %v6947 = vpop.f32.mrb[0].mxu0
        %v6948 = vadd.f32 %v6692, %v6947
        %v6949 = vpop.f32.mrb[0].mxu0
        %6950 = vmatprep.mubr.bf16.mxu0 %v6608
        %6951 = vmatmul.mubr.bf16.gmra.mrb[0].mxu0 %v6607
        %v6952 = vpop.f32.mrb[0].mxu0
        %v6953 = vadd.f32 %v6692, %v6952
        %v6954 = vpop.f32.mrb[0].mxu0
        %v6955 = vpop.f32.mrb[0].mxu0
        %v6956 = vadd.f32 %v6692, %v6955
        %v6957 = vpop.f32.mrb[0].mxu0
        %6958 = vmatprep.mubr.bf16.mxu0 %v6612
        %6959 = vmatmul.mubr.bf16.gmra.mrb[0].mxu0 %v6611
        %v6960 = vpop.f32.mrb[0].mxu0
        %v6961 = vadd.f32 %v6692, %v6960
        %v6962 = vpop.f32.mrb[0].mxu0
        %v6963 = vpop.f32.mrb[0].mxu0
        %v6964 = vadd.f32 %v6692, %v6963
        %v6965 = vpop.f32.mrb[0].mxu0
        %6966 = vmatprep.mubr.bf16.mxu0 %v6616
        %6967 = vmatmul.mubr.bf16.gmra.mrb[0].mxu0 %v6615
        %v6968 = vpop.f32.mrb[0].mxu0
        %v6969 = vadd.f32 %v6692, %v6968
        %v6970 = vpop.f32.mrb[0].mxu0
        %v6971 = vpop.f32.mrb[0].mxu0
        %v6972 = vadd.f32 %v6692, %v6971
        %v6973 = vpop.f32.mrb[0].mxu0
        %6974 = vmatprep.mubr.bf16.mxu0 %v6620
        %6975 = vmatmul.mubr.bf16.gmra.mrb[0].mxu0 %v6619
        %v6976 = vpop.f32.mrb[0].mxu0
        %v6977 = vadd.f32 %v6692, %v6976
        %v6978 = vpop.f32.mrb[0].mxu0
        %v6979 = vpop.f32.mrb[0].mxu0
        %v6980 = vadd.f32 %v6692, %v6979
        %v6981 = vpop.f32.mrb[0].mxu0
        %6982 = vdwg.mxu0
        %6983 = vmatprep.subr.bf16.mxu0 0
        %6984 = vmatpush1.bf16.msra.mxu0 %v6838
        %6985 = vmatprep.subr.bf16.mxu0 0
        %6986 = vmatpush1.bf16.msra.mxu0 %v6839
        %6987 = vmatprep.subr.bf16.mxu0 0
        %6988 = vmatpush1.bf16.msra.mxu0 %v6840
        %6989 = vmatprep.subr.bf16.mxu0 0
        %6990 = vmatpush1.bf16.msra.mxu0 %v6841
        %6991 = vmatprep.subr.bf16.mxu0 0
        %6992 = vmatpush1.bf16.msra.mxu0 %v6842
        %6993 = vmatprep.subr.bf16.mxu0 0
        %6994 = vmatpush1.bf16.msra.mxu0 %v6843
        %6995 = vmatprep.subr.bf16.mxu0 0
        %6996 = vmatpush1.bf16.msra.mxu0 %v6844
        %6997 = vmatprep.subr.bf16.mxu0 0
        %6998 = vmatpush1.bf16.msra.mxu0 %v6845
        %6999 = vmatprep.subr.bf16.mxu0 0
        %7000 = vmatpush1.bf16.msra.mxu0 %v6846
        %7001 = vmatprep.subr.bf16.mxu0 0
        %7002 = vmatpush1.bf16.msra.mxu0 %v6847
        %7003 = vmatprep.subr.bf16.mxu0 0
        %7004 = vmatpush1.bf16.msra.mxu0 %v6848
        %7005 = vmatprep.subr.bf16.mxu0 0
        %7006 = vmatpush1.bf16.msra.mxu0 %v6849
        %7007 = vmatprep.subr.bf16.mxu0 0
        %7008 = vmatpush1.bf16.msra.mxu0 %v6850
        %7009 = vmatprep.subr.bf16.mxu0 0
        %7010 = vmatpush1.bf16.msra.mxu0 %v6851
        %7011 = vmatprep.subr.bf16.mxu0 0
        %7012 = vmatpush1.bf16.msra.mxu0 %v6852
        %7013 = vmatprep.subr.bf16.mxu0 0
        %7014 = vmatpush1.bf16.msra.mxu0 %v6853
        %7015 = vmatprep.mubr.bf16.mxu0 %v6594
        %7016 = vmatmul.mubr.bf16.gmra.mrb[0].mxu0 %v6593
        %v7017 = vpop.f32.mrb[0].mxu0
        %v7018 = vadd.f32 %v6921, %v7017
        %v7019 = vpop.f32.mrb[0].mxu0
        %v7020 = vpop.f32.mrb[0].mxu0
        %v7021 = vadd.f32 %v6924, %v7020
        %v7022 = vpop.f32.mrb[0].mxu0
        %7023 = vmatprep.mubr.bf16.mxu0 %v6598
        %7024 = vmatmul.mubr.bf16.gmra.mrb[0].mxu0 %v6597
        %v7025 = vpop.f32.mrb[0].mxu0
        %v7026 = vadd.f32 %v6929, %v7025
        %v7027 = vpop.f32.mrb[0].mxu0
        %v7028 = vpop.f32.mrb[0].mxu0
        %v7029 = vadd.f32 %v6932, %v7028
        %v7030 = vpop.f32.mrb[0].mxu0
        %7031 = vmatprep.mubr.bf16.mxu0 %v6602
        %7032 = vmatmul.mubr.bf16.gmra.mrb[0].mxu0 %v6601
        %v7033 = vpop.f32.mrb[0].mxu0
        %v7034 = vadd.f32 %v6937, %v7033
        %v7035 = vpop.f32.mrb[0].mxu0
        %v7036 = vpop.f32.mrb[0].mxu0
        %v7037 = vadd.f32 %v6940, %v7036
        %v7038 = vpop.f32.mrb[0].mxu0
        %7039 = vmatprep.mubr.bf16.mxu0 %v6606
        %7040 = vmatmul.mubr.bf16.gmra.mrb[0].mxu0 %v6605
        %v7041 = vpop.f32.mrb[0].mxu0
        %v7042 = vadd.f32 %v6945, %v7041
        %v7043 = vpop.f32.mrb[0].mxu0
        %v7044 = vpop.f32.mrb[0].mxu0
        %v7045 = vadd.f32 %v6948, %v7044
        %v7046 = vpop.f32.mrb[0].mxu0
        %7047 = vmatprep.mubr.bf16.mxu0 %v6610
        %7048 = vmatmul.mubr.bf16.gmra.mrb[0].mxu0 %v6609
        %v7049 = vpop.f32.mrb[0].mxu0
        %v7050 = vadd.f32 %v6953, %v7049
        %v7051 = vpop.f32.mrb[0].mxu0
        %v7052 = vpop.f32.mrb[0].mxu0
        %v7053 = vadd.f32 %v6956, %v7052
        %v7054 = vpop.f32.mrb[0].mxu0
        %7055 = vmatprep.mubr.bf16.mxu0 %v6614
        %7056 = vmatmul.mubr.bf16.gmra.mrb[0].mxu0 %v6613
        %v7057 = vpop.f32.mrb[0].mxu0
        %v7058 = vadd.f32 %v6961, %v7057
        %v7059 = vpop.f32.mrb[0].mxu0
        %v7060 = vpop.f32.mrb[0].mxu0
        %v7061 = vadd.f32 %v6964, %v7060
        %v7062 = vpop.f32.mrb[0].mxu0
        %7063 = vmatprep.mubr.bf16.mxu0 %v6618
        %7064 = vmatmul.mubr.bf16.gmra.mrb[0].mxu0 %v6617
        %v7065 = vpop.f32.mrb[0].mxu0
        %v7066 = vadd.f32 %v6969, %v7065
        %v7067 = vpop.f32.mrb[0].mxu0
        %v7068 = vpop.f32.mrb[0].mxu0
        %v7069 = vadd.f32 %v6972, %v7068
        %v7070 = vpop.f32.mrb[0].mxu0
        %7071 = vmatprep.mubr.bf16.mxu0 %v6622
        %7072 = vmatmul.mubr.bf16.gmra.mrb[0].mxu0 %v6621
        %v7073 = vpop.f32.mrb[0].mxu0
        %v7074 = vadd.f32 %v6977, %v7073
        %v7075 = vpop.f32.mrb[0].mxu0
        %v7076 = vpop.f32.mrb[0].mxu0
        %v7077 = vadd.f32 %v6980, %v7076
        %v7078 = vpop.f32.mrb[0].mxu0
        %7079 = vdwg.mxu0
        %v7080 = vadd.f32 %v5329, %v7018
        %v7081 = vadd.f32 %v5330, %v7021
        %v7082 = vadd.f32 %v5331, %v7026
        %v7083 = vadd.f32 %v5332, %v7029
        %v7084 = vadd.f32 %v5333, %v7034
        %v7085 = vadd.f32 %v5334, %v7037
        %v7086 = vadd.f32 %v5335, %v7042
        %v7087 = vadd.f32 %v5336, %v7045
        %v7088 = vadd.f32 %v5337, %v7050
        %v7089 = vadd.f32 %v5338, %v7053
        %v7090 = vadd.f32 %v5339, %v7058
        %v7091 = vadd.f32 %v5340, %v7061
        %v7092 = vadd.f32 %v5341, %v7066
        %v7093 = vadd.f32 %v5342, %v7069
        %v7094 = vadd.f32 %v5343, %v7074
        %v7095 = vadd.f32 %v5344, %v7077
        %7096 = vst [vmem:[%s567] sm:$0xff] %v7080
        %7097 = vst [vmem:[%s567 + $0x8] sm:$0xff] %v7081
        %7098 = vst [vmem:[%s567 + $0x10] sm:$0xff] %v7082
        %7099 = vst [vmem:[%s567 + $0x18] sm:$0xff] %v7083
        %7100 = vst [vmem:[%s567 + $0x20] sm:$0xff] %v7084
        %7101 = vst [vmem:[%s567 + $0x28] sm:$0xff] %v7085
        %7102 = vst [vmem:[%s567 + $0x30] sm:$0xff] %v7086
        %7103 = vst [vmem:[%s567 + $0x38] sm:$0xff] %v7087
        %7104 = vst [vmem:[%s567 + $0x40] sm:$0xff] %v7088
        %7105 = vst [vmem:[%s567 + $0x48] sm:$0xff] %v7089
        %7106 = vst [vmem:[%s567 + $0x50] sm:$0xff] %v7090
        %7107 = vst [vmem:[%s567 + $0x58] sm:$0xff] %v7091
        %7108 = vst [vmem:[%s567 + $0x60] sm:$0xff] %v7092
        %7109 = vst [vmem:[%s567 + $0x68] sm:$0xff] %v7093
        %7110 = vst [vmem:[%s567 + $0x70] sm:$0xff] %v7094
        %7111 = vst [vmem:[%s567 + $0x78] sm:$0xff] %v7095
        %s7112 = sand.u32 %s403, 1
        %s7113 = scalar_lea.sflag [#allocation4], %s7112
        %s7114 = sand.u32 %s403, 1
        %s7115 = smul.addr %s7114, 128
        %s7116 = scalar_lea.vmem [#allocation7], %s7115
        // Predicated region
        $region97: #{tpu_custom_call.1} parent=87 // pred_check
          %p7117 = pneg %p413
        $region98: #{tpu_custom_call.1} parent=87 // pred_check_branch
          %7119 = sbr.rel (%p7117) target = $region100
        $region99: #{tpu_custom_call.1} parent=87 // pred_region
          %s7121 = ssub.s32 2048, 2048
          %7122 = vsyncadd %s7113, %s7121
          %s7123 = smul.addr %s33, 16
          %s7124 = smul.addr %s7123, 128
          %s7125 = scalar_lea.hbm %s17, %s7124
          %s7126 = sshll.u32 %s7116, 4
          %s7127 = int_to_ptr.vmem [resolvable:$true] %s7126
          %7132 = dma.vmem_to_hbm [thread:$0]  %s7127, 2048, %s7125, %s7113, 128, 128, 8
        $region100: #{tpu_custom_call.1} parent=87 // pred_fallthru
          _
      $region88: #{tpu_custom_call.1} parent=5 // pred_fallthru
        _
      %p7133 = scmp.le.s32.totalorder 2, %s28
      // Predicated region
      $region101: #{tpu_custom_call.1} parent=5 // pred_check
        %p7134 = pneg %p7133
      $region102: #{tpu_custom_call.1} parent=5 // pred_check_branch
        %7136 = sbr.rel (%p7134) target = $region104
      $region103: #{tpu_custom_call.1} parent=5 // pred_region
        %s7137 = ssub.s32 %s28, 2
        // Predicated region
        $region105: #{tpu_custom_call.1} parent=103 // pred_check
          %p7138 = pneg %p419
        $region106: #{tpu_custom_call.1} parent=103 // pred_check_branch
          %7140 = sbr.rel (%p7138) target = $region108
        $region107: #{tpu_custom_call.1} parent=103 // pred_region
          %s7141 = sand.u32 %s404, 1
          %s7142 = scalar_lea.sflag [#allocation4], %s7141
          %s7143 = sand.u32 %s404, 1
          %s7144 = smul.addr %s7143, 128
          %s7145 = scalar_lea.vmem [#allocation7], %s7144
          %7146 = dma.done %s7142, 2048
        $region108: #{tpu_custom_call.1} parent=103 // pred_fallthru
          _
      $region104: #{tpu_custom_call.1} parent=5 // pred_fallthru
        _
    $region6: #{tpu_custom_call.1} parent=1 // loop_footer
      %s32 = sadd.s32 1, %s28
    $region7: #{tpu_custom_call.1} parent=1 // loop_footer_branch
      %27 = sbr.rel target = $region3
    $region8: #{tpu_custom_call.1} parent=1 // loop_exit
      _
    %7147 = vsyncpa [#allocation3], 1
    %s7148 = scalar_lea.sflag [#allocation3], 1
    %7149 = vsyncpa %s7148, 1
    %7150 = vsyncpa [#allocation6], 1
    %7151 = vsyncpa [#allocation4], 1
    %s7152 = scalar_lea.sflag [#allocation4], 1
    %7153 = vsyncpa %s7152, 1

</llo_original>
